<compile_context>
chip_gen: v6e
topology: v6e:2x2x1
jax: 0.10.0
libtpu: 0.0.40
codegen_flags: <defaults>
</compile_context>

<pallas_src>
import math

import jax
import jax.numpy as jnp
from jax.experimental import pallas as pl
from jax.experimental.pallas import tpu as pltpu


def _gaussian_list(window_size, sigma):
    vals = [
        math.exp(-((x - window_size // 2) ** 2) / (2.0 * sigma ** 2))
        for x in range(window_size)
    ]
    s = sum(vals)
    return [v / s for v in vals]


def _round_up(x, m):
    return ((x + m - 1) // m) * m


def _make_ssim_kernel(gauss, h_pad, hout, wout, tile_p, n_planes, mask_needed):
    """Build the per-tile SSIM partial-sum kernel (all closure args static)."""
    k = len(gauss)
    half = k // 2

    def kernel(c_ref, wmat_ref, x1_ref, x2_ref, out_ref):
        c1 = c_ref[0]
        c2 = c_ref[1]
        wmat = wmat_ref[...]                       # (W, Wout) banded Gaussian

        x1 = x1_ref[...].astype(jnp.float32)       # (tile_p, h_pad, W)
        x2 = x2_ref[...].astype(jnp.float32)

        def wpass(y):
            # Lane-axis (W) Gaussian pass on the MXU: a single matmul against
            # the banded window matrix.  h_pad % 8 == 0, so the collapse of
            # the leading dims into sublanes is a layout no-op.
            flat = y.reshape(tile_p * h_pad, y.shape[-1])
            r = jnp.dot(flat, wmat,
                        preferred_element_type=jnp.float32,
                        precision=jax.lax.Precision.HIGHEST)
            return r.reshape(tile_p, h_pad, wout)

        def hpass(y):
            # Sublane-axis (H) Gaussian pass on the VPU.  The Gaussian is
            # symmetric, so pair taps a and k-1-a to halve the multiplies.
            if k == 1:
                return gauss[0] * y[:, 0:hout, :]
            acc = gauss[0] * (y[:, 0:hout, :] + y[:, k - 1:k - 1 + hout, :])
            for a in range(1, half):
                acc = acc + gauss[a] * (
                    y[:, a:a + hout, :] + y[:, k - 1 - a:k - 1 - a + hout, :])
            if k % 2 == 1:
                acc = acc + gauss[half] * y[:, half:half + hout, :]
            return acc                              # (tile_p, hout, wout)

        # Width-reduced (MXU) intermediates for the five required convs.
        g1 = wpass(x1)
        g2 = wpass(x2)
        g11 = wpass(x1 * x1)
        g22 = wpass(x2 * x2)
        g12 = wpass(x1 * x2)

        mu1 = hpass(g1)
        mu2 = hpass(g2)
        mu1_sq = mu1 * mu1
        mu2_sq = mu2 * mu2
        mu1_mu2 = mu1 * mu2

        sigma1_sq = hpass(g11) - mu1_sq
        sigma2_sq = hpass(g22) - mu2_sq
        sigma12 = hpass(g12) - mu1_mu2

        v1 = 2.0 * sigma12 + c2
        v2 = sigma1_sq + sigma2_sq + c2
        ssim_map = (2.0 * mu1_mu2 + c1) * v1 / ((mu1_sq + mu2_sq + c1) * v2)

        if mask_needed:
            # Zero out contribution of zero-padded planes in the tail tile
            # (zero planes would otherwise contribute ssim == 1).
            base = pl.program_id(0) * tile_p
            plane_idx = (
                jax.lax.broadcasted_iota(jnp.int32, ssim_map.shape, 0) + base
            )
            ssim_map = jnp.where(plane_idx < n_planes, ssim_map, 0.0)

        out_ref[0, 0] = jnp.sum(ssim_map)

    return kernel


def ssim_pallas(img1, img2, window_size=11, size_average=True, val_range=None):
    """Pallas implementation of SSIM.forward (mean SSIM over the batch)."""
    assert img1.shape == img2.shape and img1.ndim == 4
    n, c, h, w = img1.shape
    k = window_size
    hout, wout = h - k + 1, w - k + 1
    assert hout > 0 and wout > 0, "window larger than image not supported"

    # Dynamic range L (data-dependent, mirrors the torch branching).
    if val_range is None:
        max_val = jnp.where(jnp.max(img1) > 128, 255.0, 1.0)
        min_val = jnp.where(jnp.min(img1) < -0.5, -1.0, 0.0)
        lval = (max_val - min_val).astype(jnp.float32)
    else:
        lval = jnp.float32(val_range)
    consts = jnp.stack([(0.01 * lval) ** 2, (0.03 * lval) ** 2]).astype(jnp.float32)

    gauss = _gaussian_list(k, 1.5)

    # Banded matrix encoding the W (lane-axis) pass of the separable Gaussian:
    # out[:, o] = sum_b g[b] * in[:, o + b]   ->   wmat[o + b, o] = g[b].
    wmat = jnp.asarray(
        [[gauss[r - col] if 0 <= r - col < k else 0.0 for col in range(wout)]
         for r in range(w)],
        dtype=jnp.float32)

    p = n * c
    x1 = img1.reshape(p, h, w)   # native dtype; kernel upcasts in-register
    x2 = img2.reshape(p, h, w)

    # Pad H to a multiple of 8 so the in-kernel reshape feeding the MXU matmul
    # is layout-free.  Padded rows never reach the valid output window
    # (output rows < hout only depend on input rows < h).
    h_pad = _round_up(h, 8)

    # Planes per grid step: budget the lane-padded f32 footprint of the ~16
    # plane-sized arrays live per step (double-buffered inputs + f32
    # intermediates + spill slack) against ~8 MiB, staying under the smallest
    # (v5e, 16 MiB) default scoped-VMEM budget while amortizing the ~0.35 us
    # per-step overhead.
    padded_plane_bytes = h_pad * _round_up(w, 128) * 4
    tile_p = max(1, min(p, (8 * 1024 * 1024) // (16 * padded_plane_bytes)))
    grid_p = (p + tile_p - 1) // tile_p
    p_pad = grid_p * tile_p
    mask_needed = p_pad != p

    if p_pad != p or h_pad != h:
        pad = ((0, p_pad - p), (0, h_pad - h), (0, 0))
        x1 = jnp.pad(x1, pad)
        x2 = jnp.pad(x2, pad)

    kernel = _make_ssim_kernel(gauss, h_pad, hout, wout, tile_p, p, mask_needed)

    partials = pl.pallas_call(
        kernel,
        out_shape=jax.ShapeDtypeStruct((grid_p, 1), jnp.float32),
        grid_spec=pltpu.PrefetchScalarGridSpec(
            num_scalar_prefetch=1,  # consts (C1, C2) land in SMEM
            grid=(grid_p,),
            in_specs=[
                pl.BlockSpec((w, wout), lambda i, cs: (0, 0)),            # window
                pl.BlockSpec((tile_p, h_pad, w), lambda i, cs: (i, 0, 0)),
                pl.BlockSpec((tile_p, h_pad, w), lambda i, cs: (i, 0, 0)),
            ],
            out_specs=pl.BlockSpec(
                (1, 1), lambda i, cs: (i, 0), memory_space=pltpu.SMEM
            ),
        ),
        compiler_params=pltpu.CompilerParams(
            dimension_semantics=("parallel",)
        ),
    )(consts, wmat, x1, x2)

    if not size_average:
        # TODO(synk): size_average=False needs per-image partial sums; only the
        # module-default size_average=True path is implemented.
        raise NotImplementedError("size_average=False not implemented")

    total = jnp.sum(partials)
    return total / jnp.float32(p * hout * wout)


def _reference_ssim(img1, img2, window_size=11, size_average=True, val_range=None):
    """Pure-JAX reference matching torch ssim() (size_average=True path)."""
    n, c, h, w = img1.shape
    g = jnp.asarray(_gaussian_list(window_size, 1.5), dtype=jnp.float32)
    w2d = jnp.outer(g, g)
    window = jnp.broadcast_to(w2d, (c, 1, window_size, window_size))

    def conv(x):
        return jax.lax.conv_general_dilated(
            x.astype(jnp.float32), window, window_strides=(1, 1),
            padding="VALID", dimension_numbers=("NCHW", "OIHW", "NCHW"),
            feature_group_count=c)

    if val_range is None:
        max_val = jnp.where(jnp.max(img1) > 128, 255.0, 1.0)
        min_val = jnp.where(jnp.min(img1) < -0.5, -1.0, 0.0)
        lval = max_val - min_val
    else:
        lval = jnp.float32(val_range)

    mu1, mu2 = conv(img1), conv(img2)
    mu1_sq, mu2_sq, mu1_mu2 = mu1 * mu1, mu2 * mu2, mu1 * mu2
    sigma1_sq = conv(img1 * img1) - mu1_sq
    sigma2_sq = conv(img2 * img2) - mu2_sq
    sigma12 = conv(img1 * img2) - mu1_mu2

    c1 = (0.01 * lval) ** 2
    c2 = (0.03 * lval) ** 2
    v1 = 2.0 * sigma12 + c2
    v2 = sigma1_sq + sigma2_sq + c2
    ssim_map = (2.0 * mu1_mu2 + c1) * v1 / ((mu1_sq + mu2_sq + c1) * v2)
    if size_average:
        return ssim_map.mean()
    return ssim_map.mean(axis=(1, 2, 3))


if __name__ == "__main__":
    key = jax.random.PRNGKey(0)
    k1, k2 = jax.random.split(key)

    # NCHW: batch=2, channels=4, spatial=16x16 (window 11 -> 6x6 valid output)
    shape = (2, 4, 16, 16)
    img1 = jax.random.uniform(k1, shape, jnp.float32)
    img2 = jax.random.uniform(k2, shape, jnp.float32)

    out = ssim_pallas(img1, img2, window_size=11, size_average=True)
    out = jax.block_until_ready(out)
    ref = _reference_ssim(img1, img2, window_size=11, size_average=True)
    ref = jax.block_until_ready(ref)
    assert jnp.allclose(out, ref, rtol=1e-4, atol=1e-4), (out, ref)

    # Sanity: SSIM of an image with itself is ~1.
    out_same = ssim_pallas(img1, img1, window_size=11, size_average=True)
    out_same = jax.block_until_ready(out_same)
    assert abs(float(out_same) - 1.0) < 1e-3, out_same

    print("KERNEL_OK")
</pallas_src>

<mosaic_0001>
module attributes {stable_mosaic.version = 11 : i64} {
  func.func @kernel(%arg0: i32, %arg1: memref<2xf32, #tpu.memory_space<smem>>, %arg2: memref<16x6xf32, #tpu.memory_space<vmem>>, %arg3: memref<8x16x16xf32, #tpu.memory_space<vmem>>, %arg4: memref<8x16x16xf32, #tpu.memory_space<vmem>>, %arg5: memref<1x1xf32, #tpu.memory_space<smem>>) attributes {dimension_semantics = [#tpu.dimension_semantics<parallel>], iteration_bounds = array<i64: 1>, scalar_prefetch = 1 : i64, scratch_operands = 0 : i64, tpu.core_type = #tpu.core_type<tc>, window_params = [{pipeline_mode = #tpu.pipeline_mode<synchronous>, transform_indices = @transform_0, window_bounds = array<i64: 16, 6>}, {transform_indices = @transform_1, window_bounds = array<i64: 8, 16, 16>}, {transform_indices = @transform_2, window_bounds = array<i64: 8, 16, 16>}, {transform_indices = @transform_3, window_bounds = array<i64: 1, 1>}]} {
    %c0 = arith.constant 0 : index
    %0 = memref.load %arg1[%c0] : memref<2xf32, #tpu.memory_space<smem>>
    %c1 = arith.constant 1 : index
    %1 = memref.load %arg1[%c1] : memref<2xf32, #tpu.memory_space<smem>>
    %c0_0 = arith.constant 0 : index
    %c0_1 = arith.constant 0 : index
    %2 = vector.load %arg2[%c0_0, %c0_1] : memref<16x6xf32, #tpu.memory_space<vmem>>, vector<16x6xf32>
    %c0_2 = arith.constant 0 : index
    %c0_3 = arith.constant 0 : index
    %c0_4 = arith.constant 0 : index
    %3 = vector.load %arg3[%c0_2, %c0_3, %c0_4] : memref<8x16x16xf32, #tpu.memory_space<vmem>>, vector<8x16x16xf32>
    %c0_5 = arith.constant 0 : index
    %c0_6 = arith.constant 0 : index
    %c0_7 = arith.constant 0 : index
    %4 = vector.load %arg4[%c0_5, %c0_6, %c0_7] : memref<8x16x16xf32, #tpu.memory_space<vmem>>, vector<8x16x16xf32>
    %5 = vector.shape_cast %3 : vector<8x16x16xf32> to vector<128x16xf32>
    %cst = arith.constant dense<0.000000e+00> : vector<128x6xf32>
    %6 = tpu.matmul %5, %2, %cst {dimension_numbers = #tpu.dot_dimension_numbers<[1], [0], [0], [1], [0, 0, 1, 1], [], []>, precision = #tpu.contract_precision<fp32>} : vector<128x16xf32>, vector<16x6xf32>, vector<128x6xf32> -> vector<128x6xf32>
    %7 = vector.shape_cast %6 : vector<128x6xf32> to vector<8x16x6xf32>
    %8 = vector.shape_cast %4 : vector<8x16x16xf32> to vector<128x16xf32>
    %cst_8 = arith.constant dense<0.000000e+00> : vector<128x6xf32>
    %9 = tpu.matmul %8, %2, %cst_8 {dimension_numbers = #tpu.dot_dimension_numbers<[1], [0], [0], [1], [0, 0, 1, 1], [], []>, precision = #tpu.contract_precision<fp32>} : vector<128x16xf32>, vector<16x6xf32>, vector<128x6xf32> -> vector<128x6xf32>
    %10 = vector.shape_cast %9 : vector<128x6xf32> to vector<8x16x6xf32>
    %11 = arith.mulf %3, %3 : vector<8x16x16xf32>
    %12 = vector.shape_cast %11 : vector<8x16x16xf32> to vector<128x16xf32>
    %cst_9 = arith.constant dense<0.000000e+00> : vector<128x6xf32>
    %13 = tpu.matmul %12, %2, %cst_9 {dimension_numbers = #tpu.dot_dimension_numbers<[1], [0], [0], [1], [0, 0, 1, 1], [], []>, precision = #tpu.contract_precision<fp32>} : vector<128x16xf32>, vector<16x6xf32>, vector<128x6xf32> -> vector<128x6xf32>
    %14 = vector.shape_cast %13 : vector<128x6xf32> to vector<8x16x6xf32>
    %15 = arith.mulf %4, %4 : vector<8x16x16xf32>
    %16 = vector.shape_cast %15 : vector<8x16x16xf32> to vector<128x16xf32>
    %cst_10 = arith.constant dense<0.000000e+00> : vector<128x6xf32>
    %17 = tpu.matmul %16, %2, %cst_10 {dimension_numbers = #tpu.dot_dimension_numbers<[1], [0], [0], [1], [0, 0, 1, 1], [], []>, precision = #tpu.contract_precision<fp32>} : vector<128x16xf32>, vector<16x6xf32>, vector<128x6xf32> -> vector<128x6xf32>
    %18 = vector.shape_cast %17 : vector<128x6xf32> to vector<8x16x6xf32>
    %19 = arith.mulf %3, %4 : vector<8x16x16xf32>
    %20 = vector.shape_cast %19 : vector<8x16x16xf32> to vector<128x16xf32>
    %cst_11 = arith.constant dense<0.000000e+00> : vector<128x6xf32>
    %21 = tpu.matmul %20, %2, %cst_11 {dimension_numbers = #tpu.dot_dimension_numbers<[1], [0], [0], [1], [0, 0, 1, 1], [], []>, precision = #tpu.contract_precision<fp32>} : vector<128x16xf32>, vector<16x6xf32>, vector<128x6xf32> -> vector<128x6xf32>
    %22 = vector.shape_cast %21 : vector<128x6xf32> to vector<8x16x6xf32>
    %23 = vector.extract_strided_slice %7 {offsets = [0, 0, 0], sizes = [8, 6, 6], strides = [1, 1, 1]} : vector<8x16x6xf32> to vector<8x6x6xf32>
    %24 = vector.extract_strided_slice %7 {offsets = [0, 10, 0], sizes = [8, 6, 6], strides = [1, 1, 1]} : vector<8x16x6xf32> to vector<8x6x6xf32>
    %25 = arith.addf %23, %24 : vector<8x6x6xf32>
    %cst_12 = arith.constant 0.00102838012 : f32
    %26 = vector.broadcast %cst_12 : f32 to vector<8x6x6xf32>
    %27 = arith.mulf %26, %25 : vector<8x6x6xf32>
    %28 = vector.extract_strided_slice %7 {offsets = [0, 1, 0], sizes = [8, 6, 6], strides = [1, 1, 1]} : vector<8x16x6xf32> to vector<8x6x6xf32>
    %29 = vector.extract_strided_slice %7 {offsets = [0, 9, 0], sizes = [8, 6, 6], strides = [1, 1, 1]} : vector<8x16x6xf32> to vector<8x6x6xf32>
    %30 = arith.addf %28, %29 : vector<8x6x6xf32>
    %cst_13 = arith.constant 0.00759875821 : f32
    %31 = vector.broadcast %cst_13 : f32 to vector<8x6x6xf32>
    %32 = arith.mulf %31, %30 : vector<8x6x6xf32>
    %33 = arith.addf %27, %32 : vector<8x6x6xf32>
    %34 = vector.extract_strided_slice %7 {offsets = [0, 2, 0], sizes = [8, 6, 6], strides = [1, 1, 1]} : vector<8x16x6xf32> to vector<8x6x6xf32>
    %35 = vector.extract_strided_slice %7 {offsets = [0, 8, 0], sizes = [8, 6, 6], strides = [1, 1, 1]} : vector<8x16x6xf32> to vector<8x6x6xf32>
    %36 = arith.addf %34, %35 : vector<8x6x6xf32>
    %cst_14 = arith.constant 0.0360007733 : f32
    %37 = vector.broadcast %cst_14 : f32 to vector<8x6x6xf32>
    %38 = arith.mulf %37, %36 : vector<8x6x6xf32>
    %39 = arith.addf %33, %38 : vector<8x6x6xf32>
    %40 = vector.extract_strided_slice %7 {offsets = [0, 3, 0], sizes = [8, 6, 6], strides = [1, 1, 1]} : vector<8x16x6xf32> to vector<8x6x6xf32>
    %41 = vector.extract_strided_slice %7 {offsets = [0, 7, 0], sizes = [8, 6, 6], strides = [1, 1, 1]} : vector<8x16x6xf32> to vector<8x6x6xf32>
    %42 = arith.addf %40, %41 : vector<8x6x6xf32>
    %cst_15 = arith.constant 0.109360687 : f32
    %43 = vector.broadcast %cst_15 : f32 to vector<8x6x6xf32>
    %44 = arith.mulf %43, %42 : vector<8x6x6xf32>
    %45 = arith.addf %39, %44 : vector<8x6x6xf32>
    %46 = vector.extract_strided_slice %7 {offsets = [0, 4, 0], sizes = [8, 6, 6], strides = [1, 1, 1]} : vector<8x16x6xf32> to vector<8x6x6xf32>
    %47 = vector.extract_strided_slice %7 {offsets = [0, 6, 0], sizes = [8, 6, 6], strides = [1, 1, 1]} : vector<8x16x6xf32> to vector<8x6x6xf32>
    %48 = arith.addf %46, %47 : vector<8x6x6xf32>
    %cst_16 = arith.constant 0.213005543 : f32
    %49 = vector.broadcast %cst_16 : f32 to vector<8x6x6xf32>
    %50 = arith.mulf %49, %48 : vector<8x6x6xf32>
    %51 = arith.addf %45, %50 : vector<8x6x6xf32>
    %52 = vector.extract_strided_slice %7 {offsets = [0, 5, 0], sizes = [8, 6, 6], strides = [1, 1, 1]} : vector<8x16x6xf32> to vector<8x6x6xf32>
    %cst_17 = arith.constant 0.266011715 : f32
    %53 = vector.broadcast %cst_17 : f32 to vector<8x6x6xf32>
    %54 = arith.mulf %53, %52 : vector<8x6x6xf32>
    %55 = arith.addf %51, %54 : vector<8x6x6xf32>
    %56 = vector.extract_strided_slice %10 {offsets = [0, 0, 0], sizes = [8, 6, 6], strides = [1, 1, 1]} : vector<8x16x6xf32> to vector<8x6x6xf32>
    %57 = vector.extract_strided_slice %10 {offsets = [0, 10, 0], sizes = [8, 6, 6], strides = [1, 1, 1]} : vector<8x16x6xf32> to vector<8x6x6xf32>
    %58 = arith.addf %56, %57 : vector<8x6x6xf32>
    %cst_18 = arith.constant 0.00102838012 : f32
    %59 = vector.broadcast %cst_18 : f32 to vector<8x6x6xf32>
    %60 = arith.mulf %59, %58 : vector<8x6x6xf32>
    %61 = vector.extract_strided_slice %10 {offsets = [0, 1, 0], sizes = [8, 6, 6], strides = [1, 1, 1]} : vector<8x16x6xf32> to vector<8x6x6xf32>
    %62 = vector.extract_strided_slice %10 {offsets = [0, 9, 0], sizes = [8, 6, 6], strides = [1, 1, 1]} : vector<8x16x6xf32> to vector<8x6x6xf32>
    %63 = arith.addf %61, %62 : vector<8x6x6xf32>
    %cst_19 = arith.constant 0.00759875821 : f32
    %64 = vector.broadcast %cst_19 : f32 to vector<8x6x6xf32>
    %65 = arith.mulf %64, %63 : vector<8x6x6xf32>
    %66 = arith.addf %60, %65 : vector<8x6x6xf32>
    %67 = vector.extract_strided_slice %10 {offsets = [0, 2, 0], sizes = [8, 6, 6], strides = [1, 1, 1]} : vector<8x16x6xf32> to vector<8x6x6xf32>
    %68 = vector.extract_strided_slice %10 {offsets = [0, 8, 0], sizes = [8, 6, 6], strides = [1, 1, 1]} : vector<8x16x6xf32> to vector<8x6x6xf32>
    %69 = arith.addf %67, %68 : vector<8x6x6xf32>
    %cst_20 = arith.constant 0.0360007733 : f32
    %70 = vector.broadcast %cst_20 : f32 to vector<8x6x6xf32>
    %71 = arith.mulf %70, %69 : vector<8x6x6xf32>
    %72 = arith.addf %66, %71 : vector<8x6x6xf32>
    %73 = vector.extract_strided_slice %10 {offsets = [0, 3, 0], sizes = [8, 6, 6], strides = [1, 1, 1]} : vector<8x16x6xf32> to vector<8x6x6xf32>
    %74 = vector.extract_strided_slice %10 {offsets = [0, 7, 0], sizes = [8, 6, 6], strides = [1, 1, 1]} : vector<8x16x6xf32> to vector<8x6x6xf32>
    %75 = arith.addf %73, %74 : vector<8x6x6xf32>
    %cst_21 = arith.constant 0.109360687 : f32
    %76 = vector.broadcast %cst_21 : f32 to vector<8x6x6xf32>
    %77 = arith.mulf %76, %75 : vector<8x6x6xf32>
    %78 = arith.addf %72, %77 : vector<8x6x6xf32>
    %79 = vector.extract_strided_slice %10 {offsets = [0, 4, 0], sizes = [8, 6, 6], strides = [1, 1, 1]} : vector<8x16x6xf32> to vector<8x6x6xf32>
    %80 = vector.extract_strided_slice %10 {offsets = [0, 6, 0], sizes = [8, 6, 6], strides = [1, 1, 1]} : vector<8x16x6xf32> to vector<8x6x6xf32>
    %81 = arith.addf %79, %80 : vector<8x6x6xf32>
    %cst_22 = arith.constant 0.213005543 : f32
    %82 = vector.broadcast %cst_22 : f32 to vector<8x6x6xf32>
    %83 = arith.mulf %82, %81 : vector<8x6x6xf32>
    %84 = arith.addf %78, %83 : vector<8x6x6xf32>
    %85 = vector.extract_strided_slice %10 {offsets = [0, 5, 0], sizes = [8, 6, 6], strides = [1, 1, 1]} : vector<8x16x6xf32> to vector<8x6x6xf32>
    %cst_23 = arith.constant 0.266011715 : f32
    %86 = vector.broadcast %cst_23 : f32 to vector<8x6x6xf32>
    %87 = arith.mulf %86, %85 : vector<8x6x6xf32>
    %88 = arith.addf %84, %87 : vector<8x6x6xf32>
    %89 = arith.mulf %55, %55 : vector<8x6x6xf32>
    %90 = arith.mulf %88, %88 : vector<8x6x6xf32>
    %91 = arith.mulf %55, %88 : vector<8x6x6xf32>
    %92 = vector.extract_strided_slice %14 {offsets = [0, 0, 0], sizes = [8, 6, 6], strides = [1, 1, 1]} : vector<8x16x6xf32> to vector<8x6x6xf32>
    %93 = vector.extract_strided_slice %14 {offsets = [0, 10, 0], sizes = [8, 6, 6], strides = [1, 1, 1]} : vector<8x16x6xf32> to vector<8x6x6xf32>
    %94 = arith.addf %92, %93 : vector<8x6x6xf32>
    %cst_24 = arith.constant 0.00102838012 : f32
    %95 = vector.broadcast %cst_24 : f32 to vector<8x6x6xf32>
    %96 = arith.mulf %95, %94 : vector<8x6x6xf32>
    %97 = vector.extract_strided_slice %14 {offsets = [0, 1, 0], sizes = [8, 6, 6], strides = [1, 1, 1]} : vector<8x16x6xf32> to vector<8x6x6xf32>
    %98 = vector.extract_strided_slice %14 {offsets = [0, 9, 0], sizes = [8, 6, 6], strides = [1, 1, 1]} : vector<8x16x6xf32> to vector<8x6x6xf32>
    %99 = arith.addf %97, %98 : vector<8x6x6xf32>
    %cst_25 = arith.constant 0.00759875821 : f32
    %100 = vector.broadcast %cst_25 : f32 to vector<8x6x6xf32>
    %101 = arith.mulf %100, %99 : vector<8x6x6xf32>
    %102 = arith.addf %96, %101 : vector<8x6x6xf32>
    %103 = vector.extract_strided_slice %14 {offsets = [0, 2, 0], sizes = [8, 6, 6], strides = [1, 1, 1]} : vector<8x16x6xf32> to vector<8x6x6xf32>
    %104 = vector.extract_strided_slice %14 {offsets = [0, 8, 0], sizes = [8, 6, 6], strides = [1, 1, 1]} : vector<8x16x6xf32> to vector<8x6x6xf32>
    %105 = arith.addf %103, %104 : vector<8x6x6xf32>
    %cst_26 = arith.constant 0.0360007733 : f32
    %106 = vector.broadcast %cst_26 : f32 to vector<8x6x6xf32>
    %107 = arith.mulf %106, %105 : vector<8x6x6xf32>
    %108 = arith.addf %102, %107 : vector<8x6x6xf32>
    %109 = vector.extract_strided_slice %14 {offsets = [0, 3, 0], sizes = [8, 6, 6], strides = [1, 1, 1]} : vector<8x16x6xf32> to vector<8x6x6xf32>
    %110 = vector.extract_strided_slice %14 {offsets = [0, 7, 0], sizes = [8, 6, 6], strides = [1, 1, 1]} : vector<8x16x6xf32> to vector<8x6x6xf32>
    %111 = arith.addf %109, %110 : vector<8x6x6xf32>
    %cst_27 = arith.constant 0.109360687 : f32
    %112 = vector.broadcast %cst_27 : f32 to vector<8x6x6xf32>
    %113 = arith.mulf %112, %111 : vector<8x6x6xf32>
    %114 = arith.addf %108, %113 : vector<8x6x6xf32>
    %115 = vector.extract_strided_slice %14 {offsets = [0, 4, 0], sizes = [8, 6, 6], strides = [1, 1, 1]} : vector<8x16x6xf32> to vector<8x6x6xf32>
    %116 = vector.extract_strided_slice %14 {offsets = [0, 6, 0], sizes = [8, 6, 6], strides = [1, 1, 1]} : vector<8x16x6xf32> to vector<8x6x6xf32>
    %117 = arith.addf %115, %116 : vector<8x6x6xf32>
    %cst_28 = arith.constant 0.213005543 : f32
    %118 = vector.broadcast %cst_28 : f32 to vector<8x6x6xf32>
    %119 = arith.mulf %118, %117 : vector<8x6x6xf32>
    %120 = arith.addf %114, %119 : vector<8x6x6xf32>
    %121 = vector.extract_strided_slice %14 {offsets = [0, 5, 0], sizes = [8, 6, 6], strides = [1, 1, 1]} : vector<8x16x6xf32> to vector<8x6x6xf32>
    %cst_29 = arith.constant 0.266011715 : f32
    %122 = vector.broadcast %cst_29 : f32 to vector<8x6x6xf32>
    %123 = arith.mulf %122, %121 : vector<8x6x6xf32>
    %124 = arith.addf %120, %123 : vector<8x6x6xf32>
    %125 = arith.subf %124, %89 : vector<8x6x6xf32>
    %126 = vector.extract_strided_slice %18 {offsets = [0, 0, 0], sizes = [8, 6, 6], strides = [1, 1, 1]} : vector<8x16x6xf32> to vector<8x6x6xf32>
    %127 = vector.extract_strided_slice %18 {offsets = [0, 10, 0], sizes = [8, 6, 6], strides = [1, 1, 1]} : vector<8x16x6xf32> to vector<8x6x6xf32>
    %128 = arith.addf %126, %127 : vector<8x6x6xf32>
    %cst_30 = arith.constant 0.00102838012 : f32
    %129 = vector.broadcast %cst_30 : f32 to vector<8x6x6xf32>
    %130 = arith.mulf %129, %128 : vector<8x6x6xf32>
    %131 = vector.extract_strided_slice %18 {offsets = [0, 1, 0], sizes = [8, 6, 6], strides = [1, 1, 1]} : vector<8x16x6xf32> to vector<8x6x6xf32>
    %132 = vector.extract_strided_slice %18 {offsets = [0, 9, 0], sizes = [8, 6, 6], strides = [1, 1, 1]} : vector<8x16x6xf32> to vector<8x6x6xf32>
    %133 = arith.addf %131, %132 : vector<8x6x6xf32>
    %cst_31 = arith.constant 0.00759875821 : f32
    %134 = vector.broadcast %cst_31 : f32 to vector<8x6x6xf32>
    %135 = arith.mulf %134, %133 : vector<8x6x6xf32>
    %136 = arith.addf %130, %135 : vector<8x6x6xf32>
    %137 = vector.extract_strided_slice %18 {offsets = [0, 2, 0], sizes = [8, 6, 6], strides = [1, 1, 1]} : vector<8x16x6xf32> to vector<8x6x6xf32>
    %138 = vector.extract_strided_slice %18 {offsets = [0, 8, 0], sizes = [8, 6, 6], strides = [1, 1, 1]} : vector<8x16x6xf32> to vector<8x6x6xf32>
    %139 = arith.addf %137, %138 : vector<8x6x6xf32>
    %cst_32 = arith.constant 0.0360007733 : f32
    %140 = vector.broadcast %cst_32 : f32 to vector<8x6x6xf32>
    %141 = arith.mulf %140, %139 : vector<8x6x6xf32>
    %142 = arith.addf %136, %141 : vector<8x6x6xf32>
    %143 = vector.extract_strided_slice %18 {offsets = [0, 3, 0], sizes = [8, 6, 6], strides = [1, 1, 1]} : vector<8x16x6xf32> to vector<8x6x6xf32>
    %144 = vector.extract_strided_slice %18 {offsets = [0, 7, 0], sizes = [8, 6, 6], strides = [1, 1, 1]} : vector<8x16x6xf32> to vector<8x6x6xf32>
    %145 = arith.addf %143, %144 : vector<8x6x6xf32>
    %cst_33 = arith.constant 0.109360687 : f32
    %146 = vector.broadcast %cst_33 : f32 to vector<8x6x6xf32>
    %147 = arith.mulf %146, %145 : vector<8x6x6xf32>
    %148 = arith.addf %142, %147 : vector<8x6x6xf32>
    %149 = vector.extract_strided_slice %18 {offsets = [0, 4, 0], sizes = [8, 6, 6], strides = [1, 1, 1]} : vector<8x16x6xf32> to vector<8x6x6xf32>
    %150 = vector.extract_strided_slice %18 {offsets = [0, 6, 0], sizes = [8, 6, 6], strides = [1, 1, 1]} : vector<8x16x6xf32> to vector<8x6x6xf32>
    %151 = arith.addf %149, %150 : vector<8x6x6xf32>
    %cst_34 = arith.constant 0.213005543 : f32
    %152 = vector.broadcast %cst_34 : f32 to vector<8x6x6xf32>
    %153 = arith.mulf %152, %151 : vector<8x6x6xf32>
    %154 = arith.addf %148, %153 : vector<8x6x6xf32>
    %155 = vector.extract_strided_slice %18 {offsets = [0, 5, 0], sizes = [8, 6, 6], strides = [1, 1, 1]} : vector<8x16x6xf32> to vector<8x6x6xf32>
    %cst_35 = arith.constant 0.266011715 : f32
    %156 = vector.broadcast %cst_35 : f32 to vector<8x6x6xf32>
    %157 = arith.mulf %156, %155 : vector<8x6x6xf32>
    %158 = arith.addf %154, %157 : vector<8x6x6xf32>
    %159 = arith.subf %158, %90 : vector<8x6x6xf32>
    %160 = vector.extract_strided_slice %22 {offsets = [0, 0, 0], sizes = [8, 6, 6], strides = [1, 1, 1]} : vector<8x16x6xf32> to vector<8x6x6xf32>
    %161 = vector.extract_strided_slice %22 {offsets = [0, 10, 0], sizes = [8, 6, 6], strides = [1, 1, 1]} : vector<8x16x6xf32> to vector<8x6x6xf32>
    %162 = arith.addf %160, %161 : vector<8x6x6xf32>
    %cst_36 = arith.constant 0.00102838012 : f32
    %163 = vector.broadcast %cst_36 : f32 to vector<8x6x6xf32>
    %164 = arith.mulf %163, %162 : vector<8x6x6xf32>
    %165 = vector.extract_strided_slice %22 {offsets = [0, 1, 0], sizes = [8, 6, 6], strides = [1, 1, 1]} : vector<8x16x6xf32> to vector<8x6x6xf32>
    %166 = vector.extract_strided_slice %22 {offsets = [0, 9, 0], sizes = [8, 6, 6], strides = [1, 1, 1]} : vector<8x16x6xf32> to vector<8x6x6xf32>
    %167 = arith.addf %165, %166 : vector<8x6x6xf32>
    %cst_37 = arith.constant 0.00759875821 : f32
    %168 = vector.broadcast %cst_37 : f32 to vector<8x6x6xf32>
    %169 = arith.mulf %168, %167 : vector<8x6x6xf32>
    %170 = arith.addf %164, %169 : vector<8x6x6xf32>
    %171 = vector.extract_strided_slice %22 {offsets = [0, 2, 0], sizes = [8, 6, 6], strides = [1, 1, 1]} : vector<8x16x6xf32> to vector<8x6x6xf32>
    %172 = vector.extract_strided_slice %22 {offsets = [0, 8, 0], sizes = [8, 6, 6], strides = [1, 1, 1]} : vector<8x16x6xf32> to vector<8x6x6xf32>
    %173 = arith.addf %171, %172 : vector<8x6x6xf32>
    %cst_38 = arith.constant 0.0360007733 : f32
    %174 = vector.broadcast %cst_38 : f32 to vector<8x6x6xf32>
    %175 = arith.mulf %174, %173 : vector<8x6x6xf32>
    %176 = arith.addf %170, %175 : vector<8x6x6xf32>
    %177 = vector.extract_strided_slice %22 {offsets = [0, 3, 0], sizes = [8, 6, 6], strides = [1, 1, 1]} : vector<8x16x6xf32> to vector<8x6x6xf32>
    %178 = vector.extract_strided_slice %22 {offsets = [0, 7, 0], sizes = [8, 6, 6], strides = [1, 1, 1]} : vector<8x16x6xf32> to vector<8x6x6xf32>
    %179 = arith.addf %177, %178 : vector<8x6x6xf32>
    %cst_39 = arith.constant 0.109360687 : f32
    %180 = vector.broadcast %cst_39 : f32 to vector<8x6x6xf32>
    %181 = arith.mulf %180, %179 : vector<8x6x6xf32>
    %182 = arith.addf %176, %181 : vector<8x6x6xf32>
    %183 = vector.extract_strided_slice %22 {offsets = [0, 4, 0], sizes = [8, 6, 6], strides = [1, 1, 1]} : vector<8x16x6xf32> to vector<8x6x6xf32>
    %184 = vector.extract_strided_slice %22 {offsets = [0, 6, 0], sizes = [8, 6, 6], strides = [1, 1, 1]} : vector<8x16x6xf32> to vector<8x6x6xf32>
    %185 = arith.addf %183, %184 : vector<8x6x6xf32>
    %cst_40 = arith.constant 0.213005543 : f32
    %186 = vector.broadcast %cst_40 : f32 to vector<8x6x6xf32>
    %187 = arith.mulf %186, %185 : vector<8x6x6xf32>
    %188 = arith.addf %182, %187 : vector<8x6x6xf32>
    %189 = vector.extract_strided_slice %22 {offsets = [0, 5, 0], sizes = [8, 6, 6], strides = [1, 1, 1]} : vector<8x16x6xf32> to vector<8x6x6xf32>
    %cst_41 = arith.constant 0.266011715 : f32
    %190 = vector.broadcast %cst_41 : f32 to vector<8x6x6xf32>
    %191 = arith.mulf %190, %189 : vector<8x6x6xf32>
    %192 = arith.addf %188, %191 : vector<8x6x6xf32>
    %193 = arith.subf %192, %91 : vector<8x6x6xf32>
    %cst_42 = arith.constant 2.000000e+00 : f32
    %194 = vector.broadcast %cst_42 : f32 to vector<8x6x6xf32>
    %195 = arith.mulf %194, %193 : vector<8x6x6xf32>
    %196 = vector.broadcast %1 : f32 to vector<8x6x6xf32>
    %197 = arith.addf %195, %196 : vector<8x6x6xf32>
    %198 = arith.addf %125, %159 : vector<8x6x6xf32>
    %199 = vector.broadcast %1 : f32 to vector<8x6x6xf32>
    %200 = arith.addf %198, %199 : vector<8x6x6xf32>
    %cst_43 = arith.constant 2.000000e+00 : f32
    %201 = vector.broadcast %cst_43 : f32 to vector<8x6x6xf32>
    %202 = arith.mulf %201, %91 : vector<8x6x6xf32>
    %203 = vector.broadcast %0 : f32 to vector<8x6x6xf32>
    %204 = arith.addf %202, %203 : vector<8x6x6xf32>
    %205 = arith.mulf %204, %197 : vector<8x6x6xf32>
    %206 = arith.addf %89, %90 : vector<8x6x6xf32>
    %207 = vector.broadcast %0 : f32 to vector<8x6x6xf32>
    %208 = arith.addf %206, %207 : vector<8x6x6xf32>
    %209 = arith.mulf %208, %200 : vector<8x6x6xf32>
    %210 = arith.divf %205, %209 : vector<8x6x6xf32>
    %211 = vector.shape_cast %210 : vector<8x6x6xf32> to vector<1x8x6x6xf32>
    %cst_44 = arith.constant dense<0.000000e+00> : vector<1xf32>
    %212 = vector.multi_reduction <add>, %211, %cst_44 [1, 2, 3] : vector<1x8x6x6xf32> to vector<1xf32>
    %213 = vector.shape_cast %212 : vector<1xf32> to vector<1x1x1x1xf32>
    %214 = vector.extract %213[0, 0, 0, 0] : f32 from vector<1x1x1x1xf32>
    %c0_45 = arith.constant 0 : index
    %c0_46 = arith.constant 0 : index
    %215 = memref.load %arg5[%c0_45, %c0_46] : memref<1x1xf32, #tpu.memory_space<smem>>
    memref.store %214, %arg5[%c0_45, %c0_46] : memref<1x1xf32, #tpu.memory_space<smem>>
    return
  }
  func.func @transform_0(%arg0: i32, %arg1: memref<2xf32, #tpu.memory_space<smem>>) -> (i32, i32) {
    %c0_i32 = arith.constant 0 : i32
    %c0_i32_0 = arith.constant 0 : i32
    %c0_i32_1 = arith.constant 0 : i32
    return %c0_i32, %c0_i32_0 : i32, i32
  }
  func.func @transform_1(%arg0: i32, %arg1: memref<2xf32, #tpu.memory_space<smem>>) -> (i32, i32, i32) {
    %c0_i32 = arith.constant 0 : i32
    %c0_i32_0 = arith.constant 0 : i32
    %c0_i32_1 = arith.constant 0 : i32
    return %arg0, %c0_i32, %c0_i32_0 : i32, i32, i32
  }
  func.func @transform_2(%arg0: i32, %arg1: memref<2xf32, #tpu.memory_space<smem>>) -> (i32, i32, i32) {
    %c0_i32 = arith.constant 0 : i32
    %c0_i32_0 = arith.constant 0 : i32
    %c0_i32_1 = arith.constant 0 : i32
    return %arg0, %c0_i32, %c0_i32_0 : i32, i32, i32
  }
  func.func @transform_3(%arg0: i32, %arg1: memref<2xf32, #tpu.memory_space<smem>>) -> (i32, i32) {
    %c0_i32 = arith.constant 0 : i32
    %c0_i32_0 = arith.constant 0 : i32
    return %arg0, %c0_i32 : i32, i32
  }
}

</mosaic_0001>

<llo_original>
// kernel: tpu_custom_call.1
$region0: #{tpu_custom_call.1}
  #allocation0 [shape = 'u32[]', space=smem, size = 0x4, offset = 0x4, fixed_abs, tag = 'smem constant byte address 0x4 - core index']
  #allocation1 [shape = 'u32[144,128]{1,0:T(1,128)}', space=vmem, size = 0x12000, scoped, tag = 'internal scratch']
  #allocation2 [shape = 's32[1]{0}', space=sflag, size = 0x4, scoped, tag = 'scoped memory for tpu_custom_call.1']
  #allocation3 [shape = 'u8[512]{0}', space=smem, size = 0x200, scoped, tag = 'prefetched SMEM operand 0']
  %s0 = inlined_call_operand.vmem [shape: f32[2], index: 0, kind: input, shape index: {}]
  %s1 = inlined_call_operand.vmem [shape: f32[16,6], index: 1, kind: input, shape index: {}]
  %s2 = inlined_call_operand.hbm [shape: f32[8,16,16], index: 2, kind: input, shape index: {}]
  %s3 = inlined_call_operand.hbm [shape: f32[8,16,16], index: 3, kind: input, shape index: {}]
  %s4 = inlined_call_operand.hbm [shape: f32[1,1], index: 4, kind: output, shape index: {}]
  %s5 = sld [smem:[#allocation0]]
  $region30: #{tpu_custom_call.1} parent=0
    _
  %s7 = ssub.s32 1, %s5
  %s8 = scalar_select 0, %s7, %s5
  %s9 = sshll.u32 %s0, 4
  %s10 = int_to_ptr.vmem [resolvable:$true] %s9
  %12 = dma.vmem_to_smem %s10, 16, [#allocation3], [#allocation2]
  %13 = dma.done [#allocation2], 16
  %14 = sfence
  $region1: #{tpu_custom_call.1} parent=0
    #allocation4 [shape = 'u8[65536]{0}', space=vmem, size = 0x10000, scoped, tag = 'input window, operand 2, single buffered']
    #allocation5 [shape = 's32[1]{0}', space=sflag, size = 0x4, scoped, tag = 'scoped memory for tpu_custom_call.1']
    #allocation6 [shape = 's32[1]{0}', space=sflag, size = 0x4, scoped, tag = 'scoped memory for tpu_custom_call.1']
    #allocation7 [shape = 'u8[65536]{0}', space=vmem, size = 0x10000, scoped, tag = 'input window, operand 3, single buffered']
    #allocation8 [shape = 's32[1]{0}', space=sflag, size = 0x4, scoped, tag = 'scoped memory for tpu_custom_call.1']
    #allocation9 [shape = 'u8[512]{0}', space=smem, size = 0x200, scoped, tag = 'output window, operand 0, single buffered']
    %15 = vsyncpa [#allocation5], 0
    %16 = vsyncpa [#allocation8], 0
    %17 = vsyncpa [#allocation6], 0
    // Predicated region
    $region2: #{tpu_custom_call.1} parent=1 // pred_check
      _
    $region3: #{tpu_custom_call.1} parent=1 // pred_check_branch
      %19 = sbr.rel (0) target = $region5
    $region4: #{tpu_custom_call.1} parent=1 // pred_region
      _
    $region5: #{tpu_custom_call.1} parent=1 // pred_fallthru
      _
    // Predicated region
    $region6: #{tpu_custom_call.1} parent=1 // pred_check
      _
    $region7: #{tpu_custom_call.1} parent=1 // pred_check_branch
      %21 = sbr.rel (0) target = $region9
    $region8: #{tpu_custom_call.1} parent=1 // pred_region
      %s23 = ssub.s32 2048, 2048
      %24 = vsyncadd [#allocation5], %s23
      %s25 = sshll.u32 [#allocation4], 4
      %s26 = int_to_ptr.vmem [resolvable:$true] %s25
      %31 = dma.hbm_to_vmem [thread:$0]  %s2, 2048, %s26, [#allocation5], 128, 128, 8
    $region9: #{tpu_custom_call.1} parent=1 // pred_fallthru
      _
    // Predicated region
    $region10: #{tpu_custom_call.1} parent=1 // pred_check
      _
    $region11: #{tpu_custom_call.1} parent=1 // pred_check_branch
      %33 = sbr.rel (0) target = $region13
    $region12: #{tpu_custom_call.1} parent=1 // pred_region
      %s35 = ssub.s32 2048, 2048
      %36 = vsyncadd [#allocation8], %s35
      %s37 = sshll.u32 [#allocation7], 4
      %s38 = int_to_ptr.vmem [resolvable:$true] %s37
      %43 = dma.hbm_to_vmem [thread:$0]  %s3, 2048, %s38, [#allocation8], 128, 128, 8
    $region13: #{tpu_custom_call.1} parent=1 // pred_fallthru
      _
    // Predicated region
    $region14: #{tpu_custom_call.1} parent=1 // pred_check
      _
    $region15: #{tpu_custom_call.1} parent=1 // pred_check_branch
      %45 = sbr.rel (0) target = $region17
    $region16: #{tpu_custom_call.1} parent=1 // pred_region
      %46 = dma.done [#allocation5], 2048
    $region17: #{tpu_custom_call.1} parent=1 // pred_fallthru
      _
    // Predicated region
    $region18: #{tpu_custom_call.1} parent=1 // pred_check
      _
    $region19: #{tpu_custom_call.1} parent=1 // pred_check_branch
      %48 = sbr.rel (0) target = $region21
    $region20: #{tpu_custom_call.1} parent=1 // pred_region
      %49 = dma.done [#allocation8], 2048
    $region21: #{tpu_custom_call.1} parent=1 // pred_fallthru
      _
    %s50 = sld [smem:[#allocation3]]
    %s51 = sld [smem:[#allocation3 + $0x1]]
    %v52 = vld [vmem:[%s1] sm:$0xff]
    %v53 = vld [vmem:[%s1 + $0x8] sm:$0xff]
    %v54 = vld [vmem:[#allocation4] sm:$0xff]
    %v55 = vld [vmem:[#allocation4 + $0x8] sm:$0xff]
    %v56 = vld [vmem:[#allocation4 + $0x10] sm:$0xff]
    %v57 = vld [vmem:[#allocation4 + $0x18] sm:$0xff]
    %v58 = vld [vmem:[#allocation4 + $0x20] sm:$0xff]
    %v59 = vld [vmem:[#allocation4 + $0x28] sm:$0xff]
    %v60 = vld [vmem:[#allocation4 + $0x30] sm:$0xff]
    %v61 = vld [vmem:[#allocation4 + $0x38] sm:$0xff]
    %v62 = vld [vmem:[#allocation4 + $0x40] sm:$0xff]
    %v63 = vld [vmem:[#allocation4 + $0x48] sm:$0xff]
    %v64 = vld [vmem:[#allocation4 + $0x50] sm:$0xff]
    %v65 = vld [vmem:[#allocation4 + $0x58] sm:$0xff]
    %v66 = vld [vmem:[#allocation4 + $0x60] sm:$0xff]
    %v67 = vld [vmem:[#allocation4 + $0x68] sm:$0xff]
    %v68 = vld [vmem:[#allocation4 + $0x70] sm:$0xff]
    %v69 = vld [vmem:[#allocation4 + $0x78] sm:$0xff]
    %v70 = vld [vmem:[#allocation7] sm:$0xff]
    %v71 = vld [vmem:[#allocation7 + $0x8] sm:$0xff]
    %v72 = vld [vmem:[#allocation7 + $0x10] sm:$0xff]
    %v73 = vld [vmem:[#allocation7 + $0x18] sm:$0xff]
    %v74 = vld [vmem:[#allocation7 + $0x20] sm:$0xff]
    %v75 = vld [vmem:[#allocation7 + $0x28] sm:$0xff]
    %v76 = vld [vmem:[#allocation7 + $0x30] sm:$0xff]
    %v77 = vld [vmem:[#allocation7 + $0x38] sm:$0xff]
    %v78 = vld [vmem:[#allocation7 + $0x40] sm:$0xff]
    %v79 = vld [vmem:[#allocation7 + $0x48] sm:$0xff]
    %v80 = vld [vmem:[#allocation7 + $0x50] sm:$0xff]
    %v81 = vld [vmem:[#allocation7 + $0x58] sm:$0xff]
    %v82 = vld [vmem:[#allocation7 + $0x60] sm:$0xff]
    %v83 = vld [vmem:[#allocation7 + $0x68] sm:$0xff]
    %v84 = vld [vmem:[#allocation7 + $0x70] sm:$0xff]
    %v85 = vld [vmem:[#allocation7 + $0x78] sm:$0xff]
    %vm86 = vcmask 130048
    %v88 = vsel %vm86, %v54, 0
    %v91 = vsel %vm86, %v55, 0
    %v94 = vsel %vm86, %v56, 0
    %v97 = vsel %vm86, %v57, 0
    %v100 = vsel %vm86, %v58, 0
    %v103 = vsel %vm86, %v59, 0
    %v106 = vsel %vm86, %v60, 0
    %v109 = vsel %vm86, %v61, 0
    %v112 = vsel %vm86, %v62, 0
    %v115 = vsel %vm86, %v63, 0
    %v118 = vsel %vm86, %v64, 0
    %v121 = vsel %vm86, %v65, 0
    %v124 = vsel %vm86, %v66, 0
    %v127 = vsel %vm86, %v67, 0
    %v130 = vsel %vm86, %v68, 0
    %v133 = vsel %vm86, %v69, 0
    %135 = vmatprep.subr.mxu0 0.0
    %136 = vmatpush1.msra.mxu0 0.0
    %137 = vmatprep.subr.mxu0 0.0
    %138 = vmatpush1.msra.mxu0 0.0
    %139 = vmatprep.subr.mxu0 0.0
    %140 = vmatpush1.msra.mxu0 0.0
    %141 = vmatprep.subr.mxu0 0.0
    %142 = vmatpush1.msra.mxu0 0.0
    %143 = vmatprep.subr.mxu0 0.0
    %144 = vmatpush1.msra.mxu0 0.0
    %145 = vmatprep.subr.mxu0 0.0
    %146 = vmatpush1.msra.mxu0 0.0
    %147 = vmatprep.subr.mxu0 0.0
    %148 = vmatpush1.msra.mxu0 0.0
    %149 = vmatprep.subr.mxu0 0.0
    %150 = vmatpush1.msra.mxu0 0.0
    %151 = vmatprep.subr.mxu0 0.0
    %152 = vmatpush1.msra.mxu0 0.0
    %153 = vmatprep.subr.mxu0 0.0
    %154 = vmatpush1.msra.mxu0 0.0
    %155 = vmatprep.subr.mxu0 0.0
    %156 = vmatpush1.msra.mxu0 0.0
    %157 = vmatprep.subr.mxu0 0.0
    %158 = vmatpush1.msra.mxu0 0.0
    %159 = vmatprep.subr.mxu0 0.0
    %160 = vmatpush1.msra.mxu0 0.0
    %161 = vmatprep.subr.mxu0 0.0
    %162 = vmatpush1.msra.mxu0 0.0
    %163 = vmatprep.subr.mxu0 0.0
    %v164 = vand.u32 %v53, 4294901760
    %165 = vmatpush1.msra.mxu0 %v164
    %166 = vmatprep.subr.mxu0 0.0
    %v167 = vand.u32 %v52, 4294901760
    %168 = vmatpush1.msra.mxu0 %v167
    %169 = vmatprep.subr.mxu0 0.0
    %170 = vmatpush2.msra.mxu0 0.0
    %171 = vmatprep.subr.mxu0 0.0
    %172 = vmatpush2.msra.mxu0 0.0
    %173 = vmatprep.subr.mxu0 0.0
    %174 = vmatpush2.msra.mxu0 0.0
    %175 = vmatprep.subr.mxu0 0.0
    %176 = vmatpush2.msra.mxu0 0.0
    %177 = vmatprep.subr.mxu0 0.0
    %178 = vmatpush2.msra.mxu0 0.0
    %179 = vmatprep.subr.mxu0 0.0
    %180 = vmatpush2.msra.mxu0 0.0
    %181 = vmatprep.subr.mxu0 0.0
    %182 = vmatpush2.msra.mxu0 0.0
    %183 = vmatprep.subr.mxu0 0.0
    %184 = vmatpush2.msra.mxu0 0.0
    %185 = vmatprep.subr.mxu0 0.0
    %186 = vmatpush2.msra.mxu0 0.0
    %187 = vmatprep.subr.mxu0 0.0
    %188 = vmatpush2.msra.mxu0 0.0
    %189 = vmatprep.subr.mxu0 0.0
    %190 = vmatpush2.msra.mxu0 0.0
    %191 = vmatprep.subr.mxu0 0.0
    %192 = vmatpush2.msra.mxu0 0.0
    %193 = vmatprep.subr.mxu0 0.0
    %194 = vmatpush2.msra.mxu0 0.0
    %195 = vmatprep.subr.mxu0 0.0
    %196 = vmatpush2.msra.mxu0 0.0
    %197 = vmatprep.subr.mxu0 0.0
    %198 = vmatpush2.msra.mxu0 0.0
    %199 = vmatprep.subr.mxu0 0.0
    %200 = vmatpush2.msra.mxu0 0.0
    %201 = vmatprep.mubr.f32.mxu0 0.0
    %v202 = vand.u32 %v88, 4294901760
    %v203 = vsub.f32 %v88, %v202
    %v204 = vand.u32 %v203, 4294901760
    %v205 = vsub.f32 %v203, %v204
    %v206 = vand.u32 %v205, 4294901760
    %207 = vmatmul.mubr.f32.gmra.mxu0 %v206
    %v208 = vpop.f32.mrf.mxu0
    %v209 = vadd.f32 0.0, %v208
    %v210 = vpop.f32.mrf.mxu0
    %211 = vmatprep.mubr.f32.mxu0 0.0
    %v212 = vand.u32 %v91, 4294901760
    %v213 = vsub.f32 %v91, %v212
    %v214 = vand.u32 %v213, 4294901760
    %v215 = vsub.f32 %v213, %v214
    %v216 = vand.u32 %v215, 4294901760
    %217 = vmatmul.mubr.f32.gmra.mxu0 %v216
    %v218 = vpop.f32.mrf.mxu0
    %v219 = vadd.f32 0.0, %v218
    %v220 = vpop.f32.mrf.mxu0
    %221 = vmatprep.mubr.f32.mxu0 0.0
    %v222 = vand.u32 %v94, 4294901760
    %v223 = vsub.f32 %v94, %v222
    %v224 = vand.u32 %v223, 4294901760
    %v225 = vsub.f32 %v223, %v224
    %v226 = vand.u32 %v225, 4294901760
    %227 = vmatmul.mubr.f32.gmra.mxu0 %v226
    %v228 = vpop.f32.mrf.mxu0
    %v229 = vadd.f32 0.0, %v228
    %v230 = vpop.f32.mrf.mxu0
    %231 = vmatprep.mubr.f32.mxu0 0.0
    %v232 = vand.u32 %v97, 4294901760
    %v233 = vsub.f32 %v97, %v232
    %v234 = vand.u32 %v233, 4294901760
    %v235 = vsub.f32 %v233, %v234
    %v236 = vand.u32 %v235, 4294901760
    %237 = vmatmul.mubr.f32.gmra.mxu0 %v236
    %v238 = vpop.f32.mrf.mxu0
    %v239 = vadd.f32 0.0, %v238
    %v240 = vpop.f32.mrf.mxu0
    %241 = vmatprep.mubr.f32.mxu0 0.0
    %v242 = vand.u32 %v100, 4294901760
    %v243 = vsub.f32 %v100, %v242
    %v244 = vand.u32 %v243, 4294901760
    %v245 = vsub.f32 %v243, %v244
    %v246 = vand.u32 %v245, 4294901760
    %247 = vmatmul.mubr.f32.gmra.mxu0 %v246
    %v248 = vpop.f32.mrf.mxu0
    %v249 = vadd.f32 0.0, %v248
    %v250 = vpop.f32.mrf.mxu0
    %251 = vmatprep.mubr.f32.mxu0 0.0
    %v252 = vand.u32 %v103, 4294901760
    %v253 = vsub.f32 %v103, %v252
    %v254 = vand.u32 %v253, 4294901760
    %v255 = vsub.f32 %v253, %v254
    %v256 = vand.u32 %v255, 4294901760
    %257 = vmatmul.mubr.f32.gmra.mxu0 %v256
    %v258 = vpop.f32.mrf.mxu0
    %v259 = vadd.f32 0.0, %v258
    %v260 = vpop.f32.mrf.mxu0
    %261 = vmatprep.mubr.f32.mxu0 0.0
    %v262 = vand.u32 %v106, 4294901760
    %v263 = vsub.f32 %v106, %v262
    %v264 = vand.u32 %v263, 4294901760
    %v265 = vsub.f32 %v263, %v264
    %v266 = vand.u32 %v265, 4294901760
    %267 = vmatmul.mubr.f32.gmra.mxu0 %v266
    %v268 = vpop.f32.mrf.mxu0
    %v269 = vadd.f32 0.0, %v268
    %v270 = vpop.f32.mrf.mxu0
    %271 = vmatprep.mubr.f32.mxu0 0.0
    %v272 = vand.u32 %v109, 4294901760
    %v273 = vsub.f32 %v109, %v272
    %v274 = vand.u32 %v273, 4294901760
    %v275 = vsub.f32 %v273, %v274
    %v276 = vand.u32 %v275, 4294901760
    %277 = vmatmul.mubr.f32.gmra.mxu0 %v276
    %v278 = vpop.f32.mrf.mxu0
    %v279 = vadd.f32 0.0, %v278
    %v280 = vpop.f32.mrf.mxu0
    %281 = vmatprep.mubr.f32.mxu0 0.0
    %v282 = vand.u32 %v112, 4294901760
    %v283 = vsub.f32 %v112, %v282
    %v284 = vand.u32 %v283, 4294901760
    %v285 = vsub.f32 %v283, %v284
    %v286 = vand.u32 %v285, 4294901760
    %287 = vmatmul.mubr.f32.gmra.mxu0 %v286
    %v288 = vpop.f32.mrf.mxu0
    %v289 = vadd.f32 0.0, %v288
    %v290 = vpop.f32.mrf.mxu0
    %291 = vmatprep.mubr.f32.mxu0 0.0
    %v292 = vand.u32 %v115, 4294901760
    %v293 = vsub.f32 %v115, %v292
    %v294 = vand.u32 %v293, 4294901760
    %v295 = vsub.f32 %v293, %v294
    %v296 = vand.u32 %v295, 4294901760
    %297 = vmatmul.mubr.f32.gmra.mxu0 %v296
    %v298 = vpop.f32.mrf.mxu0
    %v299 = vadd.f32 0.0, %v298
    %v300 = vpop.f32.mrf.mxu0
    %301 = vmatprep.mubr.f32.mxu0 0.0
    %v302 = vand.u32 %v118, 4294901760
    %v303 = vsub.f32 %v118, %v302
    %v304 = vand.u32 %v303, 4294901760
    %v305 = vsub.f32 %v303, %v304
    %v306 = vand.u32 %v305, 4294901760
    %307 = vmatmul.mubr.f32.gmra.mxu0 %v306
    %v308 = vpop.f32.mrf.mxu0
    %v309 = vadd.f32 0.0, %v308
    %v310 = vpop.f32.mrf.mxu0
    %311 = vmatprep.mubr.f32.mxu0 0.0
    %v312 = vand.u32 %v121, 4294901760
    %v313 = vsub.f32 %v121, %v312
    %v314 = vand.u32 %v313, 4294901760
    %v315 = vsub.f32 %v313, %v314
    %v316 = vand.u32 %v315, 4294901760
    %317 = vmatmul.mubr.f32.gmra.mxu0 %v316
    %v318 = vpop.f32.mrf.mxu0
    %v319 = vadd.f32 0.0, %v318
    %v320 = vpop.f32.mrf.mxu0
    %321 = vmatprep.mubr.f32.mxu0 0.0
    %v322 = vand.u32 %v124, 4294901760
    %v323 = vsub.f32 %v124, %v322
    %v324 = vand.u32 %v323, 4294901760
    %v325 = vsub.f32 %v323, %v324
    %v326 = vand.u32 %v325, 4294901760
    %327 = vmatmul.mubr.f32.gmra.mxu0 %v326
    %v328 = vpop.f32.mrf.mxu0
    %v329 = vadd.f32 0.0, %v328
    %v330 = vpop.f32.mrf.mxu0
    %331 = vmatprep.mubr.f32.mxu0 0.0
    %v332 = vand.u32 %v127, 4294901760
    %v333 = vsub.f32 %v127, %v332
    %v334 = vand.u32 %v333, 4294901760
    %v335 = vsub.f32 %v333, %v334
    %v336 = vand.u32 %v335, 4294901760
    %337 = vmatmul.mubr.f32.gmra.mxu0 %v336
    %v338 = vpop.f32.mrf.mxu0
    %v339 = vadd.f32 0.0, %v338
    %v340 = vpop.f32.mrf.mxu0
    %341 = vmatprep.mubr.f32.mxu0 0.0
    %v342 = vand.u32 %v130, 4294901760
    %v343 = vsub.f32 %v130, %v342
    %v344 = vand.u32 %v343, 4294901760
    %v345 = vsub.f32 %v343, %v344
    %v346 = vand.u32 %v345, 4294901760
    %347 = vmatmul.mubr.f32.gmra.mxu0 %v346
    %v348 = vpop.f32.mrf.mxu0
    %v349 = vadd.f32 0.0, %v348
    %v350 = vpop.f32.mrf.mxu0
    %351 = vmatprep.mubr.f32.mxu0 0.0
    %v352 = vand.u32 %v133, 4294901760
    %v353 = vsub.f32 %v133, %v352
    %v354 = vand.u32 %v353, 4294901760
    %v355 = vsub.f32 %v353, %v354
    %v356 = vand.u32 %v355, 4294901760
    %357 = vmatmul.mubr.f32.gmra.mxu0 %v356
    %v358 = vpop.f32.mrf.mxu0
    %v359 = vadd.f32 0.0, %v358
    %v360 = vpop.f32.mrf.mxu0
    %361 = vdwg.mxu0
    %362 = vmatprep.subr.mxu0 0.0
    %363 = vmatpush1.msra.mxu0 0.0
    %364 = vmatprep.subr.mxu0 0.0
    %365 = vmatpush1.msra.mxu0 0.0
    %366 = vmatprep.subr.mxu0 0.0
    %367 = vmatpush1.msra.mxu0 0.0
    %368 = vmatprep.subr.mxu0 0.0
    %369 = vmatpush1.msra.mxu0 0.0
    %370 = vmatprep.subr.mxu0 0.0
    %371 = vmatpush1.msra.mxu0 0.0
    %372 = vmatprep.subr.mxu0 0.0
    %373 = vmatpush1.msra.mxu0 0.0
    %374 = vmatprep.subr.mxu0 0.0
    %375 = vmatpush1.msra.mxu0 0.0
    %376 = vmatprep.subr.mxu0 0.0
    %377 = vmatpush1.msra.mxu0 0.0
    %378 = vmatprep.subr.mxu0 0.0
    %379 = vmatpush1.msra.mxu0 0.0
    %380 = vmatprep.subr.mxu0 0.0
    %381 = vmatpush1.msra.mxu0 0.0
    %382 = vmatprep.subr.mxu0 0.0
    %383 = vmatpush1.msra.mxu0 0.0
    %384 = vmatprep.subr.mxu0 0.0
    %385 = vmatpush1.msra.mxu0 0.0
    %386 = vmatprep.subr.mxu0 0.0
    %387 = vmatpush1.msra.mxu0 0.0
    %388 = vmatprep.subr.mxu0 0.0
    %389 = vmatpush1.msra.mxu0 0.0
    %390 = vmatprep.subr.mxu0 0.0
    %v391 = vand.u32 %v53, 4294901760
    %v392 = vsub.f32 %v53, %v391
    %v393 = vand.u32 %v392, 4294901760
    %v394 = vsub.f32 %v392, %v393
    %v395 = vand.u32 %v394, 4294901760
    %396 = vmatpush1.msra.mxu0 %v395
    %397 = vmatprep.subr.mxu0 0.0
    %v398 = vand.u32 %v52, 4294901760
    %v399 = vsub.f32 %v52, %v398
    %v400 = vand.u32 %v399, 4294901760
    %v401 = vsub.f32 %v399, %v400
    %v402 = vand.u32 %v401, 4294901760
    %403 = vmatpush1.msra.mxu0 %v402
    %404 = vmatprep.subr.mxu0 0.0
    %405 = vmatpush2.msra.mxu0 0.0
    %406 = vmatprep.subr.mxu0 0.0
    %407 = vmatpush2.msra.mxu0 0.0
    %408 = vmatprep.subr.mxu0 0.0
    %409 = vmatpush2.msra.mxu0 0.0
    %410 = vmatprep.subr.mxu0 0.0
    %411 = vmatpush2.msra.mxu0 0.0
    %412 = vmatprep.subr.mxu0 0.0
    %413 = vmatpush2.msra.mxu0 0.0
    %414 = vmatprep.subr.mxu0 0.0
    %415 = vmatpush2.msra.mxu0 0.0
    %416 = vmatprep.subr.mxu0 0.0
    %417 = vmatpush2.msra.mxu0 0.0
    %418 = vmatprep.subr.mxu0 0.0
    %419 = vmatpush2.msra.mxu0 0.0
    %420 = vmatprep.subr.mxu0 0.0
    %421 = vmatpush2.msra.mxu0 0.0
    %422 = vmatprep.subr.mxu0 0.0
    %423 = vmatpush2.msra.mxu0 0.0
    %424 = vmatprep.subr.mxu0 0.0
    %425 = vmatpush2.msra.mxu0 0.0
    %426 = vmatprep.subr.mxu0 0.0
    %427 = vmatpush2.msra.mxu0 0.0
    %428 = vmatprep.subr.mxu0 0.0
    %429 = vmatpush2.msra.mxu0 0.0
    %430 = vmatprep.subr.mxu0 0.0
    %431 = vmatpush2.msra.mxu0 0.0
    %432 = vmatprep.subr.mxu0 0.0
    %433 = vmatpush2.msra.mxu0 0.0
    %434 = vmatprep.subr.mxu0 0.0
    %435 = vmatpush2.msra.mxu0 0.0
    %436 = vmatprep.mubr.f32.mxu0 0.0
    %v437 = vand.u32 %v88, 4294901760
    %438 = vmatmul.mubr.f32.gmra.mxu0 %v437
    %v439 = vpop.f32.mrf.mxu0
    %v440 = vadd.f32 %v209, %v439
    %v441 = vpop.f32.mrf.mxu0
    %442 = vmatprep.mubr.f32.mxu0 0.0
    %v443 = vand.u32 %v91, 4294901760
    %444 = vmatmul.mubr.f32.gmra.mxu0 %v443
    %v445 = vpop.f32.mrf.mxu0
    %v446 = vadd.f32 %v219, %v445
    %v447 = vpop.f32.mrf.mxu0
    %448 = vmatprep.mubr.f32.mxu0 0.0
    %v449 = vand.u32 %v94, 4294901760
    %450 = vmatmul.mubr.f32.gmra.mxu0 %v449
    %v451 = vpop.f32.mrf.mxu0
    %v452 = vadd.f32 %v229, %v451
    %v453 = vpop.f32.mrf.mxu0
    %454 = vmatprep.mubr.f32.mxu0 0.0
    %v455 = vand.u32 %v97, 4294901760
    %456 = vmatmul.mubr.f32.gmra.mxu0 %v455
    %v457 = vpop.f32.mrf.mxu0
    %v458 = vadd.f32 %v239, %v457
    %v459 = vpop.f32.mrf.mxu0
    %460 = vmatprep.mubr.f32.mxu0 0.0
    %v461 = vand.u32 %v100, 4294901760
    %462 = vmatmul.mubr.f32.gmra.mxu0 %v461
    %v463 = vpop.f32.mrf.mxu0
    %v464 = vadd.f32 %v249, %v463
    %v465 = vpop.f32.mrf.mxu0
    %466 = vmatprep.mubr.f32.mxu0 0.0
    %v467 = vand.u32 %v103, 4294901760
    %468 = vmatmul.mubr.f32.gmra.mxu0 %v467
    %v469 = vpop.f32.mrf.mxu0
    %v470 = vadd.f32 %v259, %v469
    %v471 = vpop.f32.mrf.mxu0
    %472 = vmatprep.mubr.f32.mxu0 0.0
    %v473 = vand.u32 %v106, 4294901760
    %474 = vmatmul.mubr.f32.gmra.mxu0 %v473
    %v475 = vpop.f32.mrf.mxu0
    %v476 = vadd.f32 %v269, %v475
    %v477 = vpop.f32.mrf.mxu0
    %478 = vmatprep.mubr.f32.mxu0 0.0
    %v479 = vand.u32 %v109, 4294901760
    %480 = vmatmul.mubr.f32.gmra.mxu0 %v479
    %v481 = vpop.f32.mrf.mxu0
    %v482 = vadd.f32 %v279, %v481
    %v483 = vpop.f32.mrf.mxu0
    %484 = vmatprep.mubr.f32.mxu0 0.0
    %v485 = vand.u32 %v112, 4294901760
    %486 = vmatmul.mubr.f32.gmra.mxu0 %v485
    %v487 = vpop.f32.mrf.mxu0
    %v488 = vadd.f32 %v289, %v487
    %v489 = vpop.f32.mrf.mxu0
    %490 = vmatprep.mubr.f32.mxu0 0.0
    %v491 = vand.u32 %v115, 4294901760
    %492 = vmatmul.mubr.f32.gmra.mxu0 %v491
    %v493 = vpop.f32.mrf.mxu0
    %v494 = vadd.f32 %v299, %v493
    %v495 = vpop.f32.mrf.mxu0
    %496 = vmatprep.mubr.f32.mxu0 0.0
    %v497 = vand.u32 %v118, 4294901760
    %498 = vmatmul.mubr.f32.gmra.mxu0 %v497
    %v499 = vpop.f32.mrf.mxu0
    %v500 = vadd.f32 %v309, %v499
    %v501 = vpop.f32.mrf.mxu0
    %502 = vmatprep.mubr.f32.mxu0 0.0
    %v503 = vand.u32 %v121, 4294901760
    %504 = vmatmul.mubr.f32.gmra.mxu0 %v503
    %v505 = vpop.f32.mrf.mxu0
    %v506 = vadd.f32 %v319, %v505
    %v507 = vpop.f32.mrf.mxu0
    %508 = vmatprep.mubr.f32.mxu0 0.0
    %v509 = vand.u32 %v124, 4294901760
    %510 = vmatmul.mubr.f32.gmra.mxu0 %v509
    %v511 = vpop.f32.mrf.mxu0
    %v512 = vadd.f32 %v329, %v511
    %v513 = vpop.f32.mrf.mxu0
    %514 = vmatprep.mubr.f32.mxu0 0.0
    %v515 = vand.u32 %v127, 4294901760
    %516 = vmatmul.mubr.f32.gmra.mxu0 %v515
    %v517 = vpop.f32.mrf.mxu0
    %v518 = vadd.f32 %v339, %v517
    %v519 = vpop.f32.mrf.mxu0
    %520 = vmatprep.mubr.f32.mxu0 0.0
    %v521 = vand.u32 %v130, 4294901760
    %522 = vmatmul.mubr.f32.gmra.mxu0 %v521
    %v523 = vpop.f32.mrf.mxu0
    %v524 = vadd.f32 %v349, %v523
    %v525 = vpop.f32.mrf.mxu0
    %526 = vmatprep.mubr.f32.mxu0 0.0
    %v527 = vand.u32 %v133, 4294901760
    %528 = vmatmul.mubr.f32.gmra.mxu0 %v527
    %v529 = vpop.f32.mrf.mxu0
    %v530 = vadd.f32 %v359, %v529
    %v531 = vpop.f32.mrf.mxu0
    %532 = vdwg.mxu0
    %533 = vmatprep.subr.mxu0 0.0
    %534 = vmatpush1.msra.mxu0 0.0
    %535 = vmatprep.subr.mxu0 0.0
    %536 = vmatpush1.msra.mxu0 0.0
    %537 = vmatprep.subr.mxu0 0.0
    %538 = vmatpush1.msra.mxu0 0.0
    %539 = vmatprep.subr.mxu0 0.0
    %540 = vmatpush1.msra.mxu0 0.0
    %541 = vmatprep.subr.mxu0 0.0
    %542 = vmatpush1.msra.mxu0 0.0
    %543 = vmatprep.subr.mxu0 0.0
    %544 = vmatpush1.msra.mxu0 0.0
    %545 = vmatprep.subr.mxu0 0.0
    %546 = vmatpush1.msra.mxu0 0.0
    %547 = vmatprep.subr.mxu0 0.0
    %548 = vmatpush1.msra.mxu0 0.0
    %549 = vmatprep.subr.mxu0 0.0
    %550 = vmatpush1.msra.mxu0 0.0
    %551 = vmatprep.subr.mxu0 0.0
    %552 = vmatpush1.msra.mxu0 0.0
    %553 = vmatprep.subr.mxu0 0.0
    %554 = vmatpush1.msra.mxu0 0.0
    %555 = vmatprep.subr.mxu0 0.0
    %556 = vmatpush1.msra.mxu0 0.0
    %557 = vmatprep.subr.mxu0 0.0
    %558 = vmatpush1.msra.mxu0 0.0
    %559 = vmatprep.subr.mxu0 0.0
    %560 = vmatpush1.msra.mxu0 0.0
    %561 = vmatprep.subr.mxu0 0.0
    %v562 = vand.u32 %v53, 4294901760
    %v563 = vsub.f32 %v53, %v562
    %564 = vmatpush1.msra.mxu0 %v563
    %565 = vmatprep.subr.mxu0 0.0
    %v566 = vand.u32 %v52, 4294901760
    %v567 = vsub.f32 %v52, %v566
    %568 = vmatpush1.msra.mxu0 %v567
    %569 = vmatprep.subr.mxu0 0.0
    %570 = vmatpush2.msra.mxu0 0.0
    %571 = vmatprep.subr.mxu0 0.0
    %572 = vmatpush2.msra.mxu0 0.0
    %573 = vmatprep.subr.mxu0 0.0
    %574 = vmatpush2.msra.mxu0 0.0
    %575 = vmatprep.subr.mxu0 0.0
    %576 = vmatpush2.msra.mxu0 0.0
    %577 = vmatprep.subr.mxu0 0.0
    %578 = vmatpush2.msra.mxu0 0.0
    %579 = vmatprep.subr.mxu0 0.0
    %580 = vmatpush2.msra.mxu0 0.0
    %581 = vmatprep.subr.mxu0 0.0
    %582 = vmatpush2.msra.mxu0 0.0
    %583 = vmatprep.subr.mxu0 0.0
    %584 = vmatpush2.msra.mxu0 0.0
    %585 = vmatprep.subr.mxu0 0.0
    %586 = vmatpush2.msra.mxu0 0.0
    %587 = vmatprep.subr.mxu0 0.0
    %588 = vmatpush2.msra.mxu0 0.0
    %589 = vmatprep.subr.mxu0 0.0
    %590 = vmatpush2.msra.mxu0 0.0
    %591 = vmatprep.subr.mxu0 0.0
    %592 = vmatpush2.msra.mxu0 0.0
    %593 = vmatprep.subr.mxu0 0.0
    %594 = vmatpush2.msra.mxu0 0.0
    %595 = vmatprep.subr.mxu0 0.0
    %596 = vmatpush2.msra.mxu0 0.0
    %597 = vmatprep.subr.mxu0 0.0
    %598 = vmatpush2.msra.mxu0 0.0
    %599 = vmatprep.subr.mxu0 0.0
    %600 = vmatpush2.msra.mxu0 0.0
    %601 = vmatprep.mubr.f32.mxu0 0.0
    %v602 = vand.u32 %v88, 4294901760
    %v603 = vsub.f32 %v88, %v602
    %604 = vmatmul.mubr.f32.gmra.mxu0 %v603
    %v605 = vpop.f32.mrf.mxu0
    %v606 = vadd.f32 %v440, %v605
    %v607 = vpop.f32.mrf.mxu0
    %608 = vmatprep.mubr.f32.mxu0 0.0
    %v609 = vand.u32 %v91, 4294901760
    %v610 = vsub.f32 %v91, %v609
    %611 = vmatmul.mubr.f32.gmra.mxu0 %v610
    %v612 = vpop.f32.mrf.mxu0
    %v613 = vadd.f32 %v446, %v612
    %v614 = vpop.f32.mrf.mxu0
    %615 = vmatprep.mubr.f32.mxu0 0.0
    %v616 = vand.u32 %v94, 4294901760
    %v617 = vsub.f32 %v94, %v616
    %618 = vmatmul.mubr.f32.gmra.mxu0 %v617
    %v619 = vpop.f32.mrf.mxu0
    %v620 = vadd.f32 %v452, %v619
    %v621 = vpop.f32.mrf.mxu0
    %622 = vmatprep.mubr.f32.mxu0 0.0
    %v623 = vand.u32 %v97, 4294901760
    %v624 = vsub.f32 %v97, %v623
    %625 = vmatmul.mubr.f32.gmra.mxu0 %v624
    %v626 = vpop.f32.mrf.mxu0
    %v627 = vadd.f32 %v458, %v626
    %v628 = vpop.f32.mrf.mxu0
    %629 = vmatprep.mubr.f32.mxu0 0.0
    %v630 = vand.u32 %v100, 4294901760
    %v631 = vsub.f32 %v100, %v630
    %632 = vmatmul.mubr.f32.gmra.mxu0 %v631
    %v633 = vpop.f32.mrf.mxu0
    %v634 = vadd.f32 %v464, %v633
    %v635 = vpop.f32.mrf.mxu0
    %636 = vmatprep.mubr.f32.mxu0 0.0
    %v637 = vand.u32 %v103, 4294901760
    %v638 = vsub.f32 %v103, %v637
    %639 = vmatmul.mubr.f32.gmra.mxu0 %v638
    %v640 = vpop.f32.mrf.mxu0
    %v641 = vadd.f32 %v470, %v640
    %v642 = vpop.f32.mrf.mxu0
    %643 = vmatprep.mubr.f32.mxu0 0.0
    %v644 = vand.u32 %v106, 4294901760
    %v645 = vsub.f32 %v106, %v644
    %646 = vmatmul.mubr.f32.gmra.mxu0 %v645
    %v647 = vpop.f32.mrf.mxu0
    %v648 = vadd.f32 %v476, %v647
    %v649 = vpop.f32.mrf.mxu0
    %650 = vmatprep.mubr.f32.mxu0 0.0
    %v651 = vand.u32 %v109, 4294901760
    %v652 = vsub.f32 %v109, %v651
    %653 = vmatmul.mubr.f32.gmra.mxu0 %v652
    %v654 = vpop.f32.mrf.mxu0
    %v655 = vadd.f32 %v482, %v654
    %v656 = vpop.f32.mrf.mxu0
    %657 = vmatprep.mubr.f32.mxu0 0.0
    %v658 = vand.u32 %v112, 4294901760
    %v659 = vsub.f32 %v112, %v658
    %660 = vmatmul.mubr.f32.gmra.mxu0 %v659
    %v661 = vpop.f32.mrf.mxu0
    %v662 = vadd.f32 %v488, %v661
    %v663 = vpop.f32.mrf.mxu0
    %664 = vmatprep.mubr.f32.mxu0 0.0
    %v665 = vand.u32 %v115, 4294901760
    %v666 = vsub.f32 %v115, %v665
    %667 = vmatmul.mubr.f32.gmra.mxu0 %v666
    %v668 = vpop.f32.mrf.mxu0
    %v669 = vadd.f32 %v494, %v668
    %v670 = vpop.f32.mrf.mxu0
    %671 = vmatprep.mubr.f32.mxu0 0.0
    %v672 = vand.u32 %v118, 4294901760
    %v673 = vsub.f32 %v118, %v672
    %674 = vmatmul.mubr.f32.gmra.mxu0 %v673
    %v675 = vpop.f32.mrf.mxu0
    %v676 = vadd.f32 %v500, %v675
    %v677 = vpop.f32.mrf.mxu0
    %678 = vmatprep.mubr.f32.mxu0 0.0
    %v679 = vand.u32 %v121, 4294901760
    %v680 = vsub.f32 %v121, %v679
    %681 = vmatmul.mubr.f32.gmra.mxu0 %v680
    %v682 = vpop.f32.mrf.mxu0
    %v683 = vadd.f32 %v506, %v682
    %v684 = vpop.f32.mrf.mxu0
    %685 = vmatprep.mubr.f32.mxu0 0.0
    %v686 = vand.u32 %v124, 4294901760
    %v687 = vsub.f32 %v124, %v686
    %688 = vmatmul.mubr.f32.gmra.mxu0 %v687
    %v689 = vpop.f32.mrf.mxu0
    %v690 = vadd.f32 %v512, %v689
    %v691 = vpop.f32.mrf.mxu0
    %692 = vmatprep.mubr.f32.mxu0 0.0
    %v693 = vand.u32 %v127, 4294901760
    %v694 = vsub.f32 %v127, %v693
    %695 = vmatmul.mubr.f32.gmra.mxu0 %v694
    %v696 = vpop.f32.mrf.mxu0
    %v697 = vadd.f32 %v518, %v696
    %v698 = vpop.f32.mrf.mxu0
    %699 = vmatprep.mubr.f32.mxu0 0.0
    %v700 = vand.u32 %v130, 4294901760
    %v701 = vsub.f32 %v130, %v700
    %702 = vmatmul.mubr.f32.gmra.mxu0 %v701
    %v703 = vpop.f32.mrf.mxu0
    %v704 = vadd.f32 %v524, %v703
    %v705 = vpop.f32.mrf.mxu0
    %706 = vmatprep.mubr.f32.mxu0 0.0
    %v707 = vand.u32 %v133, 4294901760
    %v708 = vsub.f32 %v133, %v707
    %709 = vmatmul.mubr.f32.gmra.mxu0 %v708
    %v710 = vpop.f32.mrf.mxu0
    %v711 = vadd.f32 %v530, %v710
    %v712 = vpop.f32.mrf.mxu0
    %713 = vdwg.mxu0
    %714 = vmatprep.subr.mxu0 0.0
    %715 = vmatpush1.msra.mxu0 0.0
    %716 = vmatprep.subr.mxu0 0.0
    %717 = vmatpush1.msra.mxu0 0.0
    %718 = vmatprep.subr.mxu0 0.0
    %719 = vmatpush1.msra.mxu0 0.0
    %720 = vmatprep.subr.mxu0 0.0
    %721 = vmatpush1.msra.mxu0 0.0
    %722 = vmatprep.subr.mxu0 0.0
    %723 = vmatpush1.msra.mxu0 0.0
    %724 = vmatprep.subr.mxu0 0.0
    %725 = vmatpush1.msra.mxu0 0.0
    %726 = vmatprep.subr.mxu0 0.0
    %727 = vmatpush1.msra.mxu0 0.0
    %728 = vmatprep.subr.mxu0 0.0
    %729 = vmatpush1.msra.mxu0 0.0
    %730 = vmatprep.subr.mxu0 0.0
    %731 = vmatpush1.msra.mxu0 0.0
    %732 = vmatprep.subr.mxu0 0.0
    %733 = vmatpush1.msra.mxu0 0.0
    %734 = vmatprep.subr.mxu0 0.0
    %735 = vmatpush1.msra.mxu0 0.0
    %736 = vmatprep.subr.mxu0 0.0
    %737 = vmatpush1.msra.mxu0 0.0
    %738 = vmatprep.subr.mxu0 0.0
    %739 = vmatpush1.msra.mxu0 0.0
    %740 = vmatprep.subr.mxu0 0.0
    %741 = vmatpush1.msra.mxu0 0.0
    %742 = vmatprep.subr.mxu0 0.0
    %v743 = vand.u32 %v53, 4294901760
    %744 = vmatpush1.msra.mxu0 %v743
    %745 = vmatprep.subr.mxu0 0.0
    %v746 = vand.u32 %v52, 4294901760
    %747 = vmatpush1.msra.mxu0 %v746
    %748 = vmatprep.subr.mxu0 0.0
    %749 = vmatpush2.msra.mxu0 0.0
    %750 = vmatprep.subr.mxu0 0.0
    %751 = vmatpush2.msra.mxu0 0.0
    %752 = vmatprep.subr.mxu0 0.0
    %753 = vmatpush2.msra.mxu0 0.0
    %754 = vmatprep.subr.mxu0 0.0
    %755 = vmatpush2.msra.mxu0 0.0
    %756 = vmatprep.subr.mxu0 0.0
    %757 = vmatpush2.msra.mxu0 0.0
    %758 = vmatprep.subr.mxu0 0.0
    %759 = vmatpush2.msra.mxu0 0.0
    %760 = vmatprep.subr.mxu0 0.0
    %761 = vmatpush2.msra.mxu0 0.0
    %762 = vmatprep.subr.mxu0 0.0
    %763 = vmatpush2.msra.mxu0 0.0
    %764 = vmatprep.subr.mxu0 0.0
    %765 = vmatpush2.msra.mxu0 0.0
    %766 = vmatprep.subr.mxu0 0.0
    %767 = vmatpush2.msra.mxu0 0.0
    %768 = vmatprep.subr.mxu0 0.0
    %769 = vmatpush2.msra.mxu0 0.0
    %770 = vmatprep.subr.mxu0 0.0
    %771 = vmatpush2.msra.mxu0 0.0
    %772 = vmatprep.subr.mxu0 0.0
    %773 = vmatpush2.msra.mxu0 0.0
    %774 = vmatprep.subr.mxu0 0.0
    %775 = vmatpush2.msra.mxu0 0.0
    %776 = vmatprep.subr.mxu0 0.0
    %777 = vmatpush2.msra.mxu0 0.0
    %778 = vmatprep.subr.mxu0 0.0
    %779 = vmatpush2.msra.mxu0 0.0
    %780 = vmatprep.mubr.f32.mxu0 0.0
    %v781 = vand.u32 %v88, 4294901760
    %v782 = vsub.f32 %v88, %v781
    %v783 = vand.u32 %v782, 4294901760
    %784 = vmatmul.mubr.f32.gmra.mxu0 %v783
    %v785 = vpop.f32.mrf.mxu0
    %v786 = vadd.f32 %v606, %v785
    %v787 = vpop.f32.mrf.mxu0
    %788 = vmatprep.mubr.f32.mxu0 0.0
    %v789 = vand.u32 %v91, 4294901760
    %v790 = vsub.f32 %v91, %v789
    %v791 = vand.u32 %v790, 4294901760
    %792 = vmatmul.mubr.f32.gmra.mxu0 %v791
    %v793 = vpop.f32.mrf.mxu0
    %v794 = vadd.f32 %v613, %v793
    %v795 = vpop.f32.mrf.mxu0
    %796 = vmatprep.mubr.f32.mxu0 0.0
    %v797 = vand.u32 %v94, 4294901760
    %v798 = vsub.f32 %v94, %v797
    %v799 = vand.u32 %v798, 4294901760
    %800 = vmatmul.mubr.f32.gmra.mxu0 %v799
    %v801 = vpop.f32.mrf.mxu0
    %v802 = vadd.f32 %v620, %v801
    %v803 = vpop.f32.mrf.mxu0
    %804 = vmatprep.mubr.f32.mxu0 0.0
    %v805 = vand.u32 %v97, 4294901760
    %v806 = vsub.f32 %v97, %v805
    %v807 = vand.u32 %v806, 4294901760
    %808 = vmatmul.mubr.f32.gmra.mxu0 %v807
    %v809 = vpop.f32.mrf.mxu0
    %v810 = vadd.f32 %v627, %v809
    %v811 = vpop.f32.mrf.mxu0
    %812 = vmatprep.mubr.f32.mxu0 0.0
    %v813 = vand.u32 %v100, 4294901760
    %v814 = vsub.f32 %v100, %v813
    %v815 = vand.u32 %v814, 4294901760
    %816 = vmatmul.mubr.f32.gmra.mxu0 %v815
    %v817 = vpop.f32.mrf.mxu0
    %v818 = vadd.f32 %v634, %v817
    %v819 = vpop.f32.mrf.mxu0
    %820 = vmatprep.mubr.f32.mxu0 0.0
    %v821 = vand.u32 %v103, 4294901760
    %v822 = vsub.f32 %v103, %v821
    %v823 = vand.u32 %v822, 4294901760
    %824 = vmatmul.mubr.f32.gmra.mxu0 %v823
    %v825 = vpop.f32.mrf.mxu0
    %v826 = vadd.f32 %v641, %v825
    %v827 = vpop.f32.mrf.mxu0
    %828 = vmatprep.mubr.f32.mxu0 0.0
    %v829 = vand.u32 %v106, 4294901760
    %v830 = vsub.f32 %v106, %v829
    %v831 = vand.u32 %v830, 4294901760
    %832 = vmatmul.mubr.f32.gmra.mxu0 %v831
    %v833 = vpop.f32.mrf.mxu0
    %v834 = vadd.f32 %v648, %v833
    %v835 = vpop.f32.mrf.mxu0
    %836 = vmatprep.mubr.f32.mxu0 0.0
    %v837 = vand.u32 %v109, 4294901760
    %v838 = vsub.f32 %v109, %v837
    %v839 = vand.u32 %v838, 4294901760
    %840 = vmatmul.mubr.f32.gmra.mxu0 %v839
    %v841 = vpop.f32.mrf.mxu0
    %v842 = vadd.f32 %v655, %v841
    %v843 = vpop.f32.mrf.mxu0
    %844 = vmatprep.mubr.f32.mxu0 0.0
    %v845 = vand.u32 %v112, 4294901760
    %v846 = vsub.f32 %v112, %v845
    %v847 = vand.u32 %v846, 4294901760
    %848 = vmatmul.mubr.f32.gmra.mxu0 %v847
    %v849 = vpop.f32.mrf.mxu0
    %v850 = vadd.f32 %v662, %v849
    %v851 = vpop.f32.mrf.mxu0
    %852 = vmatprep.mubr.f32.mxu0 0.0
    %v853 = vand.u32 %v115, 4294901760
    %v854 = vsub.f32 %v115, %v853
    %v855 = vand.u32 %v854, 4294901760
    %856 = vmatmul.mubr.f32.gmra.mxu0 %v855
    %v857 = vpop.f32.mrf.mxu0
    %v858 = vadd.f32 %v669, %v857
    %v859 = vpop.f32.mrf.mxu0
    %860 = vmatprep.mubr.f32.mxu0 0.0
    %v861 = vand.u32 %v118, 4294901760
    %v862 = vsub.f32 %v118, %v861
    %v863 = vand.u32 %v862, 4294901760
    %864 = vmatmul.mubr.f32.gmra.mxu0 %v863
    %v865 = vpop.f32.mrf.mxu0
    %v866 = vadd.f32 %v676, %v865
    %v867 = vpop.f32.mrf.mxu0
    %868 = vmatprep.mubr.f32.mxu0 0.0
    %v869 = vand.u32 %v121, 4294901760
    %v870 = vsub.f32 %v121, %v869
    %v871 = vand.u32 %v870, 4294901760
    %872 = vmatmul.mubr.f32.gmra.mxu0 %v871
    %v873 = vpop.f32.mrf.mxu0
    %v874 = vadd.f32 %v683, %v873
    %v875 = vpop.f32.mrf.mxu0
    %876 = vmatprep.mubr.f32.mxu0 0.0
    %v877 = vand.u32 %v124, 4294901760
    %v878 = vsub.f32 %v124, %v877
    %v879 = vand.u32 %v878, 4294901760
    %880 = vmatmul.mubr.f32.gmra.mxu0 %v879
    %v881 = vpop.f32.mrf.mxu0
    %v882 = vadd.f32 %v690, %v881
    %v883 = vpop.f32.mrf.mxu0
    %884 = vmatprep.mubr.f32.mxu0 0.0
    %v885 = vand.u32 %v127, 4294901760
    %v886 = vsub.f32 %v127, %v885
    %v887 = vand.u32 %v886, 4294901760
    %888 = vmatmul.mubr.f32.gmra.mxu0 %v887
    %v889 = vpop.f32.mrf.mxu0
    %v890 = vadd.f32 %v697, %v889
    %v891 = vpop.f32.mrf.mxu0
    %892 = vmatprep.mubr.f32.mxu0 0.0
    %v893 = vand.u32 %v130, 4294901760
    %v894 = vsub.f32 %v130, %v893
    %v895 = vand.u32 %v894, 4294901760
    %896 = vmatmul.mubr.f32.gmra.mxu0 %v895
    %v897 = vpop.f32.mrf.mxu0
    %v898 = vadd.f32 %v704, %v897
    %v899 = vpop.f32.mrf.mxu0
    %900 = vmatprep.mubr.f32.mxu0 0.0
    %v901 = vand.u32 %v133, 4294901760
    %v902 = vsub.f32 %v133, %v901
    %v903 = vand.u32 %v902, 4294901760
    %904 = vmatmul.mubr.f32.gmra.mxu0 %v903
    %v905 = vpop.f32.mrf.mxu0
    %v906 = vadd.f32 %v711, %v905
    %v907 = vpop.f32.mrf.mxu0
    %908 = vdwg.mxu0
    %909 = vmatprep.subr.mxu0 0.0
    %910 = vmatpush1.msra.mxu0 0.0
    %911 = vmatprep.subr.mxu0 0.0
    %912 = vmatpush1.msra.mxu0 0.0
    %913 = vmatprep.subr.mxu0 0.0
    %914 = vmatpush1.msra.mxu0 0.0
    %915 = vmatprep.subr.mxu0 0.0
    %916 = vmatpush1.msra.mxu0 0.0
    %917 = vmatprep.subr.mxu0 0.0
    %918 = vmatpush1.msra.mxu0 0.0
    %919 = vmatprep.subr.mxu0 0.0
    %920 = vmatpush1.msra.mxu0 0.0
    %921 = vmatprep.subr.mxu0 0.0
    %922 = vmatpush1.msra.mxu0 0.0
    %923 = vmatprep.subr.mxu0 0.0
    %924 = vmatpush1.msra.mxu0 0.0
    %925 = vmatprep.subr.mxu0 0.0
    %926 = vmatpush1.msra.mxu0 0.0
    %927 = vmatprep.subr.mxu0 0.0
    %928 = vmatpush1.msra.mxu0 0.0
    %929 = vmatprep.subr.mxu0 0.0
    %930 = vmatpush1.msra.mxu0 0.0
    %931 = vmatprep.subr.mxu0 0.0
    %932 = vmatpush1.msra.mxu0 0.0
    %933 = vmatprep.subr.mxu0 0.0
    %934 = vmatpush1.msra.mxu0 0.0
    %935 = vmatprep.subr.mxu0 0.0
    %936 = vmatpush1.msra.mxu0 0.0
    %937 = vmatprep.subr.mxu0 0.0
    %v938 = vand.u32 %v53, 4294901760
    %v939 = vsub.f32 %v53, %v938
    %v940 = vand.u32 %v939, 4294901760
    %941 = vmatpush1.msra.mxu0 %v940
    %942 = vmatprep.subr.mxu0 0.0
    %v943 = vand.u32 %v52, 4294901760
    %v944 = vsub.f32 %v52, %v943
    %v945 = vand.u32 %v944, 4294901760
    %946 = vmatpush1.msra.mxu0 %v945
    %947 = vmatprep.subr.mxu0 0.0
    %948 = vmatpush2.msra.mxu0 0.0
    %949 = vmatprep.subr.mxu0 0.0
    %950 = vmatpush2.msra.mxu0 0.0
    %951 = vmatprep.subr.mxu0 0.0
    %952 = vmatpush2.msra.mxu0 0.0
    %953 = vmatprep.subr.mxu0 0.0
    %954 = vmatpush2.msra.mxu0 0.0
    %955 = vmatprep.subr.mxu0 0.0
    %956 = vmatpush2.msra.mxu0 0.0
    %957 = vmatprep.subr.mxu0 0.0
    %958 = vmatpush2.msra.mxu0 0.0
    %959 = vmatprep.subr.mxu0 0.0
    %960 = vmatpush2.msra.mxu0 0.0
    %961 = vmatprep.subr.mxu0 0.0
    %962 = vmatpush2.msra.mxu0 0.0
    %963 = vmatprep.subr.mxu0 0.0
    %964 = vmatpush2.msra.mxu0 0.0
    %965 = vmatprep.subr.mxu0 0.0
    %966 = vmatpush2.msra.mxu0 0.0
    %967 = vmatprep.subr.mxu0 0.0
    %968 = vmatpush2.msra.mxu0 0.0
    %969 = vmatprep.subr.mxu0 0.0
    %970 = vmatpush2.msra.mxu0 0.0
    %971 = vmatprep.subr.mxu0 0.0
    %972 = vmatpush2.msra.mxu0 0.0
    %973 = vmatprep.subr.mxu0 0.0
    %974 = vmatpush2.msra.mxu0 0.0
    %975 = vmatprep.subr.mxu0 0.0
    %976 = vmatpush2.msra.mxu0 0.0
    %977 = vmatprep.subr.mxu0 0.0
    %978 = vmatpush2.msra.mxu0 0.0
    %979 = vmatprep.mubr.f32.mxu0 0.0
    %v980 = vand.u32 %v88, 4294901760
    %981 = vmatmul.mubr.f32.gmra.mxu0 %v980
    %v982 = vpop.f32.mrf.mxu0
    %v983 = vadd.f32 %v786, %v982
    %v984 = vpop.f32.mrf.mxu0
    %985 = vmatprep.mubr.f32.mxu0 0.0
    %v986 = vand.u32 %v91, 4294901760
    %987 = vmatmul.mubr.f32.gmra.mxu0 %v986
    %v988 = vpop.f32.mrf.mxu0
    %v989 = vadd.f32 %v794, %v988
    %v990 = vpop.f32.mrf.mxu0
    %991 = vmatprep.mubr.f32.mxu0 0.0
    %v992 = vand.u32 %v94, 4294901760
    %993 = vmatmul.mubr.f32.gmra.mxu0 %v992
    %v994 = vpop.f32.mrf.mxu0
    %v995 = vadd.f32 %v802, %v994
    %v996 = vpop.f32.mrf.mxu0
    %997 = vmatprep.mubr.f32.mxu0 0.0
    %v998 = vand.u32 %v97, 4294901760
    %999 = vmatmul.mubr.f32.gmra.mxu0 %v998
    %v1000 = vpop.f32.mrf.mxu0
    %v1001 = vadd.f32 %v810, %v1000
    %v1002 = vpop.f32.mrf.mxu0
    %1003 = vmatprep.mubr.f32.mxu0 0.0
    %v1004 = vand.u32 %v100, 4294901760
    %1005 = vmatmul.mubr.f32.gmra.mxu0 %v1004
    %v1006 = vpop.f32.mrf.mxu0
    %v1007 = vadd.f32 %v818, %v1006
    %v1008 = vpop.f32.mrf.mxu0
    %1009 = vmatprep.mubr.f32.mxu0 0.0
    %v1010 = vand.u32 %v103, 4294901760
    %1011 = vmatmul.mubr.f32.gmra.mxu0 %v1010
    %v1012 = vpop.f32.mrf.mxu0
    %v1013 = vadd.f32 %v826, %v1012
    %v1014 = vpop.f32.mrf.mxu0
    %1015 = vmatprep.mubr.f32.mxu0 0.0
    %v1016 = vand.u32 %v106, 4294901760
    %1017 = vmatmul.mubr.f32.gmra.mxu0 %v1016
    %v1018 = vpop.f32.mrf.mxu0
    %v1019 = vadd.f32 %v834, %v1018
    %v1020 = vpop.f32.mrf.mxu0
    %1021 = vmatprep.mubr.f32.mxu0 0.0
    %v1022 = vand.u32 %v109, 4294901760
    %1023 = vmatmul.mubr.f32.gmra.mxu0 %v1022
    %v1024 = vpop.f32.mrf.mxu0
    %v1025 = vadd.f32 %v842, %v1024
    %v1026 = vpop.f32.mrf.mxu0
    %1027 = vmatprep.mubr.f32.mxu0 0.0
    %v1028 = vand.u32 %v112, 4294901760
    %1029 = vmatmul.mubr.f32.gmra.mxu0 %v1028
    %v1030 = vpop.f32.mrf.mxu0
    %v1031 = vadd.f32 %v850, %v1030
    %v1032 = vpop.f32.mrf.mxu0
    %1033 = vmatprep.mubr.f32.mxu0 0.0
    %v1034 = vand.u32 %v115, 4294901760
    %1035 = vmatmul.mubr.f32.gmra.mxu0 %v1034
    %v1036 = vpop.f32.mrf.mxu0
    %v1037 = vadd.f32 %v858, %v1036
    %v1038 = vpop.f32.mrf.mxu0
    %1039 = vmatprep.mubr.f32.mxu0 0.0
    %v1040 = vand.u32 %v118, 4294901760
    %1041 = vmatmul.mubr.f32.gmra.mxu0 %v1040
    %v1042 = vpop.f32.mrf.mxu0
    %v1043 = vadd.f32 %v866, %v1042
    %v1044 = vpop.f32.mrf.mxu0
    %1045 = vmatprep.mubr.f32.mxu0 0.0
    %v1046 = vand.u32 %v121, 4294901760
    %1047 = vmatmul.mubr.f32.gmra.mxu0 %v1046
    %v1048 = vpop.f32.mrf.mxu0
    %v1049 = vadd.f32 %v874, %v1048
    %v1050 = vpop.f32.mrf.mxu0
    %1051 = vmatprep.mubr.f32.mxu0 0.0
    %v1052 = vand.u32 %v124, 4294901760
    %1053 = vmatmul.mubr.f32.gmra.mxu0 %v1052
    %v1054 = vpop.f32.mrf.mxu0
    %v1055 = vadd.f32 %v882, %v1054
    %v1056 = vpop.f32.mrf.mxu0
    %1057 = vmatprep.mubr.f32.mxu0 0.0
    %v1058 = vand.u32 %v127, 4294901760
    %1059 = vmatmul.mubr.f32.gmra.mxu0 %v1058
    %v1060 = vpop.f32.mrf.mxu0
    %v1061 = vadd.f32 %v890, %v1060
    %v1062 = vpop.f32.mrf.mxu0
    %1063 = vmatprep.mubr.f32.mxu0 0.0
    %v1064 = vand.u32 %v130, 4294901760
    %1065 = vmatmul.mubr.f32.gmra.mxu0 %v1064
    %v1066 = vpop.f32.mrf.mxu0
    %v1067 = vadd.f32 %v898, %v1066
    %v1068 = vpop.f32.mrf.mxu0
    %1069 = vmatprep.mubr.f32.mxu0 0.0
    %v1070 = vand.u32 %v133, 4294901760
    %1071 = vmatmul.mubr.f32.gmra.mxu0 %v1070
    %v1072 = vpop.f32.mrf.mxu0
    %v1073 = vadd.f32 %v906, %v1072
    %v1074 = vpop.f32.mrf.mxu0
    %1075 = vdwg.mxu0
    %1076 = vmatprep.subr.mxu0 0.0
    %1077 = vmatpush1.msra.mxu0 0.0
    %1078 = vmatprep.subr.mxu0 0.0
    %1079 = vmatpush1.msra.mxu0 0.0
    %1080 = vmatprep.subr.mxu0 0.0
    %1081 = vmatpush1.msra.mxu0 0.0
    %1082 = vmatprep.subr.mxu0 0.0
    %1083 = vmatpush1.msra.mxu0 0.0
    %1084 = vmatprep.subr.mxu0 0.0
    %1085 = vmatpush1.msra.mxu0 0.0
    %1086 = vmatprep.subr.mxu0 0.0
    %1087 = vmatpush1.msra.mxu0 0.0
    %1088 = vmatprep.subr.mxu0 0.0
    %1089 = vmatpush1.msra.mxu0 0.0
    %1090 = vmatprep.subr.mxu0 0.0
    %1091 = vmatpush1.msra.mxu0 0.0
    %1092 = vmatprep.subr.mxu0 0.0
    %1093 = vmatpush1.msra.mxu0 0.0
    %1094 = vmatprep.subr.mxu0 0.0
    %1095 = vmatpush1.msra.mxu0 0.0
    %1096 = vmatprep.subr.mxu0 0.0
    %1097 = vmatpush1.msra.mxu0 0.0
    %1098 = vmatprep.subr.mxu0 0.0
    %1099 = vmatpush1.msra.mxu0 0.0
    %1100 = vmatprep.subr.mxu0 0.0
    %1101 = vmatpush1.msra.mxu0 0.0
    %1102 = vmatprep.subr.mxu0 0.0
    %1103 = vmatpush1.msra.mxu0 0.0
    %1104 = vmatprep.subr.mxu0 0.0
    %v1105 = vand.u32 %v53, 4294901760
    %1106 = vmatpush1.msra.mxu0 %v1105
    %1107 = vmatprep.subr.mxu0 0.0
    %v1108 = vand.u32 %v52, 4294901760
    %1109 = vmatpush1.msra.mxu0 %v1108
    %1110 = vmatprep.subr.mxu0 0.0
    %1111 = vmatpush2.msra.mxu0 0.0
    %1112 = vmatprep.subr.mxu0 0.0
    %1113 = vmatpush2.msra.mxu0 0.0
    %1114 = vmatprep.subr.mxu0 0.0
    %1115 = vmatpush2.msra.mxu0 0.0
    %1116 = vmatprep.subr.mxu0 0.0
    %1117 = vmatpush2.msra.mxu0 0.0
    %1118 = vmatprep.subr.mxu0 0.0
    %1119 = vmatpush2.msra.mxu0 0.0
    %1120 = vmatprep.subr.mxu0 0.0
    %1121 = vmatpush2.msra.mxu0 0.0
    %1122 = vmatprep.subr.mxu0 0.0
    %1123 = vmatpush2.msra.mxu0 0.0
    %1124 = vmatprep.subr.mxu0 0.0
    %1125 = vmatpush2.msra.mxu0 0.0
    %1126 = vmatprep.subr.mxu0 0.0
    %1127 = vmatpush2.msra.mxu0 0.0
    %1128 = vmatprep.subr.mxu0 0.0
    %1129 = vmatpush2.msra.mxu0 0.0
    %1130 = vmatprep.subr.mxu0 0.0
    %1131 = vmatpush2.msra.mxu0 0.0
    %1132 = vmatprep.subr.mxu0 0.0
    %1133 = vmatpush2.msra.mxu0 0.0
    %1134 = vmatprep.subr.mxu0 0.0
    %1135 = vmatpush2.msra.mxu0 0.0
    %1136 = vmatprep.subr.mxu0 0.0
    %1137 = vmatpush2.msra.mxu0 0.0
    %1138 = vmatprep.subr.mxu0 0.0
    %1139 = vmatpush2.msra.mxu0 0.0
    %1140 = vmatprep.subr.mxu0 0.0
    %1141 = vmatpush2.msra.mxu0 0.0
    %1142 = vmatprep.mubr.f32.mxu0 0.0
    %v1143 = vand.u32 %v88, 4294901760
    %1144 = vmatmul.mubr.f32.gmra.mxu0 %v1143
    %v1145 = vpop.f32.mrf.mxu0
    %v1146 = vadd.f32 %v983, %v1145
    %v1147 = vpop.f32.mrf.mxu0
    %1148 = vmatprep.mubr.f32.mxu0 0.0
    %v1149 = vand.u32 %v91, 4294901760
    %1150 = vmatmul.mubr.f32.gmra.mxu0 %v1149
    %v1151 = vpop.f32.mrf.mxu0
    %v1152 = vadd.f32 %v989, %v1151
    %v1153 = vpop.f32.mrf.mxu0
    %1154 = vmatprep.mubr.f32.mxu0 0.0
    %v1155 = vand.u32 %v94, 4294901760
    %1156 = vmatmul.mubr.f32.gmra.mxu0 %v1155
    %v1157 = vpop.f32.mrf.mxu0
    %v1158 = vadd.f32 %v995, %v1157
    %v1159 = vpop.f32.mrf.mxu0
    %1160 = vmatprep.mubr.f32.mxu0 0.0
    %v1161 = vand.u32 %v97, 4294901760
    %1162 = vmatmul.mubr.f32.gmra.mxu0 %v1161
    %v1163 = vpop.f32.mrf.mxu0
    %v1164 = vadd.f32 %v1001, %v1163
    %v1165 = vpop.f32.mrf.mxu0
    %1166 = vmatprep.mubr.f32.mxu0 0.0
    %v1167 = vand.u32 %v100, 4294901760
    %1168 = vmatmul.mubr.f32.gmra.mxu0 %v1167
    %v1169 = vpop.f32.mrf.mxu0
    %v1170 = vadd.f32 %v1007, %v1169
    %v1171 = vpop.f32.mrf.mxu0
    %1172 = vmatprep.mubr.f32.mxu0 0.0
    %v1173 = vand.u32 %v103, 4294901760
    %1174 = vmatmul.mubr.f32.gmra.mxu0 %v1173
    %v1175 = vpop.f32.mrf.mxu0
    %v1176 = vadd.f32 %v1013, %v1175
    %v1177 = vpop.f32.mrf.mxu0
    %1178 = vmatprep.mubr.f32.mxu0 0.0
    %v1179 = vand.u32 %v106, 4294901760
    %1180 = vmatmul.mubr.f32.gmra.mxu0 %v1179
    %v1181 = vpop.f32.mrf.mxu0
    %v1182 = vadd.f32 %v1019, %v1181
    %v1183 = vpop.f32.mrf.mxu0
    %1184 = vmatprep.mubr.f32.mxu0 0.0
    %v1185 = vand.u32 %v109, 4294901760
    %1186 = vmatmul.mubr.f32.gmra.mxu0 %v1185
    %v1187 = vpop.f32.mrf.mxu0
    %v1188 = vadd.f32 %v1025, %v1187
    %v1189 = vpop.f32.mrf.mxu0
    %1190 = vmatprep.mubr.f32.mxu0 0.0
    %v1191 = vand.u32 %v112, 4294901760
    %1192 = vmatmul.mubr.f32.gmra.mxu0 %v1191
    %v1193 = vpop.f32.mrf.mxu0
    %v1194 = vadd.f32 %v1031, %v1193
    %v1195 = vpop.f32.mrf.mxu0
    %1196 = vmatprep.mubr.f32.mxu0 0.0
    %v1197 = vand.u32 %v115, 4294901760
    %1198 = vmatmul.mubr.f32.gmra.mxu0 %v1197
    %v1199 = vpop.f32.mrf.mxu0
    %v1200 = vadd.f32 %v1037, %v1199
    %v1201 = vpop.f32.mrf.mxu0
    %1202 = vmatprep.mubr.f32.mxu0 0.0
    %v1203 = vand.u32 %v118, 4294901760
    %1204 = vmatmul.mubr.f32.gmra.mxu0 %v1203
    %v1205 = vpop.f32.mrf.mxu0
    %v1206 = vadd.f32 %v1043, %v1205
    %v1207 = vpop.f32.mrf.mxu0
    %1208 = vmatprep.mubr.f32.mxu0 0.0
    %v1209 = vand.u32 %v121, 4294901760
    %1210 = vmatmul.mubr.f32.gmra.mxu0 %v1209
    %v1211 = vpop.f32.mrf.mxu0
    %v1212 = vadd.f32 %v1049, %v1211
    %v1213 = vpop.f32.mrf.mxu0
    %1214 = vmatprep.mubr.f32.mxu0 0.0
    %v1215 = vand.u32 %v124, 4294901760
    %1216 = vmatmul.mubr.f32.gmra.mxu0 %v1215
    %v1217 = vpop.f32.mrf.mxu0
    %v1218 = vadd.f32 %v1055, %v1217
    %v1219 = vpop.f32.mrf.mxu0
    %1220 = vmatprep.mubr.f32.mxu0 0.0
    %v1221 = vand.u32 %v127, 4294901760
    %1222 = vmatmul.mubr.f32.gmra.mxu0 %v1221
    %v1223 = vpop.f32.mrf.mxu0
    %v1224 = vadd.f32 %v1061, %v1223
    %v1225 = vpop.f32.mrf.mxu0
    %1226 = vmatprep.mubr.f32.mxu0 0.0
    %v1227 = vand.u32 %v130, 4294901760
    %1228 = vmatmul.mubr.f32.gmra.mxu0 %v1227
    %v1229 = vpop.f32.mrf.mxu0
    %v1230 = vadd.f32 %v1067, %v1229
    %v1231 = vpop.f32.mrf.mxu0
    %1232 = vmatprep.mubr.f32.mxu0 0.0
    %v1233 = vand.u32 %v133, 4294901760
    %1234 = vmatmul.mubr.f32.gmra.mxu0 %v1233
    %v1235 = vpop.f32.mrf.mxu0
    %v1236 = vadd.f32 %v1073, %v1235
    %v1237 = vpop.f32.mrf.mxu0
    %1238 = vdwg.mxu0
    %v1240 = vsel %vm86, %v70, 0
    %v1243 = vsel %vm86, %v71, 0
    %v1246 = vsel %vm86, %v72, 0
    %v1249 = vsel %vm86, %v73, 0
    %v1252 = vsel %vm86, %v74, 0
    %v1255 = vsel %vm86, %v75, 0
    %v1258 = vsel %vm86, %v76, 0
    %v1261 = vsel %vm86, %v77, 0
    %v1264 = vsel %vm86, %v78, 0
    %v1267 = vsel %vm86, %v79, 0
    %v1270 = vsel %vm86, %v80, 0
    %v1273 = vsel %vm86, %v81, 0
    %v1276 = vsel %vm86, %v82, 0
    %v1279 = vsel %vm86, %v83, 0
    %v1282 = vsel %vm86, %v84, 0
    %v1285 = vsel %vm86, %v85, 0
    %1287 = vmatprep.subr.mxu0 0.0
    %1288 = vmatpush1.msra.mxu0 0.0
    %1289 = vmatprep.subr.mxu0 0.0
    %1290 = vmatpush1.msra.mxu0 0.0
    %1291 = vmatprep.subr.mxu0 0.0
    %1292 = vmatpush1.msra.mxu0 0.0
    %1293 = vmatprep.subr.mxu0 0.0
    %1294 = vmatpush1.msra.mxu0 0.0
    %1295 = vmatprep.subr.mxu0 0.0
    %1296 = vmatpush1.msra.mxu0 0.0
    %1297 = vmatprep.subr.mxu0 0.0
    %1298 = vmatpush1.msra.mxu0 0.0
    %1299 = vmatprep.subr.mxu0 0.0
    %1300 = vmatpush1.msra.mxu0 0.0
    %1301 = vmatprep.subr.mxu0 0.0
    %1302 = vmatpush1.msra.mxu0 0.0
    %1303 = vmatprep.subr.mxu0 0.0
    %1304 = vmatpush1.msra.mxu0 0.0
    %1305 = vmatprep.subr.mxu0 0.0
    %1306 = vmatpush1.msra.mxu0 0.0
    %1307 = vmatprep.subr.mxu0 0.0
    %1308 = vmatpush1.msra.mxu0 0.0
    %1309 = vmatprep.subr.mxu0 0.0
    %1310 = vmatpush1.msra.mxu0 0.0
    %1311 = vmatprep.subr.mxu0 0.0
    %1312 = vmatpush1.msra.mxu0 0.0
    %1313 = vmatprep.subr.mxu0 0.0
    %1314 = vmatpush1.msra.mxu0 0.0
    %1315 = vmatprep.subr.mxu0 0.0
    %v1316 = vand.u32 %v53, 4294901760
    %1317 = vmatpush1.msra.mxu0 %v1316
    %1318 = vmatprep.subr.mxu0 0.0
    %v1319 = vand.u32 %v52, 4294901760
    %1320 = vmatpush1.msra.mxu0 %v1319
    %1321 = vmatprep.subr.mxu0 0.0
    %1322 = vmatpush2.msra.mxu0 0.0
    %1323 = vmatprep.subr.mxu0 0.0
    %1324 = vmatpush2.msra.mxu0 0.0
    %1325 = vmatprep.subr.mxu0 0.0
    %1326 = vmatpush2.msra.mxu0 0.0
    %1327 = vmatprep.subr.mxu0 0.0
    %1328 = vmatpush2.msra.mxu0 0.0
    %1329 = vmatprep.subr.mxu0 0.0
    %1330 = vmatpush2.msra.mxu0 0.0
    %1331 = vmatprep.subr.mxu0 0.0
    %1332 = vmatpush2.msra.mxu0 0.0
    %1333 = vmatprep.subr.mxu0 0.0
    %1334 = vmatpush2.msra.mxu0 0.0
    %1335 = vmatprep.subr.mxu0 0.0
    %1336 = vmatpush2.msra.mxu0 0.0
    %1337 = vmatprep.subr.mxu0 0.0
    %1338 = vmatpush2.msra.mxu0 0.0
    %1339 = vmatprep.subr.mxu0 0.0
    %1340 = vmatpush2.msra.mxu0 0.0
    %1341 = vmatprep.subr.mxu0 0.0
    %1342 = vmatpush2.msra.mxu0 0.0
    %1343 = vmatprep.subr.mxu0 0.0
    %1344 = vmatpush2.msra.mxu0 0.0
    %1345 = vmatprep.subr.mxu0 0.0
    %1346 = vmatpush2.msra.mxu0 0.0
    %1347 = vmatprep.subr.mxu0 0.0
    %1348 = vmatpush2.msra.mxu0 0.0
    %1349 = vmatprep.subr.mxu0 0.0
    %1350 = vmatpush2.msra.mxu0 0.0
    %1351 = vmatprep.subr.mxu0 0.0
    %1352 = vmatpush2.msra.mxu0 0.0
    %1353 = vmatprep.mubr.f32.mxu0 0.0
    %v1354 = vand.u32 %v1240, 4294901760
    %v1355 = vsub.f32 %v1240, %v1354
    %v1356 = vand.u32 %v1355, 4294901760
    %v1357 = vsub.f32 %v1355, %v1356
    %v1358 = vand.u32 %v1357, 4294901760
    %1359 = vmatmul.mubr.f32.gmra.mxu0 %v1358
    %v1360 = vpop.f32.mrf.mxu0
    %v1361 = vadd.f32 0.0, %v1360
    %v1362 = vpop.f32.mrf.mxu0
    %1363 = vmatprep.mubr.f32.mxu0 0.0
    %v1364 = vand.u32 %v1243, 4294901760
    %v1365 = vsub.f32 %v1243, %v1364
    %v1366 = vand.u32 %v1365, 4294901760
    %v1367 = vsub.f32 %v1365, %v1366
    %v1368 = vand.u32 %v1367, 4294901760
    %1369 = vmatmul.mubr.f32.gmra.mxu0 %v1368
    %v1370 = vpop.f32.mrf.mxu0
    %v1371 = vadd.f32 0.0, %v1370
    %v1372 = vpop.f32.mrf.mxu0
    %1373 = vmatprep.mubr.f32.mxu0 0.0
    %v1374 = vand.u32 %v1246, 4294901760
    %v1375 = vsub.f32 %v1246, %v1374
    %v1376 = vand.u32 %v1375, 4294901760
    %v1377 = vsub.f32 %v1375, %v1376
    %v1378 = vand.u32 %v1377, 4294901760
    %1379 = vmatmul.mubr.f32.gmra.mxu0 %v1378
    %v1380 = vpop.f32.mrf.mxu0
    %v1381 = vadd.f32 0.0, %v1380
    %v1382 = vpop.f32.mrf.mxu0
    %1383 = vmatprep.mubr.f32.mxu0 0.0
    %v1384 = vand.u32 %v1249, 4294901760
    %v1385 = vsub.f32 %v1249, %v1384
    %v1386 = vand.u32 %v1385, 4294901760
    %v1387 = vsub.f32 %v1385, %v1386
    %v1388 = vand.u32 %v1387, 4294901760
    %1389 = vmatmul.mubr.f32.gmra.mxu0 %v1388
    %v1390 = vpop.f32.mrf.mxu0
    %v1391 = vadd.f32 0.0, %v1390
    %v1392 = vpop.f32.mrf.mxu0
    %1393 = vmatprep.mubr.f32.mxu0 0.0
    %v1394 = vand.u32 %v1252, 4294901760
    %v1395 = vsub.f32 %v1252, %v1394
    %v1396 = vand.u32 %v1395, 4294901760
    %v1397 = vsub.f32 %v1395, %v1396
    %v1398 = vand.u32 %v1397, 4294901760
    %1399 = vmatmul.mubr.f32.gmra.mxu0 %v1398
    %v1400 = vpop.f32.mrf.mxu0
    %v1401 = vadd.f32 0.0, %v1400
    %v1402 = vpop.f32.mrf.mxu0
    %1403 = vmatprep.mubr.f32.mxu0 0.0
    %v1404 = vand.u32 %v1255, 4294901760
    %v1405 = vsub.f32 %v1255, %v1404
    %v1406 = vand.u32 %v1405, 4294901760
    %v1407 = vsub.f32 %v1405, %v1406
    %v1408 = vand.u32 %v1407, 4294901760
    %1409 = vmatmul.mubr.f32.gmra.mxu0 %v1408
    %v1410 = vpop.f32.mrf.mxu0
    %v1411 = vadd.f32 0.0, %v1410
    %v1412 = vpop.f32.mrf.mxu0
    %1413 = vmatprep.mubr.f32.mxu0 0.0
    %v1414 = vand.u32 %v1258, 4294901760
    %v1415 = vsub.f32 %v1258, %v1414
    %v1416 = vand.u32 %v1415, 4294901760
    %v1417 = vsub.f32 %v1415, %v1416
    %v1418 = vand.u32 %v1417, 4294901760
    %1419 = vmatmul.mubr.f32.gmra.mxu0 %v1418
    %v1420 = vpop.f32.mrf.mxu0
    %v1421 = vadd.f32 0.0, %v1420
    %v1422 = vpop.f32.mrf.mxu0
    %1423 = vmatprep.mubr.f32.mxu0 0.0
    %v1424 = vand.u32 %v1261, 4294901760
    %v1425 = vsub.f32 %v1261, %v1424
    %v1426 = vand.u32 %v1425, 4294901760
    %v1427 = vsub.f32 %v1425, %v1426
    %v1428 = vand.u32 %v1427, 4294901760
    %1429 = vmatmul.mubr.f32.gmra.mxu0 %v1428
    %v1430 = vpop.f32.mrf.mxu0
    %v1431 = vadd.f32 0.0, %v1430
    %v1432 = vpop.f32.mrf.mxu0
    %1433 = vmatprep.mubr.f32.mxu0 0.0
    %v1434 = vand.u32 %v1264, 4294901760
    %v1435 = vsub.f32 %v1264, %v1434
    %v1436 = vand.u32 %v1435, 4294901760
    %v1437 = vsub.f32 %v1435, %v1436
    %v1438 = vand.u32 %v1437, 4294901760
    %1439 = vmatmul.mubr.f32.gmra.mxu0 %v1438
    %v1440 = vpop.f32.mrf.mxu0
    %v1441 = vadd.f32 0.0, %v1440
    %v1442 = vpop.f32.mrf.mxu0
    %1443 = vmatprep.mubr.f32.mxu0 0.0
    %v1444 = vand.u32 %v1267, 4294901760
    %v1445 = vsub.f32 %v1267, %v1444
    %v1446 = vand.u32 %v1445, 4294901760
    %v1447 = vsub.f32 %v1445, %v1446
    %v1448 = vand.u32 %v1447, 4294901760
    %1449 = vmatmul.mubr.f32.gmra.mxu0 %v1448
    %v1450 = vpop.f32.mrf.mxu0
    %v1451 = vadd.f32 0.0, %v1450
    %v1452 = vpop.f32.mrf.mxu0
    %1453 = vmatprep.mubr.f32.mxu0 0.0
    %v1454 = vand.u32 %v1270, 4294901760
    %v1455 = vsub.f32 %v1270, %v1454
    %v1456 = vand.u32 %v1455, 4294901760
    %v1457 = vsub.f32 %v1455, %v1456
    %v1458 = vand.u32 %v1457, 4294901760
    %1459 = vmatmul.mubr.f32.gmra.mxu0 %v1458
    %v1460 = vpop.f32.mrf.mxu0
    %v1461 = vadd.f32 0.0, %v1460
    %v1462 = vpop.f32.mrf.mxu0
    %1463 = vmatprep.mubr.f32.mxu0 0.0
    %v1464 = vand.u32 %v1273, 4294901760
    %v1465 = vsub.f32 %v1273, %v1464
    %v1466 = vand.u32 %v1465, 4294901760
    %v1467 = vsub.f32 %v1465, %v1466
    %v1468 = vand.u32 %v1467, 4294901760
    %1469 = vmatmul.mubr.f32.gmra.mxu0 %v1468
    %v1470 = vpop.f32.mrf.mxu0
    %v1471 = vadd.f32 0.0, %v1470
    %v1472 = vpop.f32.mrf.mxu0
    %1473 = vmatprep.mubr.f32.mxu0 0.0
    %v1474 = vand.u32 %v1276, 4294901760
    %v1475 = vsub.f32 %v1276, %v1474
    %v1476 = vand.u32 %v1475, 4294901760
    %v1477 = vsub.f32 %v1475, %v1476
    %v1478 = vand.u32 %v1477, 4294901760
    %1479 = vmatmul.mubr.f32.gmra.mxu0 %v1478
    %v1480 = vpop.f32.mrf.mxu0
    %v1481 = vadd.f32 0.0, %v1480
    %v1482 = vpop.f32.mrf.mxu0
    %1483 = vmatprep.mubr.f32.mxu0 0.0
    %v1484 = vand.u32 %v1279, 4294901760
    %v1485 = vsub.f32 %v1279, %v1484
    %v1486 = vand.u32 %v1485, 4294901760
    %v1487 = vsub.f32 %v1485, %v1486
    %v1488 = vand.u32 %v1487, 4294901760
    %1489 = vmatmul.mubr.f32.gmra.mxu0 %v1488
    %v1490 = vpop.f32.mrf.mxu0
    %v1491 = vadd.f32 0.0, %v1490
    %v1492 = vpop.f32.mrf.mxu0
    %1493 = vmatprep.mubr.f32.mxu0 0.0
    %v1494 = vand.u32 %v1282, 4294901760
    %v1495 = vsub.f32 %v1282, %v1494
    %v1496 = vand.u32 %v1495, 4294901760
    %v1497 = vsub.f32 %v1495, %v1496
    %v1498 = vand.u32 %v1497, 4294901760
    %1499 = vmatmul.mubr.f32.gmra.mxu0 %v1498
    %v1500 = vpop.f32.mrf.mxu0
    %v1501 = vadd.f32 0.0, %v1500
    %v1502 = vpop.f32.mrf.mxu0
    %1503 = vmatprep.mubr.f32.mxu0 0.0
    %v1504 = vand.u32 %v1285, 4294901760
    %v1505 = vsub.f32 %v1285, %v1504
    %v1506 = vand.u32 %v1505, 4294901760
    %v1507 = vsub.f32 %v1505, %v1506
    %v1508 = vand.u32 %v1507, 4294901760
    %1509 = vmatmul.mubr.f32.gmra.mxu0 %v1508
    %v1510 = vpop.f32.mrf.mxu0
    %v1511 = vadd.f32 0.0, %v1510
    %v1512 = vpop.f32.mrf.mxu0
    %1513 = vdwg.mxu0
    %1514 = vmatprep.subr.mxu0 0.0
    %1515 = vmatpush1.msra.mxu0 0.0
    %1516 = vmatprep.subr.mxu0 0.0
    %1517 = vmatpush1.msra.mxu0 0.0
    %1518 = vmatprep.subr.mxu0 0.0
    %1519 = vmatpush1.msra.mxu0 0.0
    %1520 = vmatprep.subr.mxu0 0.0
    %1521 = vmatpush1.msra.mxu0 0.0
    %1522 = vmatprep.subr.mxu0 0.0
    %1523 = vmatpush1.msra.mxu0 0.0
    %1524 = vmatprep.subr.mxu0 0.0
    %1525 = vmatpush1.msra.mxu0 0.0
    %1526 = vmatprep.subr.mxu0 0.0
    %1527 = vmatpush1.msra.mxu0 0.0
    %1528 = vmatprep.subr.mxu0 0.0
    %1529 = vmatpush1.msra.mxu0 0.0
    %1530 = vmatprep.subr.mxu0 0.0
    %1531 = vmatpush1.msra.mxu0 0.0
    %1532 = vmatprep.subr.mxu0 0.0
    %1533 = vmatpush1.msra.mxu0 0.0
    %1534 = vmatprep.subr.mxu0 0.0
    %1535 = vmatpush1.msra.mxu0 0.0
    %1536 = vmatprep.subr.mxu0 0.0
    %1537 = vmatpush1.msra.mxu0 0.0
    %1538 = vmatprep.subr.mxu0 0.0
    %1539 = vmatpush1.msra.mxu0 0.0
    %1540 = vmatprep.subr.mxu0 0.0
    %1541 = vmatpush1.msra.mxu0 0.0
    %1542 = vmatprep.subr.mxu0 0.0
    %v1543 = vand.u32 %v53, 4294901760
    %v1544 = vsub.f32 %v53, %v1543
    %v1545 = vand.u32 %v1544, 4294901760
    %v1546 = vsub.f32 %v1544, %v1545
    %v1547 = vand.u32 %v1546, 4294901760
    %1548 = vmatpush1.msra.mxu0 %v1547
    %1549 = vmatprep.subr.mxu0 0.0
    %v1550 = vand.u32 %v52, 4294901760
    %v1551 = vsub.f32 %v52, %v1550
    %v1552 = vand.u32 %v1551, 4294901760
    %v1553 = vsub.f32 %v1551, %v1552
    %v1554 = vand.u32 %v1553, 4294901760
    %1555 = vmatpush1.msra.mxu0 %v1554
    %1556 = vmatprep.subr.mxu0 0.0
    %1557 = vmatpush2.msra.mxu0 0.0
    %1558 = vmatprep.subr.mxu0 0.0
    %1559 = vmatpush2.msra.mxu0 0.0
    %1560 = vmatprep.subr.mxu0 0.0
    %1561 = vmatpush2.msra.mxu0 0.0
    %1562 = vmatprep.subr.mxu0 0.0
    %1563 = vmatpush2.msra.mxu0 0.0
    %1564 = vmatprep.subr.mxu0 0.0
    %1565 = vmatpush2.msra.mxu0 0.0
    %1566 = vmatprep.subr.mxu0 0.0
    %1567 = vmatpush2.msra.mxu0 0.0
    %1568 = vmatprep.subr.mxu0 0.0
    %1569 = vmatpush2.msra.mxu0 0.0
    %1570 = vmatprep.subr.mxu0 0.0
    %1571 = vmatpush2.msra.mxu0 0.0
    %1572 = vmatprep.subr.mxu0 0.0
    %1573 = vmatpush2.msra.mxu0 0.0
    %1574 = vmatprep.subr.mxu0 0.0
    %1575 = vmatpush2.msra.mxu0 0.0
    %1576 = vmatprep.subr.mxu0 0.0
    %1577 = vmatpush2.msra.mxu0 0.0
    %1578 = vmatprep.subr.mxu0 0.0
    %1579 = vmatpush2.msra.mxu0 0.0
    %1580 = vmatprep.subr.mxu0 0.0
    %1581 = vmatpush2.msra.mxu0 0.0
    %1582 = vmatprep.subr.mxu0 0.0
    %1583 = vmatpush2.msra.mxu0 0.0
    %1584 = vmatprep.subr.mxu0 0.0
    %1585 = vmatpush2.msra.mxu0 0.0
    %1586 = vmatprep.subr.mxu0 0.0
    %1587 = vmatpush2.msra.mxu0 0.0
    %1588 = vmatprep.mubr.f32.mxu0 0.0
    %v1589 = vand.u32 %v1240, 4294901760
    %1590 = vmatmul.mubr.f32.gmra.mxu0 %v1589
    %v1591 = vpop.f32.mrf.mxu0
    %v1592 = vadd.f32 %v1361, %v1591
    %v1593 = vpop.f32.mrf.mxu0
    %1594 = vmatprep.mubr.f32.mxu0 0.0
    %v1595 = vand.u32 %v1243, 4294901760
    %1596 = vmatmul.mubr.f32.gmra.mxu0 %v1595
    %v1597 = vpop.f32.mrf.mxu0
    %v1598 = vadd.f32 %v1371, %v1597
    %v1599 = vpop.f32.mrf.mxu0
    %1600 = vmatprep.mubr.f32.mxu0 0.0
    %v1601 = vand.u32 %v1246, 4294901760
    %1602 = vmatmul.mubr.f32.gmra.mxu0 %v1601
    %v1603 = vpop.f32.mrf.mxu0
    %v1604 = vadd.f32 %v1381, %v1603
    %v1605 = vpop.f32.mrf.mxu0
    %1606 = vmatprep.mubr.f32.mxu0 0.0
    %v1607 = vand.u32 %v1249, 4294901760
    %1608 = vmatmul.mubr.f32.gmra.mxu0 %v1607
    %v1609 = vpop.f32.mrf.mxu0
    %v1610 = vadd.f32 %v1391, %v1609
    %v1611 = vpop.f32.mrf.mxu0
    %1612 = vmatprep.mubr.f32.mxu0 0.0
    %v1613 = vand.u32 %v1252, 4294901760
    %1614 = vmatmul.mubr.f32.gmra.mxu0 %v1613
    %v1615 = vpop.f32.mrf.mxu0
    %v1616 = vadd.f32 %v1401, %v1615
    %v1617 = vpop.f32.mrf.mxu0
    %1618 = vmatprep.mubr.f32.mxu0 0.0
    %v1619 = vand.u32 %v1255, 4294901760
    %1620 = vmatmul.mubr.f32.gmra.mxu0 %v1619
    %v1621 = vpop.f32.mrf.mxu0
    %v1622 = vadd.f32 %v1411, %v1621
    %v1623 = vpop.f32.mrf.mxu0
    %1624 = vmatprep.mubr.f32.mxu0 0.0
    %v1625 = vand.u32 %v1258, 4294901760
    %1626 = vmatmul.mubr.f32.gmra.mxu0 %v1625
    %v1627 = vpop.f32.mrf.mxu0
    %v1628 = vadd.f32 %v1421, %v1627
    %v1629 = vpop.f32.mrf.mxu0
    %1630 = vmatprep.mubr.f32.mxu0 0.0
    %v1631 = vand.u32 %v1261, 4294901760
    %1632 = vmatmul.mubr.f32.gmra.mxu0 %v1631
    %v1633 = vpop.f32.mrf.mxu0
    %v1634 = vadd.f32 %v1431, %v1633
    %v1635 = vpop.f32.mrf.mxu0
    %1636 = vmatprep.mubr.f32.mxu0 0.0
    %v1637 = vand.u32 %v1264, 4294901760
    %1638 = vmatmul.mubr.f32.gmra.mxu0 %v1637
    %v1639 = vpop.f32.mrf.mxu0
    %v1640 = vadd.f32 %v1441, %v1639
    %v1641 = vpop.f32.mrf.mxu0
    %1642 = vmatprep.mubr.f32.mxu0 0.0
    %v1643 = vand.u32 %v1267, 4294901760
    %1644 = vmatmul.mubr.f32.gmra.mxu0 %v1643
    %v1645 = vpop.f32.mrf.mxu0
    %v1646 = vadd.f32 %v1451, %v1645
    %v1647 = vpop.f32.mrf.mxu0
    %1648 = vmatprep.mubr.f32.mxu0 0.0
    %v1649 = vand.u32 %v1270, 4294901760
    %1650 = vmatmul.mubr.f32.gmra.mxu0 %v1649
    %v1651 = vpop.f32.mrf.mxu0
    %v1652 = vadd.f32 %v1461, %v1651
    %v1653 = vpop.f32.mrf.mxu0
    %1654 = vmatprep.mubr.f32.mxu0 0.0
    %v1655 = vand.u32 %v1273, 4294901760
    %1656 = vmatmul.mubr.f32.gmra.mxu0 %v1655
    %v1657 = vpop.f32.mrf.mxu0
    %v1658 = vadd.f32 %v1471, %v1657
    %v1659 = vpop.f32.mrf.mxu0
    %1660 = vmatprep.mubr.f32.mxu0 0.0
    %v1661 = vand.u32 %v1276, 4294901760
    %1662 = vmatmul.mubr.f32.gmra.mxu0 %v1661
    %v1663 = vpop.f32.mrf.mxu0
    %v1664 = vadd.f32 %v1481, %v1663
    %v1665 = vpop.f32.mrf.mxu0
    %1666 = vmatprep.mubr.f32.mxu0 0.0
    %v1667 = vand.u32 %v1279, 4294901760
    %1668 = vmatmul.mubr.f32.gmra.mxu0 %v1667
    %v1669 = vpop.f32.mrf.mxu0
    %v1670 = vadd.f32 %v1491, %v1669
    %v1671 = vpop.f32.mrf.mxu0
    %1672 = vmatprep.mubr.f32.mxu0 0.0
    %v1673 = vand.u32 %v1282, 4294901760
    %1674 = vmatmul.mubr.f32.gmra.mxu0 %v1673
    %v1675 = vpop.f32.mrf.mxu0
    %v1676 = vadd.f32 %v1501, %v1675
    %v1677 = vpop.f32.mrf.mxu0
    %1678 = vmatprep.mubr.f32.mxu0 0.0
    %v1679 = vand.u32 %v1285, 4294901760
    %1680 = vmatmul.mubr.f32.gmra.mxu0 %v1679
    %v1681 = vpop.f32.mrf.mxu0
    %v1682 = vadd.f32 %v1511, %v1681
    %v1683 = vpop.f32.mrf.mxu0
    %1684 = vdwg.mxu0
    %1685 = vmatprep.subr.mxu0 0.0
    %1686 = vmatpush1.msra.mxu0 0.0
    %1687 = vmatprep.subr.mxu0 0.0
    %1688 = vmatpush1.msra.mxu0 0.0
    %1689 = vmatprep.subr.mxu0 0.0
    %1690 = vmatpush1.msra.mxu0 0.0
    %1691 = vmatprep.subr.mxu0 0.0
    %1692 = vmatpush1.msra.mxu0 0.0
    %1693 = vmatprep.subr.mxu0 0.0
    %1694 = vmatpush1.msra.mxu0 0.0
    %1695 = vmatprep.subr.mxu0 0.0
    %1696 = vmatpush1.msra.mxu0 0.0
    %1697 = vmatprep.subr.mxu0 0.0
    %1698 = vmatpush1.msra.mxu0 0.0
    %1699 = vmatprep.subr.mxu0 0.0
    %1700 = vmatpush1.msra.mxu0 0.0
    %1701 = vmatprep.subr.mxu0 0.0
    %1702 = vmatpush1.msra.mxu0 0.0
    %1703 = vmatprep.subr.mxu0 0.0
    %1704 = vmatpush1.msra.mxu0 0.0
    %1705 = vmatprep.subr.mxu0 0.0
    %1706 = vmatpush1.msra.mxu0 0.0
    %1707 = vmatprep.subr.mxu0 0.0
    %1708 = vmatpush1.msra.mxu0 0.0
    %1709 = vmatprep.subr.mxu0 0.0
    %1710 = vmatpush1.msra.mxu0 0.0
    %1711 = vmatprep.subr.mxu0 0.0
    %1712 = vmatpush1.msra.mxu0 0.0
    %1713 = vmatprep.subr.mxu0 0.0
    %v1714 = vand.u32 %v53, 4294901760
    %v1715 = vsub.f32 %v53, %v1714
    %1716 = vmatpush1.msra.mxu0 %v1715
    %1717 = vmatprep.subr.mxu0 0.0
    %v1718 = vand.u32 %v52, 4294901760
    %v1719 = vsub.f32 %v52, %v1718
    %1720 = vmatpush1.msra.mxu0 %v1719
    %1721 = vmatprep.subr.mxu0 0.0
    %1722 = vmatpush2.msra.mxu0 0.0
    %1723 = vmatprep.subr.mxu0 0.0
    %1724 = vmatpush2.msra.mxu0 0.0
    %1725 = vmatprep.subr.mxu0 0.0
    %1726 = vmatpush2.msra.mxu0 0.0
    %1727 = vmatprep.subr.mxu0 0.0
    %1728 = vmatpush2.msra.mxu0 0.0
    %1729 = vmatprep.subr.mxu0 0.0
    %1730 = vmatpush2.msra.mxu0 0.0
    %1731 = vmatprep.subr.mxu0 0.0
    %1732 = vmatpush2.msra.mxu0 0.0
    %1733 = vmatprep.subr.mxu0 0.0
    %1734 = vmatpush2.msra.mxu0 0.0
    %1735 = vmatprep.subr.mxu0 0.0
    %1736 = vmatpush2.msra.mxu0 0.0
    %1737 = vmatprep.subr.mxu0 0.0
    %1738 = vmatpush2.msra.mxu0 0.0
    %1739 = vmatprep.subr.mxu0 0.0
    %1740 = vmatpush2.msra.mxu0 0.0
    %1741 = vmatprep.subr.mxu0 0.0
    %1742 = vmatpush2.msra.mxu0 0.0
    %1743 = vmatprep.subr.mxu0 0.0
    %1744 = vmatpush2.msra.mxu0 0.0
    %1745 = vmatprep.subr.mxu0 0.0
    %1746 = vmatpush2.msra.mxu0 0.0
    %1747 = vmatprep.subr.mxu0 0.0
    %1748 = vmatpush2.msra.mxu0 0.0
    %1749 = vmatprep.subr.mxu0 0.0
    %1750 = vmatpush2.msra.mxu0 0.0
    %1751 = vmatprep.subr.mxu0 0.0
    %1752 = vmatpush2.msra.mxu0 0.0
    %1753 = vmatprep.mubr.f32.mxu0 0.0
    %v1754 = vand.u32 %v1240, 4294901760
    %v1755 = vsub.f32 %v1240, %v1754
    %1756 = vmatmul.mubr.f32.gmra.mxu0 %v1755
    %v1757 = vpop.f32.mrf.mxu0
    %v1758 = vadd.f32 %v1592, %v1757
    %v1759 = vpop.f32.mrf.mxu0
    %1760 = vmatprep.mubr.f32.mxu0 0.0
    %v1761 = vand.u32 %v1243, 4294901760
    %v1762 = vsub.f32 %v1243, %v1761
    %1763 = vmatmul.mubr.f32.gmra.mxu0 %v1762
    %v1764 = vpop.f32.mrf.mxu0
    %v1765 = vadd.f32 %v1598, %v1764
    %v1766 = vpop.f32.mrf.mxu0
    %1767 = vmatprep.mubr.f32.mxu0 0.0
    %v1768 = vand.u32 %v1246, 4294901760
    %v1769 = vsub.f32 %v1246, %v1768
    %1770 = vmatmul.mubr.f32.gmra.mxu0 %v1769
    %v1771 = vpop.f32.mrf.mxu0
    %v1772 = vadd.f32 %v1604, %v1771
    %v1773 = vpop.f32.mrf.mxu0
    %1774 = vmatprep.mubr.f32.mxu0 0.0
    %v1775 = vand.u32 %v1249, 4294901760
    %v1776 = vsub.f32 %v1249, %v1775
    %1777 = vmatmul.mubr.f32.gmra.mxu0 %v1776
    %v1778 = vpop.f32.mrf.mxu0
    %v1779 = vadd.f32 %v1610, %v1778
    %v1780 = vpop.f32.mrf.mxu0
    %1781 = vmatprep.mubr.f32.mxu0 0.0
    %v1782 = vand.u32 %v1252, 4294901760
    %v1783 = vsub.f32 %v1252, %v1782
    %1784 = vmatmul.mubr.f32.gmra.mxu0 %v1783
    %v1785 = vpop.f32.mrf.mxu0
    %v1786 = vadd.f32 %v1616, %v1785
    %v1787 = vpop.f32.mrf.mxu0
    %1788 = vmatprep.mubr.f32.mxu0 0.0
    %v1789 = vand.u32 %v1255, 4294901760
    %v1790 = vsub.f32 %v1255, %v1789
    %1791 = vmatmul.mubr.f32.gmra.mxu0 %v1790
    %v1792 = vpop.f32.mrf.mxu0
    %v1793 = vadd.f32 %v1622, %v1792
    %v1794 = vpop.f32.mrf.mxu0
    %1795 = vmatprep.mubr.f32.mxu0 0.0
    %v1796 = vand.u32 %v1258, 4294901760
    %v1797 = vsub.f32 %v1258, %v1796
    %1798 = vmatmul.mubr.f32.gmra.mxu0 %v1797
    %v1799 = vpop.f32.mrf.mxu0
    %v1800 = vadd.f32 %v1628, %v1799
    %v1801 = vpop.f32.mrf.mxu0
    %1802 = vmatprep.mubr.f32.mxu0 0.0
    %v1803 = vand.u32 %v1261, 4294901760
    %v1804 = vsub.f32 %v1261, %v1803
    %1805 = vmatmul.mubr.f32.gmra.mxu0 %v1804
    %v1806 = vpop.f32.mrf.mxu0
    %v1807 = vadd.f32 %v1634, %v1806
    %v1808 = vpop.f32.mrf.mxu0
    %1809 = vmatprep.mubr.f32.mxu0 0.0
    %v1810 = vand.u32 %v1264, 4294901760
    %v1811 = vsub.f32 %v1264, %v1810
    %1812 = vmatmul.mubr.f32.gmra.mxu0 %v1811
    %v1813 = vpop.f32.mrf.mxu0
    %v1814 = vadd.f32 %v1640, %v1813
    %v1815 = vpop.f32.mrf.mxu0
    %1816 = vmatprep.mubr.f32.mxu0 0.0
    %v1817 = vand.u32 %v1267, 4294901760
    %v1818 = vsub.f32 %v1267, %v1817
    %1819 = vmatmul.mubr.f32.gmra.mxu0 %v1818
    %v1820 = vpop.f32.mrf.mxu0
    %v1821 = vadd.f32 %v1646, %v1820
    %v1822 = vpop.f32.mrf.mxu0
    %1823 = vmatprep.mubr.f32.mxu0 0.0
    %v1824 = vand.u32 %v1270, 4294901760
    %v1825 = vsub.f32 %v1270, %v1824
    %1826 = vmatmul.mubr.f32.gmra.mxu0 %v1825
    %v1827 = vpop.f32.mrf.mxu0
    %v1828 = vadd.f32 %v1652, %v1827
    %v1829 = vpop.f32.mrf.mxu0
    %1830 = vmatprep.mubr.f32.mxu0 0.0
    %v1831 = vand.u32 %v1273, 4294901760
    %v1832 = vsub.f32 %v1273, %v1831
    %1833 = vmatmul.mubr.f32.gmra.mxu0 %v1832
    %v1834 = vpop.f32.mrf.mxu0
    %v1835 = vadd.f32 %v1658, %v1834
    %v1836 = vpop.f32.mrf.mxu0
    %1837 = vmatprep.mubr.f32.mxu0 0.0
    %v1838 = vand.u32 %v1276, 4294901760
    %v1839 = vsub.f32 %v1276, %v1838
    %1840 = vmatmul.mubr.f32.gmra.mxu0 %v1839
    %v1841 = vpop.f32.mrf.mxu0
    %v1842 = vadd.f32 %v1664, %v1841
    %v1843 = vpop.f32.mrf.mxu0
    %1844 = vmatprep.mubr.f32.mxu0 0.0
    %v1845 = vand.u32 %v1279, 4294901760
    %v1846 = vsub.f32 %v1279, %v1845
    %1847 = vmatmul.mubr.f32.gmra.mxu0 %v1846
    %v1848 = vpop.f32.mrf.mxu0
    %v1849 = vadd.f32 %v1670, %v1848
    %v1850 = vpop.f32.mrf.mxu0
    %1851 = vmatprep.mubr.f32.mxu0 0.0
    %v1852 = vand.u32 %v1282, 4294901760
    %v1853 = vsub.f32 %v1282, %v1852
    %1854 = vmatmul.mubr.f32.gmra.mxu0 %v1853
    %v1855 = vpop.f32.mrf.mxu0
    %v1856 = vadd.f32 %v1676, %v1855
    %v1857 = vpop.f32.mrf.mxu0
    %1858 = vmatprep.mubr.f32.mxu0 0.0
    %v1859 = vand.u32 %v1285, 4294901760
    %v1860 = vsub.f32 %v1285, %v1859
    %1861 = vmatmul.mubr.f32.gmra.mxu0 %v1860
    %v1862 = vpop.f32.mrf.mxu0
    %v1863 = vadd.f32 %v1682, %v1862
    %v1864 = vpop.f32.mrf.mxu0
    %1865 = vdwg.mxu0
    %1866 = vmatprep.subr.mxu0 0.0
    %1867 = vmatpush1.msra.mxu0 0.0
    %1868 = vmatprep.subr.mxu0 0.0
    %1869 = vmatpush1.msra.mxu0 0.0
    %1870 = vmatprep.subr.mxu0 0.0
    %1871 = vmatpush1.msra.mxu0 0.0
    %1872 = vmatprep.subr.mxu0 0.0
    %1873 = vmatpush1.msra.mxu0 0.0
    %1874 = vmatprep.subr.mxu0 0.0
    %1875 = vmatpush1.msra.mxu0 0.0
    %1876 = vmatprep.subr.mxu0 0.0
    %1877 = vmatpush1.msra.mxu0 0.0
    %1878 = vmatprep.subr.mxu0 0.0
    %1879 = vmatpush1.msra.mxu0 0.0
    %1880 = vmatprep.subr.mxu0 0.0
    %1881 = vmatpush1.msra.mxu0 0.0
    %1882 = vmatprep.subr.mxu0 0.0
    %1883 = vmatpush1.msra.mxu0 0.0
    %1884 = vmatprep.subr.mxu0 0.0
    %1885 = vmatpush1.msra.mxu0 0.0
    %1886 = vmatprep.subr.mxu0 0.0
    %1887 = vmatpush1.msra.mxu0 0.0
    %1888 = vmatprep.subr.mxu0 0.0
    %1889 = vmatpush1.msra.mxu0 0.0
    %1890 = vmatprep.subr.mxu0 0.0
    %1891 = vmatpush1.msra.mxu0 0.0
    %1892 = vmatprep.subr.mxu0 0.0
    %1893 = vmatpush1.msra.mxu0 0.0
    %1894 = vmatprep.subr.mxu0 0.0
    %v1895 = vand.u32 %v53, 4294901760
    %1896 = vmatpush1.msra.mxu0 %v1895
    %1897 = vmatprep.subr.mxu0 0.0
    %v1898 = vand.u32 %v52, 4294901760
    %1899 = vmatpush1.msra.mxu0 %v1898
    %1900 = vmatprep.subr.mxu0 0.0
    %1901 = vmatpush2.msra.mxu0 0.0
    %1902 = vmatprep.subr.mxu0 0.0
    %1903 = vmatpush2.msra.mxu0 0.0
    %1904 = vmatprep.subr.mxu0 0.0
    %1905 = vmatpush2.msra.mxu0 0.0
    %1906 = vmatprep.subr.mxu0 0.0
    %1907 = vmatpush2.msra.mxu0 0.0
    %1908 = vmatprep.subr.mxu0 0.0
    %1909 = vmatpush2.msra.mxu0 0.0
    %1910 = vmatprep.subr.mxu0 0.0
    %1911 = vmatpush2.msra.mxu0 0.0
    %1912 = vmatprep.subr.mxu0 0.0
    %1913 = vmatpush2.msra.mxu0 0.0
    %1914 = vmatprep.subr.mxu0 0.0
    %1915 = vmatpush2.msra.mxu0 0.0
    %1916 = vmatprep.subr.mxu0 0.0
    %1917 = vmatpush2.msra.mxu0 0.0
    %1918 = vmatprep.subr.mxu0 0.0
    %1919 = vmatpush2.msra.mxu0 0.0
    %1920 = vmatprep.subr.mxu0 0.0
    %1921 = vmatpush2.msra.mxu0 0.0
    %1922 = vmatprep.subr.mxu0 0.0
    %1923 = vmatpush2.msra.mxu0 0.0
    %1924 = vmatprep.subr.mxu0 0.0
    %1925 = vmatpush2.msra.mxu0 0.0
    %1926 = vmatprep.subr.mxu0 0.0
    %1927 = vmatpush2.msra.mxu0 0.0
    %1928 = vmatprep.subr.mxu0 0.0
    %1929 = vmatpush2.msra.mxu0 0.0
    %1930 = vmatprep.subr.mxu0 0.0
    %1931 = vmatpush2.msra.mxu0 0.0
    %1932 = vmatprep.mubr.f32.mxu0 0.0
    %v1933 = vand.u32 %v1240, 4294901760
    %v1934 = vsub.f32 %v1240, %v1933
    %v1935 = vand.u32 %v1934, 4294901760
    %1936 = vmatmul.mubr.f32.gmra.mxu0 %v1935
    %v1937 = vpop.f32.mrf.mxu0
    %v1938 = vadd.f32 %v1758, %v1937
    %v1939 = vpop.f32.mrf.mxu0
    %1940 = vmatprep.mubr.f32.mxu0 0.0
    %v1941 = vand.u32 %v1243, 4294901760
    %v1942 = vsub.f32 %v1243, %v1941
    %v1943 = vand.u32 %v1942, 4294901760
    %1944 = vmatmul.mubr.f32.gmra.mxu0 %v1943
    %v1945 = vpop.f32.mrf.mxu0
    %v1946 = vadd.f32 %v1765, %v1945
    %v1947 = vpop.f32.mrf.mxu0
    %1948 = vmatprep.mubr.f32.mxu0 0.0
    %v1949 = vand.u32 %v1246, 4294901760
    %v1950 = vsub.f32 %v1246, %v1949
    %v1951 = vand.u32 %v1950, 4294901760
    %1952 = vmatmul.mubr.f32.gmra.mxu0 %v1951
    %v1953 = vpop.f32.mrf.mxu0
    %v1954 = vadd.f32 %v1772, %v1953
    %v1955 = vpop.f32.mrf.mxu0
    %1956 = vmatprep.mubr.f32.mxu0 0.0
    %v1957 = vand.u32 %v1249, 4294901760
    %v1958 = vsub.f32 %v1249, %v1957
    %v1959 = vand.u32 %v1958, 4294901760
    %1960 = vmatmul.mubr.f32.gmra.mxu0 %v1959
    %v1961 = vpop.f32.mrf.mxu0
    %v1962 = vadd.f32 %v1779, %v1961
    %v1963 = vpop.f32.mrf.mxu0
    %1964 = vmatprep.mubr.f32.mxu0 0.0
    %v1965 = vand.u32 %v1252, 4294901760
    %v1966 = vsub.f32 %v1252, %v1965
    %v1967 = vand.u32 %v1966, 4294901760
    %1968 = vmatmul.mubr.f32.gmra.mxu0 %v1967
    %v1969 = vpop.f32.mrf.mxu0
    %v1970 = vadd.f32 %v1786, %v1969
    %v1971 = vpop.f32.mrf.mxu0
    %1972 = vmatprep.mubr.f32.mxu0 0.0
    %v1973 = vand.u32 %v1255, 4294901760
    %v1974 = vsub.f32 %v1255, %v1973
    %v1975 = vand.u32 %v1974, 4294901760
    %1976 = vmatmul.mubr.f32.gmra.mxu0 %v1975
    %v1977 = vpop.f32.mrf.mxu0
    %v1978 = vadd.f32 %v1793, %v1977
    %v1979 = vpop.f32.mrf.mxu0
    %1980 = vmatprep.mubr.f32.mxu0 0.0
    %v1981 = vand.u32 %v1258, 4294901760
    %v1982 = vsub.f32 %v1258, %v1981
    %v1983 = vand.u32 %v1982, 4294901760
    %1984 = vmatmul.mubr.f32.gmra.mxu0 %v1983
    %v1985 = vpop.f32.mrf.mxu0
    %v1986 = vadd.f32 %v1800, %v1985
    %v1987 = vpop.f32.mrf.mxu0
    %1988 = vmatprep.mubr.f32.mxu0 0.0
    %v1989 = vand.u32 %v1261, 4294901760
    %v1990 = vsub.f32 %v1261, %v1989
    %v1991 = vand.u32 %v1990, 4294901760
    %1992 = vmatmul.mubr.f32.gmra.mxu0 %v1991
    %v1993 = vpop.f32.mrf.mxu0
    %v1994 = vadd.f32 %v1807, %v1993
    %v1995 = vpop.f32.mrf.mxu0
    %1996 = vmatprep.mubr.f32.mxu0 0.0
    %v1997 = vand.u32 %v1264, 4294901760
    %v1998 = vsub.f32 %v1264, %v1997
    %v1999 = vand.u32 %v1998, 4294901760
    %2000 = vmatmul.mubr.f32.gmra.mxu0 %v1999
    %v2001 = vpop.f32.mrf.mxu0
    %v2002 = vadd.f32 %v1814, %v2001
    %v2003 = vpop.f32.mrf.mxu0
    %2004 = vmatprep.mubr.f32.mxu0 0.0
    %v2005 = vand.u32 %v1267, 4294901760
    %v2006 = vsub.f32 %v1267, %v2005
    %v2007 = vand.u32 %v2006, 4294901760
    %2008 = vmatmul.mubr.f32.gmra.mxu0 %v2007
    %v2009 = vpop.f32.mrf.mxu0
    %v2010 = vadd.f32 %v1821, %v2009
    %v2011 = vpop.f32.mrf.mxu0
    %2012 = vmatprep.mubr.f32.mxu0 0.0
    %v2013 = vand.u32 %v1270, 4294901760
    %v2014 = vsub.f32 %v1270, %v2013
    %v2015 = vand.u32 %v2014, 4294901760
    %2016 = vmatmul.mubr.f32.gmra.mxu0 %v2015
    %v2017 = vpop.f32.mrf.mxu0
    %v2018 = vadd.f32 %v1828, %v2017
    %v2019 = vpop.f32.mrf.mxu0
    %2020 = vmatprep.mubr.f32.mxu0 0.0
    %v2021 = vand.u32 %v1273, 4294901760
    %v2022 = vsub.f32 %v1273, %v2021
    %v2023 = vand.u32 %v2022, 4294901760
    %2024 = vmatmul.mubr.f32.gmra.mxu0 %v2023
    %v2025 = vpop.f32.mrf.mxu0
    %v2026 = vadd.f32 %v1835, %v2025
    %v2027 = vpop.f32.mrf.mxu0
    %2028 = vmatprep.mubr.f32.mxu0 0.0
    %v2029 = vand.u32 %v1276, 4294901760
    %v2030 = vsub.f32 %v1276, %v2029
    %v2031 = vand.u32 %v2030, 4294901760
    %2032 = vmatmul.mubr.f32.gmra.mxu0 %v2031
    %v2033 = vpop.f32.mrf.mxu0
    %v2034 = vadd.f32 %v1842, %v2033
    %v2035 = vpop.f32.mrf.mxu0
    %2036 = vmatprep.mubr.f32.mxu0 0.0
    %v2037 = vand.u32 %v1279, 4294901760
    %v2038 = vsub.f32 %v1279, %v2037
    %v2039 = vand.u32 %v2038, 4294901760
    %2040 = vmatmul.mubr.f32.gmra.mxu0 %v2039
    %v2041 = vpop.f32.mrf.mxu0
    %v2042 = vadd.f32 %v1849, %v2041
    %v2043 = vpop.f32.mrf.mxu0
    %2044 = vmatprep.mubr.f32.mxu0 0.0
    %v2045 = vand.u32 %v1282, 4294901760
    %v2046 = vsub.f32 %v1282, %v2045
    %v2047 = vand.u32 %v2046, 4294901760
    %2048 = vmatmul.mubr.f32.gmra.mxu0 %v2047
    %v2049 = vpop.f32.mrf.mxu0
    %v2050 = vadd.f32 %v1856, %v2049
    %v2051 = vpop.f32.mrf.mxu0
    %2052 = vmatprep.mubr.f32.mxu0 0.0
    %v2053 = vand.u32 %v1285, 4294901760
    %v2054 = vsub.f32 %v1285, %v2053
    %v2055 = vand.u32 %v2054, 4294901760
    %2056 = vmatmul.mubr.f32.gmra.mxu0 %v2055
    %v2057 = vpop.f32.mrf.mxu0
    %v2058 = vadd.f32 %v1863, %v2057
    %v2059 = vpop.f32.mrf.mxu0
    %2060 = vdwg.mxu0
    %2061 = vmatprep.subr.mxu0 0.0
    %2062 = vmatpush1.msra.mxu0 0.0
    %2063 = vmatprep.subr.mxu0 0.0
    %2064 = vmatpush1.msra.mxu0 0.0
    %2065 = vmatprep.subr.mxu0 0.0
    %2066 = vmatpush1.msra.mxu0 0.0
    %2067 = vmatprep.subr.mxu0 0.0
    %2068 = vmatpush1.msra.mxu0 0.0
    %2069 = vmatprep.subr.mxu0 0.0
    %2070 = vmatpush1.msra.mxu0 0.0
    %2071 = vmatprep.subr.mxu0 0.0
    %2072 = vmatpush1.msra.mxu0 0.0
    %2073 = vmatprep.subr.mxu0 0.0
    %2074 = vmatpush1.msra.mxu0 0.0
    %2075 = vmatprep.subr.mxu0 0.0
    %2076 = vmatpush1.msra.mxu0 0.0
    %2077 = vmatprep.subr.mxu0 0.0
    %2078 = vmatpush1.msra.mxu0 0.0
    %2079 = vmatprep.subr.mxu0 0.0
    %2080 = vmatpush1.msra.mxu0 0.0
    %2081 = vmatprep.subr.mxu0 0.0
    %2082 = vmatpush1.msra.mxu0 0.0
    %2083 = vmatprep.subr.mxu0 0.0
    %2084 = vmatpush1.msra.mxu0 0.0
    %2085 = vmatprep.subr.mxu0 0.0
    %2086 = vmatpush1.msra.mxu0 0.0
    %2087 = vmatprep.subr.mxu0 0.0
    %2088 = vmatpush1.msra.mxu0 0.0
    %2089 = vmatprep.subr.mxu0 0.0
    %v2090 = vand.u32 %v53, 4294901760
    %v2091 = vsub.f32 %v53, %v2090
    %v2092 = vand.u32 %v2091, 4294901760
    %2093 = vmatpush1.msra.mxu0 %v2092
    %2094 = vmatprep.subr.mxu0 0.0
    %v2095 = vand.u32 %v52, 4294901760
    %v2096 = vsub.f32 %v52, %v2095
    %v2097 = vand.u32 %v2096, 4294901760
    %2098 = vmatpush1.msra.mxu0 %v2097
    %2099 = vmatprep.subr.mxu0 0.0
    %2100 = vmatpush2.msra.mxu0 0.0
    %2101 = vmatprep.subr.mxu0 0.0
    %2102 = vmatpush2.msra.mxu0 0.0
    %2103 = vmatprep.subr.mxu0 0.0
    %2104 = vmatpush2.msra.mxu0 0.0
    %2105 = vmatprep.subr.mxu0 0.0
    %2106 = vmatpush2.msra.mxu0 0.0
    %2107 = vmatprep.subr.mxu0 0.0
    %2108 = vmatpush2.msra.mxu0 0.0
    %2109 = vmatprep.subr.mxu0 0.0
    %2110 = vmatpush2.msra.mxu0 0.0
    %2111 = vmatprep.subr.mxu0 0.0
    %2112 = vmatpush2.msra.mxu0 0.0
    %2113 = vmatprep.subr.mxu0 0.0
    %2114 = vmatpush2.msra.mxu0 0.0
    %2115 = vmatprep.subr.mxu0 0.0
    %2116 = vmatpush2.msra.mxu0 0.0
    %2117 = vmatprep.subr.mxu0 0.0
    %2118 = vmatpush2.msra.mxu0 0.0
    %2119 = vmatprep.subr.mxu0 0.0
    %2120 = vmatpush2.msra.mxu0 0.0
    %2121 = vmatprep.subr.mxu0 0.0
    %2122 = vmatpush2.msra.mxu0 0.0
    %2123 = vmatprep.subr.mxu0 0.0
    %2124 = vmatpush2.msra.mxu0 0.0
    %2125 = vmatprep.subr.mxu0 0.0
    %2126 = vmatpush2.msra.mxu0 0.0
    %2127 = vmatprep.subr.mxu0 0.0
    %2128 = vmatpush2.msra.mxu0 0.0
    %2129 = vmatprep.subr.mxu0 0.0
    %2130 = vmatpush2.msra.mxu0 0.0
    %2131 = vmatprep.mubr.f32.mxu0 0.0
    %v2132 = vand.u32 %v1240, 4294901760
    %2133 = vmatmul.mubr.f32.gmra.mxu0 %v2132
    %v2134 = vpop.f32.mrf.mxu0
    %v2135 = vadd.f32 %v1938, %v2134
    %v2136 = vpop.f32.mrf.mxu0
    %2137 = vmatprep.mubr.f32.mxu0 0.0
    %v2138 = vand.u32 %v1243, 4294901760
    %2139 = vmatmul.mubr.f32.gmra.mxu0 %v2138
    %v2140 = vpop.f32.mrf.mxu0
    %v2141 = vadd.f32 %v1946, %v2140
    %v2142 = vpop.f32.mrf.mxu0
    %2143 = vmatprep.mubr.f32.mxu0 0.0
    %v2144 = vand.u32 %v1246, 4294901760
    %2145 = vmatmul.mubr.f32.gmra.mxu0 %v2144
    %v2146 = vpop.f32.mrf.mxu0
    %v2147 = vadd.f32 %v1954, %v2146
    %v2148 = vpop.f32.mrf.mxu0
    %2149 = vmatprep.mubr.f32.mxu0 0.0
    %v2150 = vand.u32 %v1249, 4294901760
    %2151 = vmatmul.mubr.f32.gmra.mxu0 %v2150
    %v2152 = vpop.f32.mrf.mxu0
    %v2153 = vadd.f32 %v1962, %v2152
    %v2154 = vpop.f32.mrf.mxu0
    %2155 = vmatprep.mubr.f32.mxu0 0.0
    %v2156 = vand.u32 %v1252, 4294901760
    %2157 = vmatmul.mubr.f32.gmra.mxu0 %v2156
    %v2158 = vpop.f32.mrf.mxu0
    %v2159 = vadd.f32 %v1970, %v2158
    %v2160 = vpop.f32.mrf.mxu0
    %2161 = vmatprep.mubr.f32.mxu0 0.0
    %v2162 = vand.u32 %v1255, 4294901760
    %2163 = vmatmul.mubr.f32.gmra.mxu0 %v2162
    %v2164 = vpop.f32.mrf.mxu0
    %v2165 = vadd.f32 %v1978, %v2164
    %v2166 = vpop.f32.mrf.mxu0
    %2167 = vmatprep.mubr.f32.mxu0 0.0
    %v2168 = vand.u32 %v1258, 4294901760
    %2169 = vmatmul.mubr.f32.gmra.mxu0 %v2168
    %v2170 = vpop.f32.mrf.mxu0
    %v2171 = vadd.f32 %v1986, %v2170
    %v2172 = vpop.f32.mrf.mxu0
    %2173 = vmatprep.mubr.f32.mxu0 0.0
    %v2174 = vand.u32 %v1261, 4294901760
    %2175 = vmatmul.mubr.f32.gmra.mxu0 %v2174
    %v2176 = vpop.f32.mrf.mxu0
    %v2177 = vadd.f32 %v1994, %v2176
    %v2178 = vpop.f32.mrf.mxu0
    %2179 = vmatprep.mubr.f32.mxu0 0.0
    %v2180 = vand.u32 %v1264, 4294901760
    %2181 = vmatmul.mubr.f32.gmra.mxu0 %v2180
    %v2182 = vpop.f32.mrf.mxu0
    %v2183 = vadd.f32 %v2002, %v2182
    %v2184 = vpop.f32.mrf.mxu0
    %2185 = vmatprep.mubr.f32.mxu0 0.0
    %v2186 = vand.u32 %v1267, 4294901760
    %2187 = vmatmul.mubr.f32.gmra.mxu0 %v2186
    %v2188 = vpop.f32.mrf.mxu0
    %v2189 = vadd.f32 %v2010, %v2188
    %v2190 = vpop.f32.mrf.mxu0
    %2191 = vmatprep.mubr.f32.mxu0 0.0
    %v2192 = vand.u32 %v1270, 4294901760
    %2193 = vmatmul.mubr.f32.gmra.mxu0 %v2192
    %v2194 = vpop.f32.mrf.mxu0
    %v2195 = vadd.f32 %v2018, %v2194
    %v2196 = vpop.f32.mrf.mxu0
    %2197 = vmatprep.mubr.f32.mxu0 0.0
    %v2198 = vand.u32 %v1273, 4294901760
    %2199 = vmatmul.mubr.f32.gmra.mxu0 %v2198
    %v2200 = vpop.f32.mrf.mxu0
    %v2201 = vadd.f32 %v2026, %v2200
    %v2202 = vpop.f32.mrf.mxu0
    %2203 = vmatprep.mubr.f32.mxu0 0.0
    %v2204 = vand.u32 %v1276, 4294901760
    %2205 = vmatmul.mubr.f32.gmra.mxu0 %v2204
    %v2206 = vpop.f32.mrf.mxu0
    %v2207 = vadd.f32 %v2034, %v2206
    %v2208 = vpop.f32.mrf.mxu0
    %2209 = vmatprep.mubr.f32.mxu0 0.0
    %v2210 = vand.u32 %v1279, 4294901760
    %2211 = vmatmul.mubr.f32.gmra.mxu0 %v2210
    %v2212 = vpop.f32.mrf.mxu0
    %v2213 = vadd.f32 %v2042, %v2212
    %v2214 = vpop.f32.mrf.mxu0
    %2215 = vmatprep.mubr.f32.mxu0 0.0
    %v2216 = vand.u32 %v1282, 4294901760
    %2217 = vmatmul.mubr.f32.gmra.mxu0 %v2216
    %v2218 = vpop.f32.mrf.mxu0
    %v2219 = vadd.f32 %v2050, %v2218
    %v2220 = vpop.f32.mrf.mxu0
    %2221 = vmatprep.mubr.f32.mxu0 0.0
    %v2222 = vand.u32 %v1285, 4294901760
    %2223 = vmatmul.mubr.f32.gmra.mxu0 %v2222
    %v2224 = vpop.f32.mrf.mxu0
    %v2225 = vadd.f32 %v2058, %v2224
    %v2226 = vpop.f32.mrf.mxu0
    %2227 = vdwg.mxu0
    %2228 = vmatprep.subr.mxu0 0.0
    %2229 = vmatpush1.msra.mxu0 0.0
    %2230 = vmatprep.subr.mxu0 0.0
    %2231 = vmatpush1.msra.mxu0 0.0
    %2232 = vmatprep.subr.mxu0 0.0
    %2233 = vmatpush1.msra.mxu0 0.0
    %2234 = vmatprep.subr.mxu0 0.0
    %2235 = vmatpush1.msra.mxu0 0.0
    %2236 = vmatprep.subr.mxu0 0.0
    %2237 = vmatpush1.msra.mxu0 0.0
    %2238 = vmatprep.subr.mxu0 0.0
    %2239 = vmatpush1.msra.mxu0 0.0
    %2240 = vmatprep.subr.mxu0 0.0
    %2241 = vmatpush1.msra.mxu0 0.0
    %2242 = vmatprep.subr.mxu0 0.0
    %2243 = vmatpush1.msra.mxu0 0.0
    %2244 = vmatprep.subr.mxu0 0.0
    %2245 = vmatpush1.msra.mxu0 0.0
    %2246 = vmatprep.subr.mxu0 0.0
    %2247 = vmatpush1.msra.mxu0 0.0
    %2248 = vmatprep.subr.mxu0 0.0
    %2249 = vmatpush1.msra.mxu0 0.0
    %2250 = vmatprep.subr.mxu0 0.0
    %2251 = vmatpush1.msra.mxu0 0.0
    %2252 = vmatprep.subr.mxu0 0.0
    %2253 = vmatpush1.msra.mxu0 0.0
    %2254 = vmatprep.subr.mxu0 0.0
    %2255 = vmatpush1.msra.mxu0 0.0
    %2256 = vmatprep.subr.mxu0 0.0
    %v2257 = vand.u32 %v53, 4294901760
    %2258 = vmatpush1.msra.mxu0 %v2257
    %2259 = vmatprep.subr.mxu0 0.0
    %v2260 = vand.u32 %v52, 4294901760
    %2261 = vmatpush1.msra.mxu0 %v2260
    %2262 = vmatprep.subr.mxu0 0.0
    %2263 = vmatpush2.msra.mxu0 0.0
    %2264 = vmatprep.subr.mxu0 0.0
    %2265 = vmatpush2.msra.mxu0 0.0
    %2266 = vmatprep.subr.mxu0 0.0
    %2267 = vmatpush2.msra.mxu0 0.0
    %2268 = vmatprep.subr.mxu0 0.0
    %2269 = vmatpush2.msra.mxu0 0.0
    %2270 = vmatprep.subr.mxu0 0.0
    %2271 = vmatpush2.msra.mxu0 0.0
    %2272 = vmatprep.subr.mxu0 0.0
    %2273 = vmatpush2.msra.mxu0 0.0
    %2274 = vmatprep.subr.mxu0 0.0
    %2275 = vmatpush2.msra.mxu0 0.0
    %2276 = vmatprep.subr.mxu0 0.0
    %2277 = vmatpush2.msra.mxu0 0.0
    %2278 = vmatprep.subr.mxu0 0.0
    %2279 = vmatpush2.msra.mxu0 0.0
    %2280 = vmatprep.subr.mxu0 0.0
    %2281 = vmatpush2.msra.mxu0 0.0
    %2282 = vmatprep.subr.mxu0 0.0
    %2283 = vmatpush2.msra.mxu0 0.0
    %2284 = vmatprep.subr.mxu0 0.0
    %2285 = vmatpush2.msra.mxu0 0.0
    %2286 = vmatprep.subr.mxu0 0.0
    %2287 = vmatpush2.msra.mxu0 0.0
    %2288 = vmatprep.subr.mxu0 0.0
    %2289 = vmatpush2.msra.mxu0 0.0
    %2290 = vmatprep.subr.mxu0 0.0
    %2291 = vmatpush2.msra.mxu0 0.0
    %2292 = vmatprep.subr.mxu0 0.0
    %2293 = vmatpush2.msra.mxu0 0.0
    %2294 = vmatprep.mubr.f32.mxu0 0.0
    %v2295 = vand.u32 %v1240, 4294901760
    %2296 = vmatmul.mubr.f32.gmra.mxu0 %v2295
    %v2297 = vpop.f32.mrf.mxu0
    %v2298 = vadd.f32 %v2135, %v2297
    %v2299 = vpop.f32.mrf.mxu0
    %2300 = vmatprep.mubr.f32.mxu0 0.0
    %v2301 = vand.u32 %v1243, 4294901760
    %2302 = vmatmul.mubr.f32.gmra.mxu0 %v2301
    %v2303 = vpop.f32.mrf.mxu0
    %v2304 = vadd.f32 %v2141, %v2303
    %v2305 = vpop.f32.mrf.mxu0
    %2306 = vmatprep.mubr.f32.mxu0 0.0
    %v2307 = vand.u32 %v1246, 4294901760
    %2308 = vmatmul.mubr.f32.gmra.mxu0 %v2307
    %v2309 = vpop.f32.mrf.mxu0
    %v2310 = vadd.f32 %v2147, %v2309
    %v2311 = vpop.f32.mrf.mxu0
    %2312 = vmatprep.mubr.f32.mxu0 0.0
    %v2313 = vand.u32 %v1249, 4294901760
    %2314 = vmatmul.mubr.f32.gmra.mxu0 %v2313
    %v2315 = vpop.f32.mrf.mxu0
    %v2316 = vadd.f32 %v2153, %v2315
    %v2317 = vpop.f32.mrf.mxu0
    %2318 = vmatprep.mubr.f32.mxu0 0.0
    %v2319 = vand.u32 %v1252, 4294901760
    %2320 = vmatmul.mubr.f32.gmra.mxu0 %v2319
    %v2321 = vpop.f32.mrf.mxu0
    %v2322 = vadd.f32 %v2159, %v2321
    %v2323 = vpop.f32.mrf.mxu0
    %2324 = vmatprep.mubr.f32.mxu0 0.0
    %v2325 = vand.u32 %v1255, 4294901760
    %2326 = vmatmul.mubr.f32.gmra.mxu0 %v2325
    %v2327 = vpop.f32.mrf.mxu0
    %v2328 = vadd.f32 %v2165, %v2327
    %v2329 = vpop.f32.mrf.mxu0
    %2330 = vmatprep.mubr.f32.mxu0 0.0
    %v2331 = vand.u32 %v1258, 4294901760
    %2332 = vmatmul.mubr.f32.gmra.mxu0 %v2331
    %v2333 = vpop.f32.mrf.mxu0
    %v2334 = vadd.f32 %v2171, %v2333
    %v2335 = vpop.f32.mrf.mxu0
    %2336 = vmatprep.mubr.f32.mxu0 0.0
    %v2337 = vand.u32 %v1261, 4294901760
    %2338 = vmatmul.mubr.f32.gmra.mxu0 %v2337
    %v2339 = vpop.f32.mrf.mxu0
    %v2340 = vadd.f32 %v2177, %v2339
    %v2341 = vpop.f32.mrf.mxu0
    %2342 = vmatprep.mubr.f32.mxu0 0.0
    %v2343 = vand.u32 %v1264, 4294901760
    %2344 = vmatmul.mubr.f32.gmra.mxu0 %v2343
    %v2345 = vpop.f32.mrf.mxu0
    %v2346 = vadd.f32 %v2183, %v2345
    %v2347 = vpop.f32.mrf.mxu0
    %2348 = vmatprep.mubr.f32.mxu0 0.0
    %v2349 = vand.u32 %v1267, 4294901760
    %2350 = vmatmul.mubr.f32.gmra.mxu0 %v2349
    %v2351 = vpop.f32.mrf.mxu0
    %v2352 = vadd.f32 %v2189, %v2351
    %v2353 = vpop.f32.mrf.mxu0
    %2354 = vmatprep.mubr.f32.mxu0 0.0
    %v2355 = vand.u32 %v1270, 4294901760
    %2356 = vmatmul.mubr.f32.gmra.mxu0 %v2355
    %v2357 = vpop.f32.mrf.mxu0
    %v2358 = vadd.f32 %v2195, %v2357
    %v2359 = vpop.f32.mrf.mxu0
    %2360 = vmatprep.mubr.f32.mxu0 0.0
    %v2361 = vand.u32 %v1273, 4294901760
    %2362 = vmatmul.mubr.f32.gmra.mxu0 %v2361
    %v2363 = vpop.f32.mrf.mxu0
    %v2364 = vadd.f32 %v2201, %v2363
    %v2365 = vpop.f32.mrf.mxu0
    %2366 = vmatprep.mubr.f32.mxu0 0.0
    %v2367 = vand.u32 %v1276, 4294901760
    %2368 = vmatmul.mubr.f32.gmra.mxu0 %v2367
    %v2369 = vpop.f32.mrf.mxu0
    %v2370 = vadd.f32 %v2207, %v2369
    %v2371 = vpop.f32.mrf.mxu0
    %2372 = vmatprep.mubr.f32.mxu0 0.0
    %v2373 = vand.u32 %v1279, 4294901760
    %2374 = vmatmul.mubr.f32.gmra.mxu0 %v2373
    %v2375 = vpop.f32.mrf.mxu0
    %v2376 = vadd.f32 %v2213, %v2375
    %v2377 = vpop.f32.mrf.mxu0
    %2378 = vmatprep.mubr.f32.mxu0 0.0
    %v2379 = vand.u32 %v1282, 4294901760
    %2380 = vmatmul.mubr.f32.gmra.mxu0 %v2379
    %v2381 = vpop.f32.mrf.mxu0
    %v2382 = vadd.f32 %v2219, %v2381
    %v2383 = vpop.f32.mrf.mxu0
    %2384 = vmatprep.mubr.f32.mxu0 0.0
    %v2385 = vand.u32 %v1285, 4294901760
    %2386 = vmatmul.mubr.f32.gmra.mxu0 %v2385
    %v2387 = vpop.f32.mrf.mxu0
    %v2388 = vadd.f32 %v2225, %v2387
    %v2389 = vpop.f32.mrf.mxu0
    %2390 = vdwg.mxu0
    %v2391 = vmul.f32 %v54, %v54
    %v2392 = vmul.f32 %v55, %v55
    %v2393 = vmul.f32 %v56, %v56
    %v2394 = vmul.f32 %v57, %v57
    %v2395 = vmul.f32 %v58, %v58
    %v2396 = vmul.f32 %v59, %v59
    %v2397 = vmul.f32 %v60, %v60
    %v2398 = vmul.f32 %v61, %v61
    %v2399 = vmul.f32 %v62, %v62
    %v2400 = vmul.f32 %v63, %v63
    %v2401 = vmul.f32 %v64, %v64
    %v2402 = vmul.f32 %v65, %v65
    %v2403 = vmul.f32 %v66, %v66
    %v2404 = vmul.f32 %v67, %v67
    %v2405 = vmul.f32 %v68, %v68
    %v2406 = vmul.f32 %v69, %v69
    %v2408 = vsel %vm86, %v2391, 0
    %v2411 = vsel %vm86, %v2392, 0
    %v2414 = vsel %vm86, %v2393, 0
    %v2417 = vsel %vm86, %v2394, 0
    %v2420 = vsel %vm86, %v2395, 0
    %v2423 = vsel %vm86, %v2396, 0
    %v2426 = vsel %vm86, %v2397, 0
    %v2429 = vsel %vm86, %v2398, 0
    %v2432 = vsel %vm86, %v2399, 0
    %v2435 = vsel %vm86, %v2400, 0
    %v2438 = vsel %vm86, %v2401, 0
    %v2441 = vsel %vm86, %v2402, 0
    %v2444 = vsel %vm86, %v2403, 0
    %v2447 = vsel %vm86, %v2404, 0
    %v2450 = vsel %vm86, %v2405, 0
    %v2453 = vsel %vm86, %v2406, 0
    %2455 = vmatprep.subr.mxu0 0.0
    %2456 = vmatpush1.msra.mxu0 0.0
    %2457 = vmatprep.subr.mxu0 0.0
    %2458 = vmatpush1.msra.mxu0 0.0
    %2459 = vmatprep.subr.mxu0 0.0
    %2460 = vmatpush1.msra.mxu0 0.0
    %2461 = vmatprep.subr.mxu0 0.0
    %2462 = vmatpush1.msra.mxu0 0.0
    %2463 = vmatprep.subr.mxu0 0.0
    %2464 = vmatpush1.msra.mxu0 0.0
    %2465 = vmatprep.subr.mxu0 0.0
    %2466 = vmatpush1.msra.mxu0 0.0
    %2467 = vmatprep.subr.mxu0 0.0
    %2468 = vmatpush1.msra.mxu0 0.0
    %2469 = vmatprep.subr.mxu0 0.0
    %2470 = vmatpush1.msra.mxu0 0.0
    %2471 = vmatprep.subr.mxu0 0.0
    %2472 = vmatpush1.msra.mxu0 0.0
    %2473 = vmatprep.subr.mxu0 0.0
    %2474 = vmatpush1.msra.mxu0 0.0
    %2475 = vmatprep.subr.mxu0 0.0
    %2476 = vmatpush1.msra.mxu0 0.0
    %2477 = vmatprep.subr.mxu0 0.0
    %2478 = vmatpush1.msra.mxu0 0.0
    %2479 = vmatprep.subr.mxu0 0.0
    %2480 = vmatpush1.msra.mxu0 0.0
    %2481 = vmatprep.subr.mxu0 0.0
    %2482 = vmatpush1.msra.mxu0 0.0
    %2483 = vmatprep.subr.mxu0 0.0
    %v2484 = vand.u32 %v53, 4294901760
    %2485 = vmatpush1.msra.mxu0 %v2484
    %2486 = vmatprep.subr.mxu0 0.0
    %v2487 = vand.u32 %v52, 4294901760
    %2488 = vmatpush1.msra.mxu0 %v2487
    %2489 = vmatprep.subr.mxu0 0.0
    %2490 = vmatpush2.msra.mxu0 0.0
    %2491 = vmatprep.subr.mxu0 0.0
    %2492 = vmatpush2.msra.mxu0 0.0
    %2493 = vmatprep.subr.mxu0 0.0
    %2494 = vmatpush2.msra.mxu0 0.0
    %2495 = vmatprep.subr.mxu0 0.0
    %2496 = vmatpush2.msra.mxu0 0.0
    %2497 = vmatprep.subr.mxu0 0.0
    %2498 = vmatpush2.msra.mxu0 0.0
    %2499 = vmatprep.subr.mxu0 0.0
    %2500 = vmatpush2.msra.mxu0 0.0
    %2501 = vmatprep.subr.mxu0 0.0
    %2502 = vmatpush2.msra.mxu0 0.0
    %2503 = vmatprep.subr.mxu0 0.0
    %2504 = vmatpush2.msra.mxu0 0.0
    %2505 = vmatprep.subr.mxu0 0.0
    %2506 = vmatpush2.msra.mxu0 0.0
    %2507 = vmatprep.subr.mxu0 0.0
    %2508 = vmatpush2.msra.mxu0 0.0
    %2509 = vmatprep.subr.mxu0 0.0
    %2510 = vmatpush2.msra.mxu0 0.0
    %2511 = vmatprep.subr.mxu0 0.0
    %2512 = vmatpush2.msra.mxu0 0.0
    %2513 = vmatprep.subr.mxu0 0.0
    %2514 = vmatpush2.msra.mxu0 0.0
    %2515 = vmatprep.subr.mxu0 0.0
    %2516 = vmatpush2.msra.mxu0 0.0
    %2517 = vmatprep.subr.mxu0 0.0
    %2518 = vmatpush2.msra.mxu0 0.0
    %2519 = vmatprep.subr.mxu0 0.0
    %2520 = vmatpush2.msra.mxu0 0.0
    %2521 = vmatprep.mubr.f32.mxu0 0.0
    %v2522 = vand.u32 %v2408, 4294901760
    %v2523 = vsub.f32 %v2408, %v2522
    %v2524 = vand.u32 %v2523, 4294901760
    %v2525 = vsub.f32 %v2523, %v2524
    %v2526 = vand.u32 %v2525, 4294901760
    %2527 = vmatmul.mubr.f32.gmra.mxu0 %v2526
    %v2528 = vpop.f32.mrf.mxu0
    %v2529 = vadd.f32 0.0, %v2528
    %v2530 = vpop.f32.mrf.mxu0
    %2531 = vmatprep.mubr.f32.mxu0 0.0
    %v2532 = vand.u32 %v2411, 4294901760
    %v2533 = vsub.f32 %v2411, %v2532
    %v2534 = vand.u32 %v2533, 4294901760
    %v2535 = vsub.f32 %v2533, %v2534
    %v2536 = vand.u32 %v2535, 4294901760
    %2537 = vmatmul.mubr.f32.gmra.mxu0 %v2536
    %v2538 = vpop.f32.mrf.mxu0
    %v2539 = vadd.f32 0.0, %v2538
    %v2540 = vpop.f32.mrf.mxu0
    %2541 = vmatprep.mubr.f32.mxu0 0.0
    %v2542 = vand.u32 %v2414, 4294901760
    %v2543 = vsub.f32 %v2414, %v2542
    %v2544 = vand.u32 %v2543, 4294901760
    %v2545 = vsub.f32 %v2543, %v2544
    %v2546 = vand.u32 %v2545, 4294901760
    %2547 = vmatmul.mubr.f32.gmra.mxu0 %v2546
    %v2548 = vpop.f32.mrf.mxu0
    %v2549 = vadd.f32 0.0, %v2548
    %v2550 = vpop.f32.mrf.mxu0
    %2551 = vmatprep.mubr.f32.mxu0 0.0
    %v2552 = vand.u32 %v2417, 4294901760
    %v2553 = vsub.f32 %v2417, %v2552
    %v2554 = vand.u32 %v2553, 4294901760
    %v2555 = vsub.f32 %v2553, %v2554
    %v2556 = vand.u32 %v2555, 4294901760
    %2557 = vmatmul.mubr.f32.gmra.mxu0 %v2556
    %v2558 = vpop.f32.mrf.mxu0
    %v2559 = vadd.f32 0.0, %v2558
    %v2560 = vpop.f32.mrf.mxu0
    %2561 = vmatprep.mubr.f32.mxu0 0.0
    %v2562 = vand.u32 %v2420, 4294901760
    %v2563 = vsub.f32 %v2420, %v2562
    %v2564 = vand.u32 %v2563, 4294901760
    %v2565 = vsub.f32 %v2563, %v2564
    %v2566 = vand.u32 %v2565, 4294901760
    %2567 = vmatmul.mubr.f32.gmra.mxu0 %v2566
    %v2568 = vpop.f32.mrf.mxu0
    %v2569 = vadd.f32 0.0, %v2568
    %v2570 = vpop.f32.mrf.mxu0
    %2571 = vmatprep.mubr.f32.mxu0 0.0
    %v2572 = vand.u32 %v2423, 4294901760
    %v2573 = vsub.f32 %v2423, %v2572
    %v2574 = vand.u32 %v2573, 4294901760
    %v2575 = vsub.f32 %v2573, %v2574
    %v2576 = vand.u32 %v2575, 4294901760
    %2577 = vmatmul.mubr.f32.gmra.mxu0 %v2576
    %v2578 = vpop.f32.mrf.mxu0
    %v2579 = vadd.f32 0.0, %v2578
    %v2580 = vpop.f32.mrf.mxu0
    %2581 = vmatprep.mubr.f32.mxu0 0.0
    %v2582 = vand.u32 %v2426, 4294901760
    %v2583 = vsub.f32 %v2426, %v2582
    %v2584 = vand.u32 %v2583, 4294901760
    %v2585 = vsub.f32 %v2583, %v2584
    %v2586 = vand.u32 %v2585, 4294901760
    %2587 = vmatmul.mubr.f32.gmra.mxu0 %v2586
    %v2588 = vpop.f32.mrf.mxu0
    %v2589 = vadd.f32 0.0, %v2588
    %v2590 = vpop.f32.mrf.mxu0
    %2591 = vmatprep.mubr.f32.mxu0 0.0
    %v2592 = vand.u32 %v2429, 4294901760
    %v2593 = vsub.f32 %v2429, %v2592
    %v2594 = vand.u32 %v2593, 4294901760
    %v2595 = vsub.f32 %v2593, %v2594
    %v2596 = vand.u32 %v2595, 4294901760
    %2597 = vmatmul.mubr.f32.gmra.mxu0 %v2596
    %v2598 = vpop.f32.mrf.mxu0
    %v2599 = vadd.f32 0.0, %v2598
    %v2600 = vpop.f32.mrf.mxu0
    %2601 = vmatprep.mubr.f32.mxu0 0.0
    %v2602 = vand.u32 %v2432, 4294901760
    %v2603 = vsub.f32 %v2432, %v2602
    %v2604 = vand.u32 %v2603, 4294901760
    %v2605 = vsub.f32 %v2603, %v2604
    %v2606 = vand.u32 %v2605, 4294901760
    %2607 = vmatmul.mubr.f32.gmra.mxu0 %v2606
    %v2608 = vpop.f32.mrf.mxu0
    %v2609 = vadd.f32 0.0, %v2608
    %v2610 = vpop.f32.mrf.mxu0
    %2611 = vmatprep.mubr.f32.mxu0 0.0
    %v2612 = vand.u32 %v2435, 4294901760
    %v2613 = vsub.f32 %v2435, %v2612
    %v2614 = vand.u32 %v2613, 4294901760
    %v2615 = vsub.f32 %v2613, %v2614
    %v2616 = vand.u32 %v2615, 4294901760
    %2617 = vmatmul.mubr.f32.gmra.mxu0 %v2616
    %v2618 = vpop.f32.mrf.mxu0
    %v2619 = vadd.f32 0.0, %v2618
    %v2620 = vpop.f32.mrf.mxu0
    %2621 = vmatprep.mubr.f32.mxu0 0.0
    %v2622 = vand.u32 %v2438, 4294901760
    %v2623 = vsub.f32 %v2438, %v2622
    %v2624 = vand.u32 %v2623, 4294901760
    %v2625 = vsub.f32 %v2623, %v2624
    %v2626 = vand.u32 %v2625, 4294901760
    %2627 = vmatmul.mubr.f32.gmra.mxu0 %v2626
    %v2628 = vpop.f32.mrf.mxu0
    %v2629 = vadd.f32 0.0, %v2628
    %v2630 = vpop.f32.mrf.mxu0
    %2631 = vmatprep.mubr.f32.mxu0 0.0
    %v2632 = vand.u32 %v2441, 4294901760
    %v2633 = vsub.f32 %v2441, %v2632
    %v2634 = vand.u32 %v2633, 4294901760
    %v2635 = vsub.f32 %v2633, %v2634
    %v2636 = vand.u32 %v2635, 4294901760
    %2637 = vmatmul.mubr.f32.gmra.mxu0 %v2636
    %v2638 = vpop.f32.mrf.mxu0
    %v2639 = vadd.f32 0.0, %v2638
    %v2640 = vpop.f32.mrf.mxu0
    %2641 = vmatprep.mubr.f32.mxu0 0.0
    %v2642 = vand.u32 %v2444, 4294901760
    %v2643 = vsub.f32 %v2444, %v2642
    %v2644 = vand.u32 %v2643, 4294901760
    %v2645 = vsub.f32 %v2643, %v2644
    %v2646 = vand.u32 %v2645, 4294901760
    %2647 = vmatmul.mubr.f32.gmra.mxu0 %v2646
    %v2648 = vpop.f32.mrf.mxu0
    %v2649 = vadd.f32 0.0, %v2648
    %v2650 = vpop.f32.mrf.mxu0
    %2651 = vmatprep.mubr.f32.mxu0 0.0
    %v2652 = vand.u32 %v2447, 4294901760
    %v2653 = vsub.f32 %v2447, %v2652
    %v2654 = vand.u32 %v2653, 4294901760
    %v2655 = vsub.f32 %v2653, %v2654
    %v2656 = vand.u32 %v2655, 4294901760
    %2657 = vmatmul.mubr.f32.gmra.mxu0 %v2656
    %v2658 = vpop.f32.mrf.mxu0
    %v2659 = vadd.f32 0.0, %v2658
    %v2660 = vpop.f32.mrf.mxu0
    %2661 = vmatprep.mubr.f32.mxu0 0.0
    %v2662 = vand.u32 %v2450, 4294901760
    %v2663 = vsub.f32 %v2450, %v2662
    %v2664 = vand.u32 %v2663, 4294901760
    %v2665 = vsub.f32 %v2663, %v2664
    %v2666 = vand.u32 %v2665, 4294901760
    %2667 = vmatmul.mubr.f32.gmra.mxu0 %v2666
    %v2668 = vpop.f32.mrf.mxu0
    %v2669 = vadd.f32 0.0, %v2668
    %v2670 = vpop.f32.mrf.mxu0
    %2671 = vmatprep.mubr.f32.mxu0 0.0
    %v2672 = vand.u32 %v2453, 4294901760
    %v2673 = vsub.f32 %v2453, %v2672
    %v2674 = vand.u32 %v2673, 4294901760
    %v2675 = vsub.f32 %v2673, %v2674
    %v2676 = vand.u32 %v2675, 4294901760
    %2677 = vmatmul.mubr.f32.gmra.mxu0 %v2676
    %v2678 = vpop.f32.mrf.mxu0
    %v2679 = vadd.f32 0.0, %v2678
    %v2680 = vpop.f32.mrf.mxu0
    %2681 = vdwg.mxu0
    %2682 = vmatprep.subr.mxu0 0.0
    %2683 = vmatpush1.msra.mxu0 0.0
    %2684 = vmatprep.subr.mxu0 0.0
    %2685 = vmatpush1.msra.mxu0 0.0
    %2686 = vmatprep.subr.mxu0 0.0
    %2687 = vmatpush1.msra.mxu0 0.0
    %2688 = vmatprep.subr.mxu0 0.0
    %2689 = vmatpush1.msra.mxu0 0.0
    %2690 = vmatprep.subr.mxu0 0.0
    %2691 = vmatpush1.msra.mxu0 0.0
    %2692 = vmatprep.subr.mxu0 0.0
    %2693 = vmatpush1.msra.mxu0 0.0
    %2694 = vmatprep.subr.mxu0 0.0
    %2695 = vmatpush1.msra.mxu0 0.0
    %2696 = vmatprep.subr.mxu0 0.0
    %2697 = vmatpush1.msra.mxu0 0.0
    %2698 = vmatprep.subr.mxu0 0.0
    %2699 = vmatpush1.msra.mxu0 0.0
    %2700 = vmatprep.subr.mxu0 0.0
    %2701 = vmatpush1.msra.mxu0 0.0
    %2702 = vmatprep.subr.mxu0 0.0
    %2703 = vmatpush1.msra.mxu0 0.0
    %2704 = vmatprep.subr.mxu0 0.0
    %2705 = vmatpush1.msra.mxu0 0.0
    %2706 = vmatprep.subr.mxu0 0.0
    %2707 = vmatpush1.msra.mxu0 0.0
    %2708 = vmatprep.subr.mxu0 0.0
    %2709 = vmatpush1.msra.mxu0 0.0
    %2710 = vmatprep.subr.mxu0 0.0
    %v2711 = vand.u32 %v53, 4294901760
    %v2712 = vsub.f32 %v53, %v2711
    %v2713 = vand.u32 %v2712, 4294901760
    %v2714 = vsub.f32 %v2712, %v2713
    %v2715 = vand.u32 %v2714, 4294901760
    %2716 = vmatpush1.msra.mxu0 %v2715
    %2717 = vmatprep.subr.mxu0 0.0
    %v2718 = vand.u32 %v52, 4294901760
    %v2719 = vsub.f32 %v52, %v2718
    %v2720 = vand.u32 %v2719, 4294901760
    %v2721 = vsub.f32 %v2719, %v2720
    %v2722 = vand.u32 %v2721, 4294901760
    %2723 = vmatpush1.msra.mxu0 %v2722
    %2724 = vmatprep.subr.mxu0 0.0
    %2725 = vmatpush2.msra.mxu0 0.0
    %2726 = vmatprep.subr.mxu0 0.0
    %2727 = vmatpush2.msra.mxu0 0.0
    %2728 = vmatprep.subr.mxu0 0.0
    %2729 = vmatpush2.msra.mxu0 0.0
    %2730 = vmatprep.subr.mxu0 0.0
    %2731 = vmatpush2.msra.mxu0 0.0
    %2732 = vmatprep.subr.mxu0 0.0
    %2733 = vmatpush2.msra.mxu0 0.0
    %2734 = vmatprep.subr.mxu0 0.0
    %2735 = vmatpush2.msra.mxu0 0.0
    %2736 = vmatprep.subr.mxu0 0.0
    %2737 = vmatpush2.msra.mxu0 0.0
    %2738 = vmatprep.subr.mxu0 0.0
    %2739 = vmatpush2.msra.mxu0 0.0
    %2740 = vmatprep.subr.mxu0 0.0
    %2741 = vmatpush2.msra.mxu0 0.0
    %2742 = vmatprep.subr.mxu0 0.0
    %2743 = vmatpush2.msra.mxu0 0.0
    %2744 = vmatprep.subr.mxu0 0.0
    %2745 = vmatpush2.msra.mxu0 0.0
    %2746 = vmatprep.subr.mxu0 0.0
    %2747 = vmatpush2.msra.mxu0 0.0
    %2748 = vmatprep.subr.mxu0 0.0
    %2749 = vmatpush2.msra.mxu0 0.0
    %2750 = vmatprep.subr.mxu0 0.0
    %2751 = vmatpush2.msra.mxu0 0.0
    %2752 = vmatprep.subr.mxu0 0.0
    %2753 = vmatpush2.msra.mxu0 0.0
    %2754 = vmatprep.subr.mxu0 0.0
    %2755 = vmatpush2.msra.mxu0 0.0
    %2756 = vmatprep.mubr.f32.mxu0 0.0
    %v2757 = vand.u32 %v2408, 4294901760
    %2758 = vmatmul.mubr.f32.gmra.mxu0 %v2757
    %v2759 = vpop.f32.mrf.mxu0
    %v2760 = vadd.f32 %v2529, %v2759
    %v2761 = vpop.f32.mrf.mxu0
    %2762 = vmatprep.mubr.f32.mxu0 0.0
    %v2763 = vand.u32 %v2411, 4294901760
    %2764 = vmatmul.mubr.f32.gmra.mxu0 %v2763
    %v2765 = vpop.f32.mrf.mxu0
    %v2766 = vadd.f32 %v2539, %v2765
    %v2767 = vpop.f32.mrf.mxu0
    %2768 = vmatprep.mubr.f32.mxu0 0.0
    %v2769 = vand.u32 %v2414, 4294901760
    %2770 = vmatmul.mubr.f32.gmra.mxu0 %v2769
    %v2771 = vpop.f32.mrf.mxu0
    %v2772 = vadd.f32 %v2549, %v2771
    %v2773 = vpop.f32.mrf.mxu0
    %2774 = vmatprep.mubr.f32.mxu0 0.0
    %v2775 = vand.u32 %v2417, 4294901760
    %2776 = vmatmul.mubr.f32.gmra.mxu0 %v2775
    %v2777 = vpop.f32.mrf.mxu0
    %v2778 = vadd.f32 %v2559, %v2777
    %v2779 = vpop.f32.mrf.mxu0
    %2780 = vmatprep.mubr.f32.mxu0 0.0
    %v2781 = vand.u32 %v2420, 4294901760
    %2782 = vmatmul.mubr.f32.gmra.mxu0 %v2781
    %v2783 = vpop.f32.mrf.mxu0
    %v2784 = vadd.f32 %v2569, %v2783
    %v2785 = vpop.f32.mrf.mxu0
    %2786 = vmatprep.mubr.f32.mxu0 0.0
    %v2787 = vand.u32 %v2423, 4294901760
    %2788 = vmatmul.mubr.f32.gmra.mxu0 %v2787
    %v2789 = vpop.f32.mrf.mxu0
    %v2790 = vadd.f32 %v2579, %v2789
    %v2791 = vpop.f32.mrf.mxu0
    %2792 = vmatprep.mubr.f32.mxu0 0.0
    %v2793 = vand.u32 %v2426, 4294901760
    %2794 = vmatmul.mubr.f32.gmra.mxu0 %v2793
    %v2795 = vpop.f32.mrf.mxu0
    %v2796 = vadd.f32 %v2589, %v2795
    %v2797 = vpop.f32.mrf.mxu0
    %2798 = vmatprep.mubr.f32.mxu0 0.0
    %v2799 = vand.u32 %v2429, 4294901760
    %2800 = vmatmul.mubr.f32.gmra.mxu0 %v2799
    %v2801 = vpop.f32.mrf.mxu0
    %v2802 = vadd.f32 %v2599, %v2801
    %v2803 = vpop.f32.mrf.mxu0
    %2804 = vmatprep.mubr.f32.mxu0 0.0
    %v2805 = vand.u32 %v2432, 4294901760
    %2806 = vmatmul.mubr.f32.gmra.mxu0 %v2805
    %v2807 = vpop.f32.mrf.mxu0
    %v2808 = vadd.f32 %v2609, %v2807
    %v2809 = vpop.f32.mrf.mxu0
    %2810 = vmatprep.mubr.f32.mxu0 0.0
    %v2811 = vand.u32 %v2435, 4294901760
    %2812 = vmatmul.mubr.f32.gmra.mxu0 %v2811
    %v2813 = vpop.f32.mrf.mxu0
    %v2814 = vadd.f32 %v2619, %v2813
    %v2815 = vpop.f32.mrf.mxu0
    %2816 = vmatprep.mubr.f32.mxu0 0.0
    %v2817 = vand.u32 %v2438, 4294901760
    %2818 = vmatmul.mubr.f32.gmra.mxu0 %v2817
    %v2819 = vpop.f32.mrf.mxu0
    %v2820 = vadd.f32 %v2629, %v2819
    %v2821 = vpop.f32.mrf.mxu0
    %2822 = vmatprep.mubr.f32.mxu0 0.0
    %v2823 = vand.u32 %v2441, 4294901760
    %2824 = vmatmul.mubr.f32.gmra.mxu0 %v2823
    %v2825 = vpop.f32.mrf.mxu0
    %v2826 = vadd.f32 %v2639, %v2825
    %v2827 = vpop.f32.mrf.mxu0
    %2828 = vmatprep.mubr.f32.mxu0 0.0
    %v2829 = vand.u32 %v2444, 4294901760
    %2830 = vmatmul.mubr.f32.gmra.mxu0 %v2829
    %v2831 = vpop.f32.mrf.mxu0
    %v2832 = vadd.f32 %v2649, %v2831
    %v2833 = vpop.f32.mrf.mxu0
    %2834 = vmatprep.mubr.f32.mxu0 0.0
    %v2835 = vand.u32 %v2447, 4294901760
    %2836 = vmatmul.mubr.f32.gmra.mxu0 %v2835
    %v2837 = vpop.f32.mrf.mxu0
    %v2838 = vadd.f32 %v2659, %v2837
    %v2839 = vpop.f32.mrf.mxu0
    %2840 = vmatprep.mubr.f32.mxu0 0.0
    %v2841 = vand.u32 %v2450, 4294901760
    %2842 = vmatmul.mubr.f32.gmra.mxu0 %v2841
    %v2843 = vpop.f32.mrf.mxu0
    %v2844 = vadd.f32 %v2669, %v2843
    %v2845 = vpop.f32.mrf.mxu0
    %2846 = vmatprep.mubr.f32.mxu0 0.0
    %v2847 = vand.u32 %v2453, 4294901760
    %2848 = vmatmul.mubr.f32.gmra.mxu0 %v2847
    %v2849 = vpop.f32.mrf.mxu0
    %v2850 = vadd.f32 %v2679, %v2849
    %v2851 = vpop.f32.mrf.mxu0
    %2852 = vdwg.mxu0
    %2853 = vmatprep.subr.mxu0 0.0
    %2854 = vmatpush1.msra.mxu0 0.0
    %2855 = vmatprep.subr.mxu0 0.0
    %2856 = vmatpush1.msra.mxu0 0.0
    %2857 = vmatprep.subr.mxu0 0.0
    %2858 = vmatpush1.msra.mxu0 0.0
    %2859 = vmatprep.subr.mxu0 0.0
    %2860 = vmatpush1.msra.mxu0 0.0
    %2861 = vmatprep.subr.mxu0 0.0
    %2862 = vmatpush1.msra.mxu0 0.0
    %2863 = vmatprep.subr.mxu0 0.0
    %2864 = vmatpush1.msra.mxu0 0.0
    %2865 = vmatprep.subr.mxu0 0.0
    %2866 = vmatpush1.msra.mxu0 0.0
    %2867 = vmatprep.subr.mxu0 0.0
    %2868 = vmatpush1.msra.mxu0 0.0
    %2869 = vmatprep.subr.mxu0 0.0
    %2870 = vmatpush1.msra.mxu0 0.0
    %2871 = vmatprep.subr.mxu0 0.0
    %2872 = vmatpush1.msra.mxu0 0.0
    %2873 = vmatprep.subr.mxu0 0.0
    %2874 = vmatpush1.msra.mxu0 0.0
    %2875 = vmatprep.subr.mxu0 0.0
    %2876 = vmatpush1.msra.mxu0 0.0
    %2877 = vmatprep.subr.mxu0 0.0
    %2878 = vmatpush1.msra.mxu0 0.0
    %2879 = vmatprep.subr.mxu0 0.0
    %2880 = vmatpush1.msra.mxu0 0.0
    %2881 = vmatprep.subr.mxu0 0.0
    %v2882 = vand.u32 %v53, 4294901760
    %v2883 = vsub.f32 %v53, %v2882
    %2884 = vmatpush1.msra.mxu0 %v2883
    %2885 = vmatprep.subr.mxu0 0.0
    %v2886 = vand.u32 %v52, 4294901760
    %v2887 = vsub.f32 %v52, %v2886
    %2888 = vmatpush1.msra.mxu0 %v2887
    %2889 = vmatprep.subr.mxu0 0.0
    %2890 = vmatpush2.msra.mxu0 0.0
    %2891 = vmatprep.subr.mxu0 0.0
    %2892 = vmatpush2.msra.mxu0 0.0
    %2893 = vmatprep.subr.mxu0 0.0
    %2894 = vmatpush2.msra.mxu0 0.0
    %2895 = vmatprep.subr.mxu0 0.0
    %2896 = vmatpush2.msra.mxu0 0.0
    %2897 = vmatprep.subr.mxu0 0.0
    %2898 = vmatpush2.msra.mxu0 0.0
    %2899 = vmatprep.subr.mxu0 0.0
    %2900 = vmatpush2.msra.mxu0 0.0
    %2901 = vmatprep.subr.mxu0 0.0
    %2902 = vmatpush2.msra.mxu0 0.0
    %2903 = vmatprep.subr.mxu0 0.0
    %2904 = vmatpush2.msra.mxu0 0.0
    %2905 = vmatprep.subr.mxu0 0.0
    %2906 = vmatpush2.msra.mxu0 0.0
    %2907 = vmatprep.subr.mxu0 0.0
    %2908 = vmatpush2.msra.mxu0 0.0
    %2909 = vmatprep.subr.mxu0 0.0
    %2910 = vmatpush2.msra.mxu0 0.0
    %2911 = vmatprep.subr.mxu0 0.0
    %2912 = vmatpush2.msra.mxu0 0.0
    %2913 = vmatprep.subr.mxu0 0.0
    %2914 = vmatpush2.msra.mxu0 0.0
    %2915 = vmatprep.subr.mxu0 0.0
    %2916 = vmatpush2.msra.mxu0 0.0
    %2917 = vmatprep.subr.mxu0 0.0
    %2918 = vmatpush2.msra.mxu0 0.0
    %2919 = vmatprep.subr.mxu0 0.0
    %2920 = vmatpush2.msra.mxu0 0.0
    %2921 = vmatprep.mubr.f32.mxu0 0.0
    %v2922 = vand.u32 %v2408, 4294901760
    %v2923 = vsub.f32 %v2408, %v2922
    %2924 = vmatmul.mubr.f32.gmra.mxu0 %v2923
    %v2925 = vpop.f32.mrf.mxu0
    %v2926 = vadd.f32 %v2760, %v2925
    %v2927 = vpop.f32.mrf.mxu0
    %2928 = vmatprep.mubr.f32.mxu0 0.0
    %v2929 = vand.u32 %v2411, 4294901760
    %v2930 = vsub.f32 %v2411, %v2929
    %2931 = vmatmul.mubr.f32.gmra.mxu0 %v2930
    %v2932 = vpop.f32.mrf.mxu0
    %v2933 = vadd.f32 %v2766, %v2932
    %v2934 = vpop.f32.mrf.mxu0
    %2935 = vmatprep.mubr.f32.mxu0 0.0
    %v2936 = vand.u32 %v2414, 4294901760
    %v2937 = vsub.f32 %v2414, %v2936
    %2938 = vmatmul.mubr.f32.gmra.mxu0 %v2937
    %v2939 = vpop.f32.mrf.mxu0
    %v2940 = vadd.f32 %v2772, %v2939
    %v2941 = vpop.f32.mrf.mxu0
    %2942 = vmatprep.mubr.f32.mxu0 0.0
    %v2943 = vand.u32 %v2417, 4294901760
    %v2944 = vsub.f32 %v2417, %v2943
    %2945 = vmatmul.mubr.f32.gmra.mxu0 %v2944
    %v2946 = vpop.f32.mrf.mxu0
    %v2947 = vadd.f32 %v2778, %v2946
    %v2948 = vpop.f32.mrf.mxu0
    %2949 = vmatprep.mubr.f32.mxu0 0.0
    %v2950 = vand.u32 %v2420, 4294901760
    %v2951 = vsub.f32 %v2420, %v2950
    %2952 = vmatmul.mubr.f32.gmra.mxu0 %v2951
    %v2953 = vpop.f32.mrf.mxu0
    %v2954 = vadd.f32 %v2784, %v2953
    %v2955 = vpop.f32.mrf.mxu0
    %2956 = vmatprep.mubr.f32.mxu0 0.0
    %v2957 = vand.u32 %v2423, 4294901760
    %v2958 = vsub.f32 %v2423, %v2957
    %2959 = vmatmul.mubr.f32.gmra.mxu0 %v2958
    %v2960 = vpop.f32.mrf.mxu0
    %v2961 = vadd.f32 %v2790, %v2960
    %v2962 = vpop.f32.mrf.mxu0
    %2963 = vmatprep.mubr.f32.mxu0 0.0
    %v2964 = vand.u32 %v2426, 4294901760
    %v2965 = vsub.f32 %v2426, %v2964
    %2966 = vmatmul.mubr.f32.gmra.mxu0 %v2965
    %v2967 = vpop.f32.mrf.mxu0
    %v2968 = vadd.f32 %v2796, %v2967
    %v2969 = vpop.f32.mrf.mxu0
    %2970 = vmatprep.mubr.f32.mxu0 0.0
    %v2971 = vand.u32 %v2429, 4294901760
    %v2972 = vsub.f32 %v2429, %v2971
    %2973 = vmatmul.mubr.f32.gmra.mxu0 %v2972
    %v2974 = vpop.f32.mrf.mxu0
    %v2975 = vadd.f32 %v2802, %v2974
    %v2976 = vpop.f32.mrf.mxu0
    %2977 = vmatprep.mubr.f32.mxu0 0.0
    %v2978 = vand.u32 %v2432, 4294901760
    %v2979 = vsub.f32 %v2432, %v2978
    %2980 = vmatmul.mubr.f32.gmra.mxu0 %v2979
    %v2981 = vpop.f32.mrf.mxu0
    %v2982 = vadd.f32 %v2808, %v2981
    %v2983 = vpop.f32.mrf.mxu0
    %2984 = vmatprep.mubr.f32.mxu0 0.0
    %v2985 = vand.u32 %v2435, 4294901760
    %v2986 = vsub.f32 %v2435, %v2985
    %2987 = vmatmul.mubr.f32.gmra.mxu0 %v2986
    %v2988 = vpop.f32.mrf.mxu0
    %v2989 = vadd.f32 %v2814, %v2988
    %v2990 = vpop.f32.mrf.mxu0
    %2991 = vmatprep.mubr.f32.mxu0 0.0
    %v2992 = vand.u32 %v2438, 4294901760
    %v2993 = vsub.f32 %v2438, %v2992
    %2994 = vmatmul.mubr.f32.gmra.mxu0 %v2993
    %v2995 = vpop.f32.mrf.mxu0
    %v2996 = vadd.f32 %v2820, %v2995
    %v2997 = vpop.f32.mrf.mxu0
    %2998 = vmatprep.mubr.f32.mxu0 0.0
    %v2999 = vand.u32 %v2441, 4294901760
    %v3000 = vsub.f32 %v2441, %v2999
    %3001 = vmatmul.mubr.f32.gmra.mxu0 %v3000
    %v3002 = vpop.f32.mrf.mxu0
    %v3003 = vadd.f32 %v2826, %v3002
    %v3004 = vpop.f32.mrf.mxu0
    %3005 = vmatprep.mubr.f32.mxu0 0.0
    %v3006 = vand.u32 %v2444, 4294901760
    %v3007 = vsub.f32 %v2444, %v3006
    %3008 = vmatmul.mubr.f32.gmra.mxu0 %v3007
    %v3009 = vpop.f32.mrf.mxu0
    %v3010 = vadd.f32 %v2832, %v3009
    %v3011 = vpop.f32.mrf.mxu0
    %3012 = vmatprep.mubr.f32.mxu0 0.0
    %v3013 = vand.u32 %v2447, 4294901760
    %v3014 = vsub.f32 %v2447, %v3013
    %3015 = vmatmul.mubr.f32.gmra.mxu0 %v3014
    %v3016 = vpop.f32.mrf.mxu0
    %v3017 = vadd.f32 %v2838, %v3016
    %v3018 = vpop.f32.mrf.mxu0
    %3019 = vmatprep.mubr.f32.mxu0 0.0
    %v3020 = vand.u32 %v2450, 4294901760
    %v3021 = vsub.f32 %v2450, %v3020
    %3022 = vmatmul.mubr.f32.gmra.mxu0 %v3021
    %v3023 = vpop.f32.mrf.mxu0
    %v3024 = vadd.f32 %v2844, %v3023
    %v3025 = vpop.f32.mrf.mxu0
    %3026 = vmatprep.mubr.f32.mxu0 0.0
    %v3027 = vand.u32 %v2453, 4294901760
    %v3028 = vsub.f32 %v2453, %v3027
    %3029 = vmatmul.mubr.f32.gmra.mxu0 %v3028
    %v3030 = vpop.f32.mrf.mxu0
    %v3031 = vadd.f32 %v2850, %v3030
    %v3032 = vpop.f32.mrf.mxu0
    %3033 = vdwg.mxu0
    %3034 = vmatprep.subr.mxu0 0.0
    %3035 = vmatpush1.msra.mxu0 0.0
    %3036 = vmatprep.subr.mxu0 0.0
    %3037 = vmatpush1.msra.mxu0 0.0
    %3038 = vmatprep.subr.mxu0 0.0
    %3039 = vmatpush1.msra.mxu0 0.0
    %3040 = vmatprep.subr.mxu0 0.0
    %3041 = vmatpush1.msra.mxu0 0.0
    %3042 = vmatprep.subr.mxu0 0.0
    %3043 = vmatpush1.msra.mxu0 0.0
    %3044 = vmatprep.subr.mxu0 0.0
    %3045 = vmatpush1.msra.mxu0 0.0
    %3046 = vmatprep.subr.mxu0 0.0
    %3047 = vmatpush1.msra.mxu0 0.0
    %3048 = vmatprep.subr.mxu0 0.0
    %3049 = vmatpush1.msra.mxu0 0.0
    %3050 = vmatprep.subr.mxu0 0.0
    %3051 = vmatpush1.msra.mxu0 0.0
    %3052 = vmatprep.subr.mxu0 0.0
    %3053 = vmatpush1.msra.mxu0 0.0
    %3054 = vmatprep.subr.mxu0 0.0
    %3055 = vmatpush1.msra.mxu0 0.0
    %3056 = vmatprep.subr.mxu0 0.0
    %3057 = vmatpush1.msra.mxu0 0.0
    %3058 = vmatprep.subr.mxu0 0.0
    %3059 = vmatpush1.msra.mxu0 0.0
    %3060 = vmatprep.subr.mxu0 0.0
    %3061 = vmatpush1.msra.mxu0 0.0
    %3062 = vmatprep.subr.mxu0 0.0
    %v3063 = vand.u32 %v53, 4294901760
    %3064 = vmatpush1.msra.mxu0 %v3063
    %3065 = vmatprep.subr.mxu0 0.0
    %v3066 = vand.u32 %v52, 4294901760
    %3067 = vmatpush1.msra.mxu0 %v3066
    %3068 = vmatprep.subr.mxu0 0.0
    %3069 = vmatpush2.msra.mxu0 0.0
    %3070 = vmatprep.subr.mxu0 0.0
    %3071 = vmatpush2.msra.mxu0 0.0
    %3072 = vmatprep.subr.mxu0 0.0
    %3073 = vmatpush2.msra.mxu0 0.0
    %3074 = vmatprep.subr.mxu0 0.0
    %3075 = vmatpush2.msra.mxu0 0.0
    %3076 = vmatprep.subr.mxu0 0.0
    %3077 = vmatpush2.msra.mxu0 0.0
    %3078 = vmatprep.subr.mxu0 0.0
    %3079 = vmatpush2.msra.mxu0 0.0
    %3080 = vmatprep.subr.mxu0 0.0
    %3081 = vmatpush2.msra.mxu0 0.0
    %3082 = vmatprep.subr.mxu0 0.0
    %3083 = vmatpush2.msra.mxu0 0.0
    %3084 = vmatprep.subr.mxu0 0.0
    %3085 = vmatpush2.msra.mxu0 0.0
    %3086 = vmatprep.subr.mxu0 0.0
    %3087 = vmatpush2.msra.mxu0 0.0
    %3088 = vmatprep.subr.mxu0 0.0
    %3089 = vmatpush2.msra.mxu0 0.0
    %3090 = vmatprep.subr.mxu0 0.0
    %3091 = vmatpush2.msra.mxu0 0.0
    %3092 = vmatprep.subr.mxu0 0.0
    %3093 = vmatpush2.msra.mxu0 0.0
    %3094 = vmatprep.subr.mxu0 0.0
    %3095 = vmatpush2.msra.mxu0 0.0
    %3096 = vmatprep.subr.mxu0 0.0
    %3097 = vmatpush2.msra.mxu0 0.0
    %3098 = vmatprep.subr.mxu0 0.0
    %3099 = vmatpush2.msra.mxu0 0.0
    %3100 = vmatprep.mubr.f32.mxu0 0.0
    %v3101 = vand.u32 %v2408, 4294901760
    %v3102 = vsub.f32 %v2408, %v3101
    %v3103 = vand.u32 %v3102, 4294901760
    %3104 = vmatmul.mubr.f32.gmra.mxu0 %v3103
    %v3105 = vpop.f32.mrf.mxu0
    %v3106 = vadd.f32 %v2926, %v3105
    %v3107 = vpop.f32.mrf.mxu0
    %3108 = vmatprep.mubr.f32.mxu0 0.0
    %v3109 = vand.u32 %v2411, 4294901760
    %v3110 = vsub.f32 %v2411, %v3109
    %v3111 = vand.u32 %v3110, 4294901760
    %3112 = vmatmul.mubr.f32.gmra.mxu0 %v3111
    %v3113 = vpop.f32.mrf.mxu0
    %v3114 = vadd.f32 %v2933, %v3113
    %v3115 = vpop.f32.mrf.mxu0
    %3116 = vmatprep.mubr.f32.mxu0 0.0
    %v3117 = vand.u32 %v2414, 4294901760
    %v3118 = vsub.f32 %v2414, %v3117
    %v3119 = vand.u32 %v3118, 4294901760
    %3120 = vmatmul.mubr.f32.gmra.mxu0 %v3119
    %v3121 = vpop.f32.mrf.mxu0
    %v3122 = vadd.f32 %v2940, %v3121
    %v3123 = vpop.f32.mrf.mxu0
    %3124 = vmatprep.mubr.f32.mxu0 0.0
    %v3125 = vand.u32 %v2417, 4294901760
    %v3126 = vsub.f32 %v2417, %v3125
    %v3127 = vand.u32 %v3126, 4294901760
    %3128 = vmatmul.mubr.f32.gmra.mxu0 %v3127
    %v3129 = vpop.f32.mrf.mxu0
    %v3130 = vadd.f32 %v2947, %v3129
    %v3131 = vpop.f32.mrf.mxu0
    %3132 = vmatprep.mubr.f32.mxu0 0.0
    %v3133 = vand.u32 %v2420, 4294901760
    %v3134 = vsub.f32 %v2420, %v3133
    %v3135 = vand.u32 %v3134, 4294901760
    %3136 = vmatmul.mubr.f32.gmra.mxu0 %v3135
    %v3137 = vpop.f32.mrf.mxu0
    %v3138 = vadd.f32 %v2954, %v3137
    %v3139 = vpop.f32.mrf.mxu0
    %3140 = vmatprep.mubr.f32.mxu0 0.0
    %v3141 = vand.u32 %v2423, 4294901760
    %v3142 = vsub.f32 %v2423, %v3141
    %v3143 = vand.u32 %v3142, 4294901760
    %3144 = vmatmul.mubr.f32.gmra.mxu0 %v3143
    %v3145 = vpop.f32.mrf.mxu0
    %v3146 = vadd.f32 %v2961, %v3145
    %v3147 = vpop.f32.mrf.mxu0
    %3148 = vmatprep.mubr.f32.mxu0 0.0
    %v3149 = vand.u32 %v2426, 4294901760
    %v3150 = vsub.f32 %v2426, %v3149
    %v3151 = vand.u32 %v3150, 4294901760
    %3152 = vmatmul.mubr.f32.gmra.mxu0 %v3151
    %v3153 = vpop.f32.mrf.mxu0
    %v3154 = vadd.f32 %v2968, %v3153
    %v3155 = vpop.f32.mrf.mxu0
    %3156 = vmatprep.mubr.f32.mxu0 0.0
    %v3157 = vand.u32 %v2429, 4294901760
    %v3158 = vsub.f32 %v2429, %v3157
    %v3159 = vand.u32 %v3158, 4294901760
    %3160 = vmatmul.mubr.f32.gmra.mxu0 %v3159
    %v3161 = vpop.f32.mrf.mxu0
    %v3162 = vadd.f32 %v2975, %v3161
    %v3163 = vpop.f32.mrf.mxu0
    %3164 = vmatprep.mubr.f32.mxu0 0.0
    %v3165 = vand.u32 %v2432, 4294901760
    %v3166 = vsub.f32 %v2432, %v3165
    %v3167 = vand.u32 %v3166, 4294901760
    %3168 = vmatmul.mubr.f32.gmra.mxu0 %v3167
    %v3169 = vpop.f32.mrf.mxu0
    %v3170 = vadd.f32 %v2982, %v3169
    %v3171 = vpop.f32.mrf.mxu0
    %3172 = vmatprep.mubr.f32.mxu0 0.0
    %v3173 = vand.u32 %v2435, 4294901760
    %v3174 = vsub.f32 %v2435, %v3173
    %v3175 = vand.u32 %v3174, 4294901760
    %3176 = vmatmul.mubr.f32.gmra.mxu0 %v3175
    %v3177 = vpop.f32.mrf.mxu0
    %v3178 = vadd.f32 %v2989, %v3177
    %v3179 = vpop.f32.mrf.mxu0
    %3180 = vmatprep.mubr.f32.mxu0 0.0
    %v3181 = vand.u32 %v2438, 4294901760
    %v3182 = vsub.f32 %v2438, %v3181
    %v3183 = vand.u32 %v3182, 4294901760
    %3184 = vmatmul.mubr.f32.gmra.mxu0 %v3183
    %v3185 = vpop.f32.mrf.mxu0
    %v3186 = vadd.f32 %v2996, %v3185
    %v3187 = vpop.f32.mrf.mxu0
    %3188 = vmatprep.mubr.f32.mxu0 0.0
    %v3189 = vand.u32 %v2441, 4294901760
    %v3190 = vsub.f32 %v2441, %v3189
    %v3191 = vand.u32 %v3190, 4294901760
    %3192 = vmatmul.mubr.f32.gmra.mxu0 %v3191
    %v3193 = vpop.f32.mrf.mxu0
    %v3194 = vadd.f32 %v3003, %v3193
    %v3195 = vpop.f32.mrf.mxu0
    %3196 = vmatprep.mubr.f32.mxu0 0.0
    %v3197 = vand.u32 %v2444, 4294901760
    %v3198 = vsub.f32 %v2444, %v3197
    %v3199 = vand.u32 %v3198, 4294901760
    %3200 = vmatmul.mubr.f32.gmra.mxu0 %v3199
    %v3201 = vpop.f32.mrf.mxu0
    %v3202 = vadd.f32 %v3010, %v3201
    %v3203 = vpop.f32.mrf.mxu0
    %3204 = vmatprep.mubr.f32.mxu0 0.0
    %v3205 = vand.u32 %v2447, 4294901760
    %v3206 = vsub.f32 %v2447, %v3205
    %v3207 = vand.u32 %v3206, 4294901760
    %3208 = vmatmul.mubr.f32.gmra.mxu0 %v3207
    %v3209 = vpop.f32.mrf.mxu0
    %v3210 = vadd.f32 %v3017, %v3209
    %v3211 = vpop.f32.mrf.mxu0
    %3212 = vmatprep.mubr.f32.mxu0 0.0
    %v3213 = vand.u32 %v2450, 4294901760
    %v3214 = vsub.f32 %v2450, %v3213
    %v3215 = vand.u32 %v3214, 4294901760
    %3216 = vmatmul.mubr.f32.gmra.mxu0 %v3215
    %v3217 = vpop.f32.mrf.mxu0
    %v3218 = vadd.f32 %v3024, %v3217
    %v3219 = vpop.f32.mrf.mxu0
    %3220 = vmatprep.mubr.f32.mxu0 0.0
    %v3221 = vand.u32 %v2453, 4294901760
    %v3222 = vsub.f32 %v2453, %v3221
    %v3223 = vand.u32 %v3222, 4294901760
    %3224 = vmatmul.mubr.f32.gmra.mxu0 %v3223
    %v3225 = vpop.f32.mrf.mxu0
    %v3226 = vadd.f32 %v3031, %v3225
    %v3227 = vpop.f32.mrf.mxu0
    %3228 = vdwg.mxu0
    %3229 = vmatprep.subr.mxu0 0.0
    %3230 = vmatpush1.msra.mxu0 0.0
    %3231 = vmatprep.subr.mxu0 0.0
    %3232 = vmatpush1.msra.mxu0 0.0
    %3233 = vmatprep.subr.mxu0 0.0
    %3234 = vmatpush1.msra.mxu0 0.0
    %3235 = vmatprep.subr.mxu0 0.0
    %3236 = vmatpush1.msra.mxu0 0.0
    %3237 = vmatprep.subr.mxu0 0.0
    %3238 = vmatpush1.msra.mxu0 0.0
    %3239 = vmatprep.subr.mxu0 0.0
    %3240 = vmatpush1.msra.mxu0 0.0
    %3241 = vmatprep.subr.mxu0 0.0
    %3242 = vmatpush1.msra.mxu0 0.0
    %3243 = vmatprep.subr.mxu0 0.0
    %3244 = vmatpush1.msra.mxu0 0.0
    %3245 = vmatprep.subr.mxu0 0.0
    %3246 = vmatpush1.msra.mxu0 0.0
    %3247 = vmatprep.subr.mxu0 0.0
    %3248 = vmatpush1.msra.mxu0 0.0
    %3249 = vmatprep.subr.mxu0 0.0
    %3250 = vmatpush1.msra.mxu0 0.0
    %3251 = vmatprep.subr.mxu0 0.0
    %3252 = vmatpush1.msra.mxu0 0.0
    %3253 = vmatprep.subr.mxu0 0.0
    %3254 = vmatpush1.msra.mxu0 0.0
    %3255 = vmatprep.subr.mxu0 0.0
    %3256 = vmatpush1.msra.mxu0 0.0
    %3257 = vmatprep.subr.mxu0 0.0
    %v3258 = vand.u32 %v53, 4294901760
    %v3259 = vsub.f32 %v53, %v3258
    %v3260 = vand.u32 %v3259, 4294901760
    %3261 = vmatpush1.msra.mxu0 %v3260
    %3262 = vmatprep.subr.mxu0 0.0
    %v3263 = vand.u32 %v52, 4294901760
    %v3264 = vsub.f32 %v52, %v3263
    %v3265 = vand.u32 %v3264, 4294901760
    %3266 = vmatpush1.msra.mxu0 %v3265
    %3267 = vmatprep.subr.mxu0 0.0
    %3268 = vmatpush2.msra.mxu0 0.0
    %3269 = vmatprep.subr.mxu0 0.0
    %3270 = vmatpush2.msra.mxu0 0.0
    %3271 = vmatprep.subr.mxu0 0.0
    %3272 = vmatpush2.msra.mxu0 0.0
    %3273 = vmatprep.subr.mxu0 0.0
    %3274 = vmatpush2.msra.mxu0 0.0
    %3275 = vmatprep.subr.mxu0 0.0
    %3276 = vmatpush2.msra.mxu0 0.0
    %3277 = vmatprep.subr.mxu0 0.0
    %3278 = vmatpush2.msra.mxu0 0.0
    %3279 = vmatprep.subr.mxu0 0.0
    %3280 = vmatpush2.msra.mxu0 0.0
    %3281 = vmatprep.subr.mxu0 0.0
    %3282 = vmatpush2.msra.mxu0 0.0
    %3283 = vmatprep.subr.mxu0 0.0
    %3284 = vmatpush2.msra.mxu0 0.0
    %3285 = vmatprep.subr.mxu0 0.0
    %3286 = vmatpush2.msra.mxu0 0.0
    %3287 = vmatprep.subr.mxu0 0.0
    %3288 = vmatpush2.msra.mxu0 0.0
    %3289 = vmatprep.subr.mxu0 0.0
    %3290 = vmatpush2.msra.mxu0 0.0
    %3291 = vmatprep.subr.mxu0 0.0
    %3292 = vmatpush2.msra.mxu0 0.0
    %3293 = vmatprep.subr.mxu0 0.0
    %3294 = vmatpush2.msra.mxu0 0.0
    %3295 = vmatprep.subr.mxu0 0.0
    %3296 = vmatpush2.msra.mxu0 0.0
    %3297 = vmatprep.subr.mxu0 0.0
    %3298 = vmatpush2.msra.mxu0 0.0
    %3299 = vmatprep.mubr.f32.mxu0 0.0
    %v3300 = vand.u32 %v2408, 4294901760
    %3301 = vmatmul.mubr.f32.gmra.mxu0 %v3300
    %v3302 = vpop.f32.mrf.mxu0
    %v3303 = vadd.f32 %v3106, %v3302
    %v3304 = vpop.f32.mrf.mxu0
    %3305 = vmatprep.mubr.f32.mxu0 0.0
    %v3306 = vand.u32 %v2411, 4294901760
    %3307 = vmatmul.mubr.f32.gmra.mxu0 %v3306
    %v3308 = vpop.f32.mrf.mxu0
    %v3309 = vadd.f32 %v3114, %v3308
    %v3310 = vpop.f32.mrf.mxu0
    %3311 = vmatprep.mubr.f32.mxu0 0.0
    %v3312 = vand.u32 %v2414, 4294901760
    %3313 = vmatmul.mubr.f32.gmra.mxu0 %v3312
    %v3314 = vpop.f32.mrf.mxu0
    %v3315 = vadd.f32 %v3122, %v3314
    %v3316 = vpop.f32.mrf.mxu0
    %3317 = vmatprep.mubr.f32.mxu0 0.0
    %v3318 = vand.u32 %v2417, 4294901760
    %3319 = vmatmul.mubr.f32.gmra.mxu0 %v3318
    %v3320 = vpop.f32.mrf.mxu0
    %v3321 = vadd.f32 %v3130, %v3320
    %v3322 = vpop.f32.mrf.mxu0
    %3323 = vmatprep.mubr.f32.mxu0 0.0
    %v3324 = vand.u32 %v2420, 4294901760
    %3325 = vmatmul.mubr.f32.gmra.mxu0 %v3324
    %v3326 = vpop.f32.mrf.mxu0
    %v3327 = vadd.f32 %v3138, %v3326
    %v3328 = vpop.f32.mrf.mxu0
    %3329 = vmatprep.mubr.f32.mxu0 0.0
    %v3330 = vand.u32 %v2423, 4294901760
    %3331 = vmatmul.mubr.f32.gmra.mxu0 %v3330
    %v3332 = vpop.f32.mrf.mxu0
    %v3333 = vadd.f32 %v3146, %v3332
    %v3334 = vpop.f32.mrf.mxu0
    %3335 = vmatprep.mubr.f32.mxu0 0.0
    %v3336 = vand.u32 %v2426, 4294901760
    %3337 = vmatmul.mubr.f32.gmra.mxu0 %v3336
    %v3338 = vpop.f32.mrf.mxu0
    %v3339 = vadd.f32 %v3154, %v3338
    %v3340 = vpop.f32.mrf.mxu0
    %3341 = vmatprep.mubr.f32.mxu0 0.0
    %v3342 = vand.u32 %v2429, 4294901760
    %3343 = vmatmul.mubr.f32.gmra.mxu0 %v3342
    %v3344 = vpop.f32.mrf.mxu0
    %v3345 = vadd.f32 %v3162, %v3344
    %v3346 = vpop.f32.mrf.mxu0
    %3347 = vmatprep.mubr.f32.mxu0 0.0
    %v3348 = vand.u32 %v2432, 4294901760
    %3349 = vmatmul.mubr.f32.gmra.mxu0 %v3348
    %v3350 = vpop.f32.mrf.mxu0
    %v3351 = vadd.f32 %v3170, %v3350
    %v3352 = vpop.f32.mrf.mxu0
    %3353 = vmatprep.mubr.f32.mxu0 0.0
    %v3354 = vand.u32 %v2435, 4294901760
    %3355 = vmatmul.mubr.f32.gmra.mxu0 %v3354
    %v3356 = vpop.f32.mrf.mxu0
    %v3357 = vadd.f32 %v3178, %v3356
    %v3358 = vpop.f32.mrf.mxu0
    %3359 = vmatprep.mubr.f32.mxu0 0.0
    %v3360 = vand.u32 %v2438, 4294901760
    %3361 = vmatmul.mubr.f32.gmra.mxu0 %v3360
    %v3362 = vpop.f32.mrf.mxu0
    %v3363 = vadd.f32 %v3186, %v3362
    %v3364 = vpop.f32.mrf.mxu0
    %3365 = vmatprep.mubr.f32.mxu0 0.0
    %v3366 = vand.u32 %v2441, 4294901760
    %3367 = vmatmul.mubr.f32.gmra.mxu0 %v3366
    %v3368 = vpop.f32.mrf.mxu0
    %v3369 = vadd.f32 %v3194, %v3368
    %v3370 = vpop.f32.mrf.mxu0
    %3371 = vmatprep.mubr.f32.mxu0 0.0
    %v3372 = vand.u32 %v2444, 4294901760
    %3373 = vmatmul.mubr.f32.gmra.mxu0 %v3372
    %v3374 = vpop.f32.mrf.mxu0
    %v3375 = vadd.f32 %v3202, %v3374
    %v3376 = vpop.f32.mrf.mxu0
    %3377 = vmatprep.mubr.f32.mxu0 0.0
    %v3378 = vand.u32 %v2447, 4294901760
    %3379 = vmatmul.mubr.f32.gmra.mxu0 %v3378
    %v3380 = vpop.f32.mrf.mxu0
    %v3381 = vadd.f32 %v3210, %v3380
    %v3382 = vpop.f32.mrf.mxu0
    %3383 = vmatprep.mubr.f32.mxu0 0.0
    %v3384 = vand.u32 %v2450, 4294901760
    %3385 = vmatmul.mubr.f32.gmra.mxu0 %v3384
    %v3386 = vpop.f32.mrf.mxu0
    %v3387 = vadd.f32 %v3218, %v3386
    %v3388 = vpop.f32.mrf.mxu0
    %3389 = vmatprep.mubr.f32.mxu0 0.0
    %v3390 = vand.u32 %v2453, 4294901760
    %3391 = vmatmul.mubr.f32.gmra.mxu0 %v3390
    %v3392 = vpop.f32.mrf.mxu0
    %v3393 = vadd.f32 %v3226, %v3392
    %v3394 = vpop.f32.mrf.mxu0
    %3395 = vdwg.mxu0
    %3396 = vmatprep.subr.mxu0 0.0
    %3397 = vmatpush1.msra.mxu0 0.0
    %3398 = vmatprep.subr.mxu0 0.0
    %3399 = vmatpush1.msra.mxu0 0.0
    %3400 = vmatprep.subr.mxu0 0.0
    %3401 = vmatpush1.msra.mxu0 0.0
    %3402 = vmatprep.subr.mxu0 0.0
    %3403 = vmatpush1.msra.mxu0 0.0
    %3404 = vmatprep.subr.mxu0 0.0
    %3405 = vmatpush1.msra.mxu0 0.0
    %3406 = vmatprep.subr.mxu0 0.0
    %3407 = vmatpush1.msra.mxu0 0.0
    %3408 = vmatprep.subr.mxu0 0.0
    %3409 = vmatpush1.msra.mxu0 0.0
    %3410 = vmatprep.subr.mxu0 0.0
    %3411 = vmatpush1.msra.mxu0 0.0
    %3412 = vmatprep.subr.mxu0 0.0
    %3413 = vmatpush1.msra.mxu0 0.0
    %3414 = vmatprep.subr.mxu0 0.0
    %3415 = vmatpush1.msra.mxu0 0.0
    %3416 = vmatprep.subr.mxu0 0.0
    %3417 = vmatpush1.msra.mxu0 0.0
    %3418 = vmatprep.subr.mxu0 0.0
    %3419 = vmatpush1.msra.mxu0 0.0
    %3420 = vmatprep.subr.mxu0 0.0
    %3421 = vmatpush1.msra.mxu0 0.0
    %3422 = vmatprep.subr.mxu0 0.0
    %3423 = vmatpush1.msra.mxu0 0.0
    %3424 = vmatprep.subr.mxu0 0.0
    %v3425 = vand.u32 %v53, 4294901760
    %3426 = vmatpush1.msra.mxu0 %v3425
    %3427 = vmatprep.subr.mxu0 0.0
    %v3428 = vand.u32 %v52, 4294901760
    %3429 = vmatpush1.msra.mxu0 %v3428
    %3430 = vmatprep.subr.mxu0 0.0
    %3431 = vmatpush2.msra.mxu0 0.0
    %3432 = vmatprep.subr.mxu0 0.0
    %3433 = vmatpush2.msra.mxu0 0.0
    %3434 = vmatprep.subr.mxu0 0.0
    %3435 = vmatpush2.msra.mxu0 0.0
    %3436 = vmatprep.subr.mxu0 0.0
    %3437 = vmatpush2.msra.mxu0 0.0
    %3438 = vmatprep.subr.mxu0 0.0
    %3439 = vmatpush2.msra.mxu0 0.0
    %3440 = vmatprep.subr.mxu0 0.0
    %3441 = vmatpush2.msra.mxu0 0.0
    %3442 = vmatprep.subr.mxu0 0.0
    %3443 = vmatpush2.msra.mxu0 0.0
    %3444 = vmatprep.subr.mxu0 0.0
    %3445 = vmatpush2.msra.mxu0 0.0
    %3446 = vmatprep.subr.mxu0 0.0
    %3447 = vmatpush2.msra.mxu0 0.0
    %3448 = vmatprep.subr.mxu0 0.0
    %3449 = vmatpush2.msra.mxu0 0.0
    %3450 = vmatprep.subr.mxu0 0.0
    %3451 = vmatpush2.msra.mxu0 0.0
    %3452 = vmatprep.subr.mxu0 0.0
    %3453 = vmatpush2.msra.mxu0 0.0
    %3454 = vmatprep.subr.mxu0 0.0
    %3455 = vmatpush2.msra.mxu0 0.0
    %3456 = vmatprep.subr.mxu0 0.0
    %3457 = vmatpush2.msra.mxu0 0.0
    %3458 = vmatprep.subr.mxu0 0.0
    %3459 = vmatpush2.msra.mxu0 0.0
    %3460 = vmatprep.subr.mxu0 0.0
    %3461 = vmatpush2.msra.mxu0 0.0
    %3462 = vmatprep.mubr.f32.mxu0 0.0
    %v3463 = vand.u32 %v2408, 4294901760
    %3464 = vmatmul.mubr.f32.gmra.mxu0 %v3463
    %v3465 = vpop.f32.mrf.mxu0
    %v3466 = vadd.f32 %v3303, %v3465
    %v3467 = vpop.f32.mrf.mxu0
    %3468 = vmatprep.mubr.f32.mxu0 0.0
    %v3469 = vand.u32 %v2411, 4294901760
    %3470 = vmatmul.mubr.f32.gmra.mxu0 %v3469
    %v3471 = vpop.f32.mrf.mxu0
    %v3472 = vadd.f32 %v3309, %v3471
    %v3473 = vpop.f32.mrf.mxu0
    %3474 = vmatprep.mubr.f32.mxu0 0.0
    %v3475 = vand.u32 %v2414, 4294901760
    %3476 = vmatmul.mubr.f32.gmra.mxu0 %v3475
    %v3477 = vpop.f32.mrf.mxu0
    %v3478 = vadd.f32 %v3315, %v3477
    %v3479 = vpop.f32.mrf.mxu0
    %3480 = vmatprep.mubr.f32.mxu0 0.0
    %v3481 = vand.u32 %v2417, 4294901760
    %3482 = vmatmul.mubr.f32.gmra.mxu0 %v3481
    %v3483 = vpop.f32.mrf.mxu0
    %v3484 = vadd.f32 %v3321, %v3483
    %v3485 = vpop.f32.mrf.mxu0
    %3486 = vmatprep.mubr.f32.mxu0 0.0
    %v3487 = vand.u32 %v2420, 4294901760
    %3488 = vmatmul.mubr.f32.gmra.mxu0 %v3487
    %v3489 = vpop.f32.mrf.mxu0
    %v3490 = vadd.f32 %v3327, %v3489
    %v3491 = vpop.f32.mrf.mxu0
    %3492 = vmatprep.mubr.f32.mxu0 0.0
    %v3493 = vand.u32 %v2423, 4294901760
    %3494 = vmatmul.mubr.f32.gmra.mxu0 %v3493
    %v3495 = vpop.f32.mrf.mxu0
    %v3496 = vadd.f32 %v3333, %v3495
    %v3497 = vpop.f32.mrf.mxu0
    %3498 = vmatprep.mubr.f32.mxu0 0.0
    %v3499 = vand.u32 %v2426, 4294901760
    %3500 = vmatmul.mubr.f32.gmra.mxu0 %v3499
    %v3501 = vpop.f32.mrf.mxu0
    %v3502 = vadd.f32 %v3339, %v3501
    %v3503 = vpop.f32.mrf.mxu0
    %3504 = vmatprep.mubr.f32.mxu0 0.0
    %v3505 = vand.u32 %v2429, 4294901760
    %3506 = vmatmul.mubr.f32.gmra.mxu0 %v3505
    %v3507 = vpop.f32.mrf.mxu0
    %v3508 = vadd.f32 %v3345, %v3507
    %v3509 = vpop.f32.mrf.mxu0
    %3510 = vmatprep.mubr.f32.mxu0 0.0
    %v3511 = vand.u32 %v2432, 4294901760
    %3512 = vmatmul.mubr.f32.gmra.mxu0 %v3511
    %v3513 = vpop.f32.mrf.mxu0
    %v3514 = vadd.f32 %v3351, %v3513
    %v3515 = vpop.f32.mrf.mxu0
    %3516 = vmatprep.mubr.f32.mxu0 0.0
    %v3517 = vand.u32 %v2435, 4294901760
    %3518 = vmatmul.mubr.f32.gmra.mxu0 %v3517
    %v3519 = vpop.f32.mrf.mxu0
    %v3520 = vadd.f32 %v3357, %v3519
    %v3521 = vpop.f32.mrf.mxu0
    %3522 = vmatprep.mubr.f32.mxu0 0.0
    %v3523 = vand.u32 %v2438, 4294901760
    %3524 = vmatmul.mubr.f32.gmra.mxu0 %v3523
    %v3525 = vpop.f32.mrf.mxu0
    %v3526 = vadd.f32 %v3363, %v3525
    %v3527 = vpop.f32.mrf.mxu0
    %3528 = vmatprep.mubr.f32.mxu0 0.0
    %v3529 = vand.u32 %v2441, 4294901760
    %3530 = vmatmul.mubr.f32.gmra.mxu0 %v3529
    %v3531 = vpop.f32.mrf.mxu0
    %v3532 = vadd.f32 %v3369, %v3531
    %v3533 = vpop.f32.mrf.mxu0
    %3534 = vmatprep.mubr.f32.mxu0 0.0
    %v3535 = vand.u32 %v2444, 4294901760
    %3536 = vmatmul.mubr.f32.gmra.mxu0 %v3535
    %v3537 = vpop.f32.mrf.mxu0
    %v3538 = vadd.f32 %v3375, %v3537
    %v3539 = vpop.f32.mrf.mxu0
    %3540 = vmatprep.mubr.f32.mxu0 0.0
    %v3541 = vand.u32 %v2447, 4294901760
    %3542 = vmatmul.mubr.f32.gmra.mxu0 %v3541
    %v3543 = vpop.f32.mrf.mxu0
    %v3544 = vadd.f32 %v3381, %v3543
    %v3545 = vpop.f32.mrf.mxu0
    %3546 = vmatprep.mubr.f32.mxu0 0.0
    %v3547 = vand.u32 %v2450, 4294901760
    %3548 = vmatmul.mubr.f32.gmra.mxu0 %v3547
    %v3549 = vpop.f32.mrf.mxu0
    %v3550 = vadd.f32 %v3387, %v3549
    %v3551 = vpop.f32.mrf.mxu0
    %3552 = vmatprep.mubr.f32.mxu0 0.0
    %v3553 = vand.u32 %v2453, 4294901760
    %3554 = vmatmul.mubr.f32.gmra.mxu0 %v3553
    %v3555 = vpop.f32.mrf.mxu0
    %v3556 = vadd.f32 %v3393, %v3555
    %v3557 = vpop.f32.mrf.mxu0
    %3558 = vdwg.mxu0
    %v3559 = vmul.f32 %v70, %v70
    %v3560 = vmul.f32 %v71, %v71
    %v3561 = vmul.f32 %v72, %v72
    %v3562 = vmul.f32 %v73, %v73
    %v3563 = vmul.f32 %v74, %v74
    %v3564 = vmul.f32 %v75, %v75
    %v3565 = vmul.f32 %v76, %v76
    %v3566 = vmul.f32 %v77, %v77
    %v3567 = vmul.f32 %v78, %v78
    %v3568 = vmul.f32 %v79, %v79
    %v3569 = vmul.f32 %v80, %v80
    %v3570 = vmul.f32 %v81, %v81
    %v3571 = vmul.f32 %v82, %v82
    %v3572 = vmul.f32 %v83, %v83
    %v3573 = vmul.f32 %v84, %v84
    %v3574 = vmul.f32 %v85, %v85
    %v3576 = vsel %vm86, %v3559, 0
    %v3579 = vsel %vm86, %v3560, 0
    %v3582 = vsel %vm86, %v3561, 0
    %v3585 = vsel %vm86, %v3562, 0
    %v3588 = vsel %vm86, %v3563, 0
    %v3591 = vsel %vm86, %v3564, 0
    %v3594 = vsel %vm86, %v3565, 0
    %v3597 = vsel %vm86, %v3566, 0
    %v3600 = vsel %vm86, %v3567, 0
    %v3603 = vsel %vm86, %v3568, 0
    %v3606 = vsel %vm86, %v3569, 0
    %v3609 = vsel %vm86, %v3570, 0
    %v3612 = vsel %vm86, %v3571, 0
    %v3615 = vsel %vm86, %v3572, 0
    %v3618 = vsel %vm86, %v3573, 0
    %v3621 = vsel %vm86, %v3574, 0
    %3623 = vmatprep.subr.mxu0 0.0
    %3624 = vmatpush1.msra.mxu0 0.0
    %3625 = vmatprep.subr.mxu0 0.0
    %3626 = vmatpush1.msra.mxu0 0.0
    %3627 = vmatprep.subr.mxu0 0.0
    %3628 = vmatpush1.msra.mxu0 0.0
    %3629 = vmatprep.subr.mxu0 0.0
    %3630 = vmatpush1.msra.mxu0 0.0
    %3631 = vmatprep.subr.mxu0 0.0
    %3632 = vmatpush1.msra.mxu0 0.0
    %3633 = vmatprep.subr.mxu0 0.0
    %3634 = vmatpush1.msra.mxu0 0.0
    %3635 = vmatprep.subr.mxu0 0.0
    %3636 = vmatpush1.msra.mxu0 0.0
    %3637 = vmatprep.subr.mxu0 0.0
    %3638 = vmatpush1.msra.mxu0 0.0
    %3639 = vmatprep.subr.mxu0 0.0
    %3640 = vmatpush1.msra.mxu0 0.0
    %3641 = vmatprep.subr.mxu0 0.0
    %3642 = vmatpush1.msra.mxu0 0.0
    %3643 = vmatprep.subr.mxu0 0.0
    %3644 = vmatpush1.msra.mxu0 0.0
    %3645 = vmatprep.subr.mxu0 0.0
    %3646 = vmatpush1.msra.mxu0 0.0
    %3647 = vmatprep.subr.mxu0 0.0
    %3648 = vmatpush1.msra.mxu0 0.0
    %3649 = vmatprep.subr.mxu0 0.0
    %3650 = vmatpush1.msra.mxu0 0.0
    %3651 = vmatprep.subr.mxu0 0.0
    %v3652 = vand.u32 %v53, 4294901760
    %3653 = vmatpush1.msra.mxu0 %v3652
    %3654 = vmatprep.subr.mxu0 0.0
    %v3655 = vand.u32 %v52, 4294901760
    %3656 = vmatpush1.msra.mxu0 %v3655
    %3657 = vmatprep.subr.mxu0 0.0
    %3658 = vmatpush2.msra.mxu0 0.0
    %3659 = vmatprep.subr.mxu0 0.0
    %3660 = vmatpush2.msra.mxu0 0.0
    %3661 = vmatprep.subr.mxu0 0.0
    %3662 = vmatpush2.msra.mxu0 0.0
    %3663 = vmatprep.subr.mxu0 0.0
    %3664 = vmatpush2.msra.mxu0 0.0
    %3665 = vmatprep.subr.mxu0 0.0
    %3666 = vmatpush2.msra.mxu0 0.0
    %3667 = vmatprep.subr.mxu0 0.0
    %3668 = vmatpush2.msra.mxu0 0.0
    %3669 = vmatprep.subr.mxu0 0.0
    %3670 = vmatpush2.msra.mxu0 0.0
    %3671 = vmatprep.subr.mxu0 0.0
    %3672 = vmatpush2.msra.mxu0 0.0
    %3673 = vmatprep.subr.mxu0 0.0
    %3674 = vmatpush2.msra.mxu0 0.0
    %3675 = vmatprep.subr.mxu0 0.0
    %3676 = vmatpush2.msra.mxu0 0.0
    %3677 = vmatprep.subr.mxu0 0.0
    %3678 = vmatpush2.msra.mxu0 0.0
    %3679 = vmatprep.subr.mxu0 0.0
    %3680 = vmatpush2.msra.mxu0 0.0
    %3681 = vmatprep.subr.mxu0 0.0
    %3682 = vmatpush2.msra.mxu0 0.0
    %3683 = vmatprep.subr.mxu0 0.0
    %3684 = vmatpush2.msra.mxu0 0.0
    %3685 = vmatprep.subr.mxu0 0.0
    %3686 = vmatpush2.msra.mxu0 0.0
    %3687 = vmatprep.subr.mxu0 0.0
    %3688 = vmatpush2.msra.mxu0 0.0
    %3689 = vmatprep.mubr.f32.mxu0 0.0
    %v3690 = vand.u32 %v3576, 4294901760
    %v3691 = vsub.f32 %v3576, %v3690
    %v3692 = vand.u32 %v3691, 4294901760
    %v3693 = vsub.f32 %v3691, %v3692
    %v3694 = vand.u32 %v3693, 4294901760
    %3695 = vmatmul.mubr.f32.gmra.mxu0 %v3694
    %v3696 = vpop.f32.mrf.mxu0
    %v3697 = vadd.f32 0.0, %v3696
    %v3698 = vpop.f32.mrf.mxu0
    %3699 = vmatprep.mubr.f32.mxu0 0.0
    %v3700 = vand.u32 %v3579, 4294901760
    %v3701 = vsub.f32 %v3579, %v3700
    %v3702 = vand.u32 %v3701, 4294901760
    %v3703 = vsub.f32 %v3701, %v3702
    %v3704 = vand.u32 %v3703, 4294901760
    %3705 = vmatmul.mubr.f32.gmra.mxu0 %v3704
    %v3706 = vpop.f32.mrf.mxu0
    %v3707 = vadd.f32 0.0, %v3706
    %v3708 = vpop.f32.mrf.mxu0
    %3709 = vmatprep.mubr.f32.mxu0 0.0
    %v3710 = vand.u32 %v3582, 4294901760
    %v3711 = vsub.f32 %v3582, %v3710
    %v3712 = vand.u32 %v3711, 4294901760
    %v3713 = vsub.f32 %v3711, %v3712
    %v3714 = vand.u32 %v3713, 4294901760
    %3715 = vmatmul.mubr.f32.gmra.mxu0 %v3714
    %v3716 = vpop.f32.mrf.mxu0
    %v3717 = vadd.f32 0.0, %v3716
    %v3718 = vpop.f32.mrf.mxu0
    %3719 = vmatprep.mubr.f32.mxu0 0.0
    %v3720 = vand.u32 %v3585, 4294901760
    %v3721 = vsub.f32 %v3585, %v3720
    %v3722 = vand.u32 %v3721, 4294901760
    %v3723 = vsub.f32 %v3721, %v3722
    %v3724 = vand.u32 %v3723, 4294901760
    %3725 = vmatmul.mubr.f32.gmra.mxu0 %v3724
    %v3726 = vpop.f32.mrf.mxu0
    %v3727 = vadd.f32 0.0, %v3726
    %v3728 = vpop.f32.mrf.mxu0
    %3729 = vmatprep.mubr.f32.mxu0 0.0
    %v3730 = vand.u32 %v3588, 4294901760
    %v3731 = vsub.f32 %v3588, %v3730
    %v3732 = vand.u32 %v3731, 4294901760
    %v3733 = vsub.f32 %v3731, %v3732
    %v3734 = vand.u32 %v3733, 4294901760
    %3735 = vmatmul.mubr.f32.gmra.mxu0 %v3734
    %v3736 = vpop.f32.mrf.mxu0
    %v3737 = vadd.f32 0.0, %v3736
    %v3738 = vpop.f32.mrf.mxu0
    %3739 = vmatprep.mubr.f32.mxu0 0.0
    %v3740 = vand.u32 %v3591, 4294901760
    %v3741 = vsub.f32 %v3591, %v3740
    %v3742 = vand.u32 %v3741, 4294901760
    %v3743 = vsub.f32 %v3741, %v3742
    %v3744 = vand.u32 %v3743, 4294901760
    %3745 = vmatmul.mubr.f32.gmra.mxu0 %v3744
    %v3746 = vpop.f32.mrf.mxu0
    %v3747 = vadd.f32 0.0, %v3746
    %v3748 = vpop.f32.mrf.mxu0
    %3749 = vmatprep.mubr.f32.mxu0 0.0
    %v3750 = vand.u32 %v3594, 4294901760
    %v3751 = vsub.f32 %v3594, %v3750
    %v3752 = vand.u32 %v3751, 4294901760
    %v3753 = vsub.f32 %v3751, %v3752
    %v3754 = vand.u32 %v3753, 4294901760
    %3755 = vmatmul.mubr.f32.gmra.mxu0 %v3754
    %v3756 = vpop.f32.mrf.mxu0
    %v3757 = vadd.f32 0.0, %v3756
    %v3758 = vpop.f32.mrf.mxu0
    %3759 = vmatprep.mubr.f32.mxu0 0.0
    %v3760 = vand.u32 %v3597, 4294901760
    %v3761 = vsub.f32 %v3597, %v3760
    %v3762 = vand.u32 %v3761, 4294901760
    %v3763 = vsub.f32 %v3761, %v3762
    %v3764 = vand.u32 %v3763, 4294901760
    %3765 = vmatmul.mubr.f32.gmra.mxu0 %v3764
    %v3766 = vpop.f32.mrf.mxu0
    %v3767 = vadd.f32 0.0, %v3766
    %v3768 = vpop.f32.mrf.mxu0
    %3769 = vmatprep.mubr.f32.mxu0 0.0
    %v3770 = vand.u32 %v3600, 4294901760
    %v3771 = vsub.f32 %v3600, %v3770
    %v3772 = vand.u32 %v3771, 4294901760
    %v3773 = vsub.f32 %v3771, %v3772
    %v3774 = vand.u32 %v3773, 4294901760
    %3775 = vmatmul.mubr.f32.gmra.mxu0 %v3774
    %v3776 = vpop.f32.mrf.mxu0
    %v3777 = vadd.f32 0.0, %v3776
    %v3778 = vpop.f32.mrf.mxu0
    %3779 = vmatprep.mubr.f32.mxu0 0.0
    %v3780 = vand.u32 %v3603, 4294901760
    %v3781 = vsub.f32 %v3603, %v3780
    %v3782 = vand.u32 %v3781, 4294901760
    %v3783 = vsub.f32 %v3781, %v3782
    %v3784 = vand.u32 %v3783, 4294901760
    %3785 = vmatmul.mubr.f32.gmra.mxu0 %v3784
    %v3786 = vpop.f32.mrf.mxu0
    %v3787 = vadd.f32 0.0, %v3786
    %v3788 = vpop.f32.mrf.mxu0
    %3789 = vmatprep.mubr.f32.mxu0 0.0
    %v3790 = vand.u32 %v3606, 4294901760
    %v3791 = vsub.f32 %v3606, %v3790
    %v3792 = vand.u32 %v3791, 4294901760
    %v3793 = vsub.f32 %v3791, %v3792
    %v3794 = vand.u32 %v3793, 4294901760
    %3795 = vmatmul.mubr.f32.gmra.mxu0 %v3794
    %v3796 = vpop.f32.mrf.mxu0
    %v3797 = vadd.f32 0.0, %v3796
    %v3798 = vpop.f32.mrf.mxu0
    %3799 = vmatprep.mubr.f32.mxu0 0.0
    %v3800 = vand.u32 %v3609, 4294901760
    %v3801 = vsub.f32 %v3609, %v3800
    %v3802 = vand.u32 %v3801, 4294901760
    %v3803 = vsub.f32 %v3801, %v3802
    %v3804 = vand.u32 %v3803, 4294901760
    %3805 = vmatmul.mubr.f32.gmra.mxu0 %v3804
    %v3806 = vpop.f32.mrf.mxu0
    %v3807 = vadd.f32 0.0, %v3806
    %v3808 = vpop.f32.mrf.mxu0
    %3809 = vmatprep.mubr.f32.mxu0 0.0
    %v3810 = vand.u32 %v3612, 4294901760
    %v3811 = vsub.f32 %v3612, %v3810
    %v3812 = vand.u32 %v3811, 4294901760
    %v3813 = vsub.f32 %v3811, %v3812
    %v3814 = vand.u32 %v3813, 4294901760
    %3815 = vmatmul.mubr.f32.gmra.mxu0 %v3814
    %v3816 = vpop.f32.mrf.mxu0
    %v3817 = vadd.f32 0.0, %v3816
    %v3818 = vpop.f32.mrf.mxu0
    %3819 = vmatprep.mubr.f32.mxu0 0.0
    %v3820 = vand.u32 %v3615, 4294901760
    %v3821 = vsub.f32 %v3615, %v3820
    %v3822 = vand.u32 %v3821, 4294901760
    %v3823 = vsub.f32 %v3821, %v3822
    %v3824 = vand.u32 %v3823, 4294901760
    %3825 = vmatmul.mubr.f32.gmra.mxu0 %v3824
    %v3826 = vpop.f32.mrf.mxu0
    %v3827 = vadd.f32 0.0, %v3826
    %v3828 = vpop.f32.mrf.mxu0
    %3829 = vmatprep.mubr.f32.mxu0 0.0
    %v3830 = vand.u32 %v3618, 4294901760
    %v3831 = vsub.f32 %v3618, %v3830
    %v3832 = vand.u32 %v3831, 4294901760
    %v3833 = vsub.f32 %v3831, %v3832
    %v3834 = vand.u32 %v3833, 4294901760
    %3835 = vmatmul.mubr.f32.gmra.mxu0 %v3834
    %v3836 = vpop.f32.mrf.mxu0
    %v3837 = vadd.f32 0.0, %v3836
    %v3838 = vpop.f32.mrf.mxu0
    %3839 = vmatprep.mubr.f32.mxu0 0.0
    %v3840 = vand.u32 %v3621, 4294901760
    %v3841 = vsub.f32 %v3621, %v3840
    %v3842 = vand.u32 %v3841, 4294901760
    %v3843 = vsub.f32 %v3841, %v3842
    %v3844 = vand.u32 %v3843, 4294901760
    %3845 = vmatmul.mubr.f32.gmra.mxu0 %v3844
    %v3846 = vpop.f32.mrf.mxu0
    %v3847 = vadd.f32 0.0, %v3846
    %v3848 = vpop.f32.mrf.mxu0
    %3849 = vdwg.mxu0
    %3850 = vmatprep.subr.mxu0 0.0
    %3851 = vmatpush1.msra.mxu0 0.0
    %3852 = vmatprep.subr.mxu0 0.0
    %3853 = vmatpush1.msra.mxu0 0.0
    %3854 = vmatprep.subr.mxu0 0.0
    %3855 = vmatpush1.msra.mxu0 0.0
    %3856 = vmatprep.subr.mxu0 0.0
    %3857 = vmatpush1.msra.mxu0 0.0
    %3858 = vmatprep.subr.mxu0 0.0
    %3859 = vmatpush1.msra.mxu0 0.0
    %3860 = vmatprep.subr.mxu0 0.0
    %3861 = vmatpush1.msra.mxu0 0.0
    %3862 = vmatprep.subr.mxu0 0.0
    %3863 = vmatpush1.msra.mxu0 0.0
    %3864 = vmatprep.subr.mxu0 0.0
    %3865 = vmatpush1.msra.mxu0 0.0
    %3866 = vmatprep.subr.mxu0 0.0
    %3867 = vmatpush1.msra.mxu0 0.0
    %3868 = vmatprep.subr.mxu0 0.0
    %3869 = vmatpush1.msra.mxu0 0.0
    %3870 = vmatprep.subr.mxu0 0.0
    %3871 = vmatpush1.msra.mxu0 0.0
    %3872 = vmatprep.subr.mxu0 0.0
    %3873 = vmatpush1.msra.mxu0 0.0
    %3874 = vmatprep.subr.mxu0 0.0
    %3875 = vmatpush1.msra.mxu0 0.0
    %3876 = vmatprep.subr.mxu0 0.0
    %3877 = vmatpush1.msra.mxu0 0.0
    %3878 = vmatprep.subr.mxu0 0.0
    %v3879 = vand.u32 %v53, 4294901760
    %v3880 = vsub.f32 %v53, %v3879
    %v3881 = vand.u32 %v3880, 4294901760
    %v3882 = vsub.f32 %v3880, %v3881
    %v3883 = vand.u32 %v3882, 4294901760
    %3884 = vmatpush1.msra.mxu0 %v3883
    %3885 = vmatprep.subr.mxu0 0.0
    %v3886 = vand.u32 %v52, 4294901760
    %v3887 = vsub.f32 %v52, %v3886
    %v3888 = vand.u32 %v3887, 4294901760
    %v3889 = vsub.f32 %v3887, %v3888
    %v3890 = vand.u32 %v3889, 4294901760
    %3891 = vmatpush1.msra.mxu0 %v3890
    %3892 = vmatprep.subr.mxu0 0.0
    %3893 = vmatpush2.msra.mxu0 0.0
    %3894 = vmatprep.subr.mxu0 0.0
    %3895 = vmatpush2.msra.mxu0 0.0
    %3896 = vmatprep.subr.mxu0 0.0
    %3897 = vmatpush2.msra.mxu0 0.0
    %3898 = vmatprep.subr.mxu0 0.0
    %3899 = vmatpush2.msra.mxu0 0.0
    %3900 = vmatprep.subr.mxu0 0.0
    %3901 = vmatpush2.msra.mxu0 0.0
    %3902 = vmatprep.subr.mxu0 0.0
    %3903 = vmatpush2.msra.mxu0 0.0
    %3904 = vmatprep.subr.mxu0 0.0
    %3905 = vmatpush2.msra.mxu0 0.0
    %3906 = vmatprep.subr.mxu0 0.0
    %3907 = vmatpush2.msra.mxu0 0.0
    %3908 = vmatprep.subr.mxu0 0.0
    %3909 = vmatpush2.msra.mxu0 0.0
    %3910 = vmatprep.subr.mxu0 0.0
    %3911 = vmatpush2.msra.mxu0 0.0
    %3912 = vmatprep.subr.mxu0 0.0
    %3913 = vmatpush2.msra.mxu0 0.0
    %3914 = vmatprep.subr.mxu0 0.0
    %3915 = vmatpush2.msra.mxu0 0.0
    %3916 = vmatprep.subr.mxu0 0.0
    %3917 = vmatpush2.msra.mxu0 0.0
    %3918 = vmatprep.subr.mxu0 0.0
    %3919 = vmatpush2.msra.mxu0 0.0
    %3920 = vmatprep.subr.mxu0 0.0
    %3921 = vmatpush2.msra.mxu0 0.0
    %3922 = vmatprep.subr.mxu0 0.0
    %3923 = vmatpush2.msra.mxu0 0.0
    %3924 = vmatprep.mubr.f32.mxu0 0.0
    %v3925 = vand.u32 %v3576, 4294901760
    %3926 = vmatmul.mubr.f32.gmra.mxu0 %v3925
    %v3927 = vpop.f32.mrf.mxu0
    %v3928 = vadd.f32 %v3697, %v3927
    %v3929 = vpop.f32.mrf.mxu0
    %3930 = vmatprep.mubr.f32.mxu0 0.0
    %v3931 = vand.u32 %v3579, 4294901760
    %3932 = vmatmul.mubr.f32.gmra.mxu0 %v3931
    %v3933 = vpop.f32.mrf.mxu0
    %v3934 = vadd.f32 %v3707, %v3933
    %v3935 = vpop.f32.mrf.mxu0
    %3936 = vmatprep.mubr.f32.mxu0 0.0
    %v3937 = vand.u32 %v3582, 4294901760
    %3938 = vmatmul.mubr.f32.gmra.mxu0 %v3937
    %v3939 = vpop.f32.mrf.mxu0
    %v3940 = vadd.f32 %v3717, %v3939
    %v3941 = vpop.f32.mrf.mxu0
    %3942 = vmatprep.mubr.f32.mxu0 0.0
    %v3943 = vand.u32 %v3585, 4294901760
    %3944 = vmatmul.mubr.f32.gmra.mxu0 %v3943
    %v3945 = vpop.f32.mrf.mxu0
    %v3946 = vadd.f32 %v3727, %v3945
    %v3947 = vpop.f32.mrf.mxu0
    %3948 = vmatprep.mubr.f32.mxu0 0.0
    %v3949 = vand.u32 %v3588, 4294901760
    %3950 = vmatmul.mubr.f32.gmra.mxu0 %v3949
    %v3951 = vpop.f32.mrf.mxu0
    %v3952 = vadd.f32 %v3737, %v3951
    %v3953 = vpop.f32.mrf.mxu0
    %3954 = vmatprep.mubr.f32.mxu0 0.0
    %v3955 = vand.u32 %v3591, 4294901760
    %3956 = vmatmul.mubr.f32.gmra.mxu0 %v3955
    %v3957 = vpop.f32.mrf.mxu0
    %v3958 = vadd.f32 %v3747, %v3957
    %v3959 = vpop.f32.mrf.mxu0
    %3960 = vmatprep.mubr.f32.mxu0 0.0
    %v3961 = vand.u32 %v3594, 4294901760
    %3962 = vmatmul.mubr.f32.gmra.mxu0 %v3961
    %v3963 = vpop.f32.mrf.mxu0
    %v3964 = vadd.f32 %v3757, %v3963
    %v3965 = vpop.f32.mrf.mxu0
    %3966 = vmatprep.mubr.f32.mxu0 0.0
    %v3967 = vand.u32 %v3597, 4294901760
    %3968 = vmatmul.mubr.f32.gmra.mxu0 %v3967
    %v3969 = vpop.f32.mrf.mxu0
    %v3970 = vadd.f32 %v3767, %v3969
    %v3971 = vpop.f32.mrf.mxu0
    %3972 = vmatprep.mubr.f32.mxu0 0.0
    %v3973 = vand.u32 %v3600, 4294901760
    %3974 = vmatmul.mubr.f32.gmra.mxu0 %v3973
    %v3975 = vpop.f32.mrf.mxu0
    %v3976 = vadd.f32 %v3777, %v3975
    %v3977 = vpop.f32.mrf.mxu0
    %3978 = vmatprep.mubr.f32.mxu0 0.0
    %v3979 = vand.u32 %v3603, 4294901760
    %3980 = vmatmul.mubr.f32.gmra.mxu0 %v3979
    %v3981 = vpop.f32.mrf.mxu0
    %v3982 = vadd.f32 %v3787, %v3981
    %v3983 = vpop.f32.mrf.mxu0
    %3984 = vmatprep.mubr.f32.mxu0 0.0
    %v3985 = vand.u32 %v3606, 4294901760
    %3986 = vmatmul.mubr.f32.gmra.mxu0 %v3985
    %v3987 = vpop.f32.mrf.mxu0
    %v3988 = vadd.f32 %v3797, %v3987
    %v3989 = vpop.f32.mrf.mxu0
    %3990 = vmatprep.mubr.f32.mxu0 0.0
    %v3991 = vand.u32 %v3609, 4294901760
    %3992 = vmatmul.mubr.f32.gmra.mxu0 %v3991
    %v3993 = vpop.f32.mrf.mxu0
    %v3994 = vadd.f32 %v3807, %v3993
    %v3995 = vpop.f32.mrf.mxu0
    %3996 = vmatprep.mubr.f32.mxu0 0.0
    %v3997 = vand.u32 %v3612, 4294901760
    %3998 = vmatmul.mubr.f32.gmra.mxu0 %v3997
    %v3999 = vpop.f32.mrf.mxu0
    %v4000 = vadd.f32 %v3817, %v3999
    %v4001 = vpop.f32.mrf.mxu0
    %4002 = vmatprep.mubr.f32.mxu0 0.0
    %v4003 = vand.u32 %v3615, 4294901760
    %4004 = vmatmul.mubr.f32.gmra.mxu0 %v4003
    %v4005 = vpop.f32.mrf.mxu0
    %v4006 = vadd.f32 %v3827, %v4005
    %v4007 = vpop.f32.mrf.mxu0
    %4008 = vmatprep.mubr.f32.mxu0 0.0
    %v4009 = vand.u32 %v3618, 4294901760
    %4010 = vmatmul.mubr.f32.gmra.mxu0 %v4009
    %v4011 = vpop.f32.mrf.mxu0
    %v4012 = vadd.f32 %v3837, %v4011
    %v4013 = vpop.f32.mrf.mxu0
    %4014 = vmatprep.mubr.f32.mxu0 0.0
    %v4015 = vand.u32 %v3621, 4294901760
    %4016 = vmatmul.mubr.f32.gmra.mxu0 %v4015
    %v4017 = vpop.f32.mrf.mxu0
    %v4018 = vadd.f32 %v3847, %v4017
    %v4019 = vpop.f32.mrf.mxu0
    %4020 = vdwg.mxu0
    %4021 = vmatprep.subr.mxu0 0.0
    %4022 = vmatpush1.msra.mxu0 0.0
    %4023 = vmatprep.subr.mxu0 0.0
    %4024 = vmatpush1.msra.mxu0 0.0
    %4025 = vmatprep.subr.mxu0 0.0
    %4026 = vmatpush1.msra.mxu0 0.0
    %4027 = vmatprep.subr.mxu0 0.0
    %4028 = vmatpush1.msra.mxu0 0.0
    %4029 = vmatprep.subr.mxu0 0.0
    %4030 = vmatpush1.msra.mxu0 0.0
    %4031 = vmatprep.subr.mxu0 0.0
    %4032 = vmatpush1.msra.mxu0 0.0
    %4033 = vmatprep.subr.mxu0 0.0
    %4034 = vmatpush1.msra.mxu0 0.0
    %4035 = vmatprep.subr.mxu0 0.0
    %4036 = vmatpush1.msra.mxu0 0.0
    %4037 = vmatprep.subr.mxu0 0.0
    %4038 = vmatpush1.msra.mxu0 0.0
    %4039 = vmatprep.subr.mxu0 0.0
    %4040 = vmatpush1.msra.mxu0 0.0
    %4041 = vmatprep.subr.mxu0 0.0
    %4042 = vmatpush1.msra.mxu0 0.0
    %4043 = vmatprep.subr.mxu0 0.0
    %4044 = vmatpush1.msra.mxu0 0.0
    %4045 = vmatprep.subr.mxu0 0.0
    %4046 = vmatpush1.msra.mxu0 0.0
    %4047 = vmatprep.subr.mxu0 0.0
    %4048 = vmatpush1.msra.mxu0 0.0
    %4049 = vmatprep.subr.mxu0 0.0
    %v4050 = vand.u32 %v53, 4294901760
    %v4051 = vsub.f32 %v53, %v4050
    %4052 = vmatpush1.msra.mxu0 %v4051
    %4053 = vmatprep.subr.mxu0 0.0
    %v4054 = vand.u32 %v52, 4294901760
    %v4055 = vsub.f32 %v52, %v4054
    %4056 = vmatpush1.msra.mxu0 %v4055
    %4057 = vmatprep.subr.mxu0 0.0
    %4058 = vmatpush2.msra.mxu0 0.0
    %4059 = vmatprep.subr.mxu0 0.0
    %4060 = vmatpush2.msra.mxu0 0.0
    %4061 = vmatprep.subr.mxu0 0.0
    %4062 = vmatpush2.msra.mxu0 0.0
    %4063 = vmatprep.subr.mxu0 0.0
    %4064 = vmatpush2.msra.mxu0 0.0
    %4065 = vmatprep.subr.mxu0 0.0
    %4066 = vmatpush2.msra.mxu0 0.0
    %4067 = vmatprep.subr.mxu0 0.0
    %4068 = vmatpush2.msra.mxu0 0.0
    %4069 = vmatprep.subr.mxu0 0.0
    %4070 = vmatpush2.msra.mxu0 0.0
    %4071 = vmatprep.subr.mxu0 0.0
    %4072 = vmatpush2.msra.mxu0 0.0
    %4073 = vmatprep.subr.mxu0 0.0
    %4074 = vmatpush2.msra.mxu0 0.0
    %4075 = vmatprep.subr.mxu0 0.0
    %4076 = vmatpush2.msra.mxu0 0.0
    %4077 = vmatprep.subr.mxu0 0.0
    %4078 = vmatpush2.msra.mxu0 0.0
    %4079 = vmatprep.subr.mxu0 0.0
    %4080 = vmatpush2.msra.mxu0 0.0
    %4081 = vmatprep.subr.mxu0 0.0
    %4082 = vmatpush2.msra.mxu0 0.0
    %4083 = vmatprep.subr.mxu0 0.0
    %4084 = vmatpush2.msra.mxu0 0.0
    %4085 = vmatprep.subr.mxu0 0.0
    %4086 = vmatpush2.msra.mxu0 0.0
    %4087 = vmatprep.subr.mxu0 0.0
    %4088 = vmatpush2.msra.mxu0 0.0
    %4089 = vmatprep.mubr.f32.mxu0 0.0
    %v4090 = vand.u32 %v3576, 4294901760
    %v4091 = vsub.f32 %v3576, %v4090
    %4092 = vmatmul.mubr.f32.gmra.mxu0 %v4091
    %v4093 = vpop.f32.mrf.mxu0
    %v4094 = vadd.f32 %v3928, %v4093
    %v4095 = vpop.f32.mrf.mxu0
    %4096 = vmatprep.mubr.f32.mxu0 0.0
    %v4097 = vand.u32 %v3579, 4294901760
    %v4098 = vsub.f32 %v3579, %v4097
    %4099 = vmatmul.mubr.f32.gmra.mxu0 %v4098
    %v4100 = vpop.f32.mrf.mxu0
    %v4101 = vadd.f32 %v3934, %v4100
    %v4102 = vpop.f32.mrf.mxu0
    %4103 = vmatprep.mubr.f32.mxu0 0.0
    %v4104 = vand.u32 %v3582, 4294901760
    %v4105 = vsub.f32 %v3582, %v4104
    %4106 = vmatmul.mubr.f32.gmra.mxu0 %v4105
    %v4107 = vpop.f32.mrf.mxu0
    %v4108 = vadd.f32 %v3940, %v4107
    %v4109 = vpop.f32.mrf.mxu0
    %4110 = vmatprep.mubr.f32.mxu0 0.0
    %v4111 = vand.u32 %v3585, 4294901760
    %v4112 = vsub.f32 %v3585, %v4111
    %4113 = vmatmul.mubr.f32.gmra.mxu0 %v4112
    %v4114 = vpop.f32.mrf.mxu0
    %v4115 = vadd.f32 %v3946, %v4114
    %v4116 = vpop.f32.mrf.mxu0
    %4117 = vmatprep.mubr.f32.mxu0 0.0
    %v4118 = vand.u32 %v3588, 4294901760
    %v4119 = vsub.f32 %v3588, %v4118
    %4120 = vmatmul.mubr.f32.gmra.mxu0 %v4119
    %v4121 = vpop.f32.mrf.mxu0
    %v4122 = vadd.f32 %v3952, %v4121
    %v4123 = vpop.f32.mrf.mxu0
    %4124 = vmatprep.mubr.f32.mxu0 0.0
    %v4125 = vand.u32 %v3591, 4294901760
    %v4126 = vsub.f32 %v3591, %v4125
    %4127 = vmatmul.mubr.f32.gmra.mxu0 %v4126
    %v4128 = vpop.f32.mrf.mxu0
    %v4129 = vadd.f32 %v3958, %v4128
    %v4130 = vpop.f32.mrf.mxu0
    %4131 = vmatprep.mubr.f32.mxu0 0.0
    %v4132 = vand.u32 %v3594, 4294901760
    %v4133 = vsub.f32 %v3594, %v4132
    %4134 = vmatmul.mubr.f32.gmra.mxu0 %v4133
    %v4135 = vpop.f32.mrf.mxu0
    %v4136 = vadd.f32 %v3964, %v4135
    %v4137 = vpop.f32.mrf.mxu0
    %4138 = vmatprep.mubr.f32.mxu0 0.0
    %v4139 = vand.u32 %v3597, 4294901760
    %v4140 = vsub.f32 %v3597, %v4139
    %4141 = vmatmul.mubr.f32.gmra.mxu0 %v4140
    %v4142 = vpop.f32.mrf.mxu0
    %v4143 = vadd.f32 %v3970, %v4142
    %v4144 = vpop.f32.mrf.mxu0
    %4145 = vmatprep.mubr.f32.mxu0 0.0
    %v4146 = vand.u32 %v3600, 4294901760
    %v4147 = vsub.f32 %v3600, %v4146
    %4148 = vmatmul.mubr.f32.gmra.mxu0 %v4147
    %v4149 = vpop.f32.mrf.mxu0
    %v4150 = vadd.f32 %v3976, %v4149
    %v4151 = vpop.f32.mrf.mxu0
    %4152 = vmatprep.mubr.f32.mxu0 0.0
    %v4153 = vand.u32 %v3603, 4294901760
    %v4154 = vsub.f32 %v3603, %v4153
    %4155 = vmatmul.mubr.f32.gmra.mxu0 %v4154
    %v4156 = vpop.f32.mrf.mxu0
    %v4157 = vadd.f32 %v3982, %v4156
    %v4158 = vpop.f32.mrf.mxu0
    %4159 = vmatprep.mubr.f32.mxu0 0.0
    %v4160 = vand.u32 %v3606, 4294901760
    %v4161 = vsub.f32 %v3606, %v4160
    %4162 = vmatmul.mubr.f32.gmra.mxu0 %v4161
    %v4163 = vpop.f32.mrf.mxu0
    %v4164 = vadd.f32 %v3988, %v4163
    %v4165 = vpop.f32.mrf.mxu0
    %4166 = vmatprep.mubr.f32.mxu0 0.0
    %v4167 = vand.u32 %v3609, 4294901760
    %v4168 = vsub.f32 %v3609, %v4167
    %4169 = vmatmul.mubr.f32.gmra.mxu0 %v4168
    %v4170 = vpop.f32.mrf.mxu0
    %v4171 = vadd.f32 %v3994, %v4170
    %v4172 = vpop.f32.mrf.mxu0
    %4173 = vmatprep.mubr.f32.mxu0 0.0
    %v4174 = vand.u32 %v3612, 4294901760
    %v4175 = vsub.f32 %v3612, %v4174
    %4176 = vmatmul.mubr.f32.gmra.mxu0 %v4175
    %v4177 = vpop.f32.mrf.mxu0
    %v4178 = vadd.f32 %v4000, %v4177
    %v4179 = vpop.f32.mrf.mxu0
    %4180 = vmatprep.mubr.f32.mxu0 0.0
    %v4181 = vand.u32 %v3615, 4294901760
    %v4182 = vsub.f32 %v3615, %v4181
    %4183 = vmatmul.mubr.f32.gmra.mxu0 %v4182
    %v4184 = vpop.f32.mrf.mxu0
    %v4185 = vadd.f32 %v4006, %v4184
    %v4186 = vpop.f32.mrf.mxu0
    %4187 = vmatprep.mubr.f32.mxu0 0.0
    %v4188 = vand.u32 %v3618, 4294901760
    %v4189 = vsub.f32 %v3618, %v4188
    %4190 = vmatmul.mubr.f32.gmra.mxu0 %v4189
    %v4191 = vpop.f32.mrf.mxu0
    %v4192 = vadd.f32 %v4012, %v4191
    %v4193 = vpop.f32.mrf.mxu0
    %4194 = vmatprep.mubr.f32.mxu0 0.0
    %v4195 = vand.u32 %v3621, 4294901760
    %v4196 = vsub.f32 %v3621, %v4195
    %4197 = vmatmul.mubr.f32.gmra.mxu0 %v4196
    %v4198 = vpop.f32.mrf.mxu0
    %v4199 = vadd.f32 %v4018, %v4198
    %v4200 = vpop.f32.mrf.mxu0
    %4201 = vdwg.mxu0
    %4202 = vmatprep.subr.mxu0 0.0
    %4203 = vmatpush1.msra.mxu0 0.0
    %4204 = vmatprep.subr.mxu0 0.0
    %4205 = vmatpush1.msra.mxu0 0.0
    %4206 = vmatprep.subr.mxu0 0.0
    %4207 = vmatpush1.msra.mxu0 0.0
    %4208 = vmatprep.subr.mxu0 0.0
    %4209 = vmatpush1.msra.mxu0 0.0
    %4210 = vmatprep.subr.mxu0 0.0
    %4211 = vmatpush1.msra.mxu0 0.0
    %4212 = vmatprep.subr.mxu0 0.0
    %4213 = vmatpush1.msra.mxu0 0.0
    %4214 = vmatprep.subr.mxu0 0.0
    %4215 = vmatpush1.msra.mxu0 0.0
    %4216 = vmatprep.subr.mxu0 0.0
    %4217 = vmatpush1.msra.mxu0 0.0
    %4218 = vmatprep.subr.mxu0 0.0
    %4219 = vmatpush1.msra.mxu0 0.0
    %4220 = vmatprep.subr.mxu0 0.0
    %4221 = vmatpush1.msra.mxu0 0.0
    %4222 = vmatprep.subr.mxu0 0.0
    %4223 = vmatpush1.msra.mxu0 0.0
    %4224 = vmatprep.subr.mxu0 0.0
    %4225 = vmatpush1.msra.mxu0 0.0
    %4226 = vmatprep.subr.mxu0 0.0
    %4227 = vmatpush1.msra.mxu0 0.0
    %4228 = vmatprep.subr.mxu0 0.0
    %4229 = vmatpush1.msra.mxu0 0.0
    %4230 = vmatprep.subr.mxu0 0.0
    %v4231 = vand.u32 %v53, 4294901760
    %4232 = vmatpush1.msra.mxu0 %v4231
    %4233 = vmatprep.subr.mxu0 0.0
    %v4234 = vand.u32 %v52, 4294901760
    %4235 = vmatpush1.msra.mxu0 %v4234
    %4236 = vmatprep.subr.mxu0 0.0
    %4237 = vmatpush2.msra.mxu0 0.0
    %4238 = vmatprep.subr.mxu0 0.0
    %4239 = vmatpush2.msra.mxu0 0.0
    %4240 = vmatprep.subr.mxu0 0.0
    %4241 = vmatpush2.msra.mxu0 0.0
    %4242 = vmatprep.subr.mxu0 0.0
    %4243 = vmatpush2.msra.mxu0 0.0
    %4244 = vmatprep.subr.mxu0 0.0
    %4245 = vmatpush2.msra.mxu0 0.0
    %4246 = vmatprep.subr.mxu0 0.0
    %4247 = vmatpush2.msra.mxu0 0.0
    %4248 = vmatprep.subr.mxu0 0.0
    %4249 = vmatpush2.msra.mxu0 0.0
    %4250 = vmatprep.subr.mxu0 0.0
    %4251 = vmatpush2.msra.mxu0 0.0
    %4252 = vmatprep.subr.mxu0 0.0
    %4253 = vmatpush2.msra.mxu0 0.0
    %4254 = vmatprep.subr.mxu0 0.0
    %4255 = vmatpush2.msra.mxu0 0.0
    %4256 = vmatprep.subr.mxu0 0.0
    %4257 = vmatpush2.msra.mxu0 0.0
    %4258 = vmatprep.subr.mxu0 0.0
    %4259 = vmatpush2.msra.mxu0 0.0
    %4260 = vmatprep.subr.mxu0 0.0
    %4261 = vmatpush2.msra.mxu0 0.0
    %4262 = vmatprep.subr.mxu0 0.0
    %4263 = vmatpush2.msra.mxu0 0.0
    %4264 = vmatprep.subr.mxu0 0.0
    %4265 = vmatpush2.msra.mxu0 0.0
    %4266 = vmatprep.subr.mxu0 0.0
    %4267 = vmatpush2.msra.mxu0 0.0
    %4268 = vmatprep.mubr.f32.mxu0 0.0
    %v4269 = vand.u32 %v3576, 4294901760
    %v4270 = vsub.f32 %v3576, %v4269
    %v4271 = vand.u32 %v4270, 4294901760
    %4272 = vmatmul.mubr.f32.gmra.mxu0 %v4271
    %v4273 = vpop.f32.mrf.mxu0
    %v4274 = vadd.f32 %v4094, %v4273
    %v4275 = vpop.f32.mrf.mxu0
    %4276 = vmatprep.mubr.f32.mxu0 0.0
    %v4277 = vand.u32 %v3579, 4294901760
    %v4278 = vsub.f32 %v3579, %v4277
    %v4279 = vand.u32 %v4278, 4294901760
    %4280 = vmatmul.mubr.f32.gmra.mxu0 %v4279
    %v4281 = vpop.f32.mrf.mxu0
    %v4282 = vadd.f32 %v4101, %v4281
    %v4283 = vpop.f32.mrf.mxu0
    %4284 = vmatprep.mubr.f32.mxu0 0.0
    %v4285 = vand.u32 %v3582, 4294901760
    %v4286 = vsub.f32 %v3582, %v4285
    %v4287 = vand.u32 %v4286, 4294901760
    %4288 = vmatmul.mubr.f32.gmra.mxu0 %v4287
    %v4289 = vpop.f32.mrf.mxu0
    %v4290 = vadd.f32 %v4108, %v4289
    %v4291 = vpop.f32.mrf.mxu0
    %4292 = vmatprep.mubr.f32.mxu0 0.0
    %v4293 = vand.u32 %v3585, 4294901760
    %v4294 = vsub.f32 %v3585, %v4293
    %v4295 = vand.u32 %v4294, 4294901760
    %4296 = vmatmul.mubr.f32.gmra.mxu0 %v4295
    %v4297 = vpop.f32.mrf.mxu0
    %v4298 = vadd.f32 %v4115, %v4297
    %v4299 = vpop.f32.mrf.mxu0
    %4300 = vmatprep.mubr.f32.mxu0 0.0
    %v4301 = vand.u32 %v3588, 4294901760
    %v4302 = vsub.f32 %v3588, %v4301
    %v4303 = vand.u32 %v4302, 4294901760
    %4304 = vmatmul.mubr.f32.gmra.mxu0 %v4303
    %v4305 = vpop.f32.mrf.mxu0
    %v4306 = vadd.f32 %v4122, %v4305
    %v4307 = vpop.f32.mrf.mxu0
    %4308 = vmatprep.mubr.f32.mxu0 0.0
    %v4309 = vand.u32 %v3591, 4294901760
    %v4310 = vsub.f32 %v3591, %v4309
    %v4311 = vand.u32 %v4310, 4294901760
    %4312 = vmatmul.mubr.f32.gmra.mxu0 %v4311
    %v4313 = vpop.f32.mrf.mxu0
    %v4314 = vadd.f32 %v4129, %v4313
    %v4315 = vpop.f32.mrf.mxu0
    %4316 = vmatprep.mubr.f32.mxu0 0.0
    %v4317 = vand.u32 %v3594, 4294901760
    %v4318 = vsub.f32 %v3594, %v4317
    %v4319 = vand.u32 %v4318, 4294901760
    %4320 = vmatmul.mubr.f32.gmra.mxu0 %v4319
    %v4321 = vpop.f32.mrf.mxu0
    %v4322 = vadd.f32 %v4136, %v4321
    %v4323 = vpop.f32.mrf.mxu0
    %4324 = vmatprep.mubr.f32.mxu0 0.0
    %v4325 = vand.u32 %v3597, 4294901760
    %v4326 = vsub.f32 %v3597, %v4325
    %v4327 = vand.u32 %v4326, 4294901760
    %4328 = vmatmul.mubr.f32.gmra.mxu0 %v4327
    %v4329 = vpop.f32.mrf.mxu0
    %v4330 = vadd.f32 %v4143, %v4329
    %v4331 = vpop.f32.mrf.mxu0
    %4332 = vmatprep.mubr.f32.mxu0 0.0
    %v4333 = vand.u32 %v3600, 4294901760
    %v4334 = vsub.f32 %v3600, %v4333
    %v4335 = vand.u32 %v4334, 4294901760
    %4336 = vmatmul.mubr.f32.gmra.mxu0 %v4335
    %v4337 = vpop.f32.mrf.mxu0
    %v4338 = vadd.f32 %v4150, %v4337
    %v4339 = vpop.f32.mrf.mxu0
    %4340 = vmatprep.mubr.f32.mxu0 0.0
    %v4341 = vand.u32 %v3603, 4294901760
    %v4342 = vsub.f32 %v3603, %v4341
    %v4343 = vand.u32 %v4342, 4294901760
    %4344 = vmatmul.mubr.f32.gmra.mxu0 %v4343
    %v4345 = vpop.f32.mrf.mxu0
    %v4346 = vadd.f32 %v4157, %v4345
    %v4347 = vpop.f32.mrf.mxu0
    %4348 = vmatprep.mubr.f32.mxu0 0.0
    %v4349 = vand.u32 %v3606, 4294901760
    %v4350 = vsub.f32 %v3606, %v4349
    %v4351 = vand.u32 %v4350, 4294901760
    %4352 = vmatmul.mubr.f32.gmra.mxu0 %v4351
    %v4353 = vpop.f32.mrf.mxu0
    %v4354 = vadd.f32 %v4164, %v4353
    %v4355 = vpop.f32.mrf.mxu0
    %4356 = vmatprep.mubr.f32.mxu0 0.0
    %v4357 = vand.u32 %v3609, 4294901760
    %v4358 = vsub.f32 %v3609, %v4357
    %v4359 = vand.u32 %v4358, 4294901760
    %4360 = vmatmul.mubr.f32.gmra.mxu0 %v4359
    %v4361 = vpop.f32.mrf.mxu0
    %v4362 = vadd.f32 %v4171, %v4361
    %v4363 = vpop.f32.mrf.mxu0
    %4364 = vmatprep.mubr.f32.mxu0 0.0
    %v4365 = vand.u32 %v3612, 4294901760
    %v4366 = vsub.f32 %v3612, %v4365
    %v4367 = vand.u32 %v4366, 4294901760
    %4368 = vmatmul.mubr.f32.gmra.mxu0 %v4367
    %v4369 = vpop.f32.mrf.mxu0
    %v4370 = vadd.f32 %v4178, %v4369
    %v4371 = vpop.f32.mrf.mxu0
    %4372 = vmatprep.mubr.f32.mxu0 0.0
    %v4373 = vand.u32 %v3615, 4294901760
    %v4374 = vsub.f32 %v3615, %v4373
    %v4375 = vand.u32 %v4374, 4294901760
    %4376 = vmatmul.mubr.f32.gmra.mxu0 %v4375
    %v4377 = vpop.f32.mrf.mxu0
    %v4378 = vadd.f32 %v4185, %v4377
    %v4379 = vpop.f32.mrf.mxu0
    %4380 = vmatprep.mubr.f32.mxu0 0.0
    %v4381 = vand.u32 %v3618, 4294901760
    %v4382 = vsub.f32 %v3618, %v4381
    %v4383 = vand.u32 %v4382, 4294901760
    %4384 = vmatmul.mubr.f32.gmra.mxu0 %v4383
    %v4385 = vpop.f32.mrf.mxu0
    %v4386 = vadd.f32 %v4192, %v4385
    %v4387 = vpop.f32.mrf.mxu0
    %4388 = vmatprep.mubr.f32.mxu0 0.0
    %v4389 = vand.u32 %v3621, 4294901760
    %v4390 = vsub.f32 %v3621, %v4389
    %v4391 = vand.u32 %v4390, 4294901760
    %4392 = vmatmul.mubr.f32.gmra.mxu0 %v4391
    %v4393 = vpop.f32.mrf.mxu0
    %v4394 = vadd.f32 %v4199, %v4393
    %v4395 = vpop.f32.mrf.mxu0
    %4396 = vdwg.mxu0
    %4397 = vmatprep.subr.mxu0 0.0
    %4398 = vmatpush1.msra.mxu0 0.0
    %4399 = vmatprep.subr.mxu0 0.0
    %4400 = vmatpush1.msra.mxu0 0.0
    %4401 = vmatprep.subr.mxu0 0.0
    %4402 = vmatpush1.msra.mxu0 0.0
    %4403 = vmatprep.subr.mxu0 0.0
    %4404 = vmatpush1.msra.mxu0 0.0
    %4405 = vmatprep.subr.mxu0 0.0
    %4406 = vmatpush1.msra.mxu0 0.0
    %4407 = vmatprep.subr.mxu0 0.0
    %4408 = vmatpush1.msra.mxu0 0.0
    %4409 = vmatprep.subr.mxu0 0.0
    %4410 = vmatpush1.msra.mxu0 0.0
    %4411 = vmatprep.subr.mxu0 0.0
    %4412 = vmatpush1.msra.mxu0 0.0
    %4413 = vmatprep.subr.mxu0 0.0
    %4414 = vmatpush1.msra.mxu0 0.0
    %4415 = vmatprep.subr.mxu0 0.0
    %4416 = vmatpush1.msra.mxu0 0.0
    %4417 = vmatprep.subr.mxu0 0.0
    %4418 = vmatpush1.msra.mxu0 0.0
    %4419 = vmatprep.subr.mxu0 0.0
    %4420 = vmatpush1.msra.mxu0 0.0
    %4421 = vmatprep.subr.mxu0 0.0
    %4422 = vmatpush1.msra.mxu0 0.0
    %4423 = vmatprep.subr.mxu0 0.0
    %4424 = vmatpush1.msra.mxu0 0.0
    %4425 = vmatprep.subr.mxu0 0.0
    %v4426 = vand.u32 %v53, 4294901760
    %v4427 = vsub.f32 %v53, %v4426
    %v4428 = vand.u32 %v4427, 4294901760
    %4429 = vmatpush1.msra.mxu0 %v4428
    %4430 = vmatprep.subr.mxu0 0.0
    %v4431 = vand.u32 %v52, 4294901760
    %v4432 = vsub.f32 %v52, %v4431
    %v4433 = vand.u32 %v4432, 4294901760
    %4434 = vmatpush1.msra.mxu0 %v4433
    %4435 = vmatprep.subr.mxu0 0.0
    %4436 = vmatpush2.msra.mxu0 0.0
    %4437 = vmatprep.subr.mxu0 0.0
    %4438 = vmatpush2.msra.mxu0 0.0
    %4439 = vmatprep.subr.mxu0 0.0
    %4440 = vmatpush2.msra.mxu0 0.0
    %4441 = vmatprep.subr.mxu0 0.0
    %4442 = vmatpush2.msra.mxu0 0.0
    %4443 = vmatprep.subr.mxu0 0.0
    %4444 = vmatpush2.msra.mxu0 0.0
    %4445 = vmatprep.subr.mxu0 0.0
    %4446 = vmatpush2.msra.mxu0 0.0
    %4447 = vmatprep.subr.mxu0 0.0
    %4448 = vmatpush2.msra.mxu0 0.0
    %4449 = vmatprep.subr.mxu0 0.0
    %4450 = vmatpush2.msra.mxu0 0.0
    %4451 = vmatprep.subr.mxu0 0.0
    %4452 = vmatpush2.msra.mxu0 0.0
    %4453 = vmatprep.subr.mxu0 0.0
    %4454 = vmatpush2.msra.mxu0 0.0
    %4455 = vmatprep.subr.mxu0 0.0
    %4456 = vmatpush2.msra.mxu0 0.0
    %4457 = vmatprep.subr.mxu0 0.0
    %4458 = vmatpush2.msra.mxu0 0.0
    %4459 = vmatprep.subr.mxu0 0.0
    %4460 = vmatpush2.msra.mxu0 0.0
    %4461 = vmatprep.subr.mxu0 0.0
    %4462 = vmatpush2.msra.mxu0 0.0
    %4463 = vmatprep.subr.mxu0 0.0
    %4464 = vmatpush2.msra.mxu0 0.0
    %4465 = vmatprep.subr.mxu0 0.0
    %4466 = vmatpush2.msra.mxu0 0.0
    %4467 = vmatprep.mubr.f32.mxu0 0.0
    %v4468 = vand.u32 %v3576, 4294901760
    %4469 = vmatmul.mubr.f32.gmra.mxu0 %v4468
    %v4470 = vpop.f32.mrf.mxu0
    %v4471 = vadd.f32 %v4274, %v4470
    %v4472 = vpop.f32.mrf.mxu0
    %4473 = vmatprep.mubr.f32.mxu0 0.0
    %v4474 = vand.u32 %v3579, 4294901760
    %4475 = vmatmul.mubr.f32.gmra.mxu0 %v4474
    %v4476 = vpop.f32.mrf.mxu0
    %v4477 = vadd.f32 %v4282, %v4476
    %v4478 = vpop.f32.mrf.mxu0
    %4479 = vmatprep.mubr.f32.mxu0 0.0
    %v4480 = vand.u32 %v3582, 4294901760
    %4481 = vmatmul.mubr.f32.gmra.mxu0 %v4480
    %v4482 = vpop.f32.mrf.mxu0
    %v4483 = vadd.f32 %v4290, %v4482
    %v4484 = vpop.f32.mrf.mxu0
    %4485 = vmatprep.mubr.f32.mxu0 0.0
    %v4486 = vand.u32 %v3585, 4294901760
    %4487 = vmatmul.mubr.f32.gmra.mxu0 %v4486
    %v4488 = vpop.f32.mrf.mxu0
    %v4489 = vadd.f32 %v4298, %v4488
    %v4490 = vpop.f32.mrf.mxu0
    %4491 = vmatprep.mubr.f32.mxu0 0.0
    %v4492 = vand.u32 %v3588, 4294901760
    %4493 = vmatmul.mubr.f32.gmra.mxu0 %v4492
    %v4494 = vpop.f32.mrf.mxu0
    %v4495 = vadd.f32 %v4306, %v4494
    %v4496 = vpop.f32.mrf.mxu0
    %4497 = vmatprep.mubr.f32.mxu0 0.0
    %v4498 = vand.u32 %v3591, 4294901760
    %4499 = vmatmul.mubr.f32.gmra.mxu0 %v4498
    %v4500 = vpop.f32.mrf.mxu0
    %v4501 = vadd.f32 %v4314, %v4500
    %v4502 = vpop.f32.mrf.mxu0
    %4503 = vmatprep.mubr.f32.mxu0 0.0
    %v4504 = vand.u32 %v3594, 4294901760
    %4505 = vmatmul.mubr.f32.gmra.mxu0 %v4504
    %v4506 = vpop.f32.mrf.mxu0
    %v4507 = vadd.f32 %v4322, %v4506
    %v4508 = vpop.f32.mrf.mxu0
    %4509 = vmatprep.mubr.f32.mxu0 0.0
    %v4510 = vand.u32 %v3597, 4294901760
    %4511 = vmatmul.mubr.f32.gmra.mxu0 %v4510
    %v4512 = vpop.f32.mrf.mxu0
    %v4513 = vadd.f32 %v4330, %v4512
    %v4514 = vpop.f32.mrf.mxu0
    %4515 = vmatprep.mubr.f32.mxu0 0.0
    %v4516 = vand.u32 %v3600, 4294901760
    %4517 = vmatmul.mubr.f32.gmra.mxu0 %v4516
    %v4518 = vpop.f32.mrf.mxu0
    %v4519 = vadd.f32 %v4338, %v4518
    %v4520 = vpop.f32.mrf.mxu0
    %4521 = vmatprep.mubr.f32.mxu0 0.0
    %v4522 = vand.u32 %v3603, 4294901760
    %4523 = vmatmul.mubr.f32.gmra.mxu0 %v4522
    %v4524 = vpop.f32.mrf.mxu0
    %v4525 = vadd.f32 %v4346, %v4524
    %v4526 = vpop.f32.mrf.mxu0
    %4527 = vmatprep.mubr.f32.mxu0 0.0
    %v4528 = vand.u32 %v3606, 4294901760
    %4529 = vmatmul.mubr.f32.gmra.mxu0 %v4528
    %v4530 = vpop.f32.mrf.mxu0
    %v4531 = vadd.f32 %v4354, %v4530
    %v4532 = vpop.f32.mrf.mxu0
    %4533 = vmatprep.mubr.f32.mxu0 0.0
    %v4534 = vand.u32 %v3609, 4294901760
    %4535 = vmatmul.mubr.f32.gmra.mxu0 %v4534
    %v4536 = vpop.f32.mrf.mxu0
    %v4537 = vadd.f32 %v4362, %v4536
    %v4538 = vpop.f32.mrf.mxu0
    %4539 = vmatprep.mubr.f32.mxu0 0.0
    %v4540 = vand.u32 %v3612, 4294901760
    %4541 = vmatmul.mubr.f32.gmra.mxu0 %v4540
    %v4542 = vpop.f32.mrf.mxu0
    %v4543 = vadd.f32 %v4370, %v4542
    %v4544 = vpop.f32.mrf.mxu0
    %4545 = vmatprep.mubr.f32.mxu0 0.0
    %v4546 = vand.u32 %v3615, 4294901760
    %4547 = vmatmul.mubr.f32.gmra.mxu0 %v4546
    %v4548 = vpop.f32.mrf.mxu0
    %v4549 = vadd.f32 %v4378, %v4548
    %v4550 = vpop.f32.mrf.mxu0
    %4551 = vmatprep.mubr.f32.mxu0 0.0
    %v4552 = vand.u32 %v3618, 4294901760
    %4553 = vmatmul.mubr.f32.gmra.mxu0 %v4552
    %v4554 = vpop.f32.mrf.mxu0
    %v4555 = vadd.f32 %v4386, %v4554
    %v4556 = vpop.f32.mrf.mxu0
    %4557 = vmatprep.mubr.f32.mxu0 0.0
    %v4558 = vand.u32 %v3621, 4294901760
    %4559 = vmatmul.mubr.f32.gmra.mxu0 %v4558
    %v4560 = vpop.f32.mrf.mxu0
    %v4561 = vadd.f32 %v4394, %v4560
    %v4562 = vpop.f32.mrf.mxu0
    %4563 = vdwg.mxu0
    %4564 = vmatprep.subr.mxu0 0.0
    %4565 = vmatpush1.msra.mxu0 0.0
    %4566 = vmatprep.subr.mxu0 0.0
    %4567 = vmatpush1.msra.mxu0 0.0
    %4568 = vmatprep.subr.mxu0 0.0
    %4569 = vmatpush1.msra.mxu0 0.0
    %4570 = vmatprep.subr.mxu0 0.0
    %4571 = vmatpush1.msra.mxu0 0.0
    %4572 = vmatprep.subr.mxu0 0.0
    %4573 = vmatpush1.msra.mxu0 0.0
    %4574 = vmatprep.subr.mxu0 0.0
    %4575 = vmatpush1.msra.mxu0 0.0
    %4576 = vmatprep.subr.mxu0 0.0
    %4577 = vmatpush1.msra.mxu0 0.0
    %4578 = vmatprep.subr.mxu0 0.0
    %4579 = vmatpush1.msra.mxu0 0.0
    %4580 = vmatprep.subr.mxu0 0.0
    %4581 = vmatpush1.msra.mxu0 0.0
    %4582 = vmatprep.subr.mxu0 0.0
    %4583 = vmatpush1.msra.mxu0 0.0
    %4584 = vmatprep.subr.mxu0 0.0
    %4585 = vmatpush1.msra.mxu0 0.0
    %4586 = vmatprep.subr.mxu0 0.0
    %4587 = vmatpush1.msra.mxu0 0.0
    %4588 = vmatprep.subr.mxu0 0.0
    %4589 = vmatpush1.msra.mxu0 0.0
    %4590 = vmatprep.subr.mxu0 0.0
    %4591 = vmatpush1.msra.mxu0 0.0
    %4592 = vmatprep.subr.mxu0 0.0
    %v4593 = vand.u32 %v53, 4294901760
    %4594 = vmatpush1.msra.mxu0 %v4593
    %4595 = vmatprep.subr.mxu0 0.0
    %v4596 = vand.u32 %v52, 4294901760
    %4597 = vmatpush1.msra.mxu0 %v4596
    %4598 = vmatprep.subr.mxu0 0.0
    %4599 = vmatpush2.msra.mxu0 0.0
    %4600 = vmatprep.subr.mxu0 0.0
    %4601 = vmatpush2.msra.mxu0 0.0
    %4602 = vmatprep.subr.mxu0 0.0
    %4603 = vmatpush2.msra.mxu0 0.0
    %4604 = vmatprep.subr.mxu0 0.0
    %4605 = vmatpush2.msra.mxu0 0.0
    %4606 = vmatprep.subr.mxu0 0.0
    %4607 = vmatpush2.msra.mxu0 0.0
    %4608 = vmatprep.subr.mxu0 0.0
    %4609 = vmatpush2.msra.mxu0 0.0
    %4610 = vmatprep.subr.mxu0 0.0
    %4611 = vmatpush2.msra.mxu0 0.0
    %4612 = vmatprep.subr.mxu0 0.0
    %4613 = vmatpush2.msra.mxu0 0.0
    %4614 = vmatprep.subr.mxu0 0.0
    %4615 = vmatpush2.msra.mxu0 0.0
    %4616 = vmatprep.subr.mxu0 0.0
    %4617 = vmatpush2.msra.mxu0 0.0
    %4618 = vmatprep.subr.mxu0 0.0
    %4619 = vmatpush2.msra.mxu0 0.0
    %4620 = vmatprep.subr.mxu0 0.0
    %4621 = vmatpush2.msra.mxu0 0.0
    %4622 = vmatprep.subr.mxu0 0.0
    %4623 = vmatpush2.msra.mxu0 0.0
    %4624 = vmatprep.subr.mxu0 0.0
    %4625 = vmatpush2.msra.mxu0 0.0
    %4626 = vmatprep.subr.mxu0 0.0
    %4627 = vmatpush2.msra.mxu0 0.0
    %4628 = vmatprep.subr.mxu0 0.0
    %4629 = vmatpush2.msra.mxu0 0.0
    %4630 = vmatprep.mubr.f32.mxu0 0.0
    %v4631 = vand.u32 %v3576, 4294901760
    %4632 = vmatmul.mubr.f32.gmra.mxu0 %v4631
    %v4633 = vpop.f32.mrf.mxu0
    %v4634 = vadd.f32 %v4471, %v4633
    %v4635 = vpop.f32.mrf.mxu0
    %4636 = vmatprep.mubr.f32.mxu0 0.0
    %v4637 = vand.u32 %v3579, 4294901760
    %4638 = vmatmul.mubr.f32.gmra.mxu0 %v4637
    %v4639 = vpop.f32.mrf.mxu0
    %v4640 = vadd.f32 %v4477, %v4639
    %v4641 = vpop.f32.mrf.mxu0
    %4642 = vmatprep.mubr.f32.mxu0 0.0
    %v4643 = vand.u32 %v3582, 4294901760
    %4644 = vmatmul.mubr.f32.gmra.mxu0 %v4643
    %v4645 = vpop.f32.mrf.mxu0
    %v4646 = vadd.f32 %v4483, %v4645
    %v4647 = vpop.f32.mrf.mxu0
    %4648 = vmatprep.mubr.f32.mxu0 0.0
    %v4649 = vand.u32 %v3585, 4294901760
    %4650 = vmatmul.mubr.f32.gmra.mxu0 %v4649
    %v4651 = vpop.f32.mrf.mxu0
    %v4652 = vadd.f32 %v4489, %v4651
    %v4653 = vpop.f32.mrf.mxu0
    %4654 = vmatprep.mubr.f32.mxu0 0.0
    %v4655 = vand.u32 %v3588, 4294901760
    %4656 = vmatmul.mubr.f32.gmra.mxu0 %v4655
    %v4657 = vpop.f32.mrf.mxu0
    %v4658 = vadd.f32 %v4495, %v4657
    %v4659 = vpop.f32.mrf.mxu0
    %4660 = vmatprep.mubr.f32.mxu0 0.0
    %v4661 = vand.u32 %v3591, 4294901760
    %4662 = vmatmul.mubr.f32.gmra.mxu0 %v4661
    %v4663 = vpop.f32.mrf.mxu0
    %v4664 = vadd.f32 %v4501, %v4663
    %v4665 = vpop.f32.mrf.mxu0
    %4666 = vmatprep.mubr.f32.mxu0 0.0
    %v4667 = vand.u32 %v3594, 4294901760
    %4668 = vmatmul.mubr.f32.gmra.mxu0 %v4667
    %v4669 = vpop.f32.mrf.mxu0
    %v4670 = vadd.f32 %v4507, %v4669
    %v4671 = vpop.f32.mrf.mxu0
    %4672 = vmatprep.mubr.f32.mxu0 0.0
    %v4673 = vand.u32 %v3597, 4294901760
    %4674 = vmatmul.mubr.f32.gmra.mxu0 %v4673
    %v4675 = vpop.f32.mrf.mxu0
    %v4676 = vadd.f32 %v4513, %v4675
    %v4677 = vpop.f32.mrf.mxu0
    %4678 = vmatprep.mubr.f32.mxu0 0.0
    %v4679 = vand.u32 %v3600, 4294901760
    %4680 = vmatmul.mubr.f32.gmra.mxu0 %v4679
    %v4681 = vpop.f32.mrf.mxu0
    %v4682 = vadd.f32 %v4519, %v4681
    %v4683 = vpop.f32.mrf.mxu0
    %4684 = vmatprep.mubr.f32.mxu0 0.0
    %v4685 = vand.u32 %v3603, 4294901760
    %4686 = vmatmul.mubr.f32.gmra.mxu0 %v4685
    %v4687 = vpop.f32.mrf.mxu0
    %v4688 = vadd.f32 %v4525, %v4687
    %v4689 = vpop.f32.mrf.mxu0
    %4690 = vmatprep.mubr.f32.mxu0 0.0
    %v4691 = vand.u32 %v3606, 4294901760
    %4692 = vmatmul.mubr.f32.gmra.mxu0 %v4691
    %v4693 = vpop.f32.mrf.mxu0
    %v4694 = vadd.f32 %v4531, %v4693
    %v4695 = vpop.f32.mrf.mxu0
    %4696 = vmatprep.mubr.f32.mxu0 0.0
    %v4697 = vand.u32 %v3609, 4294901760
    %4698 = vmatmul.mubr.f32.gmra.mxu0 %v4697
    %v4699 = vpop.f32.mrf.mxu0
    %v4700 = vadd.f32 %v4537, %v4699
    %v4701 = vpop.f32.mrf.mxu0
    %4702 = vmatprep.mubr.f32.mxu0 0.0
    %v4703 = vand.u32 %v3612, 4294901760
    %4704 = vmatmul.mubr.f32.gmra.mxu0 %v4703
    %v4705 = vpop.f32.mrf.mxu0
    %v4706 = vadd.f32 %v4543, %v4705
    %v4707 = vpop.f32.mrf.mxu0
    %4708 = vmatprep.mubr.f32.mxu0 0.0
    %v4709 = vand.u32 %v3615, 4294901760
    %4710 = vmatmul.mubr.f32.gmra.mxu0 %v4709
    %v4711 = vpop.f32.mrf.mxu0
    %v4712 = vadd.f32 %v4549, %v4711
    %v4713 = vpop.f32.mrf.mxu0
    %4714 = vmatprep.mubr.f32.mxu0 0.0
    %v4715 = vand.u32 %v3618, 4294901760
    %4716 = vmatmul.mubr.f32.gmra.mxu0 %v4715
    %v4717 = vpop.f32.mrf.mxu0
    %v4718 = vadd.f32 %v4555, %v4717
    %v4719 = vpop.f32.mrf.mxu0
    %4720 = vmatprep.mubr.f32.mxu0 0.0
    %v4721 = vand.u32 %v3621, 4294901760
    %4722 = vmatmul.mubr.f32.gmra.mxu0 %v4721
    %v4723 = vpop.f32.mrf.mxu0
    %v4724 = vadd.f32 %v4561, %v4723
    %v4725 = vpop.f32.mrf.mxu0
    %4726 = vdwg.mxu0
    %v4727 = vmul.f32 %v54, %v70
    %v4728 = vmul.f32 %v55, %v71
    %v4729 = vmul.f32 %v56, %v72
    %v4730 = vmul.f32 %v57, %v73
    %v4731 = vmul.f32 %v58, %v74
    %v4732 = vmul.f32 %v59, %v75
    %v4733 = vmul.f32 %v60, %v76
    %v4734 = vmul.f32 %v61, %v77
    %v4735 = vmul.f32 %v62, %v78
    %v4736 = vmul.f32 %v63, %v79
    %v4737 = vmul.f32 %v64, %v80
    %v4738 = vmul.f32 %v65, %v81
    %v4739 = vmul.f32 %v66, %v82
    %v4740 = vmul.f32 %v67, %v83
    %v4741 = vmul.f32 %v68, %v84
    %v4742 = vmul.f32 %v69, %v85
    %v4744 = vsel %vm86, %v4727, 0
    %v4747 = vsel %vm86, %v4728, 0
    %v4750 = vsel %vm86, %v4729, 0
    %v4753 = vsel %vm86, %v4730, 0
    %v4756 = vsel %vm86, %v4731, 0
    %v4759 = vsel %vm86, %v4732, 0
    %v4762 = vsel %vm86, %v4733, 0
    %v4765 = vsel %vm86, %v4734, 0
    %v4768 = vsel %vm86, %v4735, 0
    %v4771 = vsel %vm86, %v4736, 0
    %v4774 = vsel %vm86, %v4737, 0
    %v4777 = vsel %vm86, %v4738, 0
    %v4780 = vsel %vm86, %v4739, 0
    %v4783 = vsel %vm86, %v4740, 0
    %v4786 = vsel %vm86, %v4741, 0
    %v4789 = vsel %vm86, %v4742, 0
    %4791 = vmatprep.subr.mxu0 0.0
    %4792 = vmatpush1.msra.mxu0 0.0
    %4793 = vmatprep.subr.mxu0 0.0
    %4794 = vmatpush1.msra.mxu0 0.0
    %4795 = vmatprep.subr.mxu0 0.0
    %4796 = vmatpush1.msra.mxu0 0.0
    %4797 = vmatprep.subr.mxu0 0.0
    %4798 = vmatpush1.msra.mxu0 0.0
    %4799 = vmatprep.subr.mxu0 0.0
    %4800 = vmatpush1.msra.mxu0 0.0
    %4801 = vmatprep.subr.mxu0 0.0
    %4802 = vmatpush1.msra.mxu0 0.0
    %4803 = vmatprep.subr.mxu0 0.0
    %4804 = vmatpush1.msra.mxu0 0.0
    %4805 = vmatprep.subr.mxu0 0.0
    %4806 = vmatpush1.msra.mxu0 0.0
    %4807 = vmatprep.subr.mxu0 0.0
    %4808 = vmatpush1.msra.mxu0 0.0
    %4809 = vmatprep.subr.mxu0 0.0
    %4810 = vmatpush1.msra.mxu0 0.0
    %4811 = vmatprep.subr.mxu0 0.0
    %4812 = vmatpush1.msra.mxu0 0.0
    %4813 = vmatprep.subr.mxu0 0.0
    %4814 = vmatpush1.msra.mxu0 0.0
    %4815 = vmatprep.subr.mxu0 0.0
    %4816 = vmatpush1.msra.mxu0 0.0
    %4817 = vmatprep.subr.mxu0 0.0
    %4818 = vmatpush1.msra.mxu0 0.0
    %4819 = vmatprep.subr.mxu0 0.0
    %v4820 = vand.u32 %v53, 4294901760
    %4821 = vmatpush1.msra.mxu0 %v4820
    %4822 = vmatprep.subr.mxu0 0.0
    %v4823 = vand.u32 %v52, 4294901760
    %4824 = vmatpush1.msra.mxu0 %v4823
    %4825 = vmatprep.subr.mxu0 0.0
    %4826 = vmatpush2.msra.mxu0 0.0
    %4827 = vmatprep.subr.mxu0 0.0
    %4828 = vmatpush2.msra.mxu0 0.0
    %4829 = vmatprep.subr.mxu0 0.0
    %4830 = vmatpush2.msra.mxu0 0.0
    %4831 = vmatprep.subr.mxu0 0.0
    %4832 = vmatpush2.msra.mxu0 0.0
    %4833 = vmatprep.subr.mxu0 0.0
    %4834 = vmatpush2.msra.mxu0 0.0
    %4835 = vmatprep.subr.mxu0 0.0
    %4836 = vmatpush2.msra.mxu0 0.0
    %4837 = vmatprep.subr.mxu0 0.0
    %4838 = vmatpush2.msra.mxu0 0.0
    %4839 = vmatprep.subr.mxu0 0.0
    %4840 = vmatpush2.msra.mxu0 0.0
    %4841 = vmatprep.subr.mxu0 0.0
    %4842 = vmatpush2.msra.mxu0 0.0
    %4843 = vmatprep.subr.mxu0 0.0
    %4844 = vmatpush2.msra.mxu0 0.0
    %4845 = vmatprep.subr.mxu0 0.0
    %4846 = vmatpush2.msra.mxu0 0.0
    %4847 = vmatprep.subr.mxu0 0.0
    %4848 = vmatpush2.msra.mxu0 0.0
    %4849 = vmatprep.subr.mxu0 0.0
    %4850 = vmatpush2.msra.mxu0 0.0
    %4851 = vmatprep.subr.mxu0 0.0
    %4852 = vmatpush2.msra.mxu0 0.0
    %4853 = vmatprep.subr.mxu0 0.0
    %4854 = vmatpush2.msra.mxu0 0.0
    %4855 = vmatprep.subr.mxu0 0.0
    %4856 = vmatpush2.msra.mxu0 0.0
    %4857 = vmatprep.mubr.f32.mxu0 0.0
    %v4858 = vand.u32 %v4744, 4294901760
    %v4859 = vsub.f32 %v4744, %v4858
    %v4860 = vand.u32 %v4859, 4294901760
    %v4861 = vsub.f32 %v4859, %v4860
    %v4862 = vand.u32 %v4861, 4294901760
    %4863 = vmatmul.mubr.f32.gmra.mxu0 %v4862
    %v4864 = vpop.f32.mrf.mxu0
    %v4865 = vadd.f32 0.0, %v4864
    %v4866 = vpop.f32.mrf.mxu0
    %4867 = vmatprep.mubr.f32.mxu0 0.0
    %v4868 = vand.u32 %v4747, 4294901760
    %v4869 = vsub.f32 %v4747, %v4868
    %v4870 = vand.u32 %v4869, 4294901760
    %v4871 = vsub.f32 %v4869, %v4870
    %v4872 = vand.u32 %v4871, 4294901760
    %4873 = vmatmul.mubr.f32.gmra.mxu0 %v4872
    %v4874 = vpop.f32.mrf.mxu0
    %v4875 = vadd.f32 0.0, %v4874
    %v4876 = vpop.f32.mrf.mxu0
    %4877 = vmatprep.mubr.f32.mxu0 0.0
    %v4878 = vand.u32 %v4750, 4294901760
    %v4879 = vsub.f32 %v4750, %v4878
    %v4880 = vand.u32 %v4879, 4294901760
    %v4881 = vsub.f32 %v4879, %v4880
    %v4882 = vand.u32 %v4881, 4294901760
    %4883 = vmatmul.mubr.f32.gmra.mxu0 %v4882
    %v4884 = vpop.f32.mrf.mxu0
    %v4885 = vadd.f32 0.0, %v4884
    %v4886 = vpop.f32.mrf.mxu0
    %4887 = vmatprep.mubr.f32.mxu0 0.0
    %v4888 = vand.u32 %v4753, 4294901760
    %v4889 = vsub.f32 %v4753, %v4888
    %v4890 = vand.u32 %v4889, 4294901760
    %v4891 = vsub.f32 %v4889, %v4890
    %v4892 = vand.u32 %v4891, 4294901760
    %4893 = vmatmul.mubr.f32.gmra.mxu0 %v4892
    %v4894 = vpop.f32.mrf.mxu0
    %v4895 = vadd.f32 0.0, %v4894
    %v4896 = vpop.f32.mrf.mxu0
    %4897 = vmatprep.mubr.f32.mxu0 0.0
    %v4898 = vand.u32 %v4756, 4294901760
    %v4899 = vsub.f32 %v4756, %v4898
    %v4900 = vand.u32 %v4899, 4294901760
    %v4901 = vsub.f32 %v4899, %v4900
    %v4902 = vand.u32 %v4901, 4294901760
    %4903 = vmatmul.mubr.f32.gmra.mxu0 %v4902
    %v4904 = vpop.f32.mrf.mxu0
    %v4905 = vadd.f32 0.0, %v4904
    %v4906 = vpop.f32.mrf.mxu0
    %4907 = vmatprep.mubr.f32.mxu0 0.0
    %v4908 = vand.u32 %v4759, 4294901760
    %v4909 = vsub.f32 %v4759, %v4908
    %v4910 = vand.u32 %v4909, 4294901760
    %v4911 = vsub.f32 %v4909, %v4910
    %v4912 = vand.u32 %v4911, 4294901760
    %4913 = vmatmul.mubr.f32.gmra.mxu0 %v4912
    %v4914 = vpop.f32.mrf.mxu0
    %v4915 = vadd.f32 0.0, %v4914
    %v4916 = vpop.f32.mrf.mxu0
    %4917 = vmatprep.mubr.f32.mxu0 0.0
    %v4918 = vand.u32 %v4762, 4294901760
    %v4919 = vsub.f32 %v4762, %v4918
    %v4920 = vand.u32 %v4919, 4294901760
    %v4921 = vsub.f32 %v4919, %v4920
    %v4922 = vand.u32 %v4921, 4294901760
    %4923 = vmatmul.mubr.f32.gmra.mxu0 %v4922
    %v4924 = vpop.f32.mrf.mxu0
    %v4925 = vadd.f32 0.0, %v4924
    %v4926 = vpop.f32.mrf.mxu0
    %4927 = vmatprep.mubr.f32.mxu0 0.0
    %v4928 = vand.u32 %v4765, 4294901760
    %v4929 = vsub.f32 %v4765, %v4928
    %v4930 = vand.u32 %v4929, 4294901760
    %v4931 = vsub.f32 %v4929, %v4930
    %v4932 = vand.u32 %v4931, 4294901760
    %4933 = vmatmul.mubr.f32.gmra.mxu0 %v4932
    %v4934 = vpop.f32.mrf.mxu0
    %v4935 = vadd.f32 0.0, %v4934
    %v4936 = vpop.f32.mrf.mxu0
    %4937 = vmatprep.mubr.f32.mxu0 0.0
    %v4938 = vand.u32 %v4768, 4294901760
    %v4939 = vsub.f32 %v4768, %v4938
    %v4940 = vand.u32 %v4939, 4294901760
    %v4941 = vsub.f32 %v4939, %v4940
    %v4942 = vand.u32 %v4941, 4294901760
    %4943 = vmatmul.mubr.f32.gmra.mxu0 %v4942
    %v4944 = vpop.f32.mrf.mxu0
    %v4945 = vadd.f32 0.0, %v4944
    %v4946 = vpop.f32.mrf.mxu0
    %4947 = vmatprep.mubr.f32.mxu0 0.0
    %v4948 = vand.u32 %v4771, 4294901760
    %v4949 = vsub.f32 %v4771, %v4948
    %v4950 = vand.u32 %v4949, 4294901760
    %v4951 = vsub.f32 %v4949, %v4950
    %v4952 = vand.u32 %v4951, 4294901760
    %4953 = vmatmul.mubr.f32.gmra.mxu0 %v4952
    %v4954 = vpop.f32.mrf.mxu0
    %v4955 = vadd.f32 0.0, %v4954
    %v4956 = vpop.f32.mrf.mxu0
    %4957 = vmatprep.mubr.f32.mxu0 0.0
    %v4958 = vand.u32 %v4774, 4294901760
    %v4959 = vsub.f32 %v4774, %v4958
    %v4960 = vand.u32 %v4959, 4294901760
    %v4961 = vsub.f32 %v4959, %v4960
    %v4962 = vand.u32 %v4961, 4294901760
    %4963 = vmatmul.mubr.f32.gmra.mxu0 %v4962
    %v4964 = vpop.f32.mrf.mxu0
    %v4965 = vadd.f32 0.0, %v4964
    %v4966 = vpop.f32.mrf.mxu0
    %4967 = vmatprep.mubr.f32.mxu0 0.0
    %v4968 = vand.u32 %v4777, 4294901760
    %v4969 = vsub.f32 %v4777, %v4968
    %v4970 = vand.u32 %v4969, 4294901760
    %v4971 = vsub.f32 %v4969, %v4970
    %v4972 = vand.u32 %v4971, 4294901760
    %4973 = vmatmul.mubr.f32.gmra.mxu0 %v4972
    %v4974 = vpop.f32.mrf.mxu0
    %v4975 = vadd.f32 0.0, %v4974
    %v4976 = vpop.f32.mrf.mxu0
    %4977 = vmatprep.mubr.f32.mxu0 0.0
    %v4978 = vand.u32 %v4780, 4294901760
    %v4979 = vsub.f32 %v4780, %v4978
    %v4980 = vand.u32 %v4979, 4294901760
    %v4981 = vsub.f32 %v4979, %v4980
    %v4982 = vand.u32 %v4981, 4294901760
    %4983 = vmatmul.mubr.f32.gmra.mxu0 %v4982
    %v4984 = vpop.f32.mrf.mxu0
    %v4985 = vadd.f32 0.0, %v4984
    %v4986 = vpop.f32.mrf.mxu0
    %4987 = vmatprep.mubr.f32.mxu0 0.0
    %v4988 = vand.u32 %v4783, 4294901760
    %v4989 = vsub.f32 %v4783, %v4988
    %v4990 = vand.u32 %v4989, 4294901760
    %v4991 = vsub.f32 %v4989, %v4990
    %v4992 = vand.u32 %v4991, 4294901760
    %4993 = vmatmul.mubr.f32.gmra.mxu0 %v4992
    %v4994 = vpop.f32.mrf.mxu0
    %v4995 = vadd.f32 0.0, %v4994
    %v4996 = vpop.f32.mrf.mxu0
    %4997 = vmatprep.mubr.f32.mxu0 0.0
    %v4998 = vand.u32 %v4786, 4294901760
    %v4999 = vsub.f32 %v4786, %v4998
    %v5000 = vand.u32 %v4999, 4294901760
    %v5001 = vsub.f32 %v4999, %v5000
    %v5002 = vand.u32 %v5001, 4294901760
    %5003 = vmatmul.mubr.f32.gmra.mxu0 %v5002
    %v5004 = vpop.f32.mrf.mxu0
    %v5005 = vadd.f32 0.0, %v5004
    %v5006 = vpop.f32.mrf.mxu0
    %5007 = vmatprep.mubr.f32.mxu0 0.0
    %v5008 = vand.u32 %v4789, 4294901760
    %v5009 = vsub.f32 %v4789, %v5008
    %v5010 = vand.u32 %v5009, 4294901760
    %v5011 = vsub.f32 %v5009, %v5010
    %v5012 = vand.u32 %v5011, 4294901760
    %5013 = vmatmul.mubr.f32.gmra.mxu0 %v5012
    %v5014 = vpop.f32.mrf.mxu0
    %v5015 = vadd.f32 0.0, %v5014
    %v5016 = vpop.f32.mrf.mxu0
    %5017 = vdwg.mxu0
    %5018 = vmatprep.subr.mxu0 0.0
    %5019 = vmatpush1.msra.mxu0 0.0
    %5020 = vmatprep.subr.mxu0 0.0
    %5021 = vmatpush1.msra.mxu0 0.0
    %5022 = vmatprep.subr.mxu0 0.0
    %5023 = vmatpush1.msra.mxu0 0.0
    %5024 = vmatprep.subr.mxu0 0.0
    %5025 = vmatpush1.msra.mxu0 0.0
    %5026 = vmatprep.subr.mxu0 0.0
    %5027 = vmatpush1.msra.mxu0 0.0
    %5028 = vmatprep.subr.mxu0 0.0
    %5029 = vmatpush1.msra.mxu0 0.0
    %5030 = vmatprep.subr.mxu0 0.0
    %5031 = vmatpush1.msra.mxu0 0.0
    %5032 = vmatprep.subr.mxu0 0.0
    %5033 = vmatpush1.msra.mxu0 0.0
    %5034 = vmatprep.subr.mxu0 0.0
    %5035 = vmatpush1.msra.mxu0 0.0
    %5036 = vmatprep.subr.mxu0 0.0
    %5037 = vmatpush1.msra.mxu0 0.0
    %5038 = vmatprep.subr.mxu0 0.0
    %5039 = vmatpush1.msra.mxu0 0.0
    %5040 = vmatprep.subr.mxu0 0.0
    %5041 = vmatpush1.msra.mxu0 0.0
    %5042 = vmatprep.subr.mxu0 0.0
    %5043 = vmatpush1.msra.mxu0 0.0
    %5044 = vmatprep.subr.mxu0 0.0
    %5045 = vmatpush1.msra.mxu0 0.0
    %5046 = vmatprep.subr.mxu0 0.0
    %v5047 = vand.u32 %v53, 4294901760
    %v5048 = vsub.f32 %v53, %v5047
    %v5049 = vand.u32 %v5048, 4294901760
    %v5050 = vsub.f32 %v5048, %v5049
    %v5051 = vand.u32 %v5050, 4294901760
    %5052 = vmatpush1.msra.mxu0 %v5051
    %5053 = vmatprep.subr.mxu0 0.0
    %v5054 = vand.u32 %v52, 4294901760
    %v5055 = vsub.f32 %v52, %v5054
    %v5056 = vand.u32 %v5055, 4294901760
    %v5057 = vsub.f32 %v5055, %v5056
    %v5058 = vand.u32 %v5057, 4294901760
    %5059 = vmatpush1.msra.mxu0 %v5058
    %5060 = vmatprep.subr.mxu0 0.0
    %5061 = vmatpush2.msra.mxu0 0.0
    %5062 = vmatprep.subr.mxu0 0.0
    %5063 = vmatpush2.msra.mxu0 0.0
    %5064 = vmatprep.subr.mxu0 0.0
    %5065 = vmatpush2.msra.mxu0 0.0
    %5066 = vmatprep.subr.mxu0 0.0
    %5067 = vmatpush2.msra.mxu0 0.0
    %5068 = vmatprep.subr.mxu0 0.0
    %5069 = vmatpush2.msra.mxu0 0.0
    %5070 = vmatprep.subr.mxu0 0.0
    %5071 = vmatpush2.msra.mxu0 0.0
    %5072 = vmatprep.subr.mxu0 0.0
    %5073 = vmatpush2.msra.mxu0 0.0
    %5074 = vmatprep.subr.mxu0 0.0
    %5075 = vmatpush2.msra.mxu0 0.0
    %5076 = vmatprep.subr.mxu0 0.0
    %5077 = vmatpush2.msra.mxu0 0.0
    %5078 = vmatprep.subr.mxu0 0.0
    %5079 = vmatpush2.msra.mxu0 0.0
    %5080 = vmatprep.subr.mxu0 0.0
    %5081 = vmatpush2.msra.mxu0 0.0
    %5082 = vmatprep.subr.mxu0 0.0
    %5083 = vmatpush2.msra.mxu0 0.0
    %5084 = vmatprep.subr.mxu0 0.0
    %5085 = vmatpush2.msra.mxu0 0.0
    %5086 = vmatprep.subr.mxu0 0.0
    %5087 = vmatpush2.msra.mxu0 0.0
    %5088 = vmatprep.subr.mxu0 0.0
    %5089 = vmatpush2.msra.mxu0 0.0
    %5090 = vmatprep.subr.mxu0 0.0
    %5091 = vmatpush2.msra.mxu0 0.0
    %5092 = vmatprep.mubr.f32.mxu0 0.0
    %v5093 = vand.u32 %v4744, 4294901760
    %5094 = vmatmul.mubr.f32.gmra.mxu0 %v5093
    %v5095 = vpop.f32.mrf.mxu0
    %v5096 = vadd.f32 %v4865, %v5095
    %v5097 = vpop.f32.mrf.mxu0
    %5098 = vmatprep.mubr.f32.mxu0 0.0
    %v5099 = vand.u32 %v4747, 4294901760
    %5100 = vmatmul.mubr.f32.gmra.mxu0 %v5099
    %v5101 = vpop.f32.mrf.mxu0
    %v5102 = vadd.f32 %v4875, %v5101
    %v5103 = vpop.f32.mrf.mxu0
    %5104 = vmatprep.mubr.f32.mxu0 0.0
    %v5105 = vand.u32 %v4750, 4294901760
    %5106 = vmatmul.mubr.f32.gmra.mxu0 %v5105
    %v5107 = vpop.f32.mrf.mxu0
    %v5108 = vadd.f32 %v4885, %v5107
    %v5109 = vpop.f32.mrf.mxu0
    %5110 = vmatprep.mubr.f32.mxu0 0.0
    %v5111 = vand.u32 %v4753, 4294901760
    %5112 = vmatmul.mubr.f32.gmra.mxu0 %v5111
    %v5113 = vpop.f32.mrf.mxu0
    %v5114 = vadd.f32 %v4895, %v5113
    %v5115 = vpop.f32.mrf.mxu0
    %5116 = vmatprep.mubr.f32.mxu0 0.0
    %v5117 = vand.u32 %v4756, 4294901760
    %5118 = vmatmul.mubr.f32.gmra.mxu0 %v5117
    %v5119 = vpop.f32.mrf.mxu0
    %v5120 = vadd.f32 %v4905, %v5119
    %v5121 = vpop.f32.mrf.mxu0
    %5122 = vmatprep.mubr.f32.mxu0 0.0
    %v5123 = vand.u32 %v4759, 4294901760
    %5124 = vmatmul.mubr.f32.gmra.mxu0 %v5123
    %v5125 = vpop.f32.mrf.mxu0
    %v5126 = vadd.f32 %v4915, %v5125
    %v5127 = vpop.f32.mrf.mxu0
    %5128 = vmatprep.mubr.f32.mxu0 0.0
    %v5129 = vand.u32 %v4762, 4294901760
    %5130 = vmatmul.mubr.f32.gmra.mxu0 %v5129
    %v5131 = vpop.f32.mrf.mxu0
    %v5132 = vadd.f32 %v4925, %v5131
    %v5133 = vpop.f32.mrf.mxu0
    %5134 = vmatprep.mubr.f32.mxu0 0.0
    %v5135 = vand.u32 %v4765, 4294901760
    %5136 = vmatmul.mubr.f32.gmra.mxu0 %v5135
    %v5137 = vpop.f32.mrf.mxu0
    %v5138 = vadd.f32 %v4935, %v5137
    %v5139 = vpop.f32.mrf.mxu0
    %5140 = vmatprep.mubr.f32.mxu0 0.0
    %v5141 = vand.u32 %v4768, 4294901760
    %5142 = vmatmul.mubr.f32.gmra.mxu0 %v5141
    %v5143 = vpop.f32.mrf.mxu0
    %v5144 = vadd.f32 %v4945, %v5143
    %v5145 = vpop.f32.mrf.mxu0
    %5146 = vmatprep.mubr.f32.mxu0 0.0
    %v5147 = vand.u32 %v4771, 4294901760
    %5148 = vmatmul.mubr.f32.gmra.mxu0 %v5147
    %v5149 = vpop.f32.mrf.mxu0
    %v5150 = vadd.f32 %v4955, %v5149
    %v5151 = vpop.f32.mrf.mxu0
    %5152 = vmatprep.mubr.f32.mxu0 0.0
    %v5153 = vand.u32 %v4774, 4294901760
    %5154 = vmatmul.mubr.f32.gmra.mxu0 %v5153
    %v5155 = vpop.f32.mrf.mxu0
    %v5156 = vadd.f32 %v4965, %v5155
    %v5157 = vpop.f32.mrf.mxu0
    %5158 = vmatprep.mubr.f32.mxu0 0.0
    %v5159 = vand.u32 %v4777, 4294901760
    %5160 = vmatmul.mubr.f32.gmra.mxu0 %v5159
    %v5161 = vpop.f32.mrf.mxu0
    %v5162 = vadd.f32 %v4975, %v5161
    %v5163 = vpop.f32.mrf.mxu0
    %5164 = vmatprep.mubr.f32.mxu0 0.0
    %v5165 = vand.u32 %v4780, 4294901760
    %5166 = vmatmul.mubr.f32.gmra.mxu0 %v5165
    %v5167 = vpop.f32.mrf.mxu0
    %v5168 = vadd.f32 %v4985, %v5167
    %v5169 = vpop.f32.mrf.mxu0
    %5170 = vmatprep.mubr.f32.mxu0 0.0
    %v5171 = vand.u32 %v4783, 4294901760
    %5172 = vmatmul.mubr.f32.gmra.mxu0 %v5171
    %v5173 = vpop.f32.mrf.mxu0
    %v5174 = vadd.f32 %v4995, %v5173
    %v5175 = vpop.f32.mrf.mxu0
    %5176 = vmatprep.mubr.f32.mxu0 0.0
    %v5177 = vand.u32 %v4786, 4294901760
    %5178 = vmatmul.mubr.f32.gmra.mxu0 %v5177
    %v5179 = vpop.f32.mrf.mxu0
    %v5180 = vadd.f32 %v5005, %v5179
    %v5181 = vpop.f32.mrf.mxu0
    %5182 = vmatprep.mubr.f32.mxu0 0.0
    %v5183 = vand.u32 %v4789, 4294901760
    %5184 = vmatmul.mubr.f32.gmra.mxu0 %v5183
    %v5185 = vpop.f32.mrf.mxu0
    %v5186 = vadd.f32 %v5015, %v5185
    %v5187 = vpop.f32.mrf.mxu0
    %5188 = vdwg.mxu0
    %5189 = vmatprep.subr.mxu0 0.0
    %5190 = vmatpush1.msra.mxu0 0.0
    %5191 = vmatprep.subr.mxu0 0.0
    %5192 = vmatpush1.msra.mxu0 0.0
    %5193 = vmatprep.subr.mxu0 0.0
    %5194 = vmatpush1.msra.mxu0 0.0
    %5195 = vmatprep.subr.mxu0 0.0
    %5196 = vmatpush1.msra.mxu0 0.0
    %5197 = vmatprep.subr.mxu0 0.0
    %5198 = vmatpush1.msra.mxu0 0.0
    %5199 = vmatprep.subr.mxu0 0.0
    %5200 = vmatpush1.msra.mxu0 0.0
    %5201 = vmatprep.subr.mxu0 0.0
    %5202 = vmatpush1.msra.mxu0 0.0
    %5203 = vmatprep.subr.mxu0 0.0
    %5204 = vmatpush1.msra.mxu0 0.0
    %5205 = vmatprep.subr.mxu0 0.0
    %5206 = vmatpush1.msra.mxu0 0.0
    %5207 = vmatprep.subr.mxu0 0.0
    %5208 = vmatpush1.msra.mxu0 0.0
    %5209 = vmatprep.subr.mxu0 0.0
    %5210 = vmatpush1.msra.mxu0 0.0
    %5211 = vmatprep.subr.mxu0 0.0
    %5212 = vmatpush1.msra.mxu0 0.0
    %5213 = vmatprep.subr.mxu0 0.0
    %5214 = vmatpush1.msra.mxu0 0.0
    %5215 = vmatprep.subr.mxu0 0.0
    %5216 = vmatpush1.msra.mxu0 0.0
    %5217 = vmatprep.subr.mxu0 0.0
    %v5218 = vand.u32 %v53, 4294901760
    %v5219 = vsub.f32 %v53, %v5218
    %5220 = vmatpush1.msra.mxu0 %v5219
    %5221 = vmatprep.subr.mxu0 0.0
    %v5222 = vand.u32 %v52, 4294901760
    %v5223 = vsub.f32 %v52, %v5222
    %5224 = vmatpush1.msra.mxu0 %v5223
    %5225 = vmatprep.subr.mxu0 0.0
    %5226 = vmatpush2.msra.mxu0 0.0
    %5227 = vmatprep.subr.mxu0 0.0
    %5228 = vmatpush2.msra.mxu0 0.0
    %5229 = vmatprep.subr.mxu0 0.0
    %5230 = vmatpush2.msra.mxu0 0.0
    %5231 = vmatprep.subr.mxu0 0.0
    %5232 = vmatpush2.msra.mxu0 0.0
    %5233 = vmatprep.subr.mxu0 0.0
    %5234 = vmatpush2.msra.mxu0 0.0
    %5235 = vmatprep.subr.mxu0 0.0
    %5236 = vmatpush2.msra.mxu0 0.0
    %5237 = vmatprep.subr.mxu0 0.0
    %5238 = vmatpush2.msra.mxu0 0.0
    %5239 = vmatprep.subr.mxu0 0.0
    %5240 = vmatpush2.msra.mxu0 0.0
    %5241 = vmatprep.subr.mxu0 0.0
    %5242 = vmatpush2.msra.mxu0 0.0
    %5243 = vmatprep.subr.mxu0 0.0
    %5244 = vmatpush2.msra.mxu0 0.0
    %5245 = vmatprep.subr.mxu0 0.0
    %5246 = vmatpush2.msra.mxu0 0.0
    %5247 = vmatprep.subr.mxu0 0.0
    %5248 = vmatpush2.msra.mxu0 0.0
    %5249 = vmatprep.subr.mxu0 0.0
    %5250 = vmatpush2.msra.mxu0 0.0
    %5251 = vmatprep.subr.mxu0 0.0
    %5252 = vmatpush2.msra.mxu0 0.0
    %5253 = vmatprep.subr.mxu0 0.0
    %5254 = vmatpush2.msra.mxu0 0.0
    %5255 = vmatprep.subr.mxu0 0.0
    %5256 = vmatpush2.msra.mxu0 0.0
    %5257 = vmatprep.mubr.f32.mxu0 0.0
    %v5258 = vand.u32 %v4744, 4294901760
    %v5259 = vsub.f32 %v4744, %v5258
    %5260 = vmatmul.mubr.f32.gmra.mxu0 %v5259
    %v5261 = vpop.f32.mrf.mxu0
    %v5262 = vadd.f32 %v5096, %v5261
    %v5263 = vpop.f32.mrf.mxu0
    %5264 = vmatprep.mubr.f32.mxu0 0.0
    %v5265 = vand.u32 %v4747, 4294901760
    %v5266 = vsub.f32 %v4747, %v5265
    %5267 = vmatmul.mubr.f32.gmra.mxu0 %v5266
    %v5268 = vpop.f32.mrf.mxu0
    %v5269 = vadd.f32 %v5102, %v5268
    %v5270 = vpop.f32.mrf.mxu0
    %5271 = vmatprep.mubr.f32.mxu0 0.0
    %v5272 = vand.u32 %v4750, 4294901760
    %v5273 = vsub.f32 %v4750, %v5272
    %5274 = vmatmul.mubr.f32.gmra.mxu0 %v5273
    %v5275 = vpop.f32.mrf.mxu0
    %v5276 = vadd.f32 %v5108, %v5275
    %v5277 = vpop.f32.mrf.mxu0
    %5278 = vmatprep.mubr.f32.mxu0 0.0
    %v5279 = vand.u32 %v4753, 4294901760
    %v5280 = vsub.f32 %v4753, %v5279
    %5281 = vmatmul.mubr.f32.gmra.mxu0 %v5280
    %v5282 = vpop.f32.mrf.mxu0
    %v5283 = vadd.f32 %v5114, %v5282
    %v5284 = vpop.f32.mrf.mxu0
    %5285 = vmatprep.mubr.f32.mxu0 0.0
    %v5286 = vand.u32 %v4756, 4294901760
    %v5287 = vsub.f32 %v4756, %v5286
    %5288 = vmatmul.mubr.f32.gmra.mxu0 %v5287
    %v5289 = vpop.f32.mrf.mxu0
    %v5290 = vadd.f32 %v5120, %v5289
    %v5291 = vpop.f32.mrf.mxu0
    %5292 = vmatprep.mubr.f32.mxu0 0.0
    %v5293 = vand.u32 %v4759, 4294901760
    %v5294 = vsub.f32 %v4759, %v5293
    %5295 = vmatmul.mubr.f32.gmra.mxu0 %v5294
    %v5296 = vpop.f32.mrf.mxu0
    %v5297 = vadd.f32 %v5126, %v5296
    %v5298 = vpop.f32.mrf.mxu0
    %5299 = vmatprep.mubr.f32.mxu0 0.0
    %v5300 = vand.u32 %v4762, 4294901760
    %v5301 = vsub.f32 %v4762, %v5300
    %5302 = vmatmul.mubr.f32.gmra.mxu0 %v5301
    %v5303 = vpop.f32.mrf.mxu0
    %v5304 = vadd.f32 %v5132, %v5303
    %v5305 = vpop.f32.mrf.mxu0
    %5306 = vmatprep.mubr.f32.mxu0 0.0
    %v5307 = vand.u32 %v4765, 4294901760
    %v5308 = vsub.f32 %v4765, %v5307
    %5309 = vmatmul.mubr.f32.gmra.mxu0 %v5308
    %v5310 = vpop.f32.mrf.mxu0
    %v5311 = vadd.f32 %v5138, %v5310
    %v5312 = vpop.f32.mrf.mxu0
    %5313 = vmatprep.mubr.f32.mxu0 0.0
    %v5314 = vand.u32 %v4768, 4294901760
    %v5315 = vsub.f32 %v4768, %v5314
    %5316 = vmatmul.mubr.f32.gmra.mxu0 %v5315
    %v5317 = vpop.f32.mrf.mxu0
    %v5318 = vadd.f32 %v5144, %v5317
    %v5319 = vpop.f32.mrf.mxu0
    %5320 = vmatprep.mubr.f32.mxu0 0.0
    %v5321 = vand.u32 %v4771, 4294901760
    %v5322 = vsub.f32 %v4771, %v5321
    %5323 = vmatmul.mubr.f32.gmra.mxu0 %v5322
    %v5324 = vpop.f32.mrf.mxu0
    %v5325 = vadd.f32 %v5150, %v5324
    %v5326 = vpop.f32.mrf.mxu0
    %5327 = vmatprep.mubr.f32.mxu0 0.0
    %v5328 = vand.u32 %v4774, 4294901760
    %v5329 = vsub.f32 %v4774, %v5328
    %5330 = vmatmul.mubr.f32.gmra.mxu0 %v5329
    %v5331 = vpop.f32.mrf.mxu0
    %v5332 = vadd.f32 %v5156, %v5331
    %v5333 = vpop.f32.mrf.mxu0
    %5334 = vmatprep.mubr.f32.mxu0 0.0
    %v5335 = vand.u32 %v4777, 4294901760
    %v5336 = vsub.f32 %v4777, %v5335
    %5337 = vmatmul.mubr.f32.gmra.mxu0 %v5336
    %v5338 = vpop.f32.mrf.mxu0
    %v5339 = vadd.f32 %v5162, %v5338
    %v5340 = vpop.f32.mrf.mxu0
    %5341 = vmatprep.mubr.f32.mxu0 0.0
    %v5342 = vand.u32 %v4780, 4294901760
    %v5343 = vsub.f32 %v4780, %v5342
    %5344 = vmatmul.mubr.f32.gmra.mxu0 %v5343
    %v5345 = vpop.f32.mrf.mxu0
    %v5346 = vadd.f32 %v5168, %v5345
    %v5347 = vpop.f32.mrf.mxu0
    %5348 = vmatprep.mubr.f32.mxu0 0.0
    %v5349 = vand.u32 %v4783, 4294901760
    %v5350 = vsub.f32 %v4783, %v5349
    %5351 = vmatmul.mubr.f32.gmra.mxu0 %v5350
    %v5352 = vpop.f32.mrf.mxu0
    %v5353 = vadd.f32 %v5174, %v5352
    %v5354 = vpop.f32.mrf.mxu0
    %5355 = vmatprep.mubr.f32.mxu0 0.0
    %v5356 = vand.u32 %v4786, 4294901760
    %v5357 = vsub.f32 %v4786, %v5356
    %5358 = vmatmul.mubr.f32.gmra.mxu0 %v5357
    %v5359 = vpop.f32.mrf.mxu0
    %v5360 = vadd.f32 %v5180, %v5359
    %v5361 = vpop.f32.mrf.mxu0
    %5362 = vmatprep.mubr.f32.mxu0 0.0
    %v5363 = vand.u32 %v4789, 4294901760
    %v5364 = vsub.f32 %v4789, %v5363
    %5365 = vmatmul.mubr.f32.gmra.mxu0 %v5364
    %v5366 = vpop.f32.mrf.mxu0
    %v5367 = vadd.f32 %v5186, %v5366
    %v5368 = vpop.f32.mrf.mxu0
    %5369 = vdwg.mxu0
    %5370 = vmatprep.subr.mxu0 0.0
    %5371 = vmatpush1.msra.mxu0 0.0
    %5372 = vmatprep.subr.mxu0 0.0
    %5373 = vmatpush1.msra.mxu0 0.0
    %5374 = vmatprep.subr.mxu0 0.0
    %5375 = vmatpush1.msra.mxu0 0.0
    %5376 = vmatprep.subr.mxu0 0.0
    %5377 = vmatpush1.msra.mxu0 0.0
    %5378 = vmatprep.subr.mxu0 0.0
    %5379 = vmatpush1.msra.mxu0 0.0
    %5380 = vmatprep.subr.mxu0 0.0
    %5381 = vmatpush1.msra.mxu0 0.0
    %5382 = vmatprep.subr.mxu0 0.0
    %5383 = vmatpush1.msra.mxu0 0.0
    %5384 = vmatprep.subr.mxu0 0.0
    %5385 = vmatpush1.msra.mxu0 0.0
    %5386 = vmatprep.subr.mxu0 0.0
    %5387 = vmatpush1.msra.mxu0 0.0
    %5388 = vmatprep.subr.mxu0 0.0
    %5389 = vmatpush1.msra.mxu0 0.0
    %5390 = vmatprep.subr.mxu0 0.0
    %5391 = vmatpush1.msra.mxu0 0.0
    %5392 = vmatprep.subr.mxu0 0.0
    %5393 = vmatpush1.msra.mxu0 0.0
    %5394 = vmatprep.subr.mxu0 0.0
    %5395 = vmatpush1.msra.mxu0 0.0
    %5396 = vmatprep.subr.mxu0 0.0
    %5397 = vmatpush1.msra.mxu0 0.0
    %5398 = vmatprep.subr.mxu0 0.0
    %v5399 = vand.u32 %v53, 4294901760
    %5400 = vmatpush1.msra.mxu0 %v5399
    %5401 = vmatprep.subr.mxu0 0.0
    %v5402 = vand.u32 %v52, 4294901760
    %5403 = vmatpush1.msra.mxu0 %v5402
    %5404 = vmatprep.subr.mxu0 0.0
    %5405 = vmatpush2.msra.mxu0 0.0
    %5406 = vmatprep.subr.mxu0 0.0
    %5407 = vmatpush2.msra.mxu0 0.0
    %5408 = vmatprep.subr.mxu0 0.0
    %5409 = vmatpush2.msra.mxu0 0.0
    %5410 = vmatprep.subr.mxu0 0.0
    %5411 = vmatpush2.msra.mxu0 0.0
    %5412 = vmatprep.subr.mxu0 0.0
    %5413 = vmatpush2.msra.mxu0 0.0
    %5414 = vmatprep.subr.mxu0 0.0
    %5415 = vmatpush2.msra.mxu0 0.0
    %5416 = vmatprep.subr.mxu0 0.0
    %5417 = vmatpush2.msra.mxu0 0.0
    %5418 = vmatprep.subr.mxu0 0.0
    %5419 = vmatpush2.msra.mxu0 0.0
    %5420 = vmatprep.subr.mxu0 0.0
    %5421 = vmatpush2.msra.mxu0 0.0
    %5422 = vmatprep.subr.mxu0 0.0
    %5423 = vmatpush2.msra.mxu0 0.0
    %5424 = vmatprep.subr.mxu0 0.0
    %5425 = vmatpush2.msra.mxu0 0.0
    %5426 = vmatprep.subr.mxu0 0.0
    %5427 = vmatpush2.msra.mxu0 0.0
    %5428 = vmatprep.subr.mxu0 0.0
    %5429 = vmatpush2.msra.mxu0 0.0
    %5430 = vmatprep.subr.mxu0 0.0
    %5431 = vmatpush2.msra.mxu0 0.0
    %5432 = vmatprep.subr.mxu0 0.0
    %5433 = vmatpush2.msra.mxu0 0.0
    %5434 = vmatprep.subr.mxu0 0.0
    %5435 = vmatpush2.msra.mxu0 0.0
    %5436 = vmatprep.mubr.f32.mxu0 0.0
    %v5437 = vand.u32 %v4744, 4294901760
    %v5438 = vsub.f32 %v4744, %v5437
    %v5439 = vand.u32 %v5438, 4294901760
    %5440 = vmatmul.mubr.f32.gmra.mxu0 %v5439
    %v5441 = vpop.f32.mrf.mxu0
    %v5442 = vadd.f32 %v5262, %v5441
    %v5443 = vpop.f32.mrf.mxu0
    %5444 = vmatprep.mubr.f32.mxu0 0.0
    %v5445 = vand.u32 %v4747, 4294901760
    %v5446 = vsub.f32 %v4747, %v5445
    %v5447 = vand.u32 %v5446, 4294901760
    %5448 = vmatmul.mubr.f32.gmra.mxu0 %v5447
    %v5449 = vpop.f32.mrf.mxu0
    %v5450 = vadd.f32 %v5269, %v5449
    %v5451 = vpop.f32.mrf.mxu0
    %5452 = vmatprep.mubr.f32.mxu0 0.0
    %v5453 = vand.u32 %v4750, 4294901760
    %v5454 = vsub.f32 %v4750, %v5453
    %v5455 = vand.u32 %v5454, 4294901760
    %5456 = vmatmul.mubr.f32.gmra.mxu0 %v5455
    %v5457 = vpop.f32.mrf.mxu0
    %v5458 = vadd.f32 %v5276, %v5457
    %v5459 = vpop.f32.mrf.mxu0
    %5460 = vmatprep.mubr.f32.mxu0 0.0
    %v5461 = vand.u32 %v4753, 4294901760
    %v5462 = vsub.f32 %v4753, %v5461
    %v5463 = vand.u32 %v5462, 4294901760
    %5464 = vmatmul.mubr.f32.gmra.mxu0 %v5463
    %v5465 = vpop.f32.mrf.mxu0
    %v5466 = vadd.f32 %v5283, %v5465
    %v5467 = vpop.f32.mrf.mxu0
    %5468 = vmatprep.mubr.f32.mxu0 0.0
    %v5469 = vand.u32 %v4756, 4294901760
    %v5470 = vsub.f32 %v4756, %v5469
    %v5471 = vand.u32 %v5470, 4294901760
    %5472 = vmatmul.mubr.f32.gmra.mxu0 %v5471
    %v5473 = vpop.f32.mrf.mxu0
    %v5474 = vadd.f32 %v5290, %v5473
    %v5475 = vpop.f32.mrf.mxu0
    %5476 = vmatprep.mubr.f32.mxu0 0.0
    %v5477 = vand.u32 %v4759, 4294901760
    %v5478 = vsub.f32 %v4759, %v5477
    %v5479 = vand.u32 %v5478, 4294901760
    %5480 = vmatmul.mubr.f32.gmra.mxu0 %v5479
    %v5481 = vpop.f32.mrf.mxu0
    %v5482 = vadd.f32 %v5297, %v5481
    %v5483 = vpop.f32.mrf.mxu0
    %5484 = vmatprep.mubr.f32.mxu0 0.0
    %v5485 = vand.u32 %v4762, 4294901760
    %v5486 = vsub.f32 %v4762, %v5485
    %v5487 = vand.u32 %v5486, 4294901760
    %5488 = vmatmul.mubr.f32.gmra.mxu0 %v5487
    %v5489 = vpop.f32.mrf.mxu0
    %v5490 = vadd.f32 %v5304, %v5489
    %v5491 = vpop.f32.mrf.mxu0
    %5492 = vmatprep.mubr.f32.mxu0 0.0
    %v5493 = vand.u32 %v4765, 4294901760
    %v5494 = vsub.f32 %v4765, %v5493
    %v5495 = vand.u32 %v5494, 4294901760
    %5496 = vmatmul.mubr.f32.gmra.mxu0 %v5495
    %v5497 = vpop.f32.mrf.mxu0
    %v5498 = vadd.f32 %v5311, %v5497
    %v5499 = vpop.f32.mrf.mxu0
    %5500 = vmatprep.mubr.f32.mxu0 0.0
    %v5501 = vand.u32 %v4768, 4294901760
    %v5502 = vsub.f32 %v4768, %v5501
    %v5503 = vand.u32 %v5502, 4294901760
    %5504 = vmatmul.mubr.f32.gmra.mxu0 %v5503
    %v5505 = vpop.f32.mrf.mxu0
    %v5506 = vadd.f32 %v5318, %v5505
    %v5507 = vpop.f32.mrf.mxu0
    %5508 = vmatprep.mubr.f32.mxu0 0.0
    %v5509 = vand.u32 %v4771, 4294901760
    %v5510 = vsub.f32 %v4771, %v5509
    %v5511 = vand.u32 %v5510, 4294901760
    %5512 = vmatmul.mubr.f32.gmra.mxu0 %v5511
    %v5513 = vpop.f32.mrf.mxu0
    %v5514 = vadd.f32 %v5325, %v5513
    %v5515 = vpop.f32.mrf.mxu0
    %5516 = vmatprep.mubr.f32.mxu0 0.0
    %v5517 = vand.u32 %v4774, 4294901760
    %v5518 = vsub.f32 %v4774, %v5517
    %v5519 = vand.u32 %v5518, 4294901760
    %5520 = vmatmul.mubr.f32.gmra.mxu0 %v5519
    %v5521 = vpop.f32.mrf.mxu0
    %v5522 = vadd.f32 %v5332, %v5521
    %v5523 = vpop.f32.mrf.mxu0
    %5524 = vmatprep.mubr.f32.mxu0 0.0
    %v5525 = vand.u32 %v4777, 4294901760
    %v5526 = vsub.f32 %v4777, %v5525
    %v5527 = vand.u32 %v5526, 4294901760
    %5528 = vmatmul.mubr.f32.gmra.mxu0 %v5527
    %v5529 = vpop.f32.mrf.mxu0
    %v5530 = vadd.f32 %v5339, %v5529
    %v5531 = vpop.f32.mrf.mxu0
    %5532 = vmatprep.mubr.f32.mxu0 0.0
    %v5533 = vand.u32 %v4780, 4294901760
    %v5534 = vsub.f32 %v4780, %v5533
    %v5535 = vand.u32 %v5534, 4294901760
    %5536 = vmatmul.mubr.f32.gmra.mxu0 %v5535
    %v5537 = vpop.f32.mrf.mxu0
    %v5538 = vadd.f32 %v5346, %v5537
    %v5539 = vpop.f32.mrf.mxu0
    %5540 = vmatprep.mubr.f32.mxu0 0.0
    %v5541 = vand.u32 %v4783, 4294901760
    %v5542 = vsub.f32 %v4783, %v5541
    %v5543 = vand.u32 %v5542, 4294901760
    %5544 = vmatmul.mubr.f32.gmra.mxu0 %v5543
    %v5545 = vpop.f32.mrf.mxu0
    %v5546 = vadd.f32 %v5353, %v5545
    %v5547 = vpop.f32.mrf.mxu0
    %5548 = vmatprep.mubr.f32.mxu0 0.0
    %v5549 = vand.u32 %v4786, 4294901760
    %v5550 = vsub.f32 %v4786, %v5549
    %v5551 = vand.u32 %v5550, 4294901760
    %5552 = vmatmul.mubr.f32.gmra.mxu0 %v5551
    %v5553 = vpop.f32.mrf.mxu0
    %v5554 = vadd.f32 %v5360, %v5553
    %v5555 = vpop.f32.mrf.mxu0
    %5556 = vmatprep.mubr.f32.mxu0 0.0
    %v5557 = vand.u32 %v4789, 4294901760
    %v5558 = vsub.f32 %v4789, %v5557
    %v5559 = vand.u32 %v5558, 4294901760
    %5560 = vmatmul.mubr.f32.gmra.mxu0 %v5559
    %v5561 = vpop.f32.mrf.mxu0
    %v5562 = vadd.f32 %v5367, %v5561
    %v5563 = vpop.f32.mrf.mxu0
    %5564 = vdwg.mxu0
    %5565 = vmatprep.subr.mxu0 0.0
    %5566 = vmatpush1.msra.mxu0 0.0
    %5567 = vmatprep.subr.mxu0 0.0
    %5568 = vmatpush1.msra.mxu0 0.0
    %5569 = vmatprep.subr.mxu0 0.0
    %5570 = vmatpush1.msra.mxu0 0.0
    %5571 = vmatprep.subr.mxu0 0.0
    %5572 = vmatpush1.msra.mxu0 0.0
    %5573 = vmatprep.subr.mxu0 0.0
    %5574 = vmatpush1.msra.mxu0 0.0
    %5575 = vmatprep.subr.mxu0 0.0
    %5576 = vmatpush1.msra.mxu0 0.0
    %5577 = vmatprep.subr.mxu0 0.0
    %5578 = vmatpush1.msra.mxu0 0.0
    %5579 = vmatprep.subr.mxu0 0.0
    %5580 = vmatpush1.msra.mxu0 0.0
    %5581 = vmatprep.subr.mxu0 0.0
    %5582 = vmatpush1.msra.mxu0 0.0
    %5583 = vmatprep.subr.mxu0 0.0
    %5584 = vmatpush1.msra.mxu0 0.0
    %5585 = vmatprep.subr.mxu0 0.0
    %5586 = vmatpush1.msra.mxu0 0.0
    %5587 = vmatprep.subr.mxu0 0.0
    %5588 = vmatpush1.msra.mxu0 0.0
    %5589 = vmatprep.subr.mxu0 0.0
    %5590 = vmatpush1.msra.mxu0 0.0
    %5591 = vmatprep.subr.mxu0 0.0
    %5592 = vmatpush1.msra.mxu0 0.0
    %5593 = vmatprep.subr.mxu0 0.0
    %v5594 = vand.u32 %v53, 4294901760
    %v5595 = vsub.f32 %v53, %v5594
    %v5596 = vand.u32 %v5595, 4294901760
    %5597 = vmatpush1.msra.mxu0 %v5596
    %5598 = vmatprep.subr.mxu0 0.0
    %v5599 = vand.u32 %v52, 4294901760
    %v5600 = vsub.f32 %v52, %v5599
    %v5601 = vand.u32 %v5600, 4294901760
    %5602 = vmatpush1.msra.mxu0 %v5601
    %5603 = vmatprep.subr.mxu0 0.0
    %5604 = vmatpush2.msra.mxu0 0.0
    %5605 = vmatprep.subr.mxu0 0.0
    %5606 = vmatpush2.msra.mxu0 0.0
    %5607 = vmatprep.subr.mxu0 0.0
    %5608 = vmatpush2.msra.mxu0 0.0
    %5609 = vmatprep.subr.mxu0 0.0
    %5610 = vmatpush2.msra.mxu0 0.0
    %5611 = vmatprep.subr.mxu0 0.0
    %5612 = vmatpush2.msra.mxu0 0.0
    %5613 = vmatprep.subr.mxu0 0.0
    %5614 = vmatpush2.msra.mxu0 0.0
    %5615 = vmatprep.subr.mxu0 0.0
    %5616 = vmatpush2.msra.mxu0 0.0
    %5617 = vmatprep.subr.mxu0 0.0
    %5618 = vmatpush2.msra.mxu0 0.0
    %5619 = vmatprep.subr.mxu0 0.0
    %5620 = vmatpush2.msra.mxu0 0.0
    %5621 = vmatprep.subr.mxu0 0.0
    %5622 = vmatpush2.msra.mxu0 0.0
    %5623 = vmatprep.subr.mxu0 0.0
    %5624 = vmatpush2.msra.mxu0 0.0
    %5625 = vmatprep.subr.mxu0 0.0
    %5626 = vmatpush2.msra.mxu0 0.0
    %5627 = vmatprep.subr.mxu0 0.0
    %5628 = vmatpush2.msra.mxu0 0.0
    %5629 = vmatprep.subr.mxu0 0.0
    %5630 = vmatpush2.msra.mxu0 0.0
    %5631 = vmatprep.subr.mxu0 0.0
    %5632 = vmatpush2.msra.mxu0 0.0
    %5633 = vmatprep.subr.mxu0 0.0
    %5634 = vmatpush2.msra.mxu0 0.0
    %5635 = vmatprep.mubr.f32.mxu0 0.0
    %v5636 = vand.u32 %v4744, 4294901760
    %5637 = vmatmul.mubr.f32.gmra.mxu0 %v5636
    %v5638 = vpop.f32.mrf.mxu0
    %v5639 = vadd.f32 %v5442, %v5638
    %v5640 = vpop.f32.mrf.mxu0
    %5641 = vmatprep.mubr.f32.mxu0 0.0
    %v5642 = vand.u32 %v4747, 4294901760
    %5643 = vmatmul.mubr.f32.gmra.mxu0 %v5642
    %v5644 = vpop.f32.mrf.mxu0
    %v5645 = vadd.f32 %v5450, %v5644
    %v5646 = vpop.f32.mrf.mxu0
    %5647 = vmatprep.mubr.f32.mxu0 0.0
    %v5648 = vand.u32 %v4750, 4294901760
    %5649 = vmatmul.mubr.f32.gmra.mxu0 %v5648
    %v5650 = vpop.f32.mrf.mxu0
    %v5651 = vadd.f32 %v5458, %v5650
    %v5652 = vpop.f32.mrf.mxu0
    %5653 = vmatprep.mubr.f32.mxu0 0.0
    %v5654 = vand.u32 %v4753, 4294901760
    %5655 = vmatmul.mubr.f32.gmra.mxu0 %v5654
    %v5656 = vpop.f32.mrf.mxu0
    %v5657 = vadd.f32 %v5466, %v5656
    %v5658 = vpop.f32.mrf.mxu0
    %5659 = vmatprep.mubr.f32.mxu0 0.0
    %v5660 = vand.u32 %v4756, 4294901760
    %5661 = vmatmul.mubr.f32.gmra.mxu0 %v5660
    %v5662 = vpop.f32.mrf.mxu0
    %v5663 = vadd.f32 %v5474, %v5662
    %v5664 = vpop.f32.mrf.mxu0
    %5665 = vmatprep.mubr.f32.mxu0 0.0
    %v5666 = vand.u32 %v4759, 4294901760
    %5667 = vmatmul.mubr.f32.gmra.mxu0 %v5666
    %v5668 = vpop.f32.mrf.mxu0
    %v5669 = vadd.f32 %v5482, %v5668
    %v5670 = vpop.f32.mrf.mxu0
    %5671 = vmatprep.mubr.f32.mxu0 0.0
    %v5672 = vand.u32 %v4762, 4294901760
    %5673 = vmatmul.mubr.f32.gmra.mxu0 %v5672
    %v5674 = vpop.f32.mrf.mxu0
    %v5675 = vadd.f32 %v5490, %v5674
    %v5676 = vpop.f32.mrf.mxu0
    %5677 = vmatprep.mubr.f32.mxu0 0.0
    %v5678 = vand.u32 %v4765, 4294901760
    %5679 = vmatmul.mubr.f32.gmra.mxu0 %v5678
    %v5680 = vpop.f32.mrf.mxu0
    %v5681 = vadd.f32 %v5498, %v5680
    %v5682 = vpop.f32.mrf.mxu0
    %5683 = vmatprep.mubr.f32.mxu0 0.0
    %v5684 = vand.u32 %v4768, 4294901760
    %5685 = vmatmul.mubr.f32.gmra.mxu0 %v5684
    %v5686 = vpop.f32.mrf.mxu0
    %v5687 = vadd.f32 %v5506, %v5686
    %v5688 = vpop.f32.mrf.mxu0
    %5689 = vmatprep.mubr.f32.mxu0 0.0
    %v5690 = vand.u32 %v4771, 4294901760
    %5691 = vmatmul.mubr.f32.gmra.mxu0 %v5690
    %v5692 = vpop.f32.mrf.mxu0
    %v5693 = vadd.f32 %v5514, %v5692
    %v5694 = vpop.f32.mrf.mxu0
    %5695 = vmatprep.mubr.f32.mxu0 0.0
    %v5696 = vand.u32 %v4774, 4294901760
    %5697 = vmatmul.mubr.f32.gmra.mxu0 %v5696
    %v5698 = vpop.f32.mrf.mxu0
    %v5699 = vadd.f32 %v5522, %v5698
    %v5700 = vpop.f32.mrf.mxu0
    %5701 = vmatprep.mubr.f32.mxu0 0.0
    %v5702 = vand.u32 %v4777, 4294901760
    %5703 = vmatmul.mubr.f32.gmra.mxu0 %v5702
    %v5704 = vpop.f32.mrf.mxu0
    %v5705 = vadd.f32 %v5530, %v5704
    %v5706 = vpop.f32.mrf.mxu0
    %5707 = vmatprep.mubr.f32.mxu0 0.0
    %v5708 = vand.u32 %v4780, 4294901760
    %5709 = vmatmul.mubr.f32.gmra.mxu0 %v5708
    %v5710 = vpop.f32.mrf.mxu0
    %v5711 = vadd.f32 %v5538, %v5710
    %v5712 = vpop.f32.mrf.mxu0
    %5713 = vmatprep.mubr.f32.mxu0 0.0
    %v5714 = vand.u32 %v4783, 4294901760
    %5715 = vmatmul.mubr.f32.gmra.mxu0 %v5714
    %v5716 = vpop.f32.mrf.mxu0
    %v5717 = vadd.f32 %v5546, %v5716
    %v5718 = vpop.f32.mrf.mxu0
    %5719 = vmatprep.mubr.f32.mxu0 0.0
    %v5720 = vand.u32 %v4786, 4294901760
    %5721 = vmatmul.mubr.f32.gmra.mxu0 %v5720
    %v5722 = vpop.f32.mrf.mxu0
    %v5723 = vadd.f32 %v5554, %v5722
    %v5724 = vpop.f32.mrf.mxu0
    %5725 = vmatprep.mubr.f32.mxu0 0.0
    %v5726 = vand.u32 %v4789, 4294901760
    %5727 = vmatmul.mubr.f32.gmra.mxu0 %v5726
    %v5728 = vpop.f32.mrf.mxu0
    %v5729 = vadd.f32 %v5562, %v5728
    %v5730 = vpop.f32.mrf.mxu0
    %5731 = vdwg.mxu0
    %5732 = vmatprep.subr.mxu0 0.0
    %5733 = vmatpush1.msra.mxu0 0.0
    %5734 = vmatprep.subr.mxu0 0.0
    %5735 = vmatpush1.msra.mxu0 0.0
    %5736 = vmatprep.subr.mxu0 0.0
    %5737 = vmatpush1.msra.mxu0 0.0
    %5738 = vmatprep.subr.mxu0 0.0
    %5739 = vmatpush1.msra.mxu0 0.0
    %5740 = vmatprep.subr.mxu0 0.0
    %5741 = vmatpush1.msra.mxu0 0.0
    %5742 = vmatprep.subr.mxu0 0.0
    %5743 = vmatpush1.msra.mxu0 0.0
    %5744 = vmatprep.subr.mxu0 0.0
    %5745 = vmatpush1.msra.mxu0 0.0
    %5746 = vmatprep.subr.mxu0 0.0
    %5747 = vmatpush1.msra.mxu0 0.0
    %5748 = vmatprep.subr.mxu0 0.0
    %5749 = vmatpush1.msra.mxu0 0.0
    %5750 = vmatprep.subr.mxu0 0.0
    %5751 = vmatpush1.msra.mxu0 0.0
    %5752 = vmatprep.subr.mxu0 0.0
    %5753 = vmatpush1.msra.mxu0 0.0
    %5754 = vmatprep.subr.mxu0 0.0
    %5755 = vmatpush1.msra.mxu0 0.0
    %5756 = vmatprep.subr.mxu0 0.0
    %5757 = vmatpush1.msra.mxu0 0.0
    %5758 = vmatprep.subr.mxu0 0.0
    %5759 = vmatpush1.msra.mxu0 0.0
    %5760 = vmatprep.subr.mxu0 0.0
    %v5761 = vand.u32 %v53, 4294901760
    %5762 = vmatpush1.msra.mxu0 %v5761
    %5763 = vmatprep.subr.mxu0 0.0
    %v5764 = vand.u32 %v52, 4294901760
    %5765 = vmatpush1.msra.mxu0 %v5764
    %5766 = vmatprep.subr.mxu0 0.0
    %5767 = vmatpush2.msra.mxu0 0.0
    %5768 = vmatprep.subr.mxu0 0.0
    %5769 = vmatpush2.msra.mxu0 0.0
    %5770 = vmatprep.subr.mxu0 0.0
    %5771 = vmatpush2.msra.mxu0 0.0
    %5772 = vmatprep.subr.mxu0 0.0
    %5773 = vmatpush2.msra.mxu0 0.0
    %5774 = vmatprep.subr.mxu0 0.0
    %5775 = vmatpush2.msra.mxu0 0.0
    %5776 = vmatprep.subr.mxu0 0.0
    %5777 = vmatpush2.msra.mxu0 0.0
    %5778 = vmatprep.subr.mxu0 0.0
    %5779 = vmatpush2.msra.mxu0 0.0
    %5780 = vmatprep.subr.mxu0 0.0
    %5781 = vmatpush2.msra.mxu0 0.0
    %5782 = vmatprep.subr.mxu0 0.0
    %5783 = vmatpush2.msra.mxu0 0.0
    %5784 = vmatprep.subr.mxu0 0.0
    %5785 = vmatpush2.msra.mxu0 0.0
    %5786 = vmatprep.subr.mxu0 0.0
    %5787 = vmatpush2.msra.mxu0 0.0
    %5788 = vmatprep.subr.mxu0 0.0
    %5789 = vmatpush2.msra.mxu0 0.0
    %5790 = vmatprep.subr.mxu0 0.0
    %5791 = vmatpush2.msra.mxu0 0.0
    %5792 = vmatprep.subr.mxu0 0.0
    %5793 = vmatpush2.msra.mxu0 0.0
    %5794 = vmatprep.subr.mxu0 0.0
    %5795 = vmatpush2.msra.mxu0 0.0
    %5796 = vmatprep.subr.mxu0 0.0
    %5797 = vmatpush2.msra.mxu0 0.0
    %5798 = vmatprep.mubr.f32.mxu0 0.0
    %v5799 = vand.u32 %v4744, 4294901760
    %5800 = vmatmul.mubr.f32.gmra.mxu0 %v5799
    %v5801 = vpop.f32.mrf.mxu0
    %v5802 = vadd.f32 %v5639, %v5801
    %v5803 = vpop.f32.mrf.mxu0
    %5804 = vmatprep.mubr.f32.mxu0 0.0
    %v5805 = vand.u32 %v4747, 4294901760
    %5806 = vmatmul.mubr.f32.gmra.mxu0 %v5805
    %v5807 = vpop.f32.mrf.mxu0
    %v5808 = vadd.f32 %v5645, %v5807
    %v5809 = vpop.f32.mrf.mxu0
    %5810 = vmatprep.mubr.f32.mxu0 0.0
    %v5811 = vand.u32 %v4750, 4294901760
    %5812 = vmatmul.mubr.f32.gmra.mxu0 %v5811
    %v5813 = vpop.f32.mrf.mxu0
    %v5814 = vadd.f32 %v5651, %v5813
    %v5815 = vpop.f32.mrf.mxu0
    %5816 = vmatprep.mubr.f32.mxu0 0.0
    %v5817 = vand.u32 %v4753, 4294901760
    %5818 = vmatmul.mubr.f32.gmra.mxu0 %v5817
    %v5819 = vpop.f32.mrf.mxu0
    %v5820 = vadd.f32 %v5657, %v5819
    %v5821 = vpop.f32.mrf.mxu0
    %5822 = vmatprep.mubr.f32.mxu0 0.0
    %v5823 = vand.u32 %v4756, 4294901760
    %5824 = vmatmul.mubr.f32.gmra.mxu0 %v5823
    %v5825 = vpop.f32.mrf.mxu0
    %v5826 = vadd.f32 %v5663, %v5825
    %v5827 = vpop.f32.mrf.mxu0
    %5828 = vmatprep.mubr.f32.mxu0 0.0
    %v5829 = vand.u32 %v4759, 4294901760
    %5830 = vmatmul.mubr.f32.gmra.mxu0 %v5829
    %v5831 = vpop.f32.mrf.mxu0
    %v5832 = vadd.f32 %v5669, %v5831
    %v5833 = vpop.f32.mrf.mxu0
    %5834 = vmatprep.mubr.f32.mxu0 0.0
    %v5835 = vand.u32 %v4762, 4294901760
    %5836 = vmatmul.mubr.f32.gmra.mxu0 %v5835
    %v5837 = vpop.f32.mrf.mxu0
    %v5838 = vadd.f32 %v5675, %v5837
    %v5839 = vpop.f32.mrf.mxu0
    %5840 = vmatprep.mubr.f32.mxu0 0.0
    %v5841 = vand.u32 %v4765, 4294901760
    %5842 = vmatmul.mubr.f32.gmra.mxu0 %v5841
    %v5843 = vpop.f32.mrf.mxu0
    %v5844 = vadd.f32 %v5681, %v5843
    %v5845 = vpop.f32.mrf.mxu0
    %5846 = vmatprep.mubr.f32.mxu0 0.0
    %v5847 = vand.u32 %v4768, 4294901760
    %5848 = vmatmul.mubr.f32.gmra.mxu0 %v5847
    %v5849 = vpop.f32.mrf.mxu0
    %v5850 = vadd.f32 %v5687, %v5849
    %v5851 = vpop.f32.mrf.mxu0
    %5852 = vmatprep.mubr.f32.mxu0 0.0
    %v5853 = vand.u32 %v4771, 4294901760
    %5854 = vmatmul.mubr.f32.gmra.mxu0 %v5853
    %v5855 = vpop.f32.mrf.mxu0
    %v5856 = vadd.f32 %v5693, %v5855
    %v5857 = vpop.f32.mrf.mxu0
    %5858 = vmatprep.mubr.f32.mxu0 0.0
    %v5859 = vand.u32 %v4774, 4294901760
    %5860 = vmatmul.mubr.f32.gmra.mxu0 %v5859
    %v5861 = vpop.f32.mrf.mxu0
    %v5862 = vadd.f32 %v5699, %v5861
    %v5863 = vpop.f32.mrf.mxu0
    %5864 = vmatprep.mubr.f32.mxu0 0.0
    %v5865 = vand.u32 %v4777, 4294901760
    %5866 = vmatmul.mubr.f32.gmra.mxu0 %v5865
    %v5867 = vpop.f32.mrf.mxu0
    %v5868 = vadd.f32 %v5705, %v5867
    %v5869 = vpop.f32.mrf.mxu0
    %5870 = vmatprep.mubr.f32.mxu0 0.0
    %v5871 = vand.u32 %v4780, 4294901760
    %5872 = vmatmul.mubr.f32.gmra.mxu0 %v5871
    %v5873 = vpop.f32.mrf.mxu0
    %v5874 = vadd.f32 %v5711, %v5873
    %v5875 = vpop.f32.mrf.mxu0
    %5876 = vmatprep.mubr.f32.mxu0 0.0
    %v5877 = vand.u32 %v4783, 4294901760
    %5878 = vmatmul.mubr.f32.gmra.mxu0 %v5877
    %v5879 = vpop.f32.mrf.mxu0
    %v5880 = vadd.f32 %v5717, %v5879
    %v5881 = vpop.f32.mrf.mxu0
    %5882 = vmatprep.mubr.f32.mxu0 0.0
    %v5883 = vand.u32 %v4786, 4294901760
    %5884 = vmatmul.mubr.f32.gmra.mxu0 %v5883
    %v5885 = vpop.f32.mrf.mxu0
    %v5886 = vadd.f32 %v5723, %v5885
    %v5887 = vpop.f32.mrf.mxu0
    %5888 = vmatprep.mubr.f32.mxu0 0.0
    %v5889 = vand.u32 %v4789, 4294901760
    %5890 = vmatmul.mubr.f32.gmra.mxu0 %v5889
    %v5891 = vpop.f32.mrf.mxu0
    %v5892 = vadd.f32 %v5729, %v5891
    %v5893 = vpop.f32.mrf.mxu0
    %5894 = vdwg.mxu0
    %v5903 = vrot.slane %v1152, 2
    %v5904 = vrot.slane %v1164, 2
    %v5905 = vrot.slane %v1176, 2
    %v5906 = vrot.slane %v1188, 2
    %v5907 = vrot.slane %v1200, 2
    %v5908 = vrot.slane %v1212, 2
    %v5909 = vrot.slane %v1224, 2
    %v5910 = vrot.slane %v1236, 2
    %v5919 = vadd.f32 %v1146, %v5903
    %v5920 = vadd.f32 %v1158, %v5904
    %v5921 = vadd.f32 %v1170, %v5905
    %v5922 = vadd.f32 %v1182, %v5906
    %v5923 = vadd.f32 %v1194, %v5907
    %v5924 = vadd.f32 %v1206, %v5908
    %v5925 = vadd.f32 %v1218, %v5909
    %v5926 = vadd.f32 %v1230, %v5910
    %v5927 = vmul.f32 %v5919, 0.0010283801
    %v5928 = vmul.f32 %v5920, 0.0010283801
    %v5929 = vmul.f32 %v5921, 0.0010283801
    %v5930 = vmul.f32 %v5922, 0.0010283801
    %v5931 = vmul.f32 %v5923, 0.0010283801
    %v5932 = vmul.f32 %v5924, 0.0010283801
    %v5933 = vmul.f32 %v5925, 0.0010283801
    %v5934 = vmul.f32 %v5926, 0.0010283801
    %v5935 = vadd.f32 %v1146, %v1152
    %v5936 = vadd.f32 %v1158, %v1164
    %v5937 = vadd.f32 %v1170, %v1176
    %v5938 = vadd.f32 %v1182, %v1188
    %v5939 = vadd.f32 %v1194, %v1200
    %v5940 = vadd.f32 %v1206, %v1212
    %v5941 = vadd.f32 %v1218, %v1224
    %v5942 = vadd.f32 %v1230, %v1236
    %v5943 = vmul.f32 %v5935, 0.007598758
    %v5944 = vmul.f32 %v5936, 0.007598758
    %v5945 = vmul.f32 %v5937, 0.007598758
    %v5946 = vmul.f32 %v5938, 0.007598758
    %v5947 = vmul.f32 %v5939, 0.007598758
    %v5948 = vmul.f32 %v5940, 0.007598758
    %v5949 = vmul.f32 %v5941, 0.007598758
    %v5950 = vmul.f32 %v5942, 0.007598758
    %v5959 = vrot.slane %v5943, 1
    %v5960 = vrot.slane %v5944, 1
    %v5961 = vrot.slane %v5945, 1
    %v5962 = vrot.slane %v5946, 1
    %v5963 = vrot.slane %v5947, 1
    %v5964 = vrot.slane %v5948, 1
    %v5965 = vrot.slane %v5949, 1
    %v5966 = vrot.slane %v5950, 1
    %v5975 = vadd.f32 %v5927, %v5959
    %v5976 = vadd.f32 %v5928, %v5960
    %v5977 = vadd.f32 %v5929, %v5961
    %v5978 = vadd.f32 %v5930, %v5962
    %v5979 = vadd.f32 %v5931, %v5963
    %v5980 = vadd.f32 %v5932, %v5964
    %v5981 = vadd.f32 %v5933, %v5965
    %v5982 = vadd.f32 %v5934, %v5966
    %v5983 = vrot.slane %v1152, 6
    %v5984 = vrot.slane %v1164, 6
    %v5985 = vrot.slane %v1176, 6
    %v5986 = vrot.slane %v1188, 6
    %v5987 = vrot.slane %v1200, 6
    %v5988 = vrot.slane %v1212, 6
    %v5989 = vrot.slane %v1224, 6
    %v5990 = vrot.slane %v1236, 6
    %v5999 = vadd.f32 %v1146, %v5983
    %v6000 = vadd.f32 %v1158, %v5984
    %v6001 = vadd.f32 %v1170, %v5985
    %v6002 = vadd.f32 %v1182, %v5986
    %v6003 = vadd.f32 %v1194, %v5987
    %v6004 = vadd.f32 %v1206, %v5988
    %v6005 = vadd.f32 %v1218, %v5989
    %v6006 = vadd.f32 %v1230, %v5990
    %v6007 = vmul.f32 %v5999, 0.036000773
    %v6008 = vmul.f32 %v6000, 0.036000773
    %v6009 = vmul.f32 %v6001, 0.036000773
    %v6010 = vmul.f32 %v6002, 0.036000773
    %v6011 = vmul.f32 %v6003, 0.036000773
    %v6012 = vmul.f32 %v6004, 0.036000773
    %v6013 = vmul.f32 %v6005, 0.036000773
    %v6014 = vmul.f32 %v6006, 0.036000773
    %v6023 = vrot.slane %v6007, 2
    %v6024 = vrot.slane %v6008, 2
    %v6025 = vrot.slane %v6009, 2
    %v6026 = vrot.slane %v6010, 2
    %v6027 = vrot.slane %v6011, 2
    %v6028 = vrot.slane %v6012, 2
    %v6029 = vrot.slane %v6013, 2
    %v6030 = vrot.slane %v6014, 2
    %v6039 = vadd.f32 %v5975, %v6023
    %v6040 = vadd.f32 %v5976, %v6024
    %v6041 = vadd.f32 %v5977, %v6025
    %v6042 = vadd.f32 %v5978, %v6026
    %v6043 = vadd.f32 %v5979, %v6027
    %v6044 = vadd.f32 %v5980, %v6028
    %v6045 = vadd.f32 %v5981, %v6029
    %v6046 = vadd.f32 %v5982, %v6030
    %vm6055 = vcmask 1043456
    %v6056 = vrot.slane %v1146, 4
    %v6057 = vrot.slane %v1152, 4
    %v6058 = vsel %vm6055, %v6056, %v6057
    %v6059 = vrot.slane %v1158, 4
    %v6060 = vrot.slane %v1164, 4
    %v6061 = vsel %vm6055, %v6059, %v6060
    %v6062 = vrot.slane %v1170, 4
    %v6063 = vrot.slane %v1176, 4
    %v6064 = vsel %vm6055, %v6062, %v6063
    %v6065 = vrot.slane %v1182, 4
    %v6066 = vrot.slane %v1188, 4
    %v6067 = vsel %vm6055, %v6065, %v6066
    %v6068 = vrot.slane %v1194, 4
    %v6069 = vrot.slane %v1200, 4
    %v6070 = vsel %vm6055, %v6068, %v6069
    %v6071 = vrot.slane %v1206, 4
    %v6072 = vrot.slane %v1212, 4
    %v6073 = vsel %vm6055, %v6071, %v6072
    %v6074 = vrot.slane %v1218, 4
    %v6075 = vrot.slane %v1224, 4
    %v6076 = vsel %vm6055, %v6074, %v6075
    %v6077 = vrot.slane %v1230, 4
    %v6078 = vrot.slane %v1236, 4
    %v6079 = vsel %vm6055, %v6077, %v6078
    %v6096 = vadd.f32 %v1146, %v6058
    %v6097 = vadd.f32 %v1152, %v6057
    %v6098 = vadd.f32 %v1158, %v6061
    %v6099 = vadd.f32 %v1164, %v6060
    %v6100 = vadd.f32 %v1170, %v6064
    %v6101 = vadd.f32 %v1176, %v6063
    %v6102 = vadd.f32 %v1182, %v6067
    %v6103 = vadd.f32 %v1188, %v6066
    %v6104 = vadd.f32 %v1194, %v6070
    %v6105 = vadd.f32 %v1200, %v6069
    %v6106 = vadd.f32 %v1206, %v6073
    %v6107 = vadd.f32 %v1212, %v6072
    %v6108 = vadd.f32 %v1218, %v6076
    %v6109 = vadd.f32 %v1224, %v6075
    %v6110 = vadd.f32 %v1230, %v6079
    %v6111 = vadd.f32 %v1236, %v6078
    %v6112 = vmul.f32 %v6096, 0.10936069
    %v6113 = vmul.f32 %v6097, 0.10936069
    %v6114 = vmul.f32 %v6098, 0.10936069
    %v6115 = vmul.f32 %v6099, 0.10936069
    %v6116 = vmul.f32 %v6100, 0.10936069
    %v6117 = vmul.f32 %v6101, 0.10936069
    %v6118 = vmul.f32 %v6102, 0.10936069
    %v6119 = vmul.f32 %v6103, 0.10936069
    %v6120 = vmul.f32 %v6104, 0.10936069
    %v6121 = vmul.f32 %v6105, 0.10936069
    %v6122 = vmul.f32 %v6106, 0.10936069
    %v6123 = vmul.f32 %v6107, 0.10936069
    %v6124 = vmul.f32 %v6108, 0.10936069
    %v6125 = vmul.f32 %v6109, 0.10936069
    %v6126 = vmul.f32 %v6110, 0.10936069
    %v6127 = vmul.f32 %v6111, 0.10936069
    %vm6144 = vcmask 1044480
    %v6145 = vrot.slane %v6112, 3
    %v6146 = vrot.slane %v6113, 3
    %v6147 = vsel %vm6144, %v6145, %v6146
    %v6148 = vrot.slane %v6114, 3
    %v6149 = vrot.slane %v6115, 3
    %v6150 = vsel %vm6144, %v6148, %v6149
    %v6151 = vrot.slane %v6116, 3
    %v6152 = vrot.slane %v6117, 3
    %v6153 = vsel %vm6144, %v6151, %v6152
    %v6154 = vrot.slane %v6118, 3
    %v6155 = vrot.slane %v6119, 3
    %v6156 = vsel %vm6144, %v6154, %v6155
    %v6157 = vrot.slane %v6120, 3
    %v6158 = vrot.slane %v6121, 3
    %v6159 = vsel %vm6144, %v6157, %v6158
    %v6160 = vrot.slane %v6122, 3
    %v6161 = vrot.slane %v6123, 3
    %v6162 = vsel %vm6144, %v6160, %v6161
    %v6163 = vrot.slane %v6124, 3
    %v6164 = vrot.slane %v6125, 3
    %v6165 = vsel %vm6144, %v6163, %v6164
    %v6166 = vrot.slane %v6126, 3
    %v6167 = vrot.slane %v6127, 3
    %v6168 = vsel %vm6144, %v6166, %v6167
    %v6177 = vadd.f32 %v6039, %v6147
    %v6178 = vadd.f32 %v6040, %v6150
    %v6179 = vadd.f32 %v6041, %v6153
    %v6180 = vadd.f32 %v6042, %v6156
    %v6181 = vadd.f32 %v6043, %v6159
    %v6182 = vadd.f32 %v6044, %v6162
    %v6183 = vadd.f32 %v6045, %v6165
    %v6184 = vadd.f32 %v6046, %v6168
    %vm6185 = vcmask 1045504
    %v6186 = vrot.slane %v1146, 2
    %v6187 = vsel %vm6185, %v6186, %v5903
    %v6188 = vrot.slane %v1158, 2
    %v6189 = vsel %vm6185, %v6188, %v5904
    %v6190 = vrot.slane %v1170, 2
    %v6191 = vsel %vm6185, %v6190, %v5905
    %v6192 = vrot.slane %v1182, 2
    %v6193 = vsel %vm6185, %v6192, %v5906
    %v6194 = vrot.slane %v1194, 2
    %v6195 = vsel %vm6185, %v6194, %v5907
    %v6196 = vrot.slane %v1206, 2
    %v6197 = vsel %vm6185, %v6196, %v5908
    %v6198 = vrot.slane %v1218, 2
    %v6199 = vsel %vm6185, %v6198, %v5909
    %v6200 = vrot.slane %v1230, 2
    %v6201 = vsel %vm6185, %v6200, %v5910
    %v6210 = vadd.f32 %v1146, %v6187
    %v6211 = vadd.f32 %v1152, %v5903
    %v6212 = vadd.f32 %v1158, %v6189
    %v6213 = vadd.f32 %v1164, %v5904
    %v6214 = vadd.f32 %v1170, %v6191
    %v6215 = vadd.f32 %v1176, %v5905
    %v6216 = vadd.f32 %v1182, %v6193
    %v6217 = vadd.f32 %v1188, %v5906
    %v6218 = vadd.f32 %v1194, %v6195
    %v6219 = vadd.f32 %v1200, %v5907
    %v6220 = vadd.f32 %v1206, %v6197
    %v6221 = vadd.f32 %v1212, %v5908
    %v6222 = vadd.f32 %v1218, %v6199
    %v6223 = vadd.f32 %v1224, %v5909
    %v6224 = vadd.f32 %v1230, %v6201
    %v6225 = vadd.f32 %v1236, %v5910
    %v6226 = vmul.f32 %v6210, 0.21300554
    %v6227 = vmul.f32 %v6211, 0.21300554
    %v6228 = vmul.f32 %v6212, 0.21300554
    %v6229 = vmul.f32 %v6213, 0.21300554
    %v6230 = vmul.f32 %v6214, 0.21300554
    %v6231 = vmul.f32 %v6215, 0.21300554
    %v6232 = vmul.f32 %v6216, 0.21300554
    %v6233 = vmul.f32 %v6217, 0.21300554
    %v6234 = vmul.f32 %v6218, 0.21300554
    %v6235 = vmul.f32 %v6219, 0.21300554
    %v6236 = vmul.f32 %v6220, 0.21300554
    %v6237 = vmul.f32 %v6221, 0.21300554
    %v6238 = vmul.f32 %v6222, 0.21300554
    %v6239 = vmul.f32 %v6223, 0.21300554
    %v6240 = vmul.f32 %v6224, 0.21300554
    %v6241 = vmul.f32 %v6225, 0.21300554
    %v6258 = vrot.slane %v6226, 4
    %v6259 = vrot.slane %v6227, 4
    %v6260 = vsel %vm6055, %v6258, %v6259
    %v6261 = vrot.slane %v6228, 4
    %v6262 = vrot.slane %v6229, 4
    %v6263 = vsel %vm6055, %v6261, %v6262
    %v6264 = vrot.slane %v6230, 4
    %v6265 = vrot.slane %v6231, 4
    %v6266 = vsel %vm6055, %v6264, %v6265
    %v6267 = vrot.slane %v6232, 4
    %v6268 = vrot.slane %v6233, 4
    %v6269 = vsel %vm6055, %v6267, %v6268
    %v6270 = vrot.slane %v6234, 4
    %v6271 = vrot.slane %v6235, 4
    %v6272 = vsel %vm6055, %v6270, %v6271
    %v6273 = vrot.slane %v6236, 4
    %v6274 = vrot.slane %v6237, 4
    %v6275 = vsel %vm6055, %v6273, %v6274
    %v6276 = vrot.slane %v6238, 4
    %v6277 = vrot.slane %v6239, 4
    %v6278 = vsel %vm6055, %v6276, %v6277
    %v6279 = vrot.slane %v6240, 4
    %v6280 = vrot.slane %v6241, 4
    %v6281 = vsel %vm6055, %v6279, %v6280
    %v6290 = vadd.f32 %v6177, %v6260
    %v6291 = vadd.f32 %v6178, %v6263
    %v6292 = vadd.f32 %v6179, %v6266
    %v6293 = vadd.f32 %v6180, %v6269
    %v6294 = vadd.f32 %v6181, %v6272
    %v6295 = vadd.f32 %v6182, %v6275
    %v6296 = vadd.f32 %v6183, %v6278
    %v6297 = vadd.f32 %v6184, %v6281
    %v6298 = vmul.f32 %v1146, 0.26601171
    %v6299 = vmul.f32 %v1152, 0.26601171
    %v6300 = vmul.f32 %v1158, 0.26601171
    %v6301 = vmul.f32 %v1164, 0.26601171
    %v6302 = vmul.f32 %v1170, 0.26601171
    %v6303 = vmul.f32 %v1176, 0.26601171
    %v6304 = vmul.f32 %v1182, 0.26601171
    %v6305 = vmul.f32 %v1188, 0.26601171
    %v6306 = vmul.f32 %v1194, 0.26601171
    %v6307 = vmul.f32 %v1200, 0.26601171
    %v6308 = vmul.f32 %v1206, 0.26601171
    %v6309 = vmul.f32 %v1212, 0.26601171
    %v6310 = vmul.f32 %v1218, 0.26601171
    %v6311 = vmul.f32 %v1224, 0.26601171
    %v6312 = vmul.f32 %v1230, 0.26601171
    %v6313 = vmul.f32 %v1236, 0.26601171
    %vm6330 = vcmask 1042432
    %v6331 = vrot.slane %v6298, 5
    %v6332 = vrot.slane %v6299, 5
    %v6333 = vsel %vm6330, %v6331, %v6332
    %v6334 = vrot.slane %v6300, 5
    %v6335 = vrot.slane %v6301, 5
    %v6336 = vsel %vm6330, %v6334, %v6335
    %v6337 = vrot.slane %v6302, 5
    %v6338 = vrot.slane %v6303, 5
    %v6339 = vsel %vm6330, %v6337, %v6338
    %v6340 = vrot.slane %v6304, 5
    %v6341 = vrot.slane %v6305, 5
    %v6342 = vsel %vm6330, %v6340, %v6341
    %v6343 = vrot.slane %v6306, 5
    %v6344 = vrot.slane %v6307, 5
    %v6345 = vsel %vm6330, %v6343, %v6344
    %v6346 = vrot.slane %v6308, 5
    %v6347 = vrot.slane %v6309, 5
    %v6348 = vsel %vm6330, %v6346, %v6347
    %v6349 = vrot.slane %v6310, 5
    %v6350 = vrot.slane %v6311, 5
    %v6351 = vsel %vm6330, %v6349, %v6350
    %v6352 = vrot.slane %v6312, 5
    %v6353 = vrot.slane %v6313, 5
    %v6354 = vsel %vm6330, %v6352, %v6353
    %v6363 = vadd.f32 %v6290, %v6333
    %v6364 = vadd.f32 %v6291, %v6336
    %v6365 = vadd.f32 %v6292, %v6339
    %v6366 = vadd.f32 %v6293, %v6342
    %v6367 = vadd.f32 %v6294, %v6345
    %v6368 = vadd.f32 %v6295, %v6348
    %v6369 = vadd.f32 %v6296, %v6351
    %v6370 = vadd.f32 %v6297, %v6354
    %v6379 = vrot.slane %v2304, 2
    %v6380 = vrot.slane %v2316, 2
    %v6381 = vrot.slane %v2328, 2
    %v6382 = vrot.slane %v2340, 2
    %v6383 = vrot.slane %v2352, 2
    %v6384 = vrot.slane %v2364, 2
    %v6385 = vrot.slane %v2376, 2
    %v6386 = vrot.slane %v2388, 2
    %v6395 = vadd.f32 %v2298, %v6379
    %v6396 = vadd.f32 %v2310, %v6380
    %v6397 = vadd.f32 %v2322, %v6381
    %v6398 = vadd.f32 %v2334, %v6382
    %v6399 = vadd.f32 %v2346, %v6383
    %v6400 = vadd.f32 %v2358, %v6384
    %v6401 = vadd.f32 %v2370, %v6385
    %v6402 = vadd.f32 %v2382, %v6386
    %v6403 = vmul.f32 %v6395, 0.0010283801
    %v6404 = vmul.f32 %v6396, 0.0010283801
    %v6405 = vmul.f32 %v6397, 0.0010283801
    %v6406 = vmul.f32 %v6398, 0.0010283801
    %v6407 = vmul.f32 %v6399, 0.0010283801
    %v6408 = vmul.f32 %v6400, 0.0010283801
    %v6409 = vmul.f32 %v6401, 0.0010283801
    %v6410 = vmul.f32 %v6402, 0.0010283801
    %v6411 = vadd.f32 %v2298, %v2304
    %v6412 = vadd.f32 %v2310, %v2316
    %v6413 = vadd.f32 %v2322, %v2328
    %v6414 = vadd.f32 %v2334, %v2340
    %v6415 = vadd.f32 %v2346, %v2352
    %v6416 = vadd.f32 %v2358, %v2364
    %v6417 = vadd.f32 %v2370, %v2376
    %v6418 = vadd.f32 %v2382, %v2388
    %v6419 = vmul.f32 %v6411, 0.007598758
    %v6420 = vmul.f32 %v6412, 0.007598758
    %v6421 = vmul.f32 %v6413, 0.007598758
    %v6422 = vmul.f32 %v6414, 0.007598758
    %v6423 = vmul.f32 %v6415, 0.007598758
    %v6424 = vmul.f32 %v6416, 0.007598758
    %v6425 = vmul.f32 %v6417, 0.007598758
    %v6426 = vmul.f32 %v6418, 0.007598758
    %v6435 = vrot.slane %v6419, 1
    %v6436 = vrot.slane %v6420, 1
    %v6437 = vrot.slane %v6421, 1
    %v6438 = vrot.slane %v6422, 1
    %v6439 = vrot.slane %v6423, 1
    %v6440 = vrot.slane %v6424, 1
    %v6441 = vrot.slane %v6425, 1
    %v6442 = vrot.slane %v6426, 1
    %v6451 = vadd.f32 %v6403, %v6435
    %v6452 = vadd.f32 %v6404, %v6436
    %v6453 = vadd.f32 %v6405, %v6437
    %v6454 = vadd.f32 %v6406, %v6438
    %v6455 = vadd.f32 %v6407, %v6439
    %v6456 = vadd.f32 %v6408, %v6440
    %v6457 = vadd.f32 %v6409, %v6441
    %v6458 = vadd.f32 %v6410, %v6442
    %v6459 = vrot.slane %v2304, 6
    %v6460 = vrot.slane %v2316, 6
    %v6461 = vrot.slane %v2328, 6
    %v6462 = vrot.slane %v2340, 6
    %v6463 = vrot.slane %v2352, 6
    %v6464 = vrot.slane %v2364, 6
    %v6465 = vrot.slane %v2376, 6
    %v6466 = vrot.slane %v2388, 6
    %v6475 = vadd.f32 %v2298, %v6459
    %v6476 = vadd.f32 %v2310, %v6460
    %v6477 = vadd.f32 %v2322, %v6461
    %v6478 = vadd.f32 %v2334, %v6462
    %v6479 = vadd.f32 %v2346, %v6463
    %v6480 = vadd.f32 %v2358, %v6464
    %v6481 = vadd.f32 %v2370, %v6465
    %v6482 = vadd.f32 %v2382, %v6466
    %v6483 = vmul.f32 %v6475, 0.036000773
    %v6484 = vmul.f32 %v6476, 0.036000773
    %v6485 = vmul.f32 %v6477, 0.036000773
    %v6486 = vmul.f32 %v6478, 0.036000773
    %v6487 = vmul.f32 %v6479, 0.036000773
    %v6488 = vmul.f32 %v6480, 0.036000773
    %v6489 = vmul.f32 %v6481, 0.036000773
    %v6490 = vmul.f32 %v6482, 0.036000773
    %v6499 = vrot.slane %v6483, 2
    %v6500 = vrot.slane %v6484, 2
    %v6501 = vrot.slane %v6485, 2
    %v6502 = vrot.slane %v6486, 2
    %v6503 = vrot.slane %v6487, 2
    %v6504 = vrot.slane %v6488, 2
    %v6505 = vrot.slane %v6489, 2
    %v6506 = vrot.slane %v6490, 2
    %v6515 = vadd.f32 %v6451, %v6499
    %v6516 = vadd.f32 %v6452, %v6500
    %v6517 = vadd.f32 %v6453, %v6501
    %v6518 = vadd.f32 %v6454, %v6502
    %v6519 = vadd.f32 %v6455, %v6503
    %v6520 = vadd.f32 %v6456, %v6504
    %v6521 = vadd.f32 %v6457, %v6505
    %v6522 = vadd.f32 %v6458, %v6506
    %v6531 = vrot.slane %v2298, 4
    %v6532 = vrot.slane %v2304, 4
    %v6533 = vsel %vm6055, %v6531, %v6532
    %v6534 = vrot.slane %v2310, 4
    %v6535 = vrot.slane %v2316, 4
    %v6536 = vsel %vm6055, %v6534, %v6535
    %v6537 = vrot.slane %v2322, 4
    %v6538 = vrot.slane %v2328, 4
    %v6539 = vsel %vm6055, %v6537, %v6538
    %v6540 = vrot.slane %v2334, 4
    %v6541 = vrot.slane %v2340, 4
    %v6542 = vsel %vm6055, %v6540, %v6541
    %v6543 = vrot.slane %v2346, 4
    %v6544 = vrot.slane %v2352, 4
    %v6545 = vsel %vm6055, %v6543, %v6544
    %v6546 = vrot.slane %v2358, 4
    %v6547 = vrot.slane %v2364, 4
    %v6548 = vsel %vm6055, %v6546, %v6547
    %v6549 = vrot.slane %v2370, 4
    %v6550 = vrot.slane %v2376, 4
    %v6551 = vsel %vm6055, %v6549, %v6550
    %v6552 = vrot.slane %v2382, 4
    %v6553 = vrot.slane %v2388, 4
    %v6554 = vsel %vm6055, %v6552, %v6553
    %v6571 = vadd.f32 %v2298, %v6533
    %v6572 = vadd.f32 %v2304, %v6532
    %v6573 = vadd.f32 %v2310, %v6536
    %v6574 = vadd.f32 %v2316, %v6535
    %v6575 = vadd.f32 %v2322, %v6539
    %v6576 = vadd.f32 %v2328, %v6538
    %v6577 = vadd.f32 %v2334, %v6542
    %v6578 = vadd.f32 %v2340, %v6541
    %v6579 = vadd.f32 %v2346, %v6545
    %v6580 = vadd.f32 %v2352, %v6544
    %v6581 = vadd.f32 %v2358, %v6548
    %v6582 = vadd.f32 %v2364, %v6547
    %v6583 = vadd.f32 %v2370, %v6551
    %v6584 = vadd.f32 %v2376, %v6550
    %v6585 = vadd.f32 %v2382, %v6554
    %v6586 = vadd.f32 %v2388, %v6553
    %v6587 = vmul.f32 %v6571, 0.10936069
    %v6588 = vmul.f32 %v6572, 0.10936069
    %v6589 = vmul.f32 %v6573, 0.10936069
    %v6590 = vmul.f32 %v6574, 0.10936069
    %v6591 = vmul.f32 %v6575, 0.10936069
    %v6592 = vmul.f32 %v6576, 0.10936069
    %v6593 = vmul.f32 %v6577, 0.10936069
    %v6594 = vmul.f32 %v6578, 0.10936069
    %v6595 = vmul.f32 %v6579, 0.10936069
    %v6596 = vmul.f32 %v6580, 0.10936069
    %v6597 = vmul.f32 %v6581, 0.10936069
    %v6598 = vmul.f32 %v6582, 0.10936069
    %v6599 = vmul.f32 %v6583, 0.10936069
    %v6600 = vmul.f32 %v6584, 0.10936069
    %v6601 = vmul.f32 %v6585, 0.10936069
    %v6602 = vmul.f32 %v6586, 0.10936069
    %v6619 = vrot.slane %v6587, 3
    %v6620 = vrot.slane %v6588, 3
    %v6621 = vsel %vm6144, %v6619, %v6620
    %v6622 = vrot.slane %v6589, 3
    %v6623 = vrot.slane %v6590, 3
    %v6624 = vsel %vm6144, %v6622, %v6623
    %v6625 = vrot.slane %v6591, 3
    %v6626 = vrot.slane %v6592, 3
    %v6627 = vsel %vm6144, %v6625, %v6626
    %v6628 = vrot.slane %v6593, 3
    %v6629 = vrot.slane %v6594, 3
    %v6630 = vsel %vm6144, %v6628, %v6629
    %v6631 = vrot.slane %v6595, 3
    %v6632 = vrot.slane %v6596, 3
    %v6633 = vsel %vm6144, %v6631, %v6632
    %v6634 = vrot.slane %v6597, 3
    %v6635 = vrot.slane %v6598, 3
    %v6636 = vsel %vm6144, %v6634, %v6635
    %v6637 = vrot.slane %v6599, 3
    %v6638 = vrot.slane %v6600, 3
    %v6639 = vsel %vm6144, %v6637, %v6638
    %v6640 = vrot.slane %v6601, 3
    %v6641 = vrot.slane %v6602, 3
    %v6642 = vsel %vm6144, %v6640, %v6641
    %v6651 = vadd.f32 %v6515, %v6621
    %v6652 = vadd.f32 %v6516, %v6624
    %v6653 = vadd.f32 %v6517, %v6627
    %v6654 = vadd.f32 %v6518, %v6630
    %v6655 = vadd.f32 %v6519, %v6633
    %v6656 = vadd.f32 %v6520, %v6636
    %v6657 = vadd.f32 %v6521, %v6639
    %v6658 = vadd.f32 %v6522, %v6642
    %v6659 = vrot.slane %v2298, 2
    %v6660 = vsel %vm6185, %v6659, %v6379
    %v6661 = vrot.slane %v2310, 2
    %v6662 = vsel %vm6185, %v6661, %v6380
    %v6663 = vrot.slane %v2322, 2
    %v6664 = vsel %vm6185, %v6663, %v6381
    %v6665 = vrot.slane %v2334, 2
    %v6666 = vsel %vm6185, %v6665, %v6382
    %v6667 = vrot.slane %v2346, 2
    %v6668 = vsel %vm6185, %v6667, %v6383
    %v6669 = vrot.slane %v2358, 2
    %v6670 = vsel %vm6185, %v6669, %v6384
    %v6671 = vrot.slane %v2370, 2
    %v6672 = vsel %vm6185, %v6671, %v6385
    %v6673 = vrot.slane %v2382, 2
    %v6674 = vsel %vm6185, %v6673, %v6386
    %v6683 = vadd.f32 %v2298, %v6660
    %v6684 = vadd.f32 %v2304, %v6379
    %v6685 = vadd.f32 %v2310, %v6662
    %v6686 = vadd.f32 %v2316, %v6380
    %v6687 = vadd.f32 %v2322, %v6664
    %v6688 = vadd.f32 %v2328, %v6381
    %v6689 = vadd.f32 %v2334, %v6666
    %v6690 = vadd.f32 %v2340, %v6382
    %v6691 = vadd.f32 %v2346, %v6668
    %v6692 = vadd.f32 %v2352, %v6383
    %v6693 = vadd.f32 %v2358, %v6670
    %v6694 = vadd.f32 %v2364, %v6384
    %v6695 = vadd.f32 %v2370, %v6672
    %v6696 = vadd.f32 %v2376, %v6385
    %v6697 = vadd.f32 %v2382, %v6674
    %v6698 = vadd.f32 %v2388, %v6386
    %v6699 = vmul.f32 %v6683, 0.21300554
    %v6700 = vmul.f32 %v6684, 0.21300554
    %v6701 = vmul.f32 %v6685, 0.21300554
    %v6702 = vmul.f32 %v6686, 0.21300554
    %v6703 = vmul.f32 %v6687, 0.21300554
    %v6704 = vmul.f32 %v6688, 0.21300554
    %v6705 = vmul.f32 %v6689, 0.21300554
    %v6706 = vmul.f32 %v6690, 0.21300554
    %v6707 = vmul.f32 %v6691, 0.21300554
    %v6708 = vmul.f32 %v6692, 0.21300554
    %v6709 = vmul.f32 %v6693, 0.21300554
    %v6710 = vmul.f32 %v6694, 0.21300554
    %v6711 = vmul.f32 %v6695, 0.21300554
    %v6712 = vmul.f32 %v6696, 0.21300554
    %v6713 = vmul.f32 %v6697, 0.21300554
    %v6714 = vmul.f32 %v6698, 0.21300554
    %v6731 = vrot.slane %v6699, 4
    %v6732 = vrot.slane %v6700, 4
    %v6733 = vsel %vm6055, %v6731, %v6732
    %v6734 = vrot.slane %v6701, 4
    %v6735 = vrot.slane %v6702, 4
    %v6736 = vsel %vm6055, %v6734, %v6735
    %v6737 = vrot.slane %v6703, 4
    %v6738 = vrot.slane %v6704, 4
    %v6739 = vsel %vm6055, %v6737, %v6738
    %v6740 = vrot.slane %v6705, 4
    %v6741 = vrot.slane %v6706, 4
    %v6742 = vsel %vm6055, %v6740, %v6741
    %v6743 = vrot.slane %v6707, 4
    %v6744 = vrot.slane %v6708, 4
    %v6745 = vsel %vm6055, %v6743, %v6744
    %v6746 = vrot.slane %v6709, 4
    %v6747 = vrot.slane %v6710, 4
    %v6748 = vsel %vm6055, %v6746, %v6747
    %v6749 = vrot.slane %v6711, 4
    %v6750 = vrot.slane %v6712, 4
    %v6751 = vsel %vm6055, %v6749, %v6750
    %v6752 = vrot.slane %v6713, 4
    %v6753 = vrot.slane %v6714, 4
    %v6754 = vsel %vm6055, %v6752, %v6753
    %v6763 = vadd.f32 %v6651, %v6733
    %v6764 = vadd.f32 %v6652, %v6736
    %v6765 = vadd.f32 %v6653, %v6739
    %v6766 = vadd.f32 %v6654, %v6742
    %v6767 = vadd.f32 %v6655, %v6745
    %v6768 = vadd.f32 %v6656, %v6748
    %v6769 = vadd.f32 %v6657, %v6751
    %v6770 = vadd.f32 %v6658, %v6754
    %v6771 = vmul.f32 %v2298, 0.26601171
    %v6772 = vmul.f32 %v2304, 0.26601171
    %v6773 = vmul.f32 %v2310, 0.26601171
    %v6774 = vmul.f32 %v2316, 0.26601171
    %v6775 = vmul.f32 %v2322, 0.26601171
    %v6776 = vmul.f32 %v2328, 0.26601171
    %v6777 = vmul.f32 %v2334, 0.26601171
    %v6778 = vmul.f32 %v2340, 0.26601171
    %v6779 = vmul.f32 %v2346, 0.26601171
    %v6780 = vmul.f32 %v2352, 0.26601171
    %v6781 = vmul.f32 %v2358, 0.26601171
    %v6782 = vmul.f32 %v2364, 0.26601171
    %v6783 = vmul.f32 %v2370, 0.26601171
    %v6784 = vmul.f32 %v2376, 0.26601171
    %v6785 = vmul.f32 %v2382, 0.26601171
    %v6786 = vmul.f32 %v2388, 0.26601171
    %v6803 = vrot.slane %v6771, 5
    %v6804 = vrot.slane %v6772, 5
    %v6805 = vsel %vm6330, %v6803, %v6804
    %v6806 = vrot.slane %v6773, 5
    %v6807 = vrot.slane %v6774, 5
    %v6808 = vsel %vm6330, %v6806, %v6807
    %v6809 = vrot.slane %v6775, 5
    %v6810 = vrot.slane %v6776, 5
    %v6811 = vsel %vm6330, %v6809, %v6810
    %v6812 = vrot.slane %v6777, 5
    %v6813 = vrot.slane %v6778, 5
    %v6814 = vsel %vm6330, %v6812, %v6813
    %v6815 = vrot.slane %v6779, 5
    %v6816 = vrot.slane %v6780, 5
    %v6817 = vsel %vm6330, %v6815, %v6816
    %v6818 = vrot.slane %v6781, 5
    %v6819 = vrot.slane %v6782, 5
    %v6820 = vsel %vm6330, %v6818, %v6819
    %v6821 = vrot.slane %v6783, 5
    %v6822 = vrot.slane %v6784, 5
    %v6823 = vsel %vm6330, %v6821, %v6822
    %v6824 = vrot.slane %v6785, 5
    %v6825 = vrot.slane %v6786, 5
    %v6826 = vsel %vm6330, %v6824, %v6825
    %v6835 = vadd.f32 %v6763, %v6805
    %v6836 = vadd.f32 %v6764, %v6808
    %v6837 = vadd.f32 %v6765, %v6811
    %v6838 = vadd.f32 %v6766, %v6814
    %v6839 = vadd.f32 %v6767, %v6817
    %v6840 = vadd.f32 %v6768, %v6820
    %v6841 = vadd.f32 %v6769, %v6823
    %v6842 = vadd.f32 %v6770, %v6826
    %v6843 = vmul.f32 %v6363, %v6363
    %v6844 = vmul.f32 %v6364, %v6364
    %v6845 = vmul.f32 %v6365, %v6365
    %v6846 = vmul.f32 %v6366, %v6366
    %v6847 = vmul.f32 %v6367, %v6367
    %v6848 = vmul.f32 %v6368, %v6368
    %v6849 = vmul.f32 %v6369, %v6369
    %v6850 = vmul.f32 %v6370, %v6370
    %v6851 = vmul.f32 %v6835, %v6835
    %v6852 = vmul.f32 %v6836, %v6836
    %v6853 = vmul.f32 %v6837, %v6837
    %v6854 = vmul.f32 %v6838, %v6838
    %v6855 = vmul.f32 %v6839, %v6839
    %v6856 = vmul.f32 %v6840, %v6840
    %v6857 = vmul.f32 %v6841, %v6841
    %v6858 = vmul.f32 %v6842, %v6842
    %v6859 = vmul.f32 %v6363, %v6835
    %v6860 = vmul.f32 %v6364, %v6836
    %v6861 = vmul.f32 %v6365, %v6837
    %v6862 = vmul.f32 %v6366, %v6838
    %v6863 = vmul.f32 %v6367, %v6839
    %v6864 = vmul.f32 %v6368, %v6840
    %v6865 = vmul.f32 %v6369, %v6841
    %v6866 = vmul.f32 %v6370, %v6842
    %v6875 = vrot.slane %v3472, 2
    %v6876 = vrot.slane %v3484, 2
    %v6877 = vrot.slane %v3496, 2
    %v6878 = vrot.slane %v3508, 2
    %v6879 = vrot.slane %v3520, 2
    %v6880 = vrot.slane %v3532, 2
    %v6881 = vrot.slane %v3544, 2
    %v6882 = vrot.slane %v3556, 2
    %v6891 = vadd.f32 %v3466, %v6875
    %v6892 = vadd.f32 %v3478, %v6876
    %v6893 = vadd.f32 %v3490, %v6877
    %v6894 = vadd.f32 %v3502, %v6878
    %v6895 = vadd.f32 %v3514, %v6879
    %v6896 = vadd.f32 %v3526, %v6880
    %v6897 = vadd.f32 %v3538, %v6881
    %v6898 = vadd.f32 %v3550, %v6882
    %v6899 = vmul.f32 %v6891, 0.0010283801
    %v6900 = vmul.f32 %v6892, 0.0010283801
    %v6901 = vmul.f32 %v6893, 0.0010283801
    %v6902 = vmul.f32 %v6894, 0.0010283801
    %v6903 = vmul.f32 %v6895, 0.0010283801
    %v6904 = vmul.f32 %v6896, 0.0010283801
    %v6905 = vmul.f32 %v6897, 0.0010283801
    %v6906 = vmul.f32 %v6898, 0.0010283801
    %v6907 = vadd.f32 %v3466, %v3472
    %v6908 = vadd.f32 %v3478, %v3484
    %v6909 = vadd.f32 %v3490, %v3496
    %v6910 = vadd.f32 %v3502, %v3508
    %v6911 = vadd.f32 %v3514, %v3520
    %v6912 = vadd.f32 %v3526, %v3532
    %v6913 = vadd.f32 %v3538, %v3544
    %v6914 = vadd.f32 %v3550, %v3556
    %v6915 = vmul.f32 %v6907, 0.007598758
    %v6916 = vmul.f32 %v6908, 0.007598758
    %v6917 = vmul.f32 %v6909, 0.007598758
    %v6918 = vmul.f32 %v6910, 0.007598758
    %v6919 = vmul.f32 %v6911, 0.007598758
    %v6920 = vmul.f32 %v6912, 0.007598758
    %v6921 = vmul.f32 %v6913, 0.007598758
    %v6922 = vmul.f32 %v6914, 0.007598758
    %v6931 = vrot.slane %v6915, 1
    %v6932 = vrot.slane %v6916, 1
    %v6933 = vrot.slane %v6917, 1
    %v6934 = vrot.slane %v6918, 1
    %v6935 = vrot.slane %v6919, 1
    %v6936 = vrot.slane %v6920, 1
    %v6937 = vrot.slane %v6921, 1
    %v6938 = vrot.slane %v6922, 1
    %v6947 = vadd.f32 %v6899, %v6931
    %v6948 = vadd.f32 %v6900, %v6932
    %v6949 = vadd.f32 %v6901, %v6933
    %v6950 = vadd.f32 %v6902, %v6934
    %v6951 = vadd.f32 %v6903, %v6935
    %v6952 = vadd.f32 %v6904, %v6936
    %v6953 = vadd.f32 %v6905, %v6937
    %v6954 = vadd.f32 %v6906, %v6938
    %v6955 = vrot.slane %v3472, 6
    %v6956 = vrot.slane %v3484, 6
    %v6957 = vrot.slane %v3496, 6
    %v6958 = vrot.slane %v3508, 6
    %v6959 = vrot.slane %v3520, 6
    %v6960 = vrot.slane %v3532, 6
    %v6961 = vrot.slane %v3544, 6
    %v6962 = vrot.slane %v3556, 6
    %v6971 = vadd.f32 %v3466, %v6955
    %v6972 = vadd.f32 %v3478, %v6956
    %v6973 = vadd.f32 %v3490, %v6957
    %v6974 = vadd.f32 %v3502, %v6958
    %v6975 = vadd.f32 %v3514, %v6959
    %v6976 = vadd.f32 %v3526, %v6960
    %v6977 = vadd.f32 %v3538, %v6961
    %v6978 = vadd.f32 %v3550, %v6962
    %v6979 = vmul.f32 %v6971, 0.036000773
    %v6980 = vmul.f32 %v6972, 0.036000773
    %v6981 = vmul.f32 %v6973, 0.036000773
    %v6982 = vmul.f32 %v6974, 0.036000773
    %v6983 = vmul.f32 %v6975, 0.036000773
    %v6984 = vmul.f32 %v6976, 0.036000773
    %v6985 = vmul.f32 %v6977, 0.036000773
    %v6986 = vmul.f32 %v6978, 0.036000773
    %v6995 = vrot.slane %v6979, 2
    %v6996 = vrot.slane %v6980, 2
    %v6997 = vrot.slane %v6981, 2
    %v6998 = vrot.slane %v6982, 2
    %v6999 = vrot.slane %v6983, 2
    %v7000 = vrot.slane %v6984, 2
    %v7001 = vrot.slane %v6985, 2
    %v7002 = vrot.slane %v6986, 2
    %v7011 = vadd.f32 %v6947, %v6995
    %v7012 = vadd.f32 %v6948, %v6996
    %v7013 = vadd.f32 %v6949, %v6997
    %v7014 = vadd.f32 %v6950, %v6998
    %v7015 = vadd.f32 %v6951, %v6999
    %v7016 = vadd.f32 %v6952, %v7000
    %v7017 = vadd.f32 %v6953, %v7001
    %v7018 = vadd.f32 %v6954, %v7002
    %v7027 = vrot.slane %v3466, 4
    %v7028 = vrot.slane %v3472, 4
    %v7029 = vsel %vm6055, %v7027, %v7028
    %v7030 = vrot.slane %v3478, 4
    %v7031 = vrot.slane %v3484, 4
    %v7032 = vsel %vm6055, %v7030, %v7031
    %v7033 = vrot.slane %v3490, 4
    %v7034 = vrot.slane %v3496, 4
    %v7035 = vsel %vm6055, %v7033, %v7034
    %v7036 = vrot.slane %v3502, 4
    %v7037 = vrot.slane %v3508, 4
    %v7038 = vsel %vm6055, %v7036, %v7037
    %v7039 = vrot.slane %v3514, 4
    %v7040 = vrot.slane %v3520, 4
    %v7041 = vsel %vm6055, %v7039, %v7040
    %v7042 = vrot.slane %v3526, 4
    %v7043 = vrot.slane %v3532, 4
    %v7044 = vsel %vm6055, %v7042, %v7043
    %v7045 = vrot.slane %v3538, 4
    %v7046 = vrot.slane %v3544, 4
    %v7047 = vsel %vm6055, %v7045, %v7046
    %v7048 = vrot.slane %v3550, 4
    %v7049 = vrot.slane %v3556, 4
    %v7050 = vsel %vm6055, %v7048, %v7049
    %v7067 = vadd.f32 %v3466, %v7029
    %v7068 = vadd.f32 %v3472, %v7028
    %v7069 = vadd.f32 %v3478, %v7032
    %v7070 = vadd.f32 %v3484, %v7031
    %v7071 = vadd.f32 %v3490, %v7035
    %v7072 = vadd.f32 %v3496, %v7034
    %v7073 = vadd.f32 %v3502, %v7038
    %v7074 = vadd.f32 %v3508, %v7037
    %v7075 = vadd.f32 %v3514, %v7041
    %v7076 = vadd.f32 %v3520, %v7040
    %v7077 = vadd.f32 %v3526, %v7044
    %v7078 = vadd.f32 %v3532, %v7043
    %v7079 = vadd.f32 %v3538, %v7047
    %v7080 = vadd.f32 %v3544, %v7046
    %v7081 = vadd.f32 %v3550, %v7050
    %v7082 = vadd.f32 %v3556, %v7049
    %v7083 = vmul.f32 %v7067, 0.10936069
    %v7084 = vmul.f32 %v7068, 0.10936069
    %v7085 = vmul.f32 %v7069, 0.10936069
    %v7086 = vmul.f32 %v7070, 0.10936069
    %v7087 = vmul.f32 %v7071, 0.10936069
    %v7088 = vmul.f32 %v7072, 0.10936069
    %v7089 = vmul.f32 %v7073, 0.10936069
    %v7090 = vmul.f32 %v7074, 0.10936069
    %v7091 = vmul.f32 %v7075, 0.10936069
    %v7092 = vmul.f32 %v7076, 0.10936069
    %v7093 = vmul.f32 %v7077, 0.10936069
    %v7094 = vmul.f32 %v7078, 0.10936069
    %v7095 = vmul.f32 %v7079, 0.10936069
    %v7096 = vmul.f32 %v7080, 0.10936069
    %v7097 = vmul.f32 %v7081, 0.10936069
    %v7098 = vmul.f32 %v7082, 0.10936069
    %v7115 = vrot.slane %v7083, 3
    %v7116 = vrot.slane %v7084, 3
    %v7117 = vsel %vm6144, %v7115, %v7116
    %v7118 = vrot.slane %v7085, 3
    %v7119 = vrot.slane %v7086, 3
    %v7120 = vsel %vm6144, %v7118, %v7119
    %v7121 = vrot.slane %v7087, 3
    %v7122 = vrot.slane %v7088, 3
    %v7123 = vsel %vm6144, %v7121, %v7122
    %v7124 = vrot.slane %v7089, 3
    %v7125 = vrot.slane %v7090, 3
    %v7126 = vsel %vm6144, %v7124, %v7125
    %v7127 = vrot.slane %v7091, 3
    %v7128 = vrot.slane %v7092, 3
    %v7129 = vsel %vm6144, %v7127, %v7128
    %v7130 = vrot.slane %v7093, 3
    %v7131 = vrot.slane %v7094, 3
    %v7132 = vsel %vm6144, %v7130, %v7131
    %v7133 = vrot.slane %v7095, 3
    %v7134 = vrot.slane %v7096, 3
    %v7135 = vsel %vm6144, %v7133, %v7134
    %v7136 = vrot.slane %v7097, 3
    %v7137 = vrot.slane %v7098, 3
    %v7138 = vsel %vm6144, %v7136, %v7137
    %v7147 = vadd.f32 %v7011, %v7117
    %v7148 = vadd.f32 %v7012, %v7120
    %v7149 = vadd.f32 %v7013, %v7123
    %v7150 = vadd.f32 %v7014, %v7126
    %v7151 = vadd.f32 %v7015, %v7129
    %v7152 = vadd.f32 %v7016, %v7132
    %v7153 = vadd.f32 %v7017, %v7135
    %v7154 = vadd.f32 %v7018, %v7138
    %v7155 = vrot.slane %v3466, 2
    %v7156 = vsel %vm6185, %v7155, %v6875
    %v7157 = vrot.slane %v3478, 2
    %v7158 = vsel %vm6185, %v7157, %v6876
    %v7159 = vrot.slane %v3490, 2
    %v7160 = vsel %vm6185, %v7159, %v6877
    %v7161 = vrot.slane %v3502, 2
    %v7162 = vsel %vm6185, %v7161, %v6878
    %v7163 = vrot.slane %v3514, 2
    %v7164 = vsel %vm6185, %v7163, %v6879
    %v7165 = vrot.slane %v3526, 2
    %v7166 = vsel %vm6185, %v7165, %v6880
    %v7167 = vrot.slane %v3538, 2
    %v7168 = vsel %vm6185, %v7167, %v6881
    %v7169 = vrot.slane %v3550, 2
    %v7170 = vsel %vm6185, %v7169, %v6882
    %v7179 = vadd.f32 %v3466, %v7156
    %v7180 = vadd.f32 %v3472, %v6875
    %v7181 = vadd.f32 %v3478, %v7158
    %v7182 = vadd.f32 %v3484, %v6876
    %v7183 = vadd.f32 %v3490, %v7160
    %v7184 = vadd.f32 %v3496, %v6877
    %v7185 = vadd.f32 %v3502, %v7162
    %v7186 = vadd.f32 %v3508, %v6878
    %v7187 = vadd.f32 %v3514, %v7164
    %v7188 = vadd.f32 %v3520, %v6879
    %v7189 = vadd.f32 %v3526, %v7166
    %v7190 = vadd.f32 %v3532, %v6880
    %v7191 = vadd.f32 %v3538, %v7168
    %v7192 = vadd.f32 %v3544, %v6881
    %v7193 = vadd.f32 %v3550, %v7170
    %v7194 = vadd.f32 %v3556, %v6882
    %v7195 = vmul.f32 %v7179, 0.21300554
    %v7196 = vmul.f32 %v7180, 0.21300554
    %v7197 = vmul.f32 %v7181, 0.21300554
    %v7198 = vmul.f32 %v7182, 0.21300554
    %v7199 = vmul.f32 %v7183, 0.21300554
    %v7200 = vmul.f32 %v7184, 0.21300554
    %v7201 = vmul.f32 %v7185, 0.21300554
    %v7202 = vmul.f32 %v7186, 0.21300554
    %v7203 = vmul.f32 %v7187, 0.21300554
    %v7204 = vmul.f32 %v7188, 0.21300554
    %v7205 = vmul.f32 %v7189, 0.21300554
    %v7206 = vmul.f32 %v7190, 0.21300554
    %v7207 = vmul.f32 %v7191, 0.21300554
    %v7208 = vmul.f32 %v7192, 0.21300554
    %v7209 = vmul.f32 %v7193, 0.21300554
    %v7210 = vmul.f32 %v7194, 0.21300554
    %v7227 = vrot.slane %v7195, 4
    %v7228 = vrot.slane %v7196, 4
    %v7229 = vsel %vm6055, %v7227, %v7228
    %v7230 = vrot.slane %v7197, 4
    %v7231 = vrot.slane %v7198, 4
    %v7232 = vsel %vm6055, %v7230, %v7231
    %v7233 = vrot.slane %v7199, 4
    %v7234 = vrot.slane %v7200, 4
    %v7235 = vsel %vm6055, %v7233, %v7234
    %v7236 = vrot.slane %v7201, 4
    %v7237 = vrot.slane %v7202, 4
    %v7238 = vsel %vm6055, %v7236, %v7237
    %v7239 = vrot.slane %v7203, 4
    %v7240 = vrot.slane %v7204, 4
    %v7241 = vsel %vm6055, %v7239, %v7240
    %v7242 = vrot.slane %v7205, 4
    %v7243 = vrot.slane %v7206, 4
    %v7244 = vsel %vm6055, %v7242, %v7243
    %v7245 = vrot.slane %v7207, 4
    %v7246 = vrot.slane %v7208, 4
    %v7247 = vsel %vm6055, %v7245, %v7246
    %v7248 = vrot.slane %v7209, 4
    %v7249 = vrot.slane %v7210, 4
    %v7250 = vsel %vm6055, %v7248, %v7249
    %v7259 = vadd.f32 %v7147, %v7229
    %v7260 = vadd.f32 %v7148, %v7232
    %v7261 = vadd.f32 %v7149, %v7235
    %v7262 = vadd.f32 %v7150, %v7238
    %v7263 = vadd.f32 %v7151, %v7241
    %v7264 = vadd.f32 %v7152, %v7244
    %v7265 = vadd.f32 %v7153, %v7247
    %v7266 = vadd.f32 %v7154, %v7250
    %v7267 = vmul.f32 %v3466, 0.26601171
    %v7268 = vmul.f32 %v3472, 0.26601171
    %v7269 = vmul.f32 %v3478, 0.26601171
    %v7270 = vmul.f32 %v3484, 0.26601171
    %v7271 = vmul.f32 %v3490, 0.26601171
    %v7272 = vmul.f32 %v3496, 0.26601171
    %v7273 = vmul.f32 %v3502, 0.26601171
    %v7274 = vmul.f32 %v3508, 0.26601171
    %v7275 = vmul.f32 %v3514, 0.26601171
    %v7276 = vmul.f32 %v3520, 0.26601171
    %v7277 = vmul.f32 %v3526, 0.26601171
    %v7278 = vmul.f32 %v3532, 0.26601171
    %v7279 = vmul.f32 %v3538, 0.26601171
    %v7280 = vmul.f32 %v3544, 0.26601171
    %v7281 = vmul.f32 %v3550, 0.26601171
    %v7282 = vmul.f32 %v3556, 0.26601171
    %v7299 = vrot.slane %v7267, 5
    %v7300 = vrot.slane %v7268, 5
    %v7301 = vsel %vm6330, %v7299, %v7300
    %v7302 = vrot.slane %v7269, 5
    %v7303 = vrot.slane %v7270, 5
    %v7304 = vsel %vm6330, %v7302, %v7303
    %v7305 = vrot.slane %v7271, 5
    %v7306 = vrot.slane %v7272, 5
    %v7307 = vsel %vm6330, %v7305, %v7306
    %v7308 = vrot.slane %v7273, 5
    %v7309 = vrot.slane %v7274, 5
    %v7310 = vsel %vm6330, %v7308, %v7309
    %v7311 = vrot.slane %v7275, 5
    %v7312 = vrot.slane %v7276, 5
    %v7313 = vsel %vm6330, %v7311, %v7312
    %v7314 = vrot.slane %v7277, 5
    %v7315 = vrot.slane %v7278, 5
    %v7316 = vsel %vm6330, %v7314, %v7315
    %v7317 = vrot.slane %v7279, 5
    %v7318 = vrot.slane %v7280, 5
    %v7319 = vsel %vm6330, %v7317, %v7318
    %v7320 = vrot.slane %v7281, 5
    %v7321 = vrot.slane %v7282, 5
    %v7322 = vsel %vm6330, %v7320, %v7321
    %v7331 = vadd.f32 %v7259, %v7301
    %v7332 = vadd.f32 %v7260, %v7304
    %v7333 = vadd.f32 %v7261, %v7307
    %v7334 = vadd.f32 %v7262, %v7310
    %v7335 = vadd.f32 %v7263, %v7313
    %v7336 = vadd.f32 %v7264, %v7316
    %v7337 = vadd.f32 %v7265, %v7319
    %v7338 = vadd.f32 %v7266, %v7322
    %v7339 = vsub.f32 %v7331, %v6843
    %v7340 = vsub.f32 %v7332, %v6844
    %v7341 = vsub.f32 %v7333, %v6845
    %v7342 = vsub.f32 %v7334, %v6846
    %v7343 = vsub.f32 %v7335, %v6847
    %v7344 = vsub.f32 %v7336, %v6848
    %v7345 = vsub.f32 %v7337, %v6849
    %v7346 = vsub.f32 %v7338, %v6850
    %v7355 = vrot.slane %v4640, 2
    %v7356 = vrot.slane %v4652, 2
    %v7357 = vrot.slane %v4664, 2
    %v7358 = vrot.slane %v4676, 2
    %v7359 = vrot.slane %v4688, 2
    %v7360 = vrot.slane %v4700, 2
    %v7361 = vrot.slane %v4712, 2
    %v7362 = vrot.slane %v4724, 2
    %v7371 = vadd.f32 %v4634, %v7355
    %v7372 = vadd.f32 %v4646, %v7356
    %v7373 = vadd.f32 %v4658, %v7357
    %v7374 = vadd.f32 %v4670, %v7358
    %v7375 = vadd.f32 %v4682, %v7359
    %v7376 = vadd.f32 %v4694, %v7360
    %v7377 = vadd.f32 %v4706, %v7361
    %v7378 = vadd.f32 %v4718, %v7362
    %v7379 = vmul.f32 %v7371, 0.0010283801
    %v7380 = vmul.f32 %v7372, 0.0010283801
    %v7381 = vmul.f32 %v7373, 0.0010283801
    %v7382 = vmul.f32 %v7374, 0.0010283801
    %v7383 = vmul.f32 %v7375, 0.0010283801
    %v7384 = vmul.f32 %v7376, 0.0010283801
    %v7385 = vmul.f32 %v7377, 0.0010283801
    %v7386 = vmul.f32 %v7378, 0.0010283801
    %v7387 = vadd.f32 %v4634, %v4640
    %v7388 = vadd.f32 %v4646, %v4652
    %v7389 = vadd.f32 %v4658, %v4664
    %v7390 = vadd.f32 %v4670, %v4676
    %v7391 = vadd.f32 %v4682, %v4688
    %v7392 = vadd.f32 %v4694, %v4700
    %v7393 = vadd.f32 %v4706, %v4712
    %v7394 = vadd.f32 %v4718, %v4724
    %v7395 = vmul.f32 %v7387, 0.007598758
    %v7396 = vmul.f32 %v7388, 0.007598758
    %v7397 = vmul.f32 %v7389, 0.007598758
    %v7398 = vmul.f32 %v7390, 0.007598758
    %v7399 = vmul.f32 %v7391, 0.007598758
    %v7400 = vmul.f32 %v7392, 0.007598758
    %v7401 = vmul.f32 %v7393, 0.007598758
    %v7402 = vmul.f32 %v7394, 0.007598758
    %v7411 = vrot.slane %v7395, 1
    %v7412 = vrot.slane %v7396, 1
    %v7413 = vrot.slane %v7397, 1
    %v7414 = vrot.slane %v7398, 1
    %v7415 = vrot.slane %v7399, 1
    %v7416 = vrot.slane %v7400, 1
    %v7417 = vrot.slane %v7401, 1
    %v7418 = vrot.slane %v7402, 1
    %v7427 = vadd.f32 %v7379, %v7411
    %v7428 = vadd.f32 %v7380, %v7412
    %v7429 = vadd.f32 %v7381, %v7413
    %v7430 = vadd.f32 %v7382, %v7414
    %v7431 = vadd.f32 %v7383, %v7415
    %v7432 = vadd.f32 %v7384, %v7416
    %v7433 = vadd.f32 %v7385, %v7417
    %v7434 = vadd.f32 %v7386, %v7418
    %v7435 = vrot.slane %v4640, 6
    %v7436 = vrot.slane %v4652, 6
    %v7437 = vrot.slane %v4664, 6
    %v7438 = vrot.slane %v4676, 6
    %v7439 = vrot.slane %v4688, 6
    %v7440 = vrot.slane %v4700, 6
    %v7441 = vrot.slane %v4712, 6
    %v7442 = vrot.slane %v4724, 6
    %v7451 = vadd.f32 %v4634, %v7435
    %v7452 = vadd.f32 %v4646, %v7436
    %v7453 = vadd.f32 %v4658, %v7437
    %v7454 = vadd.f32 %v4670, %v7438
    %v7455 = vadd.f32 %v4682, %v7439
    %v7456 = vadd.f32 %v4694, %v7440
    %v7457 = vadd.f32 %v4706, %v7441
    %v7458 = vadd.f32 %v4718, %v7442
    %v7459 = vmul.f32 %v7451, 0.036000773
    %v7460 = vmul.f32 %v7452, 0.036000773
    %v7461 = vmul.f32 %v7453, 0.036000773
    %v7462 = vmul.f32 %v7454, 0.036000773
    %v7463 = vmul.f32 %v7455, 0.036000773
    %v7464 = vmul.f32 %v7456, 0.036000773
    %v7465 = vmul.f32 %v7457, 0.036000773
    %v7466 = vmul.f32 %v7458, 0.036000773
    %v7475 = vrot.slane %v7459, 2
    %v7476 = vrot.slane %v7460, 2
    %v7477 = vrot.slane %v7461, 2
    %v7478 = vrot.slane %v7462, 2
    %v7479 = vrot.slane %v7463, 2
    %v7480 = vrot.slane %v7464, 2
    %v7481 = vrot.slane %v7465, 2
    %v7482 = vrot.slane %v7466, 2
    %v7491 = vadd.f32 %v7427, %v7475
    %v7492 = vadd.f32 %v7428, %v7476
    %v7493 = vadd.f32 %v7429, %v7477
    %v7494 = vadd.f32 %v7430, %v7478
    %v7495 = vadd.f32 %v7431, %v7479
    %v7496 = vadd.f32 %v7432, %v7480
    %v7497 = vadd.f32 %v7433, %v7481
    %v7498 = vadd.f32 %v7434, %v7482
    %v7507 = vrot.slane %v4634, 4
    %v7508 = vrot.slane %v4640, 4
    %v7509 = vsel %vm6055, %v7507, %v7508
    %v7510 = vrot.slane %v4646, 4
    %v7511 = vrot.slane %v4652, 4
    %v7512 = vsel %vm6055, %v7510, %v7511
    %v7513 = vrot.slane %v4658, 4
    %v7514 = vrot.slane %v4664, 4
    %v7515 = vsel %vm6055, %v7513, %v7514
    %v7516 = vrot.slane %v4670, 4
    %v7517 = vrot.slane %v4676, 4
    %v7518 = vsel %vm6055, %v7516, %v7517
    %v7519 = vrot.slane %v4682, 4
    %v7520 = vrot.slane %v4688, 4
    %v7521 = vsel %vm6055, %v7519, %v7520
    %v7522 = vrot.slane %v4694, 4
    %v7523 = vrot.slane %v4700, 4
    %v7524 = vsel %vm6055, %v7522, %v7523
    %v7525 = vrot.slane %v4706, 4
    %v7526 = vrot.slane %v4712, 4
    %v7527 = vsel %vm6055, %v7525, %v7526
    %v7528 = vrot.slane %v4718, 4
    %v7529 = vrot.slane %v4724, 4
    %v7530 = vsel %vm6055, %v7528, %v7529
    %v7547 = vadd.f32 %v4634, %v7509
    %v7548 = vadd.f32 %v4640, %v7508
    %v7549 = vadd.f32 %v4646, %v7512
    %v7550 = vadd.f32 %v4652, %v7511
    %v7551 = vadd.f32 %v4658, %v7515
    %v7552 = vadd.f32 %v4664, %v7514
    %v7553 = vadd.f32 %v4670, %v7518
    %v7554 = vadd.f32 %v4676, %v7517
    %v7555 = vadd.f32 %v4682, %v7521
    %v7556 = vadd.f32 %v4688, %v7520
    %v7557 = vadd.f32 %v4694, %v7524
    %v7558 = vadd.f32 %v4700, %v7523
    %v7559 = vadd.f32 %v4706, %v7527
    %v7560 = vadd.f32 %v4712, %v7526
    %v7561 = vadd.f32 %v4718, %v7530
    %v7562 = vadd.f32 %v4724, %v7529
    %v7563 = vmul.f32 %v7547, 0.10936069
    %v7564 = vmul.f32 %v7548, 0.10936069
    %v7565 = vmul.f32 %v7549, 0.10936069
    %v7566 = vmul.f32 %v7550, 0.10936069
    %v7567 = vmul.f32 %v7551, 0.10936069
    %v7568 = vmul.f32 %v7552, 0.10936069
    %v7569 = vmul.f32 %v7553, 0.10936069
    %v7570 = vmul.f32 %v7554, 0.10936069
    %v7571 = vmul.f32 %v7555, 0.10936069
    %v7572 = vmul.f32 %v7556, 0.10936069
    %v7573 = vmul.f32 %v7557, 0.10936069
    %v7574 = vmul.f32 %v7558, 0.10936069
    %v7575 = vmul.f32 %v7559, 0.10936069
    %v7576 = vmul.f32 %v7560, 0.10936069
    %v7577 = vmul.f32 %v7561, 0.10936069
    %v7578 = vmul.f32 %v7562, 0.10936069
    %v7595 = vrot.slane %v7563, 3
    %v7596 = vrot.slane %v7564, 3
    %v7597 = vsel %vm6144, %v7595, %v7596
    %v7598 = vrot.slane %v7565, 3
    %v7599 = vrot.slane %v7566, 3
    %v7600 = vsel %vm6144, %v7598, %v7599
    %v7601 = vrot.slane %v7567, 3
    %v7602 = vrot.slane %v7568, 3
    %v7603 = vsel %vm6144, %v7601, %v7602
    %v7604 = vrot.slane %v7569, 3
    %v7605 = vrot.slane %v7570, 3
    %v7606 = vsel %vm6144, %v7604, %v7605
    %v7607 = vrot.slane %v7571, 3
    %v7608 = vrot.slane %v7572, 3
    %v7609 = vsel %vm6144, %v7607, %v7608
    %v7610 = vrot.slane %v7573, 3
    %v7611 = vrot.slane %v7574, 3
    %v7612 = vsel %vm6144, %v7610, %v7611
    %v7613 = vrot.slane %v7575, 3
    %v7614 = vrot.slane %v7576, 3
    %v7615 = vsel %vm6144, %v7613, %v7614
    %v7616 = vrot.slane %v7577, 3
    %v7617 = vrot.slane %v7578, 3
    %v7618 = vsel %vm6144, %v7616, %v7617
    %v7627 = vadd.f32 %v7491, %v7597
    %v7628 = vadd.f32 %v7492, %v7600
    %v7629 = vadd.f32 %v7493, %v7603
    %v7630 = vadd.f32 %v7494, %v7606
    %v7631 = vadd.f32 %v7495, %v7609
    %v7632 = vadd.f32 %v7496, %v7612
    %v7633 = vadd.f32 %v7497, %v7615
    %v7634 = vadd.f32 %v7498, %v7618
    %v7635 = vrot.slane %v4634, 2
    %v7636 = vsel %vm6185, %v7635, %v7355
    %v7637 = vrot.slane %v4646, 2
    %v7638 = vsel %vm6185, %v7637, %v7356
    %v7639 = vrot.slane %v4658, 2
    %v7640 = vsel %vm6185, %v7639, %v7357
    %v7641 = vrot.slane %v4670, 2
    %v7642 = vsel %vm6185, %v7641, %v7358
    %v7643 = vrot.slane %v4682, 2
    %v7644 = vsel %vm6185, %v7643, %v7359
    %v7645 = vrot.slane %v4694, 2
    %v7646 = vsel %vm6185, %v7645, %v7360
    %v7647 = vrot.slane %v4706, 2
    %v7648 = vsel %vm6185, %v7647, %v7361
    %v7649 = vrot.slane %v4718, 2
    %v7650 = vsel %vm6185, %v7649, %v7362
    %v7659 = vadd.f32 %v4634, %v7636
    %v7660 = vadd.f32 %v4640, %v7355
    %v7661 = vadd.f32 %v4646, %v7638
    %v7662 = vadd.f32 %v4652, %v7356
    %v7663 = vadd.f32 %v4658, %v7640
    %v7664 = vadd.f32 %v4664, %v7357
    %v7665 = vadd.f32 %v4670, %v7642
    %v7666 = vadd.f32 %v4676, %v7358
    %v7667 = vadd.f32 %v4682, %v7644
    %v7668 = vadd.f32 %v4688, %v7359
    %v7669 = vadd.f32 %v4694, %v7646
    %v7670 = vadd.f32 %v4700, %v7360
    %v7671 = vadd.f32 %v4706, %v7648
    %v7672 = vadd.f32 %v4712, %v7361
    %v7673 = vadd.f32 %v4718, %v7650
    %v7674 = vadd.f32 %v4724, %v7362
    %v7675 = vmul.f32 %v7659, 0.21300554
    %v7676 = vmul.f32 %v7660, 0.21300554
    %v7677 = vmul.f32 %v7661, 0.21300554
    %v7678 = vmul.f32 %v7662, 0.21300554
    %v7679 = vmul.f32 %v7663, 0.21300554
    %v7680 = vmul.f32 %v7664, 0.21300554
    %v7681 = vmul.f32 %v7665, 0.21300554
    %v7682 = vmul.f32 %v7666, 0.21300554
    %v7683 = vmul.f32 %v7667, 0.21300554
    %v7684 = vmul.f32 %v7668, 0.21300554
    %v7685 = vmul.f32 %v7669, 0.21300554
    %v7686 = vmul.f32 %v7670, 0.21300554
    %v7687 = vmul.f32 %v7671, 0.21300554
    %v7688 = vmul.f32 %v7672, 0.21300554
    %v7689 = vmul.f32 %v7673, 0.21300554
    %v7690 = vmul.f32 %v7674, 0.21300554
    %v7707 = vrot.slane %v7675, 4
    %v7708 = vrot.slane %v7676, 4
    %v7709 = vsel %vm6055, %v7707, %v7708
    %v7710 = vrot.slane %v7677, 4
    %v7711 = vrot.slane %v7678, 4
    %v7712 = vsel %vm6055, %v7710, %v7711
    %v7713 = vrot.slane %v7679, 4
    %v7714 = vrot.slane %v7680, 4
    %v7715 = vsel %vm6055, %v7713, %v7714
    %v7716 = vrot.slane %v7681, 4
    %v7717 = vrot.slane %v7682, 4
    %v7718 = vsel %vm6055, %v7716, %v7717
    %v7719 = vrot.slane %v7683, 4
    %v7720 = vrot.slane %v7684, 4
    %v7721 = vsel %vm6055, %v7719, %v7720
    %v7722 = vrot.slane %v7685, 4
    %v7723 = vrot.slane %v7686, 4
    %v7724 = vsel %vm6055, %v7722, %v7723
    %v7725 = vrot.slane %v7687, 4
    %v7726 = vrot.slane %v7688, 4
    %v7727 = vsel %vm6055, %v7725, %v7726
    %v7728 = vrot.slane %v7689, 4
    %v7729 = vrot.slane %v7690, 4
    %v7730 = vsel %vm6055, %v7728, %v7729
    %v7739 = vadd.f32 %v7627, %v7709
    %v7740 = vadd.f32 %v7628, %v7712
    %v7741 = vadd.f32 %v7629, %v7715
    %v7742 = vadd.f32 %v7630, %v7718
    %v7743 = vadd.f32 %v7631, %v7721
    %v7744 = vadd.f32 %v7632, %v7724
    %v7745 = vadd.f32 %v7633, %v7727
    %v7746 = vadd.f32 %v7634, %v7730
    %v7747 = vmul.f32 %v4634, 0.26601171
    %v7748 = vmul.f32 %v4640, 0.26601171
    %v7749 = vmul.f32 %v4646, 0.26601171
    %v7750 = vmul.f32 %v4652, 0.26601171
    %v7751 = vmul.f32 %v4658, 0.26601171
    %v7752 = vmul.f32 %v4664, 0.26601171
    %v7753 = vmul.f32 %v4670, 0.26601171
    %v7754 = vmul.f32 %v4676, 0.26601171
    %v7755 = vmul.f32 %v4682, 0.26601171
    %v7756 = vmul.f32 %v4688, 0.26601171
    %v7757 = vmul.f32 %v4694, 0.26601171
    %v7758 = vmul.f32 %v4700, 0.26601171
    %v7759 = vmul.f32 %v4706, 0.26601171
    %v7760 = vmul.f32 %v4712, 0.26601171
    %v7761 = vmul.f32 %v4718, 0.26601171
    %v7762 = vmul.f32 %v4724, 0.26601171
    %v7779 = vrot.slane %v7747, 5
    %v7780 = vrot.slane %v7748, 5
    %v7781 = vsel %vm6330, %v7779, %v7780
    %v7782 = vrot.slane %v7749, 5
    %v7783 = vrot.slane %v7750, 5
    %v7784 = vsel %vm6330, %v7782, %v7783
    %v7785 = vrot.slane %v7751, 5
    %v7786 = vrot.slane %v7752, 5
    %v7787 = vsel %vm6330, %v7785, %v7786
    %v7788 = vrot.slane %v7753, 5
    %v7789 = vrot.slane %v7754, 5
    %v7790 = vsel %vm6330, %v7788, %v7789
    %v7791 = vrot.slane %v7755, 5
    %v7792 = vrot.slane %v7756, 5
    %v7793 = vsel %vm6330, %v7791, %v7792
    %v7794 = vrot.slane %v7757, 5
    %v7795 = vrot.slane %v7758, 5
    %v7796 = vsel %vm6330, %v7794, %v7795
    %v7797 = vrot.slane %v7759, 5
    %v7798 = vrot.slane %v7760, 5
    %v7799 = vsel %vm6330, %v7797, %v7798
    %v7800 = vrot.slane %v7761, 5
    %v7801 = vrot.slane %v7762, 5
    %v7802 = vsel %vm6330, %v7800, %v7801
    %v7811 = vadd.f32 %v7739, %v7781
    %v7812 = vadd.f32 %v7740, %v7784
    %v7813 = vadd.f32 %v7741, %v7787
    %v7814 = vadd.f32 %v7742, %v7790
    %v7815 = vadd.f32 %v7743, %v7793
    %v7816 = vadd.f32 %v7744, %v7796
    %v7817 = vadd.f32 %v7745, %v7799
    %v7818 = vadd.f32 %v7746, %v7802
    %v7819 = vsub.f32 %v7811, %v6851
    %v7820 = vsub.f32 %v7812, %v6852
    %v7821 = vsub.f32 %v7813, %v6853
    %v7822 = vsub.f32 %v7814, %v6854
    %v7823 = vsub.f32 %v7815, %v6855
    %v7824 = vsub.f32 %v7816, %v6856
    %v7825 = vsub.f32 %v7817, %v6857
    %v7826 = vsub.f32 %v7818, %v6858
    %v7835 = vrot.slane %v5808, 2
    %v7836 = vrot.slane %v5820, 2
    %v7837 = vrot.slane %v5832, 2
    %v7838 = vrot.slane %v5844, 2
    %v7839 = vrot.slane %v5856, 2
    %v7840 = vrot.slane %v5868, 2
    %v7841 = vrot.slane %v5880, 2
    %v7842 = vrot.slane %v5892, 2
    %v7851 = vadd.f32 %v5802, %v7835
    %v7852 = vadd.f32 %v5814, %v7836
    %v7853 = vadd.f32 %v5826, %v7837
    %v7854 = vadd.f32 %v5838, %v7838
    %v7855 = vadd.f32 %v5850, %v7839
    %v7856 = vadd.f32 %v5862, %v7840
    %v7857 = vadd.f32 %v5874, %v7841
    %v7858 = vadd.f32 %v5886, %v7842
    %v7859 = vmul.f32 %v7851, 0.0010283801
    %v7860 = vmul.f32 %v7852, 0.0010283801
    %v7861 = vmul.f32 %v7853, 0.0010283801
    %v7862 = vmul.f32 %v7854, 0.0010283801
    %v7863 = vmul.f32 %v7855, 0.0010283801
    %v7864 = vmul.f32 %v7856, 0.0010283801
    %v7865 = vmul.f32 %v7857, 0.0010283801
    %v7866 = vmul.f32 %v7858, 0.0010283801
    %v7867 = vadd.f32 %v5802, %v5808
    %v7868 = vadd.f32 %v5814, %v5820
    %v7869 = vadd.f32 %v5826, %v5832
    %v7870 = vadd.f32 %v5838, %v5844
    %v7871 = vadd.f32 %v5850, %v5856
    %v7872 = vadd.f32 %v5862, %v5868
    %v7873 = vadd.f32 %v5874, %v5880
    %v7874 = vadd.f32 %v5886, %v5892
    %v7875 = vmul.f32 %v7867, 0.007598758
    %v7876 = vmul.f32 %v7868, 0.007598758
    %v7877 = vmul.f32 %v7869, 0.007598758
    %v7878 = vmul.f32 %v7870, 0.007598758
    %v7879 = vmul.f32 %v7871, 0.007598758
    %v7880 = vmul.f32 %v7872, 0.007598758
    %v7881 = vmul.f32 %v7873, 0.007598758
    %v7882 = vmul.f32 %v7874, 0.007598758
    %v7891 = vrot.slane %v7875, 1
    %v7892 = vrot.slane %v7876, 1
    %v7893 = vrot.slane %v7877, 1
    %v7894 = vrot.slane %v7878, 1
    %v7895 = vrot.slane %v7879, 1
    %v7896 = vrot.slane %v7880, 1
    %v7897 = vrot.slane %v7881, 1
    %v7898 = vrot.slane %v7882, 1
    %v7907 = vadd.f32 %v7859, %v7891
    %v7908 = vadd.f32 %v7860, %v7892
    %v7909 = vadd.f32 %v7861, %v7893
    %v7910 = vadd.f32 %v7862, %v7894
    %v7911 = vadd.f32 %v7863, %v7895
    %v7912 = vadd.f32 %v7864, %v7896
    %v7913 = vadd.f32 %v7865, %v7897
    %v7914 = vadd.f32 %v7866, %v7898
    %v7915 = vrot.slane %v5808, 6
    %v7916 = vrot.slane %v5820, 6
    %v7917 = vrot.slane %v5832, 6
    %v7918 = vrot.slane %v5844, 6
    %v7919 = vrot.slane %v5856, 6
    %v7920 = vrot.slane %v5868, 6
    %v7921 = vrot.slane %v5880, 6
    %v7922 = vrot.slane %v5892, 6
    %v7931 = vadd.f32 %v5802, %v7915
    %v7932 = vadd.f32 %v5814, %v7916
    %v7933 = vadd.f32 %v5826, %v7917
    %v7934 = vadd.f32 %v5838, %v7918
    %v7935 = vadd.f32 %v5850, %v7919
    %v7936 = vadd.f32 %v5862, %v7920
    %v7937 = vadd.f32 %v5874, %v7921
    %v7938 = vadd.f32 %v5886, %v7922
    %v7939 = vmul.f32 %v7931, 0.036000773
    %v7940 = vmul.f32 %v7932, 0.036000773
    %v7941 = vmul.f32 %v7933, 0.036000773
    %v7942 = vmul.f32 %v7934, 0.036000773
    %v7943 = vmul.f32 %v7935, 0.036000773
    %v7944 = vmul.f32 %v7936, 0.036000773
    %v7945 = vmul.f32 %v7937, 0.036000773
    %v7946 = vmul.f32 %v7938, 0.036000773
    %v7955 = vrot.slane %v7939, 2
    %v7956 = vrot.slane %v7940, 2
    %v7957 = vrot.slane %v7941, 2
    %v7958 = vrot.slane %v7942, 2
    %v7959 = vrot.slane %v7943, 2
    %v7960 = vrot.slane %v7944, 2
    %v7961 = vrot.slane %v7945, 2
    %v7962 = vrot.slane %v7946, 2
    %v7971 = vadd.f32 %v7907, %v7955
    %v7972 = vadd.f32 %v7908, %v7956
    %v7973 = vadd.f32 %v7909, %v7957
    %v7974 = vadd.f32 %v7910, %v7958
    %v7975 = vadd.f32 %v7911, %v7959
    %v7976 = vadd.f32 %v7912, %v7960
    %v7977 = vadd.f32 %v7913, %v7961
    %v7978 = vadd.f32 %v7914, %v7962
    %v7987 = vrot.slane %v5802, 4
    %v7988 = vrot.slane %v5808, 4
    %v7989 = vsel %vm6055, %v7987, %v7988
    %v7990 = vrot.slane %v5814, 4
    %v7991 = vrot.slane %v5820, 4
    %v7992 = vsel %vm6055, %v7990, %v7991
    %v7993 = vrot.slane %v5826, 4
    %v7994 = vrot.slane %v5832, 4
    %v7995 = vsel %vm6055, %v7993, %v7994
    %v7996 = vrot.slane %v5838, 4
    %v7997 = vrot.slane %v5844, 4
    %v7998 = vsel %vm6055, %v7996, %v7997
    %v7999 = vrot.slane %v5850, 4
    %v8000 = vrot.slane %v5856, 4
    %v8001 = vsel %vm6055, %v7999, %v8000
    %v8002 = vrot.slane %v5862, 4
    %v8003 = vrot.slane %v5868, 4
    %v8004 = vsel %vm6055, %v8002, %v8003
    %v8005 = vrot.slane %v5874, 4
    %v8006 = vrot.slane %v5880, 4
    %v8007 = vsel %vm6055, %v8005, %v8006
    %v8008 = vrot.slane %v5886, 4
    %v8009 = vrot.slane %v5892, 4
    %v8010 = vsel %vm6055, %v8008, %v8009
    %v8027 = vadd.f32 %v5802, %v7989
    %v8028 = vadd.f32 %v5808, %v7988
    %v8029 = vadd.f32 %v5814, %v7992
    %v8030 = vadd.f32 %v5820, %v7991
    %v8031 = vadd.f32 %v5826, %v7995
    %v8032 = vadd.f32 %v5832, %v7994
    %v8033 = vadd.f32 %v5838, %v7998
    %v8034 = vadd.f32 %v5844, %v7997
    %v8035 = vadd.f32 %v5850, %v8001
    %v8036 = vadd.f32 %v5856, %v8000
    %v8037 = vadd.f32 %v5862, %v8004
    %v8038 = vadd.f32 %v5868, %v8003
    %v8039 = vadd.f32 %v5874, %v8007
    %v8040 = vadd.f32 %v5880, %v8006
    %v8041 = vadd.f32 %v5886, %v8010
    %v8042 = vadd.f32 %v5892, %v8009
    %v8043 = vmul.f32 %v8027, 0.10936069
    %v8044 = vmul.f32 %v8028, 0.10936069
    %v8045 = vmul.f32 %v8029, 0.10936069
    %v8046 = vmul.f32 %v8030, 0.10936069
    %v8047 = vmul.f32 %v8031, 0.10936069
    %v8048 = vmul.f32 %v8032, 0.10936069
    %v8049 = vmul.f32 %v8033, 0.10936069
    %v8050 = vmul.f32 %v8034, 0.10936069
    %v8051 = vmul.f32 %v8035, 0.10936069
    %v8052 = vmul.f32 %v8036, 0.10936069
    %v8053 = vmul.f32 %v8037, 0.10936069
    %v8054 = vmul.f32 %v8038, 0.10936069
    %v8055 = vmul.f32 %v8039, 0.10936069
    %v8056 = vmul.f32 %v8040, 0.10936069
    %v8057 = vmul.f32 %v8041, 0.10936069
    %v8058 = vmul.f32 %v8042, 0.10936069
    %v8075 = vrot.slane %v8043, 3
    %v8076 = vrot.slane %v8044, 3
    %v8077 = vsel %vm6144, %v8075, %v8076
    %v8078 = vrot.slane %v8045, 3
    %v8079 = vrot.slane %v8046, 3
    %v8080 = vsel %vm6144, %v8078, %v8079
    %v8081 = vrot.slane %v8047, 3
    %v8082 = vrot.slane %v8048, 3
    %v8083 = vsel %vm6144, %v8081, %v8082
    %v8084 = vrot.slane %v8049, 3
    %v8085 = vrot.slane %v8050, 3
    %v8086 = vsel %vm6144, %v8084, %v8085
    %v8087 = vrot.slane %v8051, 3
    %v8088 = vrot.slane %v8052, 3
    %v8089 = vsel %vm6144, %v8087, %v8088
    %v8090 = vrot.slane %v8053, 3
    %v8091 = vrot.slane %v8054, 3
    %v8092 = vsel %vm6144, %v8090, %v8091
    %v8093 = vrot.slane %v8055, 3
    %v8094 = vrot.slane %v8056, 3
    %v8095 = vsel %vm6144, %v8093, %v8094
    %v8096 = vrot.slane %v8057, 3
    %v8097 = vrot.slane %v8058, 3
    %v8098 = vsel %vm6144, %v8096, %v8097
    %v8107 = vadd.f32 %v7971, %v8077
    %v8108 = vadd.f32 %v7972, %v8080
    %v8109 = vadd.f32 %v7973, %v8083
    %v8110 = vadd.f32 %v7974, %v8086
    %v8111 = vadd.f32 %v7975, %v8089
    %v8112 = vadd.f32 %v7976, %v8092
    %v8113 = vadd.f32 %v7977, %v8095
    %v8114 = vadd.f32 %v7978, %v8098
    %v8115 = vrot.slane %v5802, 2
    %v8116 = vsel %vm6185, %v8115, %v7835
    %v8117 = vrot.slane %v5814, 2
    %v8118 = vsel %vm6185, %v8117, %v7836
    %v8119 = vrot.slane %v5826, 2
    %v8120 = vsel %vm6185, %v8119, %v7837
    %v8121 = vrot.slane %v5838, 2
    %v8122 = vsel %vm6185, %v8121, %v7838
    %v8123 = vrot.slane %v5850, 2
    %v8124 = vsel %vm6185, %v8123, %v7839
    %v8125 = vrot.slane %v5862, 2
    %v8126 = vsel %vm6185, %v8125, %v7840
    %v8127 = vrot.slane %v5874, 2
    %v8128 = vsel %vm6185, %v8127, %v7841
    %v8129 = vrot.slane %v5886, 2
    %v8130 = vsel %vm6185, %v8129, %v7842
    %v8139 = vadd.f32 %v5802, %v8116
    %v8140 = vadd.f32 %v5808, %v7835
    %v8141 = vadd.f32 %v5814, %v8118
    %v8142 = vadd.f32 %v5820, %v7836
    %v8143 = vadd.f32 %v5826, %v8120
    %v8144 = vadd.f32 %v5832, %v7837
    %v8145 = vadd.f32 %v5838, %v8122
    %v8146 = vadd.f32 %v5844, %v7838
    %v8147 = vadd.f32 %v5850, %v8124
    %v8148 = vadd.f32 %v5856, %v7839
    %v8149 = vadd.f32 %v5862, %v8126
    %v8150 = vadd.f32 %v5868, %v7840
    %v8151 = vadd.f32 %v5874, %v8128
    %v8152 = vadd.f32 %v5880, %v7841
    %v8153 = vadd.f32 %v5886, %v8130
    %v8154 = vadd.f32 %v5892, %v7842
    %v8155 = vmul.f32 %v8139, 0.21300554
    %v8156 = vmul.f32 %v8140, 0.21300554
    %v8157 = vmul.f32 %v8141, 0.21300554
    %v8158 = vmul.f32 %v8142, 0.21300554
    %v8159 = vmul.f32 %v8143, 0.21300554
    %v8160 = vmul.f32 %v8144, 0.21300554
    %v8161 = vmul.f32 %v8145, 0.21300554
    %v8162 = vmul.f32 %v8146, 0.21300554
    %v8163 = vmul.f32 %v8147, 0.21300554
    %v8164 = vmul.f32 %v8148, 0.21300554
    %v8165 = vmul.f32 %v8149, 0.21300554
    %v8166 = vmul.f32 %v8150, 0.21300554
    %v8167 = vmul.f32 %v8151, 0.21300554
    %v8168 = vmul.f32 %v8152, 0.21300554
    %v8169 = vmul.f32 %v8153, 0.21300554
    %v8170 = vmul.f32 %v8154, 0.21300554
    %v8187 = vrot.slane %v8155, 4
    %v8188 = vrot.slane %v8156, 4
    %v8189 = vsel %vm6055, %v8187, %v8188
    %v8190 = vrot.slane %v8157, 4
    %v8191 = vrot.slane %v8158, 4
    %v8192 = vsel %vm6055, %v8190, %v8191
    %v8193 = vrot.slane %v8159, 4
    %v8194 = vrot.slane %v8160, 4
    %v8195 = vsel %vm6055, %v8193, %v8194
    %v8196 = vrot.slane %v8161, 4
    %v8197 = vrot.slane %v8162, 4
    %v8198 = vsel %vm6055, %v8196, %v8197
    %v8199 = vrot.slane %v8163, 4
    %v8200 = vrot.slane %v8164, 4
    %v8201 = vsel %vm6055, %v8199, %v8200
    %v8202 = vrot.slane %v8165, 4
    %v8203 = vrot.slane %v8166, 4
    %v8204 = vsel %vm6055, %v8202, %v8203
    %v8205 = vrot.slane %v8167, 4
    %v8206 = vrot.slane %v8168, 4
    %v8207 = vsel %vm6055, %v8205, %v8206
    %v8208 = vrot.slane %v8169, 4
    %v8209 = vrot.slane %v8170, 4
    %v8210 = vsel %vm6055, %v8208, %v8209
    %v8219 = vadd.f32 %v8107, %v8189
    %v8220 = vadd.f32 %v8108, %v8192
    %v8221 = vadd.f32 %v8109, %v8195
    %v8222 = vadd.f32 %v8110, %v8198
    %v8223 = vadd.f32 %v8111, %v8201
    %v8224 = vadd.f32 %v8112, %v8204
    %v8225 = vadd.f32 %v8113, %v8207
    %v8226 = vadd.f32 %v8114, %v8210
    %v8227 = vmul.f32 %v5802, 0.26601171
    %v8228 = vmul.f32 %v5808, 0.26601171
    %v8229 = vmul.f32 %v5814, 0.26601171
    %v8230 = vmul.f32 %v5820, 0.26601171
    %v8231 = vmul.f32 %v5826, 0.26601171
    %v8232 = vmul.f32 %v5832, 0.26601171
    %v8233 = vmul.f32 %v5838, 0.26601171
    %v8234 = vmul.f32 %v5844, 0.26601171
    %v8235 = vmul.f32 %v5850, 0.26601171
    %v8236 = vmul.f32 %v5856, 0.26601171
    %v8237 = vmul.f32 %v5862, 0.26601171
    %v8238 = vmul.f32 %v5868, 0.26601171
    %v8239 = vmul.f32 %v5874, 0.26601171
    %v8240 = vmul.f32 %v5880, 0.26601171
    %v8241 = vmul.f32 %v5886, 0.26601171
    %v8242 = vmul.f32 %v5892, 0.26601171
    %v8259 = vrot.slane %v8227, 5
    %v8260 = vrot.slane %v8228, 5
    %v8261 = vsel %vm6330, %v8259, %v8260
    %v8262 = vrot.slane %v8229, 5
    %v8263 = vrot.slane %v8230, 5
    %v8264 = vsel %vm6330, %v8262, %v8263
    %v8265 = vrot.slane %v8231, 5
    %v8266 = vrot.slane %v8232, 5
    %v8267 = vsel %vm6330, %v8265, %v8266
    %v8268 = vrot.slane %v8233, 5
    %v8269 = vrot.slane %v8234, 5
    %v8270 = vsel %vm6330, %v8268, %v8269
    %v8271 = vrot.slane %v8235, 5
    %v8272 = vrot.slane %v8236, 5
    %v8273 = vsel %vm6330, %v8271, %v8272
    %v8274 = vrot.slane %v8237, 5
    %v8275 = vrot.slane %v8238, 5
    %v8276 = vsel %vm6330, %v8274, %v8275
    %v8277 = vrot.slane %v8239, 5
    %v8278 = vrot.slane %v8240, 5
    %v8279 = vsel %vm6330, %v8277, %v8278
    %v8280 = vrot.slane %v8241, 5
    %v8281 = vrot.slane %v8242, 5
    %v8282 = vsel %vm6330, %v8280, %v8281
    %v8291 = vadd.f32 %v8219, %v8261
    %v8292 = vadd.f32 %v8220, %v8264
    %v8293 = vadd.f32 %v8221, %v8267
    %v8294 = vadd.f32 %v8222, %v8270
    %v8295 = vadd.f32 %v8223, %v8273
    %v8296 = vadd.f32 %v8224, %v8276
    %v8297 = vadd.f32 %v8225, %v8279
    %v8298 = vadd.f32 %v8226, %v8282
    %v8299 = vsub.f32 %v8291, %v6859
    %v8300 = vsub.f32 %v8292, %v6860
    %v8301 = vsub.f32 %v8293, %v6861
    %v8302 = vsub.f32 %v8294, %v6862
    %v8303 = vsub.f32 %v8295, %v6863
    %v8304 = vsub.f32 %v8296, %v6864
    %v8305 = vsub.f32 %v8297, %v6865
    %v8306 = vsub.f32 %v8298, %v6866
    %v8307 = vmul.f32 %v8299, 2.0
    %v8308 = vmul.f32 %v8300, 2.0
    %v8309 = vmul.f32 %v8301, 2.0
    %v8310 = vmul.f32 %v8302, 2.0
    %v8311 = vmul.f32 %v8303, 2.0
    %v8312 = vmul.f32 %v8304, 2.0
    %v8313 = vmul.f32 %v8305, 2.0
    %v8314 = vmul.f32 %v8306, 2.0
    %v8315 = vstv %s51
    %v8316 = vadd.f32 %v8307, %v8315
    %v8317 = vadd.f32 %v8308, %v8315
    %v8318 = vadd.f32 %v8309, %v8315
    %v8319 = vadd.f32 %v8310, %v8315
    %v8320 = vadd.f32 %v8311, %v8315
    %v8321 = vadd.f32 %v8312, %v8315
    %v8322 = vadd.f32 %v8313, %v8315
    %v8323 = vadd.f32 %v8314, %v8315
    %v8324 = vadd.f32 %v7339, %v7819
    %v8325 = vadd.f32 %v7340, %v7820
    %v8326 = vadd.f32 %v7341, %v7821
    %v8327 = vadd.f32 %v7342, %v7822
    %v8328 = vadd.f32 %v7343, %v7823
    %v8329 = vadd.f32 %v7344, %v7824
    %v8330 = vadd.f32 %v7345, %v7825
    %v8331 = vadd.f32 %v7346, %v7826
    %v8332 = vadd.f32 %v8324, %v8315
    %v8333 = vadd.f32 %v8325, %v8315
    %v8334 = vadd.f32 %v8326, %v8315
    %v8335 = vadd.f32 %v8327, %v8315
    %v8336 = vadd.f32 %v8328, %v8315
    %v8337 = vadd.f32 %v8329, %v8315
    %v8338 = vadd.f32 %v8330, %v8315
    %v8339 = vadd.f32 %v8331, %v8315
    %v8340 = vmul.f32 %v6859, 2.0
    %v8341 = vmul.f32 %v6860, 2.0
    %v8342 = vmul.f32 %v6861, 2.0
    %v8343 = vmul.f32 %v6862, 2.0
    %v8344 = vmul.f32 %v6863, 2.0
    %v8345 = vmul.f32 %v6864, 2.0
    %v8346 = vmul.f32 %v6865, 2.0
    %v8347 = vmul.f32 %v6866, 2.0
    %v8348 = vstv %s50
    %v8349 = vadd.f32 %v8340, %v8348
    %v8350 = vadd.f32 %v8341, %v8348
    %v8351 = vadd.f32 %v8342, %v8348
    %v8352 = vadd.f32 %v8343, %v8348
    %v8353 = vadd.f32 %v8344, %v8348
    %v8354 = vadd.f32 %v8345, %v8348
    %v8355 = vadd.f32 %v8346, %v8348
    %v8356 = vadd.f32 %v8347, %v8348
    %v8357 = vmul.f32 %v8349, %v8316
    %v8358 = vmul.f32 %v8350, %v8317
    %v8359 = vmul.f32 %v8351, %v8318
    %v8360 = vmul.f32 %v8352, %v8319
    %v8361 = vmul.f32 %v8353, %v8320
    %v8362 = vmul.f32 %v8354, %v8321
    %v8363 = vmul.f32 %v8355, %v8322
    %v8364 = vmul.f32 %v8356, %v8323
    %v8365 = vadd.f32 %v6843, %v6851
    %v8366 = vadd.f32 %v6844, %v6852
    %v8367 = vadd.f32 %v6845, %v6853
    %v8368 = vadd.f32 %v6846, %v6854
    %v8369 = vadd.f32 %v6847, %v6855
    %v8370 = vadd.f32 %v6848, %v6856
    %v8371 = vadd.f32 %v6849, %v6857
    %v8372 = vadd.f32 %v6850, %v6858
    %v8373 = vadd.f32 %v8365, %v8348
    %v8374 = vadd.f32 %v8366, %v8348
    %v8375 = vadd.f32 %v8367, %v8348
    %v8376 = vadd.f32 %v8368, %v8348
    %v8377 = vadd.f32 %v8369, %v8348
    %v8378 = vadd.f32 %v8370, %v8348
    %v8379 = vadd.f32 %v8371, %v8348
    %v8380 = vadd.f32 %v8372, %v8348
    %v8381 = vmul.f32 %v8373, %v8332
    %v8382 = vmul.f32 %v8374, %v8333
    %v8383 = vmul.f32 %v8375, %v8334
    %v8384 = vmul.f32 %v8376, %v8335
    %v8385 = vmul.f32 %v8377, %v8336
    %v8386 = vmul.f32 %v8378, %v8337
    %v8387 = vmul.f32 %v8379, %v8338
    %v8388 = vmul.f32 %v8380, %v8339
    %v8389 = vrcp.pop %v8381
    %v8390 = vmul.f32 %v8357, %v8389
    %v8391 = vrcp.pop %v8382
    %v8392 = vmul.f32 %v8358, %v8391
    %v8393 = vrcp.pop %v8383
    %v8394 = vmul.f32 %v8359, %v8393
    %v8395 = vrcp.pop %v8384
    %v8396 = vmul.f32 %v8360, %v8395
    %v8397 = vrcp.pop %v8385
    %v8398 = vmul.f32 %v8361, %v8397
    %v8399 = vrcp.pop %v8386
    %v8400 = vmul.f32 %v8362, %v8399
    %v8401 = vrcp.pop %v8387
    %v8402 = vmul.f32 %v8363, %v8401
    %v8403 = vrcp.pop %v8388
    %v8404 = vmul.f32 %v8364, %v8403
    %vm8405 = vcmask 46080
    %v8406 = vsel %vm8405, %v8390, 0.0
    %v8407 = vsel %vm8405, %v8392, 0.0
    %v8408 = vadd.f32 %v8406, %v8407
    %v8409 = vsel %vm8405, %v8394, 0.0
    %v8410 = vadd.f32 %v8408, %v8409
    %v8411 = vsel %vm8405, %v8396, 0.0
    %v8412 = vadd.f32 %v8410, %v8411
    %v8413 = vsel %vm8405, %v8398, 0.0
    %v8414 = vadd.f32 %v8412, %v8413
    %v8415 = vsel %vm8405, %v8400, 0.0
    %v8416 = vadd.f32 %v8414, %v8415
    %v8417 = vsel %vm8405, %v8402, 0.0
    %v8418 = vadd.f32 %v8416, %v8417
    %v8419 = vsel %vm8405, %v8404, 0.0
    %v8420 = vadd.f32 %v8418, %v8419
    %8421 = vadd.xlane.f32.xlu0 %v8420
    %v8422 = vpop.xlane.xlu0 %8421
    %v8423 = vrot.slane %v8422, 4
    %v8424 = vadd.f32 %v8422, %v8423
    %v8425 = vrot.slane %v8424, 2
    %v8426 = vadd.f32 %v8424, %v8425
    %v8427 = vrot.slane %v8426, 1
    %v8428 = vadd.f32 %v8426, %v8427
    %s8429 = vtos %v8428
    %s8430 = scalar_lea.smem [#allocation9], 0
    %8431 = sst [smem:[%s8430]] %s8429
    // Predicated region
    $region22: #{tpu_custom_call.1} parent=1 // pred_check
      _
    $region23: #{tpu_custom_call.1} parent=1 // pred_check_branch
      %8433 = sbr.rel (0) target = $region25
    $region24: #{tpu_custom_call.1} parent=1 // pred_region
      %s8435 = ssub.s32 16, 16
      %8436 = vsyncadd [#allocation6], %s8435
      %8439 = dma.smem_to_hbm [#allocation9], 16, %s4, [#allocation6]
    $region25: #{tpu_custom_call.1} parent=1 // pred_fallthru
      _
    // Predicated region
    $region26: #{tpu_custom_call.1} parent=1 // pred_check
      _
    $region27: #{tpu_custom_call.1} parent=1 // pred_check_branch
      %8441 = sbr.rel (0) target = $region29
    $region28: #{tpu_custom_call.1} parent=1 // pred_region
      %8442 = dma.done [#allocation6], 16
    $region29: #{tpu_custom_call.1} parent=1 // pred_fallthru
      _
    %8443 = sfence
    %8444 = vsyncpa [#allocation5], 1
    %8445 = vsyncpa [#allocation8], 1
    %8446 = vsyncpa [#allocation6], 1

</llo_original>
